<compile_context>
chip_gen: v6e
topology: v6e:2x2x1
jax: 0.10.0
libtpu: 0.0.40
codegen_flags: <defaults>
</compile_context>

<pallas_src>
import jax
import jax.numpy as jnp
from jax import lax
from jax.experimental import pallas as pl
from jax.experimental.pallas import tpu as pltpu

# --- small config (scaled down from the module's n_embd=256, n_head=12,
#     n_layer=12, block_size=192, vocab=tokenizer.get_vocab_size()) ---
VOCAB_SIZE = 65
VOCAB_PAD = 128                       # lm_head output padded to a full lane group
N_EMBD = 64
N_HEAD = 4
HEAD_SIZE = N_EMBD // N_HEAD          # head_size = n_embd // n_head
N_LAYER = 2
BLOCK_SIZE = 32                       # max positions
SEQ_LEN = 32                          # T used in this script (== BLOCK_SIZE)
SEQ_PER_BLOCK = 4                     # sequences per grid step -> 128 rows per MXU matmul
NEG_SLOPE = 0.01                      # LeakyReLU negative_slope
LN_EPS = 1e-5                         # torch.nn.LayerNorm default eps
NEG_INF = -1e30                       # finite mask value (avoids inf-inf NaN)


# ----------------------------- fused Pallas kernel -----------------------------

def _layernorm(x, g, b):
    """PyTorch-style LayerNorm (biased variance) on f32 values in vregs."""
    mu = jnp.mean(x, axis=-1, keepdims=True)
    var = jnp.mean((x - mu) ** 2, axis=-1, keepdims=True)
    return (x - mu) * lax.rsqrt(var + LN_EPS) * g + b


def _gpt_fused_kernel(x_ref,
                      ln1_g_ref, ln1_b_ref, wqkv_ref, proj_w_ref, proj_b_ref,
                      ln2_g_ref, ln2_b_ref, ff1_w_ref, ff1_b_ref,
                      ff2_w_ref, ff2_b_ref,
                      lnf_g_ref, lnf_b_ref, head_w_ref, head_b_ref,
                      logits_ref):
    T = SEQ_LEN
    BB = SEQ_PER_BLOCK
    C = N_EMBD
    x = x_ref[...].astype(jnp.float32)                        # (BB*T, C) row slab

    # Causal additive bias, hoisted out of all loops; tiled across heads so the stacked
    # (H*T, T) softmax can apply it in one add.
    row = lax.broadcasted_iota(jnp.int32, (T, T), 0)
    col = lax.broadcasted_iota(jnp.int32, (T, T), 1)
    causal = jnp.where(col <= row, 0.0, NEG_INF).astype(jnp.float32)
    causal_h = jnp.tile(causal, (N_HEAD, 1))                  # (H*T, T)

    scale = HEAD_SIZE ** -0.5                                  # k.shape[-1] ** -0.5

    for l in range(N_LAYER):
        # ---- multi-head self attention (pre-LN), x = x + sa(ln1(x)) ----
        h = _layernorm(x, ln1_g_ref[l], ln1_b_ref[l])
        qkv = jnp.dot(h.astype(jnp.bfloat16), wqkv_ref[l],
                      preferred_element_type=jnp.float32)      # (BB*T, 3C), M=128 rows

        att_rows = []
        for b in range(BB):                                    # per-sequence attention
            qkv_b = qkv[b * T:(b + 1) * T, :]                  # (T, 3C) sublane slice
            qb = qkv_b[:, 0:C].astype(jnp.bfloat16)
            kb = qkv_b[:, C:2 * C].astype(jnp.bfloat16)
            vb = qkv_b[:, 2 * C:3 * C].astype(jnp.bfloat16)

            # per-head scores, stacked along sublanes -> one dense softmax
            s_tiles = []
            for hd in range(N_HEAD):
                lo, hi = hd * HEAD_SIZE, (hd + 1) * HEAD_SIZE
                s_tiles.append(
                    lax.dot_general(qb[:, lo:hi], kb[:, lo:hi],
                                    (((1,), (1,)), ((), ())),
                                    preferred_element_type=jnp.float32))
            s = jnp.concatenate(s_tiles, axis=0) * scale + causal_h     # (H*T, T)
            s = s - jnp.max(s, axis=-1, keepdims=True)
            p = jnp.exp(s)
            p = p * pl.reciprocal(jnp.sum(p, axis=-1, keepdims=True), approx=True)
            p = p.astype(jnp.bfloat16)

            # per-head p @ v, concatenated back to (T, C)
            o_tiles = []
            for hd in range(N_HEAD):
                lo, hi = hd * HEAD_SIZE, (hd + 1) * HEAD_SIZE
                o_tiles.append(jnp.dot(p[hd * T:(hd + 1) * T, :], vb[:, lo:hi],
                                       preferred_element_type=jnp.float32))
            att_rows.append(jnp.concatenate(o_tiles, axis=1))           # (T, C)

        att = jnp.concatenate(att_rows, axis=0)                         # (BB*T, C)
        # single K=C output projection on the full row slab
        x = x + jnp.dot(att.astype(jnp.bfloat16), proj_w_ref[l],
                        preferred_element_type=jnp.float32) + proj_b_ref[l]

        # ---- feed forward: Linear -> LeakyReLU -> Linear, x = x + ffwd(ln2(x)) ----
        h2 = _layernorm(x, ln2_g_ref[l], ln2_b_ref[l])
        ff = jnp.dot(h2.astype(jnp.bfloat16), ff1_w_ref[l],
                     preferred_element_type=jnp.float32) + ff1_b_ref[l]
        ff = jnp.where(ff > 0, ff, NEG_SLOPE * ff)
        ff = jnp.dot(ff.astype(jnp.bfloat16), ff2_w_ref[l],
                     preferred_element_type=jnp.float32) + ff2_b_ref[l]
        x = x + ff

    # ---- final layernorm + lm_head (padded to 128 lanes, lane-dense store) ----
    xf = _layernorm(x, lnf_g_ref[...], lnf_b_ref[...])
    logits_ref[...] = (jnp.dot(xf.astype(jnp.bfloat16), head_w_ref[...],
                               preferred_element_type=jnp.float32)
                       + head_b_ref[...]).astype(logits_ref.dtype)


def gpt_fused(x2d, p, n_row_blocks):
    """x2d: (B*T, C) embeddings (f32). Returns (B*T, VOCAB_PAD) padded logits."""
    weights = [p["ln1_g"], p["ln1_b"], p["wqkv"], p["proj_w"], p["proj_b"],
               p["ln2_g"], p["ln2_b"], p["ff1_w"], p["ff1_b"],
               p["ff2_w"], p["ff2_b"],
               p["ln_f_g"], p["ln_f_b"], p["lm_head_w"], p["lm_head_b"]]

    def full_spec(arr):
        nd = arr.ndim
        # constant block index -> weight stays VMEM-resident across grid steps
        return pl.BlockSpec(arr.shape, lambda i, _nd=nd: (0,) * _nd)

    rows = SEQ_PER_BLOCK * SEQ_LEN
    in_specs = ([pl.BlockSpec((rows, N_EMBD), lambda i: (i, 0))]
                + [full_spec(w) for w in weights])
    out_specs = pl.BlockSpec((rows, VOCAB_PAD), lambda i: (i, 0))

    # ---- cost estimate + explicit VMEM budget ----
    R_total = x2d.shape[0]
    flops = 0
    flops += 2 * R_total * N_EMBD * (3 * N_EMBD) * N_LAYER            # QKV
    flops += 2 * R_total * SEQ_LEN * N_EMBD * 2 * N_LAYER             # QK^T + PV
    flops += 2 * R_total * N_EMBD * N_EMBD * N_LAYER                  # output proj
    flops += 2 * R_total * N_EMBD * (4 * N_EMBD) * 2 * N_LAYER        # FFN
    flops += 2 * R_total * N_EMBD * VOCAB_PAD                         # lm_head
    transcendentals = R_total * SEQ_LEN * N_HEAD * N_LAYER            # softmax exps
    weight_bytes = sum(int(w.size) * w.dtype.itemsize for w in weights)
    bytes_accessed = int(x2d.size) * 4 + weight_bytes + R_total * VOCAB_PAD * 4
    vmem_limit = 32 * 1024 * 1024                                     # >> resident footprint

    return pl.pallas_call(
        _gpt_fused_kernel,
        grid=(n_row_blocks,),
        in_specs=in_specs,
        out_specs=out_specs,
        out_shape=jax.ShapeDtypeStruct((R_total, VOCAB_PAD), jnp.float32),
        compiler_params=pltpu.CompilerParams(
            dimension_semantics=("parallel",),       # split 128-row steps across TCs (v7x)
            vmem_limit_bytes=vmem_limit),
        cost_estimate=pl.CostEstimate(flops=int(flops),
                                      transcendentals=int(transcendentals),
                                      bytes_accessed=int(bytes_accessed)),
    )(x2d, *weights)


# ------------------------------- model glue -------------------------------

def gpt_forward(params, idx, targets=None):
    """forward_normal: returns (logits, loss). loss is None when targets is None."""
    B, T = idx.shape
    assert T == SEQ_LEN, "this toy build fixes T == SEQ_LEN (pad shorter prompts)"
    assert B % SEQ_PER_BLOCK == 0, "B must be a multiple of SEQ_PER_BLOCK"
    tok_emb = jnp.take(params["tok_emb"], idx, axis=0)           # (B, T, C)
    pos_emb = params["pos_emb"][:T]                              # (T, C)
    x2d = (tok_emb + pos_emb).reshape(B * T, N_EMBD).astype(jnp.float32)

    n_row_blocks = B // SEQ_PER_BLOCK
    logits_pad = gpt_fused(x2d, params, n_row_blocks)            # (B*T, VOCAB_PAD)
    logits = logits_pad[:, :VOCAB_SIZE].reshape(B, T, VOCAB_SIZE)

    if targets is None:
        return logits, None
    lg = logits.reshape(B * T, VOCAB_SIZE)
    tg = targets.reshape(B * T)
    logp = jax.nn.log_softmax(lg, axis=-1)
    loss = -jnp.mean(jnp.take_along_axis(logp, tg[:, None], axis=-1))
    return logits, loss


# --------------------------- parameter creation ----------------------------

def init_params(key):
    keys = iter(jax.random.split(key, 256))

    def nrm(shape):
        return 0.02 * jax.random.normal(next(keys), shape, dtype=jnp.float32)

    wqkv, proj_w, proj_b = [], [], []
    ff1_w, ff1_b, ff2_w, ff2_b = [], [], [], []
    for _ in range(N_LAYER):
        # per-head key/query/value weights (no bias), concatenated along output columns
        wq = jnp.concatenate([nrm((N_EMBD, HEAD_SIZE)) for _ in range(N_HEAD)], axis=1)
        wk = jnp.concatenate([nrm((N_EMBD, HEAD_SIZE)) for _ in range(N_HEAD)], axis=1)
        wv = jnp.concatenate([nrm((N_EMBD, HEAD_SIZE)) for _ in range(N_HEAD)], axis=1)
        wqkv.append(jnp.concatenate([wq, wk, wv], axis=1))        # (C, 3C)
        proj_w.append(nrm((N_EMBD, N_EMBD)))
        proj_b.append(jnp.zeros((1, N_EMBD), jnp.float32))
        ff1_w.append(nrm((N_EMBD, 4 * N_EMBD)))
        ff1_b.append(jnp.zeros((1, 4 * N_EMBD), jnp.float32))
        ff2_w.append(nrm((4 * N_EMBD, N_EMBD)))
        ff2_b.append(jnp.zeros((1, N_EMBD), jnp.float32))

    # lm_head padded with zero columns up to VOCAB_PAD lanes (sliced off in the wrapper)
    lm_w = nrm((N_EMBD, VOCAB_SIZE))
    lm_w = jnp.concatenate(
        [lm_w, jnp.zeros((N_EMBD, VOCAB_PAD - VOCAB_SIZE), jnp.float32)], axis=1)

    bf16 = jnp.bfloat16
    params = {
        "tok_emb": nrm((VOCAB_SIZE, N_EMBD)),
        "pos_emb": nrm((BLOCK_SIZE, N_EMBD)),
        # matmul weights stored in bf16 (MXU inputs); biases / LN params stay f32
        "wqkv": jnp.stack(wqkv).astype(bf16),                    # (L, C, 3C)
        "proj_w": jnp.stack(proj_w).astype(bf16),                # (L, C, C)
        "proj_b": jnp.stack(proj_b),                             # (L, 1, C)
        "ff1_w": jnp.stack(ff1_w).astype(bf16),                  # (L, C, 4C)
        "ff1_b": jnp.stack(ff1_b),                               # (L, 1, 4C)
        "ff2_w": jnp.stack(ff2_w).astype(bf16),                  # (L, 4C, C)
        "ff2_b": jnp.stack(ff2_b),                               # (L, 1, C)
        "ln1_g": jnp.ones((N_LAYER, 1, N_EMBD), jnp.float32),
        "ln1_b": jnp.zeros((N_LAYER, 1, N_EMBD), jnp.float32),
        "ln2_g": jnp.ones((N_LAYER, 1, N_EMBD), jnp.float32),
        "ln2_b": jnp.zeros((N_LAYER, 1, N_EMBD), jnp.float32),
        "ln_f_g": jnp.ones((1, N_EMBD), jnp.float32),
        "ln_f_b": jnp.zeros((1, N_EMBD), jnp.float32),
        "lm_head_w": lm_w.astype(bf16),                          # (C, VOCAB_PAD)
        "lm_head_b": jnp.zeros((1, VOCAB_PAD), jnp.float32),
    }
    return params


# ----------------------------------- main -----------------------------------

if __name__ == "__main__":
    key = jax.random.PRNGKey(0)
    pkey, dkey = jax.random.split(key)
    params = init_params(pkey)

    B, T = 8, SEQ_LEN                      # 8 sequences of 32 tokens -> 2 x 128-row grid steps
    idx = jax.random.randint(dkey, (B, T), 0, VOCAB_SIZE, dtype=jnp.int32)

    fwd = jax.jit(lambda p, i: gpt_forward(p, i))
    logits, loss = fwd(params, idx)
    jax.block_until_ready(logits)

    assert logits.shape == (B, T, VOCAB_SIZE)
    assert logits.dtype == jnp.float32
    assert bool(jnp.all(jnp.isfinite(logits)))
    assert loss is None
    print("KERNEL_OK")
</pallas_src>

<mosaic_0001>
module attributes {stable_mosaic.version = 11 : i64} {
  func.func @_gpt_fused_kernel(%arg0: i32, %arg1: memref<128x64xf32, #tpu.memory_space<vmem>>, %arg2: memref<2x1x64xf32, #tpu.memory_space<vmem>>, %arg3: memref<2x1x64xf32, #tpu.memory_space<vmem>>, %arg4: memref<2x64x192xbf16, #tpu.memory_space<vmem>>, %arg5: memref<2x64x64xbf16, #tpu.memory_space<vmem>>, %arg6: memref<2x1x64xf32, #tpu.memory_space<vmem>>, %arg7: memref<2x1x64xf32, #tpu.memory_space<vmem>>, %arg8: memref<2x1x64xf32, #tpu.memory_space<vmem>>, %arg9: memref<2x64x256xbf16, #tpu.memory_space<vmem>>, %arg10: memref<2x1x256xf32, #tpu.memory_space<vmem>>, %arg11: memref<2x256x64xbf16, #tpu.memory_space<vmem>>, %arg12: memref<2x1x64xf32, #tpu.memory_space<vmem>>, %arg13: memref<1x64xf32, #tpu.memory_space<vmem>>, %arg14: memref<1x64xf32, #tpu.memory_space<vmem>>, %arg15: memref<64x128xbf16, #tpu.memory_space<vmem>>, %arg16: memref<1x128xf32, #tpu.memory_space<vmem>>, %arg17: memref<128x128xf32, #tpu.memory_space<vmem>>) attributes {dimension_semantics = [#tpu.dimension_semantics<parallel>], iteration_bounds = array<i64: 2>, scalar_prefetch = 0 : i64, scratch_operands = 0 : i64, tpu.core_type = #tpu.core_type<tc>, window_params = [{transform_indices = @transform_0, window_bounds = array<i64: 128, 64>}, {pipeline_mode = #tpu.pipeline_mode<synchronous>, transform_indices = @transform_1, window_bounds = array<i64: 2, 1, 64>}, {pipeline_mode = #tpu.pipeline_mode<synchronous>, transform_indices = @transform_2, window_bounds = array<i64: 2, 1, 64>}, {pipeline_mode = #tpu.pipeline_mode<synchronous>, transform_indices = @transform_3, window_bounds = array<i64: 2, 64, 192>}, {pipeline_mode = #tpu.pipeline_mode<synchronous>, transform_indices = @transform_4, window_bounds = array<i64: 2, 64, 64>}, {pipeline_mode = #tpu.pipeline_mode<synchronous>, transform_indices = @transform_5, window_bounds = array<i64: 2, 1, 64>}, {pipeline_mode = #tpu.pipeline_mode<synchronous>, transform_indices = @transform_6, window_bounds = array<i64: 2, 1, 64>}, {pipeline_mode = #tpu.pipeline_mode<synchronous>, transform_indices = @transform_7, window_bounds = array<i64: 2, 1, 64>}, {pipeline_mode = #tpu.pipeline_mode<synchronous>, transform_indices = @transform_8, window_bounds = array<i64: 2, 64, 256>}, {pipeline_mode = #tpu.pipeline_mode<synchronous>, transform_indices = @transform_9, window_bounds = array<i64: 2, 1, 256>}, {pipeline_mode = #tpu.pipeline_mode<synchronous>, transform_indices = @transform_10, window_bounds = array<i64: 2, 256, 64>}, {pipeline_mode = #tpu.pipeline_mode<synchronous>, transform_indices = @transform_11, window_bounds = array<i64: 2, 1, 64>}, {pipeline_mode = #tpu.pipeline_mode<synchronous>, transform_indices = @transform_12, window_bounds = array<i64: 1, 64>}, {pipeline_mode = #tpu.pipeline_mode<synchronous>, transform_indices = @transform_13, window_bounds = array<i64: 1, 64>}, {pipeline_mode = #tpu.pipeline_mode<synchronous>, transform_indices = @transform_14, window_bounds = array<i64: 64, 128>}, {pipeline_mode = #tpu.pipeline_mode<synchronous>, transform_indices = @transform_15, window_bounds = array<i64: 1, 128>}, {transform_indices = @transform_16, window_bounds = array<i64: 128, 128>}]} {
    %c0 = arith.constant 0 : index
    %c0_0 = arith.constant 0 : index
    %0 = vector.load %arg1[%c0, %c0_0] : memref<128x64xf32, #tpu.memory_space<vmem>>, vector<128x64xf32>
    %1 = tpu.iota {dimensions = array<i32: 0>} : vector<32x32xi32>
    %2 = tpu.iota {dimensions = array<i32: 1>} : vector<32x32xi32>
    %3 = arith.cmpi sle, %2, %1 : vector<32x32xi32>
    %cst = arith.constant 0.000000e+00 : f32
    %cst_1 = arith.constant -1.000000e+30 : f32
    %4 = vector.broadcast %cst : f32 to vector<32x32xf32>
    %5 = vector.broadcast %cst_1 : f32 to vector<32x32xf32>
    %6 = arith.select %3, %4, %5 : vector<32x32xi1>, vector<32x32xf32>
    %7 = tpu.concatenate %6, %6, %6, %6 in 0 : vector<32x32xf32>, vector<32x32xf32>, vector<32x32xf32>, vector<32x32xf32> -> vector<128x32xf32>
    %c0_2 = arith.constant 0 : index
    %c0_3 = arith.constant 0 : index
    %c0_4 = arith.constant 0 : index
    %8 = vector.load %arg2[%c0_2, %c0_3, %c0_4] : memref<2x1x64xf32, #tpu.memory_space<vmem>>, vector<1x1x64xf32>
    %9 = vector.shape_cast %8 : vector<1x1x64xf32> to vector<1x64xf32>
    %c0_5 = arith.constant 0 : index
    %c0_6 = arith.constant 0 : index
    %c0_7 = arith.constant 0 : index
    %10 = vector.load %arg3[%c0_5, %c0_6, %c0_7] : memref<2x1x64xf32, #tpu.memory_space<vmem>>, vector<1x1x64xf32>
    %11 = vector.shape_cast %10 : vector<1x1x64xf32> to vector<1x64xf32>
    %cst_8 = arith.constant dense<0.000000e+00> : vector<128xf32>
    %12 = vector.multi_reduction <add>, %0, %cst_8 [1] : vector<128x64xf32> to vector<128xf32>
    %13 = vector.shape_cast %12 : vector<128xf32> to vector<128x1xf32>
    %cst_9 = arith.constant 6.400000e+01 : f32
    %14 = vector.broadcast %cst_9 : f32 to vector<128x1xf32>
    %15 = arith.divf %13, %14 : vector<128x1xf32>
    %16 = vector.broadcast %15 : vector<128x1xf32> to vector<128x64xf32>
    %17 = arith.subf %0, %16 : vector<128x64xf32>
    %18 = arith.mulf %17, %17 : vector<128x64xf32>
    %cst_10 = arith.constant dense<0.000000e+00> : vector<128xf32>
    %19 = vector.multi_reduction <add>, %18, %cst_10 [1] : vector<128x64xf32> to vector<128xf32>
    %20 = vector.shape_cast %19 : vector<128xf32> to vector<128x1xf32>
    %cst_11 = arith.constant 6.400000e+01 : f32
    %21 = vector.broadcast %cst_11 : f32 to vector<128x1xf32>
    %22 = arith.divf %20, %21 : vector<128x1xf32>
    %23 = vector.broadcast %15 : vector<128x1xf32> to vector<128x64xf32>
    %24 = arith.subf %0, %23 : vector<128x64xf32>
    %cst_12 = arith.constant 9.99999974E-6 : f32
    %25 = vector.broadcast %cst_12 : f32 to vector<128x1xf32>
    %26 = arith.addf %22, %25 : vector<128x1xf32>
    %27 = math.rsqrt %26 : vector<128x1xf32>
    %28 = vector.broadcast %27 : vector<128x1xf32> to vector<128x64xf32>
    %29 = arith.mulf %24, %28 : vector<128x64xf32>
    %30 = vector.broadcast %9 : vector<1x64xf32> to vector<128x64xf32>
    %31 = arith.mulf %29, %30 : vector<128x64xf32>
    %32 = vector.broadcast %11 : vector<1x64xf32> to vector<128x64xf32>
    %33 = arith.addf %31, %32 : vector<128x64xf32>
    %34 = arith.truncf %33 : vector<128x64xf32> to vector<128x64xbf16>
    %c0_13 = arith.constant 0 : index
    %c0_14 = arith.constant 0 : index
    %c0_15 = arith.constant 0 : index
    %35 = vector.load %arg4[%c0_13, %c0_14, %c0_15] : memref<2x64x192xbf16, #tpu.memory_space<vmem>>, vector<1x64x192xbf16>
    %36 = vector.shape_cast %35 : vector<1x64x192xbf16> to vector<64x192xbf16>
    %cst_16 = arith.constant dense<0.000000e+00> : vector<128x192xf32>
    %37 = tpu.matmul %34, %36, %cst_16 {dimension_numbers = #tpu.dot_dimension_numbers<[1], [0], [0], [1], [0, 0, 1, 1], [], []>} : vector<128x64xbf16>, vector<64x192xbf16>, vector<128x192xf32> -> vector<128x192xf32>
    %38 = vector.extract_strided_slice %37 {offsets = [0, 0], sizes = [32, 192], strides = [1, 1]} : vector<128x192xf32> to vector<32x192xf32>
    %39 = vector.extract_strided_slice %38 {offsets = [0, 0], sizes = [32, 64], strides = [1, 1]} : vector<32x192xf32> to vector<32x64xf32>
    %40 = arith.truncf %39 : vector<32x64xf32> to vector<32x64xbf16>
    %41 = vector.extract_strided_slice %38 {offsets = [0, 64], sizes = [32, 64], strides = [1, 1]} : vector<32x192xf32> to vector<32x64xf32>
    %42 = arith.truncf %41 : vector<32x64xf32> to vector<32x64xbf16>
    %43 = vector.extract_strided_slice %38 {offsets = [0, 128], sizes = [32, 64], strides = [1, 1]} : vector<32x192xf32> to vector<32x64xf32>
    %44 = arith.truncf %43 : vector<32x64xf32> to vector<32x64xbf16>
    %45 = vector.extract_strided_slice %40 {offsets = [0, 0], sizes = [32, 16], strides = [1, 1]} : vector<32x64xbf16> to vector<32x16xbf16>
    %46 = vector.extract_strided_slice %42 {offsets = [0, 0], sizes = [32, 16], strides = [1, 1]} : vector<32x64xbf16> to vector<32x16xbf16>
    %cst_17 = arith.constant dense<0.000000e+00> : vector<32x32xf32>
    %47 = tpu.matmul %45, %46, %cst_17 {dimension_numbers = #tpu.dot_dimension_numbers<[1], [1], [0], [0], [0, 0, 1, 0], [], []>} : vector<32x16xbf16>, vector<32x16xbf16>, vector<32x32xf32> -> vector<32x32xf32>
    %48 = vector.extract_strided_slice %40 {offsets = [0, 16], sizes = [32, 16], strides = [1, 1]} : vector<32x64xbf16> to vector<32x16xbf16>
    %49 = vector.extract_strided_slice %42 {offsets = [0, 16], sizes = [32, 16], strides = [1, 1]} : vector<32x64xbf16> to vector<32x16xbf16>
    %cst_18 = arith.constant dense<0.000000e+00> : vector<32x32xf32>
    %50 = tpu.matmul %48, %49, %cst_18 {dimension_numbers = #tpu.dot_dimension_numbers<[1], [1], [0], [0], [0, 0, 1, 0], [], []>} : vector<32x16xbf16>, vector<32x16xbf16>, vector<32x32xf32> -> vector<32x32xf32>
    %51 = vector.extract_strided_slice %40 {offsets = [0, 32], sizes = [32, 16], strides = [1, 1]} : vector<32x64xbf16> to vector<32x16xbf16>
    %52 = vector.extract_strided_slice %42 {offsets = [0, 32], sizes = [32, 16], strides = [1, 1]} : vector<32x64xbf16> to vector<32x16xbf16>
    %cst_19 = arith.constant dense<0.000000e+00> : vector<32x32xf32>
    %53 = tpu.matmul %51, %52, %cst_19 {dimension_numbers = #tpu.dot_dimension_numbers<[1], [1], [0], [0], [0, 0, 1, 0], [], []>} : vector<32x16xbf16>, vector<32x16xbf16>, vector<32x32xf32> -> vector<32x32xf32>
    %54 = vector.extract_strided_slice %40 {offsets = [0, 48], sizes = [32, 16], strides = [1, 1]} : vector<32x64xbf16> to vector<32x16xbf16>
    %55 = vector.extract_strided_slice %42 {offsets = [0, 48], sizes = [32, 16], strides = [1, 1]} : vector<32x64xbf16> to vector<32x16xbf16>
    %cst_20 = arith.constant dense<0.000000e+00> : vector<32x32xf32>
    %56 = tpu.matmul %54, %55, %cst_20 {dimension_numbers = #tpu.dot_dimension_numbers<[1], [1], [0], [0], [0, 0, 1, 0], [], []>} : vector<32x16xbf16>, vector<32x16xbf16>, vector<32x32xf32> -> vector<32x32xf32>
    %57 = tpu.concatenate %47, %50, %53, %56 in 0 : vector<32x32xf32>, vector<32x32xf32>, vector<32x32xf32>, vector<32x32xf32> -> vector<128x32xf32>
    %cst_21 = arith.constant 2.500000e-01 : f32
    %58 = vector.broadcast %cst_21 : f32 to vector<128x32xf32>
    %59 = arith.mulf %57, %58 : vector<128x32xf32>
    %60 = arith.addf %59, %7 : vector<128x32xf32>
    %cst_22 = arith.constant dense<0xFF800000> : vector<128xf32>
    %61 = vector.multi_reduction <maximumf>, %60, %cst_22 [1] : vector<128x32xf32> to vector<128xf32>
    %62 = vector.shape_cast %61 : vector<128xf32> to vector<128x1xf32>
    %63 = vector.broadcast %62 : vector<128x1xf32> to vector<128x32xf32>
    %64 = arith.subf %60, %63 : vector<128x32xf32>
    %65 = math.exp %64 : vector<128x32xf32>
    %cst_23 = arith.constant dense<0.000000e+00> : vector<128xf32>
    %66 = vector.multi_reduction <add>, %65, %cst_23 [1] : vector<128x32xf32> to vector<128xf32>
    %67 = vector.shape_cast %66 : vector<128xf32> to vector<128x1xf32>
    %68 = tpu.reciprocal %67 {approx = true} : vector<128x1xf32> -> vector<128x1xf32>
    %69 = vector.broadcast %68 : vector<128x1xf32> to vector<128x32xf32>
    %70 = arith.mulf %65, %69 : vector<128x32xf32>
    %71 = arith.truncf %70 : vector<128x32xf32> to vector<128x32xbf16>
    %72 = vector.extract_strided_slice %71 {offsets = [0, 0], sizes = [32, 32], strides = [1, 1]} : vector<128x32xbf16> to vector<32x32xbf16>
    %73 = vector.extract_strided_slice %44 {offsets = [0, 0], sizes = [32, 16], strides = [1, 1]} : vector<32x64xbf16> to vector<32x16xbf16>
    %cst_24 = arith.constant dense<0.000000e+00> : vector<32x16xf32>
    %74 = tpu.matmul %72, %73, %cst_24 {dimension_numbers = #tpu.dot_dimension_numbers<[1], [0], [0], [1], [0, 0, 1, 1], [], []>} : vector<32x32xbf16>, vector<32x16xbf16>, vector<32x16xf32> -> vector<32x16xf32>
    %75 = vector.extract_strided_slice %71 {offsets = [32, 0], sizes = [32, 32], strides = [1, 1]} : vector<128x32xbf16> to vector<32x32xbf16>
    %76 = vector.extract_strided_slice %44 {offsets = [0, 16], sizes = [32, 16], strides = [1, 1]} : vector<32x64xbf16> to vector<32x16xbf16>
    %cst_25 = arith.constant dense<0.000000e+00> : vector<32x16xf32>
    %77 = tpu.matmul %75, %76, %cst_25 {dimension_numbers = #tpu.dot_dimension_numbers<[1], [0], [0], [1], [0, 0, 1, 1], [], []>} : vector<32x32xbf16>, vector<32x16xbf16>, vector<32x16xf32> -> vector<32x16xf32>
    %78 = vector.extract_strided_slice %71 {offsets = [64, 0], sizes = [32, 32], strides = [1, 1]} : vector<128x32xbf16> to vector<32x32xbf16>
    %79 = vector.extract_strided_slice %44 {offsets = [0, 32], sizes = [32, 16], strides = [1, 1]} : vector<32x64xbf16> to vector<32x16xbf16>
    %cst_26 = arith.constant dense<0.000000e+00> : vector<32x16xf32>
    %80 = tpu.matmul %78, %79, %cst_26 {dimension_numbers = #tpu.dot_dimension_numbers<[1], [0], [0], [1], [0, 0, 1, 1], [], []>} : vector<32x32xbf16>, vector<32x16xbf16>, vector<32x16xf32> -> vector<32x16xf32>
    %81 = vector.extract_strided_slice %71 {offsets = [96, 0], sizes = [32, 32], strides = [1, 1]} : vector<128x32xbf16> to vector<32x32xbf16>
    %82 = vector.extract_strided_slice %44 {offsets = [0, 48], sizes = [32, 16], strides = [1, 1]} : vector<32x64xbf16> to vector<32x16xbf16>
    %cst_27 = arith.constant dense<0.000000e+00> : vector<32x16xf32>
    %83 = tpu.matmul %81, %82, %cst_27 {dimension_numbers = #tpu.dot_dimension_numbers<[1], [0], [0], [1], [0, 0, 1, 1], [], []>} : vector<32x32xbf16>, vector<32x16xbf16>, vector<32x16xf32> -> vector<32x16xf32>
    %84 = tpu.concatenate %74, %77, %80, %83 in 1 : vector<32x16xf32>, vector<32x16xf32>, vector<32x16xf32>, vector<32x16xf32> -> vector<32x64xf32>
    %85 = vector.extract_strided_slice %37 {offsets = [32, 0], sizes = [32, 192], strides = [1, 1]} : vector<128x192xf32> to vector<32x192xf32>
    %86 = vector.extract_strided_slice %85 {offsets = [0, 0], sizes = [32, 64], strides = [1, 1]} : vector<32x192xf32> to vector<32x64xf32>
    %87 = arith.truncf %86 : vector<32x64xf32> to vector<32x64xbf16>
    %88 = vector.extract_strided_slice %85 {offsets = [0, 64], sizes = [32, 64], strides = [1, 1]} : vector<32x192xf32> to vector<32x64xf32>
    %89 = arith.truncf %88 : vector<32x64xf32> to vector<32x64xbf16>
    %90 = vector.extract_strided_slice %85 {offsets = [0, 128], sizes = [32, 64], strides = [1, 1]} : vector<32x192xf32> to vector<32x64xf32>
    %91 = arith.truncf %90 : vector<32x64xf32> to vector<32x64xbf16>
    %92 = vector.extract_strided_slice %87 {offsets = [0, 0], sizes = [32, 16], strides = [1, 1]} : vector<32x64xbf16> to vector<32x16xbf16>
    %93 = vector.extract_strided_slice %89 {offsets = [0, 0], sizes = [32, 16], strides = [1, 1]} : vector<32x64xbf16> to vector<32x16xbf16>
    %cst_28 = arith.constant dense<0.000000e+00> : vector<32x32xf32>
    %94 = tpu.matmul %92, %93, %cst_28 {dimension_numbers = #tpu.dot_dimension_numbers<[1], [1], [0], [0], [0, 0, 1, 0], [], []>} : vector<32x16xbf16>, vector<32x16xbf16>, vector<32x32xf32> -> vector<32x32xf32>
    %95 = vector.extract_strided_slice %87 {offsets = [0, 16], sizes = [32, 16], strides = [1, 1]} : vector<32x64xbf16> to vector<32x16xbf16>
    %96 = vector.extract_strided_slice %89 {offsets = [0, 16], sizes = [32, 16], strides = [1, 1]} : vector<32x64xbf16> to vector<32x16xbf16>
    %cst_29 = arith.constant dense<0.000000e+00> : vector<32x32xf32>
    %97 = tpu.matmul %95, %96, %cst_29 {dimension_numbers = #tpu.dot_dimension_numbers<[1], [1], [0], [0], [0, 0, 1, 0], [], []>} : vector<32x16xbf16>, vector<32x16xbf16>, vector<32x32xf32> -> vector<32x32xf32>
    %98 = vector.extract_strided_slice %87 {offsets = [0, 32], sizes = [32, 16], strides = [1, 1]} : vector<32x64xbf16> to vector<32x16xbf16>
    %99 = vector.extract_strided_slice %89 {offsets = [0, 32], sizes = [32, 16], strides = [1, 1]} : vector<32x64xbf16> to vector<32x16xbf16>
    %cst_30 = arith.constant dense<0.000000e+00> : vector<32x32xf32>
    %100 = tpu.matmul %98, %99, %cst_30 {dimension_numbers = #tpu.dot_dimension_numbers<[1], [1], [0], [0], [0, 0, 1, 0], [], []>} : vector<32x16xbf16>, vector<32x16xbf16>, vector<32x32xf32> -> vector<32x32xf32>
    %101 = vector.extract_strided_slice %87 {offsets = [0, 48], sizes = [32, 16], strides = [1, 1]} : vector<32x64xbf16> to vector<32x16xbf16>
    %102 = vector.extract_strided_slice %89 {offsets = [0, 48], sizes = [32, 16], strides = [1, 1]} : vector<32x64xbf16> to vector<32x16xbf16>
    %cst_31 = arith.constant dense<0.000000e+00> : vector<32x32xf32>
    %103 = tpu.matmul %101, %102, %cst_31 {dimension_numbers = #tpu.dot_dimension_numbers<[1], [1], [0], [0], [0, 0, 1, 0], [], []>} : vector<32x16xbf16>, vector<32x16xbf16>, vector<32x32xf32> -> vector<32x32xf32>
    %104 = tpu.concatenate %94, %97, %100, %103 in 0 : vector<32x32xf32>, vector<32x32xf32>, vector<32x32xf32>, vector<32x32xf32> -> vector<128x32xf32>
    %cst_32 = arith.constant 2.500000e-01 : f32
    %105 = vector.broadcast %cst_32 : f32 to vector<128x32xf32>
    %106 = arith.mulf %104, %105 : vector<128x32xf32>
    %107 = arith.addf %106, %7 : vector<128x32xf32>
    %cst_33 = arith.constant dense<0xFF800000> : vector<128xf32>
    %108 = vector.multi_reduction <maximumf>, %107, %cst_33 [1] : vector<128x32xf32> to vector<128xf32>
    %109 = vector.shape_cast %108 : vector<128xf32> to vector<128x1xf32>
    %110 = vector.broadcast %109 : vector<128x1xf32> to vector<128x32xf32>
    %111 = arith.subf %107, %110 : vector<128x32xf32>
    %112 = math.exp %111 : vector<128x32xf32>
    %cst_34 = arith.constant dense<0.000000e+00> : vector<128xf32>
    %113 = vector.multi_reduction <add>, %112, %cst_34 [1] : vector<128x32xf32> to vector<128xf32>
    %114 = vector.shape_cast %113 : vector<128xf32> to vector<128x1xf32>
    %115 = tpu.reciprocal %114 {approx = true} : vector<128x1xf32> -> vector<128x1xf32>
    %116 = vector.broadcast %115 : vector<128x1xf32> to vector<128x32xf32>
    %117 = arith.mulf %112, %116 : vector<128x32xf32>
    %118 = arith.truncf %117 : vector<128x32xf32> to vector<128x32xbf16>
    %119 = vector.extract_strided_slice %118 {offsets = [0, 0], sizes = [32, 32], strides = [1, 1]} : vector<128x32xbf16> to vector<32x32xbf16>
    %120 = vector.extract_strided_slice %91 {offsets = [0, 0], sizes = [32, 16], strides = [1, 1]} : vector<32x64xbf16> to vector<32x16xbf16>
    %cst_35 = arith.constant dense<0.000000e+00> : vector<32x16xf32>
    %121 = tpu.matmul %119, %120, %cst_35 {dimension_numbers = #tpu.dot_dimension_numbers<[1], [0], [0], [1], [0, 0, 1, 1], [], []>} : vector<32x32xbf16>, vector<32x16xbf16>, vector<32x16xf32> -> vector<32x16xf32>
    %122 = vector.extract_strided_slice %118 {offsets = [32, 0], sizes = [32, 32], strides = [1, 1]} : vector<128x32xbf16> to vector<32x32xbf16>
    %123 = vector.extract_strided_slice %91 {offsets = [0, 16], sizes = [32, 16], strides = [1, 1]} : vector<32x64xbf16> to vector<32x16xbf16>
    %cst_36 = arith.constant dense<0.000000e+00> : vector<32x16xf32>
    %124 = tpu.matmul %122, %123, %cst_36 {dimension_numbers = #tpu.dot_dimension_numbers<[1], [0], [0], [1], [0, 0, 1, 1], [], []>} : vector<32x32xbf16>, vector<32x16xbf16>, vector<32x16xf32> -> vector<32x16xf32>
    %125 = vector.extract_strided_slice %118 {offsets = [64, 0], sizes = [32, 32], strides = [1, 1]} : vector<128x32xbf16> to vector<32x32xbf16>
    %126 = vector.extract_strided_slice %91 {offsets = [0, 32], sizes = [32, 16], strides = [1, 1]} : vector<32x64xbf16> to vector<32x16xbf16>
    %cst_37 = arith.constant dense<0.000000e+00> : vector<32x16xf32>
    %127 = tpu.matmul %125, %126, %cst_37 {dimension_numbers = #tpu.dot_dimension_numbers<[1], [0], [0], [1], [0, 0, 1, 1], [], []>} : vector<32x32xbf16>, vector<32x16xbf16>, vector<32x16xf32> -> vector<32x16xf32>
    %128 = vector.extract_strided_slice %118 {offsets = [96, 0], sizes = [32, 32], strides = [1, 1]} : vector<128x32xbf16> to vector<32x32xbf16>
    %129 = vector.extract_strided_slice %91 {offsets = [0, 48], sizes = [32, 16], strides = [1, 1]} : vector<32x64xbf16> to vector<32x16xbf16>
    %cst_38 = arith.constant dense<0.000000e+00> : vector<32x16xf32>
    %130 = tpu.matmul %128, %129, %cst_38 {dimension_numbers = #tpu.dot_dimension_numbers<[1], [0], [0], [1], [0, 0, 1, 1], [], []>} : vector<32x32xbf16>, vector<32x16xbf16>, vector<32x16xf32> -> vector<32x16xf32>
    %131 = tpu.concatenate %121, %124, %127, %130 in 1 : vector<32x16xf32>, vector<32x16xf32>, vector<32x16xf32>, vector<32x16xf32> -> vector<32x64xf32>
    %132 = vector.extract_strided_slice %37 {offsets = [64, 0], sizes = [32, 192], strides = [1, 1]} : vector<128x192xf32> to vector<32x192xf32>
    %133 = vector.extract_strided_slice %132 {offsets = [0, 0], sizes = [32, 64], strides = [1, 1]} : vector<32x192xf32> to vector<32x64xf32>
    %134 = arith.truncf %133 : vector<32x64xf32> to vector<32x64xbf16>
    %135 = vector.extract_strided_slice %132 {offsets = [0, 64], sizes = [32, 64], strides = [1, 1]} : vector<32x192xf32> to vector<32x64xf32>
    %136 = arith.truncf %135 : vector<32x64xf32> to vector<32x64xbf16>
    %137 = vector.extract_strided_slice %132 {offsets = [0, 128], sizes = [32, 64], strides = [1, 1]} : vector<32x192xf32> to vector<32x64xf32>
    %138 = arith.truncf %137 : vector<32x64xf32> to vector<32x64xbf16>
    %139 = vector.extract_strided_slice %134 {offsets = [0, 0], sizes = [32, 16], strides = [1, 1]} : vector<32x64xbf16> to vector<32x16xbf16>
    %140 = vector.extract_strided_slice %136 {offsets = [0, 0], sizes = [32, 16], strides = [1, 1]} : vector<32x64xbf16> to vector<32x16xbf16>
    %cst_39 = arith.constant dense<0.000000e+00> : vector<32x32xf32>
    %141 = tpu.matmul %139, %140, %cst_39 {dimension_numbers = #tpu.dot_dimension_numbers<[1], [1], [0], [0], [0, 0, 1, 0], [], []>} : vector<32x16xbf16>, vector<32x16xbf16>, vector<32x32xf32> -> vector<32x32xf32>
    %142 = vector.extract_strided_slice %134 {offsets = [0, 16], sizes = [32, 16], strides = [1, 1]} : vector<32x64xbf16> to vector<32x16xbf16>
    %143 = vector.extract_strided_slice %136 {offsets = [0, 16], sizes = [32, 16], strides = [1, 1]} : vector<32x64xbf16> to vector<32x16xbf16>
    %cst_40 = arith.constant dense<0.000000e+00> : vector<32x32xf32>
    %144 = tpu.matmul %142, %143, %cst_40 {dimension_numbers = #tpu.dot_dimension_numbers<[1], [1], [0], [0], [0, 0, 1, 0], [], []>} : vector<32x16xbf16>, vector<32x16xbf16>, vector<32x32xf32> -> vector<32x32xf32>
    %145 = vector.extract_strided_slice %134 {offsets = [0, 32], sizes = [32, 16], strides = [1, 1]} : vector<32x64xbf16> to vector<32x16xbf16>
    %146 = vector.extract_strided_slice %136 {offsets = [0, 32], sizes = [32, 16], strides = [1, 1]} : vector<32x64xbf16> to vector<32x16xbf16>
    %cst_41 = arith.constant dense<0.000000e+00> : vector<32x32xf32>
    %147 = tpu.matmul %145, %146, %cst_41 {dimension_numbers = #tpu.dot_dimension_numbers<[1], [1], [0], [0], [0, 0, 1, 0], [], []>} : vector<32x16xbf16>, vector<32x16xbf16>, vector<32x32xf32> -> vector<32x32xf32>
    %148 = vector.extract_strided_slice %134 {offsets = [0, 48], sizes = [32, 16], strides = [1, 1]} : vector<32x64xbf16> to vector<32x16xbf16>
    %149 = vector.extract_strided_slice %136 {offsets = [0, 48], sizes = [32, 16], strides = [1, 1]} : vector<32x64xbf16> to vector<32x16xbf16>
    %cst_42 = arith.constant dense<0.000000e+00> : vector<32x32xf32>
    %150 = tpu.matmul %148, %149, %cst_42 {dimension_numbers = #tpu.dot_dimension_numbers<[1], [1], [0], [0], [0, 0, 1, 0], [], []>} : vector<32x16xbf16>, vector<32x16xbf16>, vector<32x32xf32> -> vector<32x32xf32>
    %151 = tpu.concatenate %141, %144, %147, %150 in 0 : vector<32x32xf32>, vector<32x32xf32>, vector<32x32xf32>, vector<32x32xf32> -> vector<128x32xf32>
    %cst_43 = arith.constant 2.500000e-01 : f32
    %152 = vector.broadcast %cst_43 : f32 to vector<128x32xf32>
    %153 = arith.mulf %151, %152 : vector<128x32xf32>
    %154 = arith.addf %153, %7 : vector<128x32xf32>
    %cst_44 = arith.constant dense<0xFF800000> : vector<128xf32>
    %155 = vector.multi_reduction <maximumf>, %154, %cst_44 [1] : vector<128x32xf32> to vector<128xf32>
    %156 = vector.shape_cast %155 : vector<128xf32> to vector<128x1xf32>
    %157 = vector.broadcast %156 : vector<128x1xf32> to vector<128x32xf32>
    %158 = arith.subf %154, %157 : vector<128x32xf32>
    %159 = math.exp %158 : vector<128x32xf32>
    %cst_45 = arith.constant dense<0.000000e+00> : vector<128xf32>
    %160 = vector.multi_reduction <add>, %159, %cst_45 [1] : vector<128x32xf32> to vector<128xf32>
    %161 = vector.shape_cast %160 : vector<128xf32> to vector<128x1xf32>
    %162 = tpu.reciprocal %161 {approx = true} : vector<128x1xf32> -> vector<128x1xf32>
    %163 = vector.broadcast %162 : vector<128x1xf32> to vector<128x32xf32>
    %164 = arith.mulf %159, %163 : vector<128x32xf32>
    %165 = arith.truncf %164 : vector<128x32xf32> to vector<128x32xbf16>
    %166 = vector.extract_strided_slice %165 {offsets = [0, 0], sizes = [32, 32], strides = [1, 1]} : vector<128x32xbf16> to vector<32x32xbf16>
    %167 = vector.extract_strided_slice %138 {offsets = [0, 0], sizes = [32, 16], strides = [1, 1]} : vector<32x64xbf16> to vector<32x16xbf16>
    %cst_46 = arith.constant dense<0.000000e+00> : vector<32x16xf32>
    %168 = tpu.matmul %166, %167, %cst_46 {dimension_numbers = #tpu.dot_dimension_numbers<[1], [0], [0], [1], [0, 0, 1, 1], [], []>} : vector<32x32xbf16>, vector<32x16xbf16>, vector<32x16xf32> -> vector<32x16xf32>
    %169 = vector.extract_strided_slice %165 {offsets = [32, 0], sizes = [32, 32], strides = [1, 1]} : vector<128x32xbf16> to vector<32x32xbf16>
    %170 = vector.extract_strided_slice %138 {offsets = [0, 16], sizes = [32, 16], strides = [1, 1]} : vector<32x64xbf16> to vector<32x16xbf16>
    %cst_47 = arith.constant dense<0.000000e+00> : vector<32x16xf32>
    %171 = tpu.matmul %169, %170, %cst_47 {dimension_numbers = #tpu.dot_dimension_numbers<[1], [0], [0], [1], [0, 0, 1, 1], [], []>} : vector<32x32xbf16>, vector<32x16xbf16>, vector<32x16xf32> -> vector<32x16xf32>
    %172 = vector.extract_strided_slice %165 {offsets = [64, 0], sizes = [32, 32], strides = [1, 1]} : vector<128x32xbf16> to vector<32x32xbf16>
    %173 = vector.extract_strided_slice %138 {offsets = [0, 32], sizes = [32, 16], strides = [1, 1]} : vector<32x64xbf16> to vector<32x16xbf16>
    %cst_48 = arith.constant dense<0.000000e+00> : vector<32x16xf32>
    %174 = tpu.matmul %172, %173, %cst_48 {dimension_numbers = #tpu.dot_dimension_numbers<[1], [0], [0], [1], [0, 0, 1, 1], [], []>} : vector<32x32xbf16>, vector<32x16xbf16>, vector<32x16xf32> -> vector<32x16xf32>
    %175 = vector.extract_strided_slice %165 {offsets = [96, 0], sizes = [32, 32], strides = [1, 1]} : vector<128x32xbf16> to vector<32x32xbf16>
    %176 = vector.extract_strided_slice %138 {offsets = [0, 48], sizes = [32, 16], strides = [1, 1]} : vector<32x64xbf16> to vector<32x16xbf16>
    %cst_49 = arith.constant dense<0.000000e+00> : vector<32x16xf32>
    %177 = tpu.matmul %175, %176, %cst_49 {dimension_numbers = #tpu.dot_dimension_numbers<[1], [0], [0], [1], [0, 0, 1, 1], [], []>} : vector<32x32xbf16>, vector<32x16xbf16>, vector<32x16xf32> -> vector<32x16xf32>
    %178 = tpu.concatenate %168, %171, %174, %177 in 1 : vector<32x16xf32>, vector<32x16xf32>, vector<32x16xf32>, vector<32x16xf32> -> vector<32x64xf32>
    %179 = vector.extract_strided_slice %37 {offsets = [96, 0], sizes = [32, 192], strides = [1, 1]} : vector<128x192xf32> to vector<32x192xf32>
    %180 = vector.extract_strided_slice %179 {offsets = [0, 0], sizes = [32, 64], strides = [1, 1]} : vector<32x192xf32> to vector<32x64xf32>
    %181 = arith.truncf %180 : vector<32x64xf32> to vector<32x64xbf16>
    %182 = vector.extract_strided_slice %179 {offsets = [0, 64], sizes = [32, 64], strides = [1, 1]} : vector<32x192xf32> to vector<32x64xf32>
    %183 = arith.truncf %182 : vector<32x64xf32> to vector<32x64xbf16>
    %184 = vector.extract_strided_slice %179 {offsets = [0, 128], sizes = [32, 64], strides = [1, 1]} : vector<32x192xf32> to vector<32x64xf32>
    %185 = arith.truncf %184 : vector<32x64xf32> to vector<32x64xbf16>
    %186 = vector.extract_strided_slice %181 {offsets = [0, 0], sizes = [32, 16], strides = [1, 1]} : vector<32x64xbf16> to vector<32x16xbf16>
    %187 = vector.extract_strided_slice %183 {offsets = [0, 0], sizes = [32, 16], strides = [1, 1]} : vector<32x64xbf16> to vector<32x16xbf16>
    %cst_50 = arith.constant dense<0.000000e+00> : vector<32x32xf32>
    %188 = tpu.matmul %186, %187, %cst_50 {dimension_numbers = #tpu.dot_dimension_numbers<[1], [1], [0], [0], [0, 0, 1, 0], [], []>} : vector<32x16xbf16>, vector<32x16xbf16>, vector<32x32xf32> -> vector<32x32xf32>
    %189 = vector.extract_strided_slice %181 {offsets = [0, 16], sizes = [32, 16], strides = [1, 1]} : vector<32x64xbf16> to vector<32x16xbf16>
    %190 = vector.extract_strided_slice %183 {offsets = [0, 16], sizes = [32, 16], strides = [1, 1]} : vector<32x64xbf16> to vector<32x16xbf16>
    %cst_51 = arith.constant dense<0.000000e+00> : vector<32x32xf32>
    %191 = tpu.matmul %189, %190, %cst_51 {dimension_numbers = #tpu.dot_dimension_numbers<[1], [1], [0], [0], [0, 0, 1, 0], [], []>} : vector<32x16xbf16>, vector<32x16xbf16>, vector<32x32xf32> -> vector<32x32xf32>
    %192 = vector.extract_strided_slice %181 {offsets = [0, 32], sizes = [32, 16], strides = [1, 1]} : vector<32x64xbf16> to vector<32x16xbf16>
    %193 = vector.extract_strided_slice %183 {offsets = [0, 32], sizes = [32, 16], strides = [1, 1]} : vector<32x64xbf16> to vector<32x16xbf16>
    %cst_52 = arith.constant dense<0.000000e+00> : vector<32x32xf32>
    %194 = tpu.matmul %192, %193, %cst_52 {dimension_numbers = #tpu.dot_dimension_numbers<[1], [1], [0], [0], [0, 0, 1, 0], [], []>} : vector<32x16xbf16>, vector<32x16xbf16>, vector<32x32xf32> -> vector<32x32xf32>
    %195 = vector.extract_strided_slice %181 {offsets = [0, 48], sizes = [32, 16], strides = [1, 1]} : vector<32x64xbf16> to vector<32x16xbf16>
    %196 = vector.extract_strided_slice %183 {offsets = [0, 48], sizes = [32, 16], strides = [1, 1]} : vector<32x64xbf16> to vector<32x16xbf16>
    %cst_53 = arith.constant dense<0.000000e+00> : vector<32x32xf32>
    %197 = tpu.matmul %195, %196, %cst_53 {dimension_numbers = #tpu.dot_dimension_numbers<[1], [1], [0], [0], [0, 0, 1, 0], [], []>} : vector<32x16xbf16>, vector<32x16xbf16>, vector<32x32xf32> -> vector<32x32xf32>
    %198 = tpu.concatenate %188, %191, %194, %197 in 0 : vector<32x32xf32>, vector<32x32xf32>, vector<32x32xf32>, vector<32x32xf32> -> vector<128x32xf32>
    %cst_54 = arith.constant 2.500000e-01 : f32
    %199 = vector.broadcast %cst_54 : f32 to vector<128x32xf32>
    %200 = arith.mulf %198, %199 : vector<128x32xf32>
    %201 = arith.addf %200, %7 : vector<128x32xf32>
    %cst_55 = arith.constant dense<0xFF800000> : vector<128xf32>
    %202 = vector.multi_reduction <maximumf>, %201, %cst_55 [1] : vector<128x32xf32> to vector<128xf32>
    %203 = vector.shape_cast %202 : vector<128xf32> to vector<128x1xf32>
    %204 = vector.broadcast %203 : vector<128x1xf32> to vector<128x32xf32>
    %205 = arith.subf %201, %204 : vector<128x32xf32>
    %206 = math.exp %205 : vector<128x32xf32>
    %cst_56 = arith.constant dense<0.000000e+00> : vector<128xf32>
    %207 = vector.multi_reduction <add>, %206, %cst_56 [1] : vector<128x32xf32> to vector<128xf32>
    %208 = vector.shape_cast %207 : vector<128xf32> to vector<128x1xf32>
    %209 = tpu.reciprocal %208 {approx = true} : vector<128x1xf32> -> vector<128x1xf32>
    %210 = vector.broadcast %209 : vector<128x1xf32> to vector<128x32xf32>
    %211 = arith.mulf %206, %210 : vector<128x32xf32>
    %212 = arith.truncf %211 : vector<128x32xf32> to vector<128x32xbf16>
    %213 = vector.extract_strided_slice %212 {offsets = [0, 0], sizes = [32, 32], strides = [1, 1]} : vector<128x32xbf16> to vector<32x32xbf16>
    %214 = vector.extract_strided_slice %185 {offsets = [0, 0], sizes = [32, 16], strides = [1, 1]} : vector<32x64xbf16> to vector<32x16xbf16>
    %cst_57 = arith.constant dense<0.000000e+00> : vector<32x16xf32>
    %215 = tpu.matmul %213, %214, %cst_57 {dimension_numbers = #tpu.dot_dimension_numbers<[1], [0], [0], [1], [0, 0, 1, 1], [], []>} : vector<32x32xbf16>, vector<32x16xbf16>, vector<32x16xf32> -> vector<32x16xf32>
    %216 = vector.extract_strided_slice %212 {offsets = [32, 0], sizes = [32, 32], strides = [1, 1]} : vector<128x32xbf16> to vector<32x32xbf16>
    %217 = vector.extract_strided_slice %185 {offsets = [0, 16], sizes = [32, 16], strides = [1, 1]} : vector<32x64xbf16> to vector<32x16xbf16>
    %cst_58 = arith.constant dense<0.000000e+00> : vector<32x16xf32>
    %218 = tpu.matmul %216, %217, %cst_58 {dimension_numbers = #tpu.dot_dimension_numbers<[1], [0], [0], [1], [0, 0, 1, 1], [], []>} : vector<32x32xbf16>, vector<32x16xbf16>, vector<32x16xf32> -> vector<32x16xf32>
    %219 = vector.extract_strided_slice %212 {offsets = [64, 0], sizes = [32, 32], strides = [1, 1]} : vector<128x32xbf16> to vector<32x32xbf16>
    %220 = vector.extract_strided_slice %185 {offsets = [0, 32], sizes = [32, 16], strides = [1, 1]} : vector<32x64xbf16> to vector<32x16xbf16>
    %cst_59 = arith.constant dense<0.000000e+00> : vector<32x16xf32>
    %221 = tpu.matmul %219, %220, %cst_59 {dimension_numbers = #tpu.dot_dimension_numbers<[1], [0], [0], [1], [0, 0, 1, 1], [], []>} : vector<32x32xbf16>, vector<32x16xbf16>, vector<32x16xf32> -> vector<32x16xf32>
    %222 = vector.extract_strided_slice %212 {offsets = [96, 0], sizes = [32, 32], strides = [1, 1]} : vector<128x32xbf16> to vector<32x32xbf16>
    %223 = vector.extract_strided_slice %185 {offsets = [0, 48], sizes = [32, 16], strides = [1, 1]} : vector<32x64xbf16> to vector<32x16xbf16>
    %cst_60 = arith.constant dense<0.000000e+00> : vector<32x16xf32>
    %224 = tpu.matmul %222, %223, %cst_60 {dimension_numbers = #tpu.dot_dimension_numbers<[1], [0], [0], [1], [0, 0, 1, 1], [], []>} : vector<32x32xbf16>, vector<32x16xbf16>, vector<32x16xf32> -> vector<32x16xf32>
    %225 = tpu.concatenate %215, %218, %221, %224 in 1 : vector<32x16xf32>, vector<32x16xf32>, vector<32x16xf32>, vector<32x16xf32> -> vector<32x64xf32>
    %226 = tpu.concatenate %84, %131, %178, %225 in 0 : vector<32x64xf32>, vector<32x64xf32>, vector<32x64xf32>, vector<32x64xf32> -> vector<128x64xf32>
    %227 = arith.truncf %226 : vector<128x64xf32> to vector<128x64xbf16>
    %c0_61 = arith.constant 0 : index
    %c0_62 = arith.constant 0 : index
    %c0_63 = arith.constant 0 : index
    %228 = vector.load %arg5[%c0_61, %c0_62, %c0_63] : memref<2x64x64xbf16, #tpu.memory_space<vmem>>, vector<1x64x64xbf16>
    %229 = vector.shape_cast %228 : vector<1x64x64xbf16> to vector<64x64xbf16>
    %cst_64 = arith.constant dense<0.000000e+00> : vector<128x64xf32>
    %230 = tpu.matmul %227, %229, %cst_64 {dimension_numbers = #tpu.dot_dimension_numbers<[1], [0], [0], [1], [0, 0, 1, 1], [], []>} : vector<128x64xbf16>, vector<64x64xbf16>, vector<128x64xf32> -> vector<128x64xf32>
    %231 = arith.addf %0, %230 : vector<128x64xf32>
    %c0_65 = arith.constant 0 : index
    %c0_66 = arith.constant 0 : index
    %c0_67 = arith.constant 0 : index
    %232 = vector.load %arg6[%c0_65, %c0_66, %c0_67] : memref<2x1x64xf32, #tpu.memory_space<vmem>>, vector<1x1x64xf32>
    %233 = vector.shape_cast %232 : vector<1x1x64xf32> to vector<1x64xf32>
    %234 = vector.broadcast %233 : vector<1x64xf32> to vector<128x64xf32>
    %235 = arith.addf %231, %234 : vector<128x64xf32>
    %c0_68 = arith.constant 0 : index
    %c0_69 = arith.constant 0 : index
    %c0_70 = arith.constant 0 : index
    %236 = vector.load %arg7[%c0_68, %c0_69, %c0_70] : memref<2x1x64xf32, #tpu.memory_space<vmem>>, vector<1x1x64xf32>
    %237 = vector.shape_cast %236 : vector<1x1x64xf32> to vector<1x64xf32>
    %c0_71 = arith.constant 0 : index
    %c0_72 = arith.constant 0 : index
    %c0_73 = arith.constant 0 : index
    %238 = vector.load %arg8[%c0_71, %c0_72, %c0_73] : memref<2x1x64xf32, #tpu.memory_space<vmem>>, vector<1x1x64xf32>
    %239 = vector.shape_cast %238 : vector<1x1x64xf32> to vector<1x64xf32>
    %cst_74 = arith.constant dense<0.000000e+00> : vector<128xf32>
    %240 = vector.multi_reduction <add>, %235, %cst_74 [1] : vector<128x64xf32> to vector<128xf32>
    %241 = vector.shape_cast %240 : vector<128xf32> to vector<128x1xf32>
    %cst_75 = arith.constant 6.400000e+01 : f32
    %242 = vector.broadcast %cst_75 : f32 to vector<128x1xf32>
    %243 = arith.divf %241, %242 : vector<128x1xf32>
    %244 = vector.broadcast %243 : vector<128x1xf32> to vector<128x64xf32>
    %245 = arith.subf %235, %244 : vector<128x64xf32>
    %246 = arith.mulf %245, %245 : vector<128x64xf32>
    %cst_76 = arith.constant dense<0.000000e+00> : vector<128xf32>
    %247 = vector.multi_reduction <add>, %246, %cst_76 [1] : vector<128x64xf32> to vector<128xf32>
    %248 = vector.shape_cast %247 : vector<128xf32> to vector<128x1xf32>
    %cst_77 = arith.constant 6.400000e+01 : f32
    %249 = vector.broadcast %cst_77 : f32 to vector<128x1xf32>
    %250 = arith.divf %248, %249 : vector<128x1xf32>
    %251 = vector.broadcast %243 : vector<128x1xf32> to vector<128x64xf32>
    %252 = arith.subf %235, %251 : vector<128x64xf32>
    %cst_78 = arith.constant 9.99999974E-6 : f32
    %253 = vector.broadcast %cst_78 : f32 to vector<128x1xf32>
    %254 = arith.addf %250, %253 : vector<128x1xf32>
    %255 = math.rsqrt %254 : vector<128x1xf32>
    %256 = vector.broadcast %255 : vector<128x1xf32> to vector<128x64xf32>
    %257 = arith.mulf %252, %256 : vector<128x64xf32>
    %258 = vector.broadcast %237 : vector<1x64xf32> to vector<128x64xf32>
    %259 = arith.mulf %257, %258 : vector<128x64xf32>
    %260 = vector.broadcast %239 : vector<1x64xf32> to vector<128x64xf32>
    %261 = arith.addf %259, %260 : vector<128x64xf32>
    %262 = arith.truncf %261 : vector<128x64xf32> to vector<128x64xbf16>
    %c0_79 = arith.constant 0 : index
    %c0_80 = arith.constant 0 : index
    %c0_81 = arith.constant 0 : index
    %263 = vector.load %arg9[%c0_79, %c0_80, %c0_81] : memref<2x64x256xbf16, #tpu.memory_space<vmem>>, vector<1x64x256xbf16>
    %264 = vector.shape_cast %263 : vector<1x64x256xbf16> to vector<64x256xbf16>
    %cst_82 = arith.constant dense<0.000000e+00> : vector<128x256xf32>
    %265 = tpu.matmul %262, %264, %cst_82 {dimension_numbers = #tpu.dot_dimension_numbers<[1], [0], [0], [1], [0, 0, 1, 1], [], []>} : vector<128x64xbf16>, vector<64x256xbf16>, vector<128x256xf32> -> vector<128x256xf32>
    %c0_83 = arith.constant 0 : index
    %c0_84 = arith.constant 0 : index
    %c0_85 = arith.constant 0 : index
    %266 = vector.load %arg10[%c0_83, %c0_84, %c0_85] : memref<2x1x256xf32, #tpu.memory_space<vmem>>, vector<1x1x256xf32>
    %267 = vector.shape_cast %266 : vector<1x1x256xf32> to vector<1x256xf32>
    %268 = vector.broadcast %267 : vector<1x256xf32> to vector<128x256xf32>
    %269 = arith.addf %265, %268 : vector<128x256xf32>
    %cst_86 = arith.constant 0.000000e+00 : f32
    %270 = vector.broadcast %cst_86 : f32 to vector<128x256xf32>
    %271 = arith.cmpf ogt, %269, %270 : vector<128x256xf32>
    %cst_87 = arith.constant 0.00999999977 : f32
    %272 = vector.broadcast %cst_87 : f32 to vector<128x256xf32>
    %273 = arith.mulf %272, %269 : vector<128x256xf32>
    %274 = arith.select %271, %269, %273 : vector<128x256xi1>, vector<128x256xf32>
    %275 = arith.truncf %274 : vector<128x256xf32> to vector<128x256xbf16>
    %c0_88 = arith.constant 0 : index
    %c0_89 = arith.constant 0 : index
    %c0_90 = arith.constant 0 : index
    %276 = vector.load %arg11[%c0_88, %c0_89, %c0_90] : memref<2x256x64xbf16, #tpu.memory_space<vmem>>, vector<1x256x64xbf16>
    %277 = vector.shape_cast %276 : vector<1x256x64xbf16> to vector<256x64xbf16>
    %cst_91 = arith.constant dense<0.000000e+00> : vector<128x64xf32>
    %278 = tpu.matmul %275, %277, %cst_91 {dimension_numbers = #tpu.dot_dimension_numbers<[1], [0], [0], [1], [0, 0, 1, 1], [], []>} : vector<128x256xbf16>, vector<256x64xbf16>, vector<128x64xf32> -> vector<128x64xf32>
    %c0_92 = arith.constant 0 : index
    %c0_93 = arith.constant 0 : index
    %c0_94 = arith.constant 0 : index
    %279 = vector.load %arg12[%c0_92, %c0_93, %c0_94] : memref<2x1x64xf32, #tpu.memory_space<vmem>>, vector<1x1x64xf32>
    %280 = vector.shape_cast %279 : vector<1x1x64xf32> to vector<1x64xf32>
    %281 = vector.broadcast %280 : vector<1x64xf32> to vector<128x64xf32>
    %282 = arith.addf %278, %281 : vector<128x64xf32>
    %283 = arith.addf %235, %282 : vector<128x64xf32>
    %c1 = arith.constant 1 : index
    %c0_95 = arith.constant 0 : index
    %c0_96 = arith.constant 0 : index
    %284 = vector.load %arg2[%c1, %c0_95, %c0_96] : memref<2x1x64xf32, #tpu.memory_space<vmem>>, vector<1x1x64xf32>
    %285 = vector.shape_cast %284 : vector<1x1x64xf32> to vector<1x64xf32>
    %c1_97 = arith.constant 1 : index
    %c0_98 = arith.constant 0 : index
    %c0_99 = arith.constant 0 : index
    %286 = vector.load %arg3[%c1_97, %c0_98, %c0_99] : memref<2x1x64xf32, #tpu.memory_space<vmem>>, vector<1x1x64xf32>
    %287 = vector.shape_cast %286 : vector<1x1x64xf32> to vector<1x64xf32>
    %cst_100 = arith.constant dense<0.000000e+00> : vector<128xf32>
    %288 = vector.multi_reduction <add>, %283, %cst_100 [1] : vector<128x64xf32> to vector<128xf32>
    %289 = vector.shape_cast %288 : vector<128xf32> to vector<128x1xf32>
    %cst_101 = arith.constant 6.400000e+01 : f32
    %290 = vector.broadcast %cst_101 : f32 to vector<128x1xf32>
    %291 = arith.divf %289, %290 : vector<128x1xf32>
    %292 = vector.broadcast %291 : vector<128x1xf32> to vector<128x64xf32>
    %293 = arith.subf %283, %292 : vector<128x64xf32>
    %294 = arith.mulf %293, %293 : vector<128x64xf32>
    %cst_102 = arith.constant dense<0.000000e+00> : vector<128xf32>
    %295 = vector.multi_reduction <add>, %294, %cst_102 [1] : vector<128x64xf32> to vector<128xf32>
    %296 = vector.shape_cast %295 : vector<128xf32> to vector<128x1xf32>
    %cst_103 = arith.constant 6.400000e+01 : f32
    %297 = vector.broadcast %cst_103 : f32 to vector<128x1xf32>
    %298 = arith.divf %296, %297 : vector<128x1xf32>
    %299 = vector.broadcast %291 : vector<128x1xf32> to vector<128x64xf32>
    %300 = arith.subf %283, %299 : vector<128x64xf32>
    %cst_104 = arith.constant 9.99999974E-6 : f32
    %301 = vector.broadcast %cst_104 : f32 to vector<128x1xf32>
    %302 = arith.addf %298, %301 : vector<128x1xf32>
    %303 = math.rsqrt %302 : vector<128x1xf32>
    %304 = vector.broadcast %303 : vector<128x1xf32> to vector<128x64xf32>
    %305 = arith.mulf %300, %304 : vector<128x64xf32>
    %306 = vector.broadcast %285 : vector<1x64xf32> to vector<128x64xf32>
    %307 = arith.mulf %305, %306 : vector<128x64xf32>
    %308 = vector.broadcast %287 : vector<1x64xf32> to vector<128x64xf32>
    %309 = arith.addf %307, %308 : vector<128x64xf32>
    %310 = arith.truncf %309 : vector<128x64xf32> to vector<128x64xbf16>
    %c1_105 = arith.constant 1 : index
    %c0_106 = arith.constant 0 : index
    %c0_107 = arith.constant 0 : index
    %311 = vector.load %arg4[%c1_105, %c0_106, %c0_107] : memref<2x64x192xbf16, #tpu.memory_space<vmem>>, vector<1x64x192xbf16>
    %312 = vector.shape_cast %311 : vector<1x64x192xbf16> to vector<64x192xbf16>
    %cst_108 = arith.constant dense<0.000000e+00> : vector<128x192xf32>
    %313 = tpu.matmul %310, %312, %cst_108 {dimension_numbers = #tpu.dot_dimension_numbers<[1], [0], [0], [1], [0, 0, 1, 1], [], []>} : vector<128x64xbf16>, vector<64x192xbf16>, vector<128x192xf32> -> vector<128x192xf32>
    %314 = vector.extract_strided_slice %313 {offsets = [0, 0], sizes = [32, 192], strides = [1, 1]} : vector<128x192xf32> to vector<32x192xf32>
    %315 = vector.extract_strided_slice %314 {offsets = [0, 0], sizes = [32, 64], strides = [1, 1]} : vector<32x192xf32> to vector<32x64xf32>
    %316 = arith.truncf %315 : vector<32x64xf32> to vector<32x64xbf16>
    %317 = vector.extract_strided_slice %314 {offsets = [0, 64], sizes = [32, 64], strides = [1, 1]} : vector<32x192xf32> to vector<32x64xf32>
    %318 = arith.truncf %317 : vector<32x64xf32> to vector<32x64xbf16>
    %319 = vector.extract_strided_slice %314 {offsets = [0, 128], sizes = [32, 64], strides = [1, 1]} : vector<32x192xf32> to vector<32x64xf32>
    %320 = arith.truncf %319 : vector<32x64xf32> to vector<32x64xbf16>
    %321 = vector.extract_strided_slice %316 {offsets = [0, 0], sizes = [32, 16], strides = [1, 1]} : vector<32x64xbf16> to vector<32x16xbf16>
    %322 = vector.extract_strided_slice %318 {offsets = [0, 0], sizes = [32, 16], strides = [1, 1]} : vector<32x64xbf16> to vector<32x16xbf16>
    %cst_109 = arith.constant dense<0.000000e+00> : vector<32x32xf32>
    %323 = tpu.matmul %321, %322, %cst_109 {dimension_numbers = #tpu.dot_dimension_numbers<[1], [1], [0], [0], [0, 0, 1, 0], [], []>} : vector<32x16xbf16>, vector<32x16xbf16>, vector<32x32xf32> -> vector<32x32xf32>
    %324 = vector.extract_strided_slice %316 {offsets = [0, 16], sizes = [32, 16], strides = [1, 1]} : vector<32x64xbf16> to vector<32x16xbf16>
    %325 = vector.extract_strided_slice %318 {offsets = [0, 16], sizes = [32, 16], strides = [1, 1]} : vector<32x64xbf16> to vector<32x16xbf16>
    %cst_110 = arith.constant dense<0.000000e+00> : vector<32x32xf32>
    %326 = tpu.matmul %324, %325, %cst_110 {dimension_numbers = #tpu.dot_dimension_numbers<[1], [1], [0], [0], [0, 0, 1, 0], [], []>} : vector<32x16xbf16>, vector<32x16xbf16>, vector<32x32xf32> -> vector<32x32xf32>
    %327 = vector.extract_strided_slice %316 {offsets = [0, 32], sizes = [32, 16], strides = [1, 1]} : vector<32x64xbf16> to vector<32x16xbf16>
    %328 = vector.extract_strided_slice %318 {offsets = [0, 32], sizes = [32, 16], strides = [1, 1]} : vector<32x64xbf16> to vector<32x16xbf16>
    %cst_111 = arith.constant dense<0.000000e+00> : vector<32x32xf32>
    %329 = tpu.matmul %327, %328, %cst_111 {dimension_numbers = #tpu.dot_dimension_numbers<[1], [1], [0], [0], [0, 0, 1, 0], [], []>} : vector<32x16xbf16>, vector<32x16xbf16>, vector<32x32xf32> -> vector<32x32xf32>
    %330 = vector.extract_strided_slice %316 {offsets = [0, 48], sizes = [32, 16], strides = [1, 1]} : vector<32x64xbf16> to vector<32x16xbf16>
    %331 = vector.extract_strided_slice %318 {offsets = [0, 48], sizes = [32, 16], strides = [1, 1]} : vector<32x64xbf16> to vector<32x16xbf16>
    %cst_112 = arith.constant dense<0.000000e+00> : vector<32x32xf32>
    %332 = tpu.matmul %330, %331, %cst_112 {dimension_numbers = #tpu.dot_dimension_numbers<[1], [1], [0], [0], [0, 0, 1, 0], [], []>} : vector<32x16xbf16>, vector<32x16xbf16>, vector<32x32xf32> -> vector<32x32xf32>
    %333 = tpu.concatenate %323, %326, %329, %332 in 0 : vector<32x32xf32>, vector<32x32xf32>, vector<32x32xf32>, vector<32x32xf32> -> vector<128x32xf32>
    %cst_113 = arith.constant 2.500000e-01 : f32
    %334 = vector.broadcast %cst_113 : f32 to vector<128x32xf32>
    %335 = arith.mulf %333, %334 : vector<128x32xf32>
    %336 = arith.addf %335, %7 : vector<128x32xf32>
    %cst_114 = arith.constant dense<0xFF800000> : vector<128xf32>
    %337 = vector.multi_reduction <maximumf>, %336, %cst_114 [1] : vector<128x32xf32> to vector<128xf32>
    %338 = vector.shape_cast %337 : vector<128xf32> to vector<128x1xf32>
    %339 = vector.broadcast %338 : vector<128x1xf32> to vector<128x32xf32>
    %340 = arith.subf %336, %339 : vector<128x32xf32>
    %341 = math.exp %340 : vector<128x32xf32>
    %cst_115 = arith.constant dense<0.000000e+00> : vector<128xf32>
    %342 = vector.multi_reduction <add>, %341, %cst_115 [1] : vector<128x32xf32> to vector<128xf32>
    %343 = vector.shape_cast %342 : vector<128xf32> to vector<128x1xf32>
    %344 = tpu.reciprocal %343 {approx = true} : vector<128x1xf32> -> vector<128x1xf32>
    %345 = vector.broadcast %344 : vector<128x1xf32> to vector<128x32xf32>
    %346 = arith.mulf %341, %345 : vector<128x32xf32>
    %347 = arith.truncf %346 : vector<128x32xf32> to vector<128x32xbf16>
    %348 = vector.extract_strided_slice %347 {offsets = [0, 0], sizes = [32, 32], strides = [1, 1]} : vector<128x32xbf16> to vector<32x32xbf16>
    %349 = vector.extract_strided_slice %320 {offsets = [0, 0], sizes = [32, 16], strides = [1, 1]} : vector<32x64xbf16> to vector<32x16xbf16>
    %cst_116 = arith.constant dense<0.000000e+00> : vector<32x16xf32>
    %350 = tpu.matmul %348, %349, %cst_116 {dimension_numbers = #tpu.dot_dimension_numbers<[1], [0], [0], [1], [0, 0, 1, 1], [], []>} : vector<32x32xbf16>, vector<32x16xbf16>, vector<32x16xf32> -> vector<32x16xf32>
    %351 = vector.extract_strided_slice %347 {offsets = [32, 0], sizes = [32, 32], strides = [1, 1]} : vector<128x32xbf16> to vector<32x32xbf16>
    %352 = vector.extract_strided_slice %320 {offsets = [0, 16], sizes = [32, 16], strides = [1, 1]} : vector<32x64xbf16> to vector<32x16xbf16>
    %cst_117 = arith.constant dense<0.000000e+00> : vector<32x16xf32>
    %353 = tpu.matmul %351, %352, %cst_117 {dimension_numbers = #tpu.dot_dimension_numbers<[1], [0], [0], [1], [0, 0, 1, 1], [], []>} : vector<32x32xbf16>, vector<32x16xbf16>, vector<32x16xf32> -> vector<32x16xf32>
    %354 = vector.extract_strided_slice %347 {offsets = [64, 0], sizes = [32, 32], strides = [1, 1]} : vector<128x32xbf16> to vector<32x32xbf16>
    %355 = vector.extract_strided_slice %320 {offsets = [0, 32], sizes = [32, 16], strides = [1, 1]} : vector<32x64xbf16> to vector<32x16xbf16>
    %cst_118 = arith.constant dense<0.000000e+00> : vector<32x16xf32>
    %356 = tpu.matmul %354, %355, %cst_118 {dimension_numbers = #tpu.dot_dimension_numbers<[1], [0], [0], [1], [0, 0, 1, 1], [], []>} : vector<32x32xbf16>, vector<32x16xbf16>, vector<32x16xf32> -> vector<32x16xf32>
    %357 = vector.extract_strided_slice %347 {offsets = [96, 0], sizes = [32, 32], strides = [1, 1]} : vector<128x32xbf16> to vector<32x32xbf16>
    %358 = vector.extract_strided_slice %320 {offsets = [0, 48], sizes = [32, 16], strides = [1, 1]} : vector<32x64xbf16> to vector<32x16xbf16>
    %cst_119 = arith.constant dense<0.000000e+00> : vector<32x16xf32>
    %359 = tpu.matmul %357, %358, %cst_119 {dimension_numbers = #tpu.dot_dimension_numbers<[1], [0], [0], [1], [0, 0, 1, 1], [], []>} : vector<32x32xbf16>, vector<32x16xbf16>, vector<32x16xf32> -> vector<32x16xf32>
    %360 = tpu.concatenate %350, %353, %356, %359 in 1 : vector<32x16xf32>, vector<32x16xf32>, vector<32x16xf32>, vector<32x16xf32> -> vector<32x64xf32>
    %361 = vector.extract_strided_slice %313 {offsets = [32, 0], sizes = [32, 192], strides = [1, 1]} : vector<128x192xf32> to vector<32x192xf32>
    %362 = vector.extract_strided_slice %361 {offsets = [0, 0], sizes = [32, 64], strides = [1, 1]} : vector<32x192xf32> to vector<32x64xf32>
    %363 = arith.truncf %362 : vector<32x64xf32> to vector<32x64xbf16>
    %364 = vector.extract_strided_slice %361 {offsets = [0, 64], sizes = [32, 64], strides = [1, 1]} : vector<32x192xf32> to vector<32x64xf32>
    %365 = arith.truncf %364 : vector<32x64xf32> to vector<32x64xbf16>
    %366 = vector.extract_strided_slice %361 {offsets = [0, 128], sizes = [32, 64], strides = [1, 1]} : vector<32x192xf32> to vector<32x64xf32>
    %367 = arith.truncf %366 : vector<32x64xf32> to vector<32x64xbf16>
    %368 = vector.extract_strided_slice %363 {offsets = [0, 0], sizes = [32, 16], strides = [1, 1]} : vector<32x64xbf16> to vector<32x16xbf16>
    %369 = vector.extract_strided_slice %365 {offsets = [0, 0], sizes = [32, 16], strides = [1, 1]} : vector<32x64xbf16> to vector<32x16xbf16>
    %cst_120 = arith.constant dense<0.000000e+00> : vector<32x32xf32>
    %370 = tpu.matmul %368, %369, %cst_120 {dimension_numbers = #tpu.dot_dimension_numbers<[1], [1], [0], [0], [0, 0, 1, 0], [], []>} : vector<32x16xbf16>, vector<32x16xbf16>, vector<32x32xf32> -> vector<32x32xf32>
    %371 = vector.extract_strided_slice %363 {offsets = [0, 16], sizes = [32, 16], strides = [1, 1]} : vector<32x64xbf16> to vector<32x16xbf16>
    %372 = vector.extract_strided_slice %365 {offsets = [0, 16], sizes = [32, 16], strides = [1, 1]} : vector<32x64xbf16> to vector<32x16xbf16>
    %cst_121 = arith.constant dense<0.000000e+00> : vector<32x32xf32>
    %373 = tpu.matmul %371, %372, %cst_121 {dimension_numbers = #tpu.dot_dimension_numbers<[1], [1], [0], [0], [0, 0, 1, 0], [], []>} : vector<32x16xbf16>, vector<32x16xbf16>, vector<32x32xf32> -> vector<32x32xf32>
    %374 = vector.extract_strided_slice %363 {offsets = [0, 32], sizes = [32, 16], strides = [1, 1]} : vector<32x64xbf16> to vector<32x16xbf16>
    %375 = vector.extract_strided_slice %365 {offsets = [0, 32], sizes = [32, 16], strides = [1, 1]} : vector<32x64xbf16> to vector<32x16xbf16>
    %cst_122 = arith.constant dense<0.000000e+00> : vector<32x32xf32>
    %376 = tpu.matmul %374, %375, %cst_122 {dimension_numbers = #tpu.dot_dimension_numbers<[1], [1], [0], [0], [0, 0, 1, 0], [], []>} : vector<32x16xbf16>, vector<32x16xbf16>, vector<32x32xf32> -> vector<32x32xf32>
    %377 = vector.extract_strided_slice %363 {offsets = [0, 48], sizes = [32, 16], strides = [1, 1]} : vector<32x64xbf16> to vector<32x16xbf16>
    %378 = vector.extract_strided_slice %365 {offsets = [0, 48], sizes = [32, 16], strides = [1, 1]} : vector<32x64xbf16> to vector<32x16xbf16>
    %cst_123 = arith.constant dense<0.000000e+00> : vector<32x32xf32>
    %379 = tpu.matmul %377, %378, %cst_123 {dimension_numbers = #tpu.dot_dimension_numbers<[1], [1], [0], [0], [0, 0, 1, 0], [], []>} : vector<32x16xbf16>, vector<32x16xbf16>, vector<32x32xf32> -> vector<32x32xf32>
    %380 = tpu.concatenate %370, %373, %376, %379 in 0 : vector<32x32xf32>, vector<32x32xf32>, vector<32x32xf32>, vector<32x32xf32> -> vector<128x32xf32>
    %cst_124 = arith.constant 2.500000e-01 : f32
    %381 = vector.broadcast %cst_124 : f32 to vector<128x32xf32>
    %382 = arith.mulf %380, %381 : vector<128x32xf32>
    %383 = arith.addf %382, %7 : vector<128x32xf32>
    %cst_125 = arith.constant dense<0xFF800000> : vector<128xf32>
    %384 = vector.multi_reduction <maximumf>, %383, %cst_125 [1] : vector<128x32xf32> to vector<128xf32>
    %385 = vector.shape_cast %384 : vector<128xf32> to vector<128x1xf32>
    %386 = vector.broadcast %385 : vector<128x1xf32> to vector<128x32xf32>
    %387 = arith.subf %383, %386 : vector<128x32xf32>
    %388 = math.exp %387 : vector<128x32xf32>
    %cst_126 = arith.constant dense<0.000000e+00> : vector<128xf32>
    %389 = vector.multi_reduction <add>, %388, %cst_126 [1] : vector<128x32xf32> to vector<128xf32>
    %390 = vector.shape_cast %389 : vector<128xf32> to vector<128x1xf32>
    %391 = tpu.reciprocal %390 {approx = true} : vector<128x1xf32> -> vector<128x1xf32>
    %392 = vector.broadcast %391 : vector<128x1xf32> to vector<128x32xf32>
    %393 = arith.mulf %388, %392 : vector<128x32xf32>
    %394 = arith.truncf %393 : vector<128x32xf32> to vector<128x32xbf16>
    %395 = vector.extract_strided_slice %394 {offsets = [0, 0], sizes = [32, 32], strides = [1, 1]} : vector<128x32xbf16> to vector<32x32xbf16>
    %396 = vector.extract_strided_slice %367 {offsets = [0, 0], sizes = [32, 16], strides = [1, 1]} : vector<32x64xbf16> to vector<32x16xbf16>
    %cst_127 = arith.constant dense<0.000000e+00> : vector<32x16xf32>
    %397 = tpu.matmul %395, %396, %cst_127 {dimension_numbers = #tpu.dot_dimension_numbers<[1], [0], [0], [1], [0, 0, 1, 1], [], []>} : vector<32x32xbf16>, vector<32x16xbf16>, vector<32x16xf32> -> vector<32x16xf32>
    %398 = vector.extract_strided_slice %394 {offsets = [32, 0], sizes = [32, 32], strides = [1, 1]} : vector<128x32xbf16> to vector<32x32xbf16>
    %399 = vector.extract_strided_slice %367 {offsets = [0, 16], sizes = [32, 16], strides = [1, 1]} : vector<32x64xbf16> to vector<32x16xbf16>
    %cst_128 = arith.constant dense<0.000000e+00> : vector<32x16xf32>
    %400 = tpu.matmul %398, %399, %cst_128 {dimension_numbers = #tpu.dot_dimension_numbers<[1], [0], [0], [1], [0, 0, 1, 1], [], []>} : vector<32x32xbf16>, vector<32x16xbf16>, vector<32x16xf32> -> vector<32x16xf32>
    %401 = vector.extract_strided_slice %394 {offsets = [64, 0], sizes = [32, 32], strides = [1, 1]} : vector<128x32xbf16> to vector<32x32xbf16>
    %402 = vector.extract_strided_slice %367 {offsets = [0, 32], sizes = [32, 16], strides = [1, 1]} : vector<32x64xbf16> to vector<32x16xbf16>
    %cst_129 = arith.constant dense<0.000000e+00> : vector<32x16xf32>
    %403 = tpu.matmul %401, %402, %cst_129 {dimension_numbers = #tpu.dot_dimension_numbers<[1], [0], [0], [1], [0, 0, 1, 1], [], []>} : vector<32x32xbf16>, vector<32x16xbf16>, vector<32x16xf32> -> vector<32x16xf32>
    %404 = vector.extract_strided_slice %394 {offsets = [96, 0], sizes = [32, 32], strides = [1, 1]} : vector<128x32xbf16> to vector<32x32xbf16>
    %405 = vector.extract_strided_slice %367 {offsets = [0, 48], sizes = [32, 16], strides = [1, 1]} : vector<32x64xbf16> to vector<32x16xbf16>
    %cst_130 = arith.constant dense<0.000000e+00> : vector<32x16xf32>
    %406 = tpu.matmul %404, %405, %cst_130 {dimension_numbers = #tpu.dot_dimension_numbers<[1], [0], [0], [1], [0, 0, 1, 1], [], []>} : vector<32x32xbf16>, vector<32x16xbf16>, vector<32x16xf32> -> vector<32x16xf32>
    %407 = tpu.concatenate %397, %400, %403, %406 in 1 : vector<32x16xf32>, vector<32x16xf32>, vector<32x16xf32>, vector<32x16xf32> -> vector<32x64xf32>
    %408 = vector.extract_strided_slice %313 {offsets = [64, 0], sizes = [32, 192], strides = [1, 1]} : vector<128x192xf32> to vector<32x192xf32>
    %409 = vector.extract_strided_slice %408 {offsets = [0, 0], sizes = [32, 64], strides = [1, 1]} : vector<32x192xf32> to vector<32x64xf32>
    %410 = arith.truncf %409 : vector<32x64xf32> to vector<32x64xbf16>
    %411 = vector.extract_strided_slice %408 {offsets = [0, 64], sizes = [32, 64], strides = [1, 1]} : vector<32x192xf32> to vector<32x64xf32>
    %412 = arith.truncf %411 : vector<32x64xf32> to vector<32x64xbf16>
    %413 = vector.extract_strided_slice %408 {offsets = [0, 128], sizes = [32, 64], strides = [1, 1]} : vector<32x192xf32> to vector<32x64xf32>
    %414 = arith.truncf %413 : vector<32x64xf32> to vector<32x64xbf16>
    %415 = vector.extract_strided_slice %410 {offsets = [0, 0], sizes = [32, 16], strides = [1, 1]} : vector<32x64xbf16> to vector<32x16xbf16>
    %416 = vector.extract_strided_slice %412 {offsets = [0, 0], sizes = [32, 16], strides = [1, 1]} : vector<32x64xbf16> to vector<32x16xbf16>
    %cst_131 = arith.constant dense<0.000000e+00> : vector<32x32xf32>
    %417 = tpu.matmul %415, %416, %cst_131 {dimension_numbers = #tpu.dot_dimension_numbers<[1], [1], [0], [0], [0, 0, 1, 0], [], []>} : vector<32x16xbf16>, vector<32x16xbf16>, vector<32x32xf32> -> vector<32x32xf32>
    %418 = vector.extract_strided_slice %410 {offsets = [0, 16], sizes = [32, 16], strides = [1, 1]} : vector<32x64xbf16> to vector<32x16xbf16>
    %419 = vector.extract_strided_slice %412 {offsets = [0, 16], sizes = [32, 16], strides = [1, 1]} : vector<32x64xbf16> to vector<32x16xbf16>
    %cst_132 = arith.constant dense<0.000000e+00> : vector<32x32xf32>
    %420 = tpu.matmul %418, %419, %cst_132 {dimension_numbers = #tpu.dot_dimension_numbers<[1], [1], [0], [0], [0, 0, 1, 0], [], []>} : vector<32x16xbf16>, vector<32x16xbf16>, vector<32x32xf32> -> vector<32x32xf32>
    %421 = vector.extract_strided_slice %410 {offsets = [0, 32], sizes = [32, 16], strides = [1, 1]} : vector<32x64xbf16> to vector<32x16xbf16>
    %422 = vector.extract_strided_slice %412 {offsets = [0, 32], sizes = [32, 16], strides = [1, 1]} : vector<32x64xbf16> to vector<32x16xbf16>
    %cst_133 = arith.constant dense<0.000000e+00> : vector<32x32xf32>
    %423 = tpu.matmul %421, %422, %cst_133 {dimension_numbers = #tpu.dot_dimension_numbers<[1], [1], [0], [0], [0, 0, 1, 0], [], []>} : vector<32x16xbf16>, vector<32x16xbf16>, vector<32x32xf32> -> vector<32x32xf32>
    %424 = vector.extract_strided_slice %410 {offsets = [0, 48], sizes = [32, 16], strides = [1, 1]} : vector<32x64xbf16> to vector<32x16xbf16>
    %425 = vector.extract_strided_slice %412 {offsets = [0, 48], sizes = [32, 16], strides = [1, 1]} : vector<32x64xbf16> to vector<32x16xbf16>
    %cst_134 = arith.constant dense<0.000000e+00> : vector<32x32xf32>
    %426 = tpu.matmul %424, %425, %cst_134 {dimension_numbers = #tpu.dot_dimension_numbers<[1], [1], [0], [0], [0, 0, 1, 0], [], []>} : vector<32x16xbf16>, vector<32x16xbf16>, vector<32x32xf32> -> vector<32x32xf32>
    %427 = tpu.concatenate %417, %420, %423, %426 in 0 : vector<32x32xf32>, vector<32x32xf32>, vector<32x32xf32>, vector<32x32xf32> -> vector<128x32xf32>
    %cst_135 = arith.constant 2.500000e-01 : f32
    %428 = vector.broadcast %cst_135 : f32 to vector<128x32xf32>
    %429 = arith.mulf %427, %428 : vector<128x32xf32>
    %430 = arith.addf %429, %7 : vector<128x32xf32>
    %cst_136 = arith.constant dense<0xFF800000> : vector<128xf32>
    %431 = vector.multi_reduction <maximumf>, %430, %cst_136 [1] : vector<128x32xf32> to vector<128xf32>
    %432 = vector.shape_cast %431 : vector<128xf32> to vector<128x1xf32>
    %433 = vector.broadcast %432 : vector<128x1xf32> to vector<128x32xf32>
    %434 = arith.subf %430, %433 : vector<128x32xf32>
    %435 = math.exp %434 : vector<128x32xf32>
    %cst_137 = arith.constant dense<0.000000e+00> : vector<128xf32>
    %436 = vector.multi_reduction <add>, %435, %cst_137 [1] : vector<128x32xf32> to vector<128xf32>
    %437 = vector.shape_cast %436 : vector<128xf32> to vector<128x1xf32>
    %438 = tpu.reciprocal %437 {approx = true} : vector<128x1xf32> -> vector<128x1xf32>
    %439 = vector.broadcast %438 : vector<128x1xf32> to vector<128x32xf32>
    %440 = arith.mulf %435, %439 : vector<128x32xf32>
    %441 = arith.truncf %440 : vector<128x32xf32> to vector<128x32xbf16>
    %442 = vector.extract_strided_slice %441 {offsets = [0, 0], sizes = [32, 32], strides = [1, 1]} : vector<128x32xbf16> to vector<32x32xbf16>
    %443 = vector.extract_strided_slice %414 {offsets = [0, 0], sizes = [32, 16], strides = [1, 1]} : vector<32x64xbf16> to vector<32x16xbf16>
    %cst_138 = arith.constant dense<0.000000e+00> : vector<32x16xf32>
    %444 = tpu.matmul %442, %443, %cst_138 {dimension_numbers = #tpu.dot_dimension_numbers<[1], [0], [0], [1], [0, 0, 1, 1], [], []>} : vector<32x32xbf16>, vector<32x16xbf16>, vector<32x16xf32> -> vector<32x16xf32>
    %445 = vector.extract_strided_slice %441 {offsets = [32, 0], sizes = [32, 32], strides = [1, 1]} : vector<128x32xbf16> to vector<32x32xbf16>
    %446 = vector.extract_strided_slice %414 {offsets = [0, 16], sizes = [32, 16], strides = [1, 1]} : vector<32x64xbf16> to vector<32x16xbf16>
    %cst_139 = arith.constant dense<0.000000e+00> : vector<32x16xf32>
    %447 = tpu.matmul %445, %446, %cst_139 {dimension_numbers = #tpu.dot_dimension_numbers<[1], [0], [0], [1], [0, 0, 1, 1], [], []>} : vector<32x32xbf16>, vector<32x16xbf16>, vector<32x16xf32> -> vector<32x16xf32>
    %448 = vector.extract_strided_slice %441 {offsets = [64, 0], sizes = [32, 32], strides = [1, 1]} : vector<128x32xbf16> to vector<32x32xbf16>
    %449 = vector.extract_strided_slice %414 {offsets = [0, 32], sizes = [32, 16], strides = [1, 1]} : vector<32x64xbf16> to vector<32x16xbf16>
    %cst_140 = arith.constant dense<0.000000e+00> : vector<32x16xf32>
    %450 = tpu.matmul %448, %449, %cst_140 {dimension_numbers = #tpu.dot_dimension_numbers<[1], [0], [0], [1], [0, 0, 1, 1], [], []>} : vector<32x32xbf16>, vector<32x16xbf16>, vector<32x16xf32> -> vector<32x16xf32>
    %451 = vector.extract_strided_slice %441 {offsets = [96, 0], sizes = [32, 32], strides = [1, 1]} : vector<128x32xbf16> to vector<32x32xbf16>
    %452 = vector.extract_strided_slice %414 {offsets = [0, 48], sizes = [32, 16], strides = [1, 1]} : vector<32x64xbf16> to vector<32x16xbf16>
    %cst_141 = arith.constant dense<0.000000e+00> : vector<32x16xf32>
    %453 = tpu.matmul %451, %452, %cst_141 {dimension_numbers = #tpu.dot_dimension_numbers<[1], [0], [0], [1], [0, 0, 1, 1], [], []>} : vector<32x32xbf16>, vector<32x16xbf16>, vector<32x16xf32> -> vector<32x16xf32>
    %454 = tpu.concatenate %444, %447, %450, %453 in 1 : vector<32x16xf32>, vector<32x16xf32>, vector<32x16xf32>, vector<32x16xf32> -> vector<32x64xf32>
    %455 = vector.extract_strided_slice %313 {offsets = [96, 0], sizes = [32, 192], strides = [1, 1]} : vector<128x192xf32> to vector<32x192xf32>
    %456 = vector.extract_strided_slice %455 {offsets = [0, 0], sizes = [32, 64], strides = [1, 1]} : vector<32x192xf32> to vector<32x64xf32>
    %457 = arith.truncf %456 : vector<32x64xf32> to vector<32x64xbf16>
    %458 = vector.extract_strided_slice %455 {offsets = [0, 64], sizes = [32, 64], strides = [1, 1]} : vector<32x192xf32> to vector<32x64xf32>
    %459 = arith.truncf %458 : vector<32x64xf32> to vector<32x64xbf16>
    %460 = vector.extract_strided_slice %455 {offsets = [0, 128], sizes = [32, 64], strides = [1, 1]} : vector<32x192xf32> to vector<32x64xf32>
    %461 = arith.truncf %460 : vector<32x64xf32> to vector<32x64xbf16>
    %462 = vector.extract_strided_slice %457 {offsets = [0, 0], sizes = [32, 16], strides = [1, 1]} : vector<32x64xbf16> to vector<32x16xbf16>
    %463 = vector.extract_strided_slice %459 {offsets = [0, 0], sizes = [32, 16], strides = [1, 1]} : vector<32x64xbf16> to vector<32x16xbf16>
    %cst_142 = arith.constant dense<0.000000e+00> : vector<32x32xf32>
    %464 = tpu.matmul %462, %463, %cst_142 {dimension_numbers = #tpu.dot_dimension_numbers<[1], [1], [0], [0], [0, 0, 1, 0], [], []>} : vector<32x16xbf16>, vector<32x16xbf16>, vector<32x32xf32> -> vector<32x32xf32>
    %465 = vector.extract_strided_slice %457 {offsets = [0, 16], sizes = [32, 16], strides = [1, 1]} : vector<32x64xbf16> to vector<32x16xbf16>
    %466 = vector.extract_strided_slice %459 {offsets = [0, 16], sizes = [32, 16], strides = [1, 1]} : vector<32x64xbf16> to vector<32x16xbf16>
    %cst_143 = arith.constant dense<0.000000e+00> : vector<32x32xf32>
    %467 = tpu.matmul %465, %466, %cst_143 {dimension_numbers = #tpu.dot_dimension_numbers<[1], [1], [0], [0], [0, 0, 1, 0], [], []>} : vector<32x16xbf16>, vector<32x16xbf16>, vector<32x32xf32> -> vector<32x32xf32>
    %468 = vector.extract_strided_slice %457 {offsets = [0, 32], sizes = [32, 16], strides = [1, 1]} : vector<32x64xbf16> to vector<32x16xbf16>
    %469 = vector.extract_strided_slice %459 {offsets = [0, 32], sizes = [32, 16], strides = [1, 1]} : vector<32x64xbf16> to vector<32x16xbf16>
    %cst_144 = arith.constant dense<0.000000e+00> : vector<32x32xf32>
    %470 = tpu.matmul %468, %469, %cst_144 {dimension_numbers = #tpu.dot_dimension_numbers<[1], [1], [0], [0], [0, 0, 1, 0], [], []>} : vector<32x16xbf16>, vector<32x16xbf16>, vector<32x32xf32> -> vector<32x32xf32>
    %471 = vector.extract_strided_slice %457 {offsets = [0, 48], sizes = [32, 16], strides = [1, 1]} : vector<32x64xbf16> to vector<32x16xbf16>
    %472 = vector.extract_strided_slice %459 {offsets = [0, 48], sizes = [32, 16], strides = [1, 1]} : vector<32x64xbf16> to vector<32x16xbf16>
    %cst_145 = arith.constant dense<0.000000e+00> : vector<32x32xf32>
    %473 = tpu.matmul %471, %472, %cst_145 {dimension_numbers = #tpu.dot_dimension_numbers<[1], [1], [0], [0], [0, 0, 1, 0], [], []>} : vector<32x16xbf16>, vector<32x16xbf16>, vector<32x32xf32> -> vector<32x32xf32>
    %474 = tpu.concatenate %464, %467, %470, %473 in 0 : vector<32x32xf32>, vector<32x32xf32>, vector<32x32xf32>, vector<32x32xf32> -> vector<128x32xf32>
    %cst_146 = arith.constant 2.500000e-01 : f32
    %475 = vector.broadcast %cst_146 : f32 to vector<128x32xf32>
    %476 = arith.mulf %474, %475 : vector<128x32xf32>
    %477 = arith.addf %476, %7 : vector<128x32xf32>
    %cst_147 = arith.constant dense<0xFF800000> : vector<128xf32>
    %478 = vector.multi_reduction <maximumf>, %477, %cst_147 [1] : vector<128x32xf32> to vector<128xf32>
    %479 = vector.shape_cast %478 : vector<128xf32> to vector<128x1xf32>
    %480 = vector.broadcast %479 : vector<128x1xf32> to vector<128x32xf32>
    %481 = arith.subf %477, %480 : vector<128x32xf32>
    %482 = math.exp %481 : vector<128x32xf32>
    %cst_148 = arith.constant dense<0.000000e+00> : vector<128xf32>
    %483 = vector.multi_reduction <add>, %482, %cst_148 [1] : vector<128x32xf32> to vector<128xf32>
    %484 = vector.shape_cast %483 : vector<128xf32> to vector<128x1xf32>
    %485 = tpu.reciprocal %484 {approx = true} : vector<128x1xf32> -> vector<128x1xf32>
    %486 = vector.broadcast %485 : vector<128x1xf32> to vector<128x32xf32>
    %487 = arith.mulf %482, %486 : vector<128x32xf32>
    %488 = arith.truncf %487 : vector<128x32xf32> to vector<128x32xbf16>
    %489 = vector.extract_strided_slice %488 {offsets = [0, 0], sizes = [32, 32], strides = [1, 1]} : vector<128x32xbf16> to vector<32x32xbf16>
    %490 = vector.extract_strided_slice %461 {offsets = [0, 0], sizes = [32, 16], strides = [1, 1]} : vector<32x64xbf16> to vector<32x16xbf16>
    %cst_149 = arith.constant dense<0.000000e+00> : vector<32x16xf32>
    %491 = tpu.matmul %489, %490, %cst_149 {dimension_numbers = #tpu.dot_dimension_numbers<[1], [0], [0], [1], [0, 0, 1, 1], [], []>} : vector<32x32xbf16>, vector<32x16xbf16>, vector<32x16xf32> -> vector<32x16xf32>
    %492 = vector.extract_strided_slice %488 {offsets = [32, 0], sizes = [32, 32], strides = [1, 1]} : vector<128x32xbf16> to vector<32x32xbf16>
    %493 = vector.extract_strided_slice %461 {offsets = [0, 16], sizes = [32, 16], strides = [1, 1]} : vector<32x64xbf16> to vector<32x16xbf16>
    %cst_150 = arith.constant dense<0.000000e+00> : vector<32x16xf32>
    %494 = tpu.matmul %492, %493, %cst_150 {dimension_numbers = #tpu.dot_dimension_numbers<[1], [0], [0], [1], [0, 0, 1, 1], [], []>} : vector<32x32xbf16>, vector<32x16xbf16>, vector<32x16xf32> -> vector<32x16xf32>
    %495 = vector.extract_strided_slice %488 {offsets = [64, 0], sizes = [32, 32], strides = [1, 1]} : vector<128x32xbf16> to vector<32x32xbf16>
    %496 = vector.extract_strided_slice %461 {offsets = [0, 32], sizes = [32, 16], strides = [1, 1]} : vector<32x64xbf16> to vector<32x16xbf16>
    %cst_151 = arith.constant dense<0.000000e+00> : vector<32x16xf32>
    %497 = tpu.matmul %495, %496, %cst_151 {dimension_numbers = #tpu.dot_dimension_numbers<[1], [0], [0], [1], [0, 0, 1, 1], [], []>} : vector<32x32xbf16>, vector<32x16xbf16>, vector<32x16xf32> -> vector<32x16xf32>
    %498 = vector.extract_strided_slice %488 {offsets = [96, 0], sizes = [32, 32], strides = [1, 1]} : vector<128x32xbf16> to vector<32x32xbf16>
    %499 = vector.extract_strided_slice %461 {offsets = [0, 48], sizes = [32, 16], strides = [1, 1]} : vector<32x64xbf16> to vector<32x16xbf16>
    %cst_152 = arith.constant dense<0.000000e+00> : vector<32x16xf32>
    %500 = tpu.matmul %498, %499, %cst_152 {dimension_numbers = #tpu.dot_dimension_numbers<[1], [0], [0], [1], [0, 0, 1, 1], [], []>} : vector<32x32xbf16>, vector<32x16xbf16>, vector<32x16xf32> -> vector<32x16xf32>
    %501 = tpu.concatenate %491, %494, %497, %500 in 1 : vector<32x16xf32>, vector<32x16xf32>, vector<32x16xf32>, vector<32x16xf32> -> vector<32x64xf32>
    %502 = tpu.concatenate %360, %407, %454, %501 in 0 : vector<32x64xf32>, vector<32x64xf32>, vector<32x64xf32>, vector<32x64xf32> -> vector<128x64xf32>
    %503 = arith.truncf %502 : vector<128x64xf32> to vector<128x64xbf16>
    %c1_153 = arith.constant 1 : index
    %c0_154 = arith.constant 0 : index
    %c0_155 = arith.constant 0 : index
    %504 = vector.load %arg5[%c1_153, %c0_154, %c0_155] : memref<2x64x64xbf16, #tpu.memory_space<vmem>>, vector<1x64x64xbf16>
    %505 = vector.shape_cast %504 : vector<1x64x64xbf16> to vector<64x64xbf16>
    %cst_156 = arith.constant dense<0.000000e+00> : vector<128x64xf32>
    %506 = tpu.matmul %503, %505, %cst_156 {dimension_numbers = #tpu.dot_dimension_numbers<[1], [0], [0], [1], [0, 0, 1, 1], [], []>} : vector<128x64xbf16>, vector<64x64xbf16>, vector<128x64xf32> -> vector<128x64xf32>
    %507 = arith.addf %283, %506 : vector<128x64xf32>
    %c1_157 = arith.constant 1 : index
    %c0_158 = arith.constant 0 : index
    %c0_159 = arith.constant 0 : index
    %508 = vector.load %arg6[%c1_157, %c0_158, %c0_159] : memref<2x1x64xf32, #tpu.memory_space<vmem>>, vector<1x1x64xf32>
    %509 = vector.shape_cast %508 : vector<1x1x64xf32> to vector<1x64xf32>
    %510 = vector.broadcast %509 : vector<1x64xf32> to vector<128x64xf32>
    %511 = arith.addf %507, %510 : vector<128x64xf32>
    %c1_160 = arith.constant 1 : index
    %c0_161 = arith.constant 0 : index
    %c0_162 = arith.constant 0 : index
    %512 = vector.load %arg7[%c1_160, %c0_161, %c0_162] : memref<2x1x64xf32, #tpu.memory_space<vmem>>, vector<1x1x64xf32>
    %513 = vector.shape_cast %512 : vector<1x1x64xf32> to vector<1x64xf32>
    %c1_163 = arith.constant 1 : index
    %c0_164 = arith.constant 0 : index
    %c0_165 = arith.constant 0 : index
    %514 = vector.load %arg8[%c1_163, %c0_164, %c0_165] : memref<2x1x64xf32, #tpu.memory_space<vmem>>, vector<1x1x64xf32>
    %515 = vector.shape_cast %514 : vector<1x1x64xf32> to vector<1x64xf32>
    %cst_166 = arith.constant dense<0.000000e+00> : vector<128xf32>
    %516 = vector.multi_reduction <add>, %511, %cst_166 [1] : vector<128x64xf32> to vector<128xf32>
    %517 = vector.shape_cast %516 : vector<128xf32> to vector<128x1xf32>
    %cst_167 = arith.constant 6.400000e+01 : f32
    %518 = vector.broadcast %cst_167 : f32 to vector<128x1xf32>
    %519 = arith.divf %517, %518 : vector<128x1xf32>
    %520 = vector.broadcast %519 : vector<128x1xf32> to vector<128x64xf32>
    %521 = arith.subf %511, %520 : vector<128x64xf32>
    %522 = arith.mulf %521, %521 : vector<128x64xf32>
    %cst_168 = arith.constant dense<0.000000e+00> : vector<128xf32>
    %523 = vector.multi_reduction <add>, %522, %cst_168 [1] : vector<128x64xf32> to vector<128xf32>
    %524 = vector.shape_cast %523 : vector<128xf32> to vector<128x1xf32>
    %cst_169 = arith.constant 6.400000e+01 : f32
    %525 = vector.broadcast %cst_169 : f32 to vector<128x1xf32>
    %526 = arith.divf %524, %525 : vector<128x1xf32>
    %527 = vector.broadcast %519 : vector<128x1xf32> to vector<128x64xf32>
    %528 = arith.subf %511, %527 : vector<128x64xf32>
    %cst_170 = arith.constant 9.99999974E-6 : f32
    %529 = vector.broadcast %cst_170 : f32 to vector<128x1xf32>
    %530 = arith.addf %526, %529 : vector<128x1xf32>
    %531 = math.rsqrt %530 : vector<128x1xf32>
    %532 = vector.broadcast %531 : vector<128x1xf32> to vector<128x64xf32>
    %533 = arith.mulf %528, %532 : vector<128x64xf32>
    %534 = vector.broadcast %513 : vector<1x64xf32> to vector<128x64xf32>
    %535 = arith.mulf %533, %534 : vector<128x64xf32>
    %536 = vector.broadcast %515 : vector<1x64xf32> to vector<128x64xf32>
    %537 = arith.addf %535, %536 : vector<128x64xf32>
    %538 = arith.truncf %537 : vector<128x64xf32> to vector<128x64xbf16>
    %c1_171 = arith.constant 1 : index
    %c0_172 = arith.constant 0 : index
    %c0_173 = arith.constant 0 : index
    %539 = vector.load %arg9[%c1_171, %c0_172, %c0_173] : memref<2x64x256xbf16, #tpu.memory_space<vmem>>, vector<1x64x256xbf16>
    %540 = vector.shape_cast %539 : vector<1x64x256xbf16> to vector<64x256xbf16>
    %cst_174 = arith.constant dense<0.000000e+00> : vector<128x256xf32>
    %541 = tpu.matmul %538, %540, %cst_174 {dimension_numbers = #tpu.dot_dimension_numbers<[1], [0], [0], [1], [0, 0, 1, 1], [], []>} : vector<128x64xbf16>, vector<64x256xbf16>, vector<128x256xf32> -> vector<128x256xf32>
    %c1_175 = arith.constant 1 : index
    %c0_176 = arith.constant 0 : index
    %c0_177 = arith.constant 0 : index
    %542 = vector.load %arg10[%c1_175, %c0_176, %c0_177] : memref<2x1x256xf32, #tpu.memory_space<vmem>>, vector<1x1x256xf32>
    %543 = vector.shape_cast %542 : vector<1x1x256xf32> to vector<1x256xf32>
    %544 = vector.broadcast %543 : vector<1x256xf32> to vector<128x256xf32>
    %545 = arith.addf %541, %544 : vector<128x256xf32>
    %cst_178 = arith.constant 0.000000e+00 : f32
    %546 = vector.broadcast %cst_178 : f32 to vector<128x256xf32>
    %547 = arith.cmpf ogt, %545, %546 : vector<128x256xf32>
    %cst_179 = arith.constant 0.00999999977 : f32
    %548 = vector.broadcast %cst_179 : f32 to vector<128x256xf32>
    %549 = arith.mulf %548, %545 : vector<128x256xf32>
    %550 = arith.select %547, %545, %549 : vector<128x256xi1>, vector<128x256xf32>
    %551 = arith.truncf %550 : vector<128x256xf32> to vector<128x256xbf16>
    %c1_180 = arith.constant 1 : index
    %c0_181 = arith.constant 0 : index
    %c0_182 = arith.constant 0 : index
    %552 = vector.load %arg11[%c1_180, %c0_181, %c0_182] : memref<2x256x64xbf16, #tpu.memory_space<vmem>>, vector<1x256x64xbf16>
    %553 = vector.shape_cast %552 : vector<1x256x64xbf16> to vector<256x64xbf16>
    %cst_183 = arith.constant dense<0.000000e+00> : vector<128x64xf32>
    %554 = tpu.matmul %551, %553, %cst_183 {dimension_numbers = #tpu.dot_dimension_numbers<[1], [0], [0], [1], [0, 0, 1, 1], [], []>} : vector<128x256xbf16>, vector<256x64xbf16>, vector<128x64xf32> -> vector<128x64xf32>
    %c1_184 = arith.constant 1 : index
    %c0_185 = arith.constant 0 : index
    %c0_186 = arith.constant 0 : index
    %555 = vector.load %arg12[%c1_184, %c0_185, %c0_186] : memref<2x1x64xf32, #tpu.memory_space<vmem>>, vector<1x1x64xf32>
    %556 = vector.shape_cast %555 : vector<1x1x64xf32> to vector<1x64xf32>
    %557 = vector.broadcast %556 : vector<1x64xf32> to vector<128x64xf32>
    %558 = arith.addf %554, %557 : vector<128x64xf32>
    %559 = arith.addf %511, %558 : vector<128x64xf32>
    %c0_187 = arith.constant 0 : index
    %c0_188 = arith.constant 0 : index
    %560 = vector.load %arg13[%c0_187, %c0_188] : memref<1x64xf32, #tpu.memory_space<vmem>>, vector<1x64xf32>
    %c0_189 = arith.constant 0 : index
    %c0_190 = arith.constant 0 : index
    %561 = vector.load %arg14[%c0_189, %c0_190] : memref<1x64xf32, #tpu.memory_space<vmem>>, vector<1x64xf32>
    %cst_191 = arith.constant dense<0.000000e+00> : vector<128xf32>
    %562 = vector.multi_reduction <add>, %559, %cst_191 [1] : vector<128x64xf32> to vector<128xf32>
    %563 = vector.shape_cast %562 : vector<128xf32> to vector<128x1xf32>
    %cst_192 = arith.constant 6.400000e+01 : f32
    %564 = vector.broadcast %cst_192 : f32 to vector<128x1xf32>
    %565 = arith.divf %563, %564 : vector<128x1xf32>
    %566 = vector.broadcast %565 : vector<128x1xf32> to vector<128x64xf32>
    %567 = arith.subf %559, %566 : vector<128x64xf32>
    %568 = arith.mulf %567, %567 : vector<128x64xf32>
    %cst_193 = arith.constant dense<0.000000e+00> : vector<128xf32>
    %569 = vector.multi_reduction <add>, %568, %cst_193 [1] : vector<128x64xf32> to vector<128xf32>
    %570 = vector.shape_cast %569 : vector<128xf32> to vector<128x1xf32>
    %cst_194 = arith.constant 6.400000e+01 : f32
    %571 = vector.broadcast %cst_194 : f32 to vector<128x1xf32>
    %572 = arith.divf %570, %571 : vector<128x1xf32>
    %573 = vector.broadcast %565 : vector<128x1xf32> to vector<128x64xf32>
    %574 = arith.subf %559, %573 : vector<128x64xf32>
    %cst_195 = arith.constant 9.99999974E-6 : f32
    %575 = vector.broadcast %cst_195 : f32 to vector<128x1xf32>
    %576 = arith.addf %572, %575 : vector<128x1xf32>
    %577 = math.rsqrt %576 : vector<128x1xf32>
    %578 = vector.broadcast %577 : vector<128x1xf32> to vector<128x64xf32>
    %579 = arith.mulf %574, %578 : vector<128x64xf32>
    %580 = vector.broadcast %560 : vector<1x64xf32> to vector<128x64xf32>
    %581 = arith.mulf %579, %580 : vector<128x64xf32>
    %582 = vector.broadcast %561 : vector<1x64xf32> to vector<128x64xf32>
    %583 = arith.addf %581, %582 : vector<128x64xf32>
    %584 = arith.truncf %583 : vector<128x64xf32> to vector<128x64xbf16>
    %c0_196 = arith.constant 0 : index
    %c0_197 = arith.constant 0 : index
    %585 = vector.load %arg15[%c0_196, %c0_197] : memref<64x128xbf16, #tpu.memory_space<vmem>>, vector<64x128xbf16>
    %cst_198 = arith.constant dense<0.000000e+00> : vector<128x128xf32>
    %586 = tpu.matmul %584, %585, %cst_198 {dimension_numbers = #tpu.dot_dimension_numbers<[1], [0], [0], [1], [0, 0, 1, 1], [], []>} : vector<128x64xbf16>, vector<64x128xbf16>, vector<128x128xf32> -> vector<128x128xf32>
    %c0_199 = arith.constant 0 : index
    %c0_200 = arith.constant 0 : index
    %587 = vector.load %arg16[%c0_199, %c0_200] : memref<1x128xf32, #tpu.memory_space<vmem>>, vector<1x128xf32>
    %588 = vector.broadcast %587 : vector<1x128xf32> to vector<128x128xf32>
    %589 = arith.addf %586, %588 : vector<128x128xf32>
    %c0_201 = arith.constant 0 : index
    %c0_202 = arith.constant 0 : index
    %590 = vector.load %arg17[%c0_201, %c0_202] : memref<128x128xf32, #tpu.memory_space<vmem>>, vector<128x128xf32>
    tpu.vector_store %arg17[%c0_201, %c0_202], %589 {strides = array<i32>} : memref<128x128xf32, #tpu.memory_space<vmem>>, vector<128x128xf32>,
    return
  }
  func.func @transform_0(%arg0: i32) -> (i32, i32) {
    %c0_i32 = arith.constant 0 : i32
    %c0_i32_0 = arith.constant 0 : i32
    return %arg0, %c0_i32 : i32, i32
  }
  func.func @transform_1(%arg0: i32) -> (i32, i32, i32) {
    %c0_i32 = arith.constant 0 : i32
    %c0_i32_0 = arith.constant 0 : i32
    %c0_i32_1 = arith.constant 0 : i32
    %c0_i32_2 = arith.constant 0 : i32
    return %c0_i32, %c0_i32_0, %c0_i32_1 : i32, i32, i32
  }
  func.func @transform_2(%arg0: i32) -> (i32, i32, i32) {
    %c0_i32 = arith.constant 0 : i32
    %c0_i32_0 = arith.constant 0 : i32
    %c0_i32_1 = arith.constant 0 : i32
    %c0_i32_2 = arith.constant 0 : i32
    return %c0_i32, %c0_i32_0, %c0_i32_1 : i32, i32, i32
  }
  func.func @transform_3(%arg0: i32) -> (i32, i32, i32) {
    %c0_i32 = arith.constant 0 : i32
    %c0_i32_0 = arith.constant 0 : i32
    %c0_i32_1 = arith.constant 0 : i32
    %c0_i32_2 = arith.constant 0 : i32
    return %c0_i32, %c0_i32_0, %c0_i32_1 : i32, i32, i32
  }
  func.func @transform_4(%arg0: i32) -> (i32, i32, i32) {
    %c0_i32 = arith.constant 0 : i32
    %c0_i32_0 = arith.constant 0 : i32
    %c0_i32_1 = arith.constant 0 : i32
    %c0_i32_2 = arith.constant 0 : i32
    return %c0_i32, %c0_i32_0, %c0_i32_1 : i32, i32, i32
  }
  func.func @transform_5(%arg0: i32) -> (i32, i32, i32) {
    %c0_i32 = arith.constant 0 : i32
    %c0_i32_0 = arith.constant 0 : i32
    %c0_i32_1 = arith.constant 0 : i32
    %c0_i32_2 = arith.constant 0 : i32
    return %c0_i32, %c0_i32_0, %c0_i32_1 : i32, i32, i32
  }
  func.func @transform_6(%arg0: i32) -> (i32, i32, i32) {
    %c0_i32 = arith.constant 0 : i32
    %c0_i32_0 = arith.constant 0 : i32
    %c0_i32_1 = arith.constant 0 : i32
    %c0_i32_2 = arith.constant 0 : i32
    return %c0_i32, %c0_i32_0, %c0_i32_1 : i32, i32, i32
  }
  func.func @transform_7(%arg0: i32) -> (i32, i32, i32) {
    %c0_i32 = arith.constant 0 : i32
    %c0_i32_0 = arith.constant 0 : i32
    %c0_i32_1 = arith.constant 0 : i32
    %c0_i32_2 = arith.constant 0 : i32
    return %c0_i32, %c0_i32_0, %c0_i32_1 : i32, i32, i32
  }
  func.func @transform_8(%arg0: i32) -> (i32, i32, i32) {
    %c0_i32 = arith.constant 0 : i32
    %c0_i32_0 = arith.constant 0 : i32
    %c0_i32_1 = arith.constant 0 : i32
    %c0_i32_2 = arith.constant 0 : i32
    return %c0_i32, %c0_i32_0, %c0_i32_1 : i32, i32, i32
  }
  func.func @transform_9(%arg0: i32) -> (i32, i32, i32) {
    %c0_i32 = arith.constant 0 : i32
    %c0_i32_0 = arith.constant 0 : i32
    %c0_i32_1 = arith.constant 0 : i32
    %c0_i32_2 = arith.constant 0 : i32
    return %c0_i32, %c0_i32_0, %c0_i32_1 : i32, i32, i32
  }
  func.func @transform_10(%arg0: i32) -> (i32, i32, i32) {
    %c0_i32 = arith.constant 0 : i32
    %c0_i32_0 = arith.constant 0 : i32
    %c0_i32_1 = arith.constant 0 : i32
    %c0_i32_2 = arith.constant 0 : i32
    return %c0_i32, %c0_i32_0, %c0_i32_1 : i32, i32, i32
  }
  func.func @transform_11(%arg0: i32) -> (i32, i32, i32) {
    %c0_i32 = arith.constant 0 : i32
    %c0_i32_0 = arith.constant 0 : i32
    %c0_i32_1 = arith.constant 0 : i32
    %c0_i32_2 = arith.constant 0 : i32
    return %c0_i32, %c0_i32_0, %c0_i32_1 : i32, i32, i32
  }
  func.func @transform_12(%arg0: i32) -> (i32, i32) {
    %c0_i32 = arith.constant 0 : i32
    %c0_i32_0 = arith.constant 0 : i32
    %c0_i32_1 = arith.constant 0 : i32
    return %c0_i32, %c0_i32_0 : i32, i32
  }
  func.func @transform_13(%arg0: i32) -> (i32, i32) {
    %c0_i32 = arith.constant 0 : i32
    %c0_i32_0 = arith.constant 0 : i32
    %c0_i32_1 = arith.constant 0 : i32
    return %c0_i32, %c0_i32_0 : i32, i32
  }
  func.func @transform_14(%arg0: i32) -> (i32, i32) {
    %c0_i32 = arith.constant 0 : i32
    %c0_i32_0 = arith.constant 0 : i32
    %c0_i32_1 = arith.constant 0 : i32
    return %c0_i32, %c0_i32_0 : i32, i32
  }
  func.func @transform_15(%arg0: i32) -> (i32, i32) {
    %c0_i32 = arith.constant 0 : i32
    %c0_i32_0 = arith.constant 0 : i32
    %c0_i32_1 = arith.constant 0 : i32
    return %c0_i32, %c0_i32_0 : i32, i32
  }
  func.func @transform_16(%arg0: i32) -> (i32, i32) {
    %c0_i32 = arith.constant 0 : i32
    %c0_i32_0 = arith.constant 0 : i32
    return %arg0, %c0_i32 : i32, i32
  }
}

</mosaic_0001>

<llo_original>
// kernel: _lambda_.1
$region0: #{_lambda_.1}
  #allocation0 [shape = 'u32[]', space=smem, size = 0x4, offset = 0x4, fixed_abs, tag = 'smem constant byte address 0x4 - core index']
  #allocation1 [shape = 'u32[144,128]{1,0:T(1,128)}', space=vmem, size = 0x12000, scoped, tag = 'internal scratch']
  %s0 = inlined_call_operand.vmem [shape: f32[256,64], index: 0, kind: input, shape index: {}]
  %s1 = inlined_call_operand.vmem [shape: f32[2,1,64], index: 1, kind: input, shape index: {}]
  %s2 = inlined_call_operand.vmem [shape: f32[2,1,64], index: 2, kind: input, shape index: {}]
  %s3 = inlined_call_operand.vmem [shape: bf16[2,64,192], index: 3, kind: input, shape index: {}]
  %s4 = inlined_call_operand.vmem [shape: bf16[2,64,64], index: 4, kind: input, shape index: {}]
  %s5 = inlined_call_operand.vmem [shape: f32[2,1,64], index: 5, kind: input, shape index: {}]
  %s6 = inlined_call_operand.vmem [shape: f32[2,1,64], index: 6, kind: input, shape index: {}]
  %s7 = inlined_call_operand.vmem [shape: f32[2,1,64], index: 7, kind: input, shape index: {}]
  %s8 = inlined_call_operand.vmem [shape: bf16[2,64,256], index: 8, kind: input, shape index: {}]
  %s9 = inlined_call_operand.vmem [shape: f32[2,1,256], index: 9, kind: input, shape index: {}]
  %s10 = inlined_call_operand.vmem [shape: bf16[2,256,64], index: 10, kind: input, shape index: {}]
  %s11 = inlined_call_operand.vmem [shape: f32[2,1,64], index: 11, kind: input, shape index: {}]
  %s12 = inlined_call_operand.vmem [shape: f32[1,64], index: 12, kind: input, shape index: {}]
  %s13 = inlined_call_operand.vmem [shape: f32[1,64], index: 13, kind: input, shape index: {}]
  %s14 = inlined_call_operand.vmem [shape: bf16[64,128], index: 14, kind: input, shape index: {}]
  %s15 = inlined_call_operand.vmem [shape: f32[1,128], index: 15, kind: input, shape index: {}]
  %s16 = inlined_call_operand.hbm [shape: f32[256,128], index: 16, kind: output, shape index: {}]
  %s17 = sld [smem:[#allocation0]]
  $region97: #{_lambda_.1} parent=0
    _
  %s19 = ssub.s32 1, %s17
  %s20 = scalar_select 0, %s19, %s17
  $region1: #{_lambda_.1} parent=0
    #allocation2 [shape = 'u8[131072]{0}', space=vmem, size = 0x20000, scoped, tag = 'output window, operand 0']
    #allocation3 [shape = 's32[2]{0}', space=sflag, size = 0x8, scoped, tag = 'scoped memory for _lambda_.1']
    %21 = vsyncpa [#allocation3], 0
    %s22 = scalar_lea.sflag [#allocation3], 1
    %23 = vsyncpa %s22, 0
    loop: start=0, step=1, limit=4
    $region2: #{_lambda_.1} parent=1 // loop_pre_header
      _
    $region3: #{_lambda_.1} parent=1 // loop_header
      %s25 = sphi 0, %s29
      %p26 = scmp.ge.s32.totalorder %s25, 4
      %s35 = sphi 0, %s37
      %s38 = sphi 0, %s35
      %s39 = sphi 0, %s38
      %s55 = sphi 0, %s39
      %s59 = sphi 0, %s59
      %s61 = sphi 0, %s59
      %s62 = sphi 0, %s61
      %s76 = sphi 0, %s62
      %s80 = sphi 0, %s80
      %s82 = sphi 0, %s80
      %s83 = sphi 0, %s82
      %s97 = sphi 0, %s83
      %s101 = sphi 0, %s101
      %s103 = sphi 0, %s101
      %s104 = sphi 0, %s103
      %s118 = sphi 0, %s104
      %s122 = sphi 0, %s122
      %s124 = sphi 0, %s122
      %s125 = sphi 0, %s124
      %s139 = sphi 0, %s125
      %s143 = sphi 0, %s143
      %s145 = sphi 0, %s143
      %s146 = sphi 0, %s145
      %s160 = sphi 0, %s146
      %s164 = sphi 0, %s164
      %s166 = sphi 0, %s164
      %s167 = sphi 0, %s166
      %s181 = sphi 0, %s167
      %s185 = sphi 0, %s185
      %s187 = sphi 0, %s185
      %s188 = sphi 0, %s187
      %s202 = sphi 0, %s188
      %s206 = sphi 0, %s206
      %s208 = sphi 0, %s206
      %s209 = sphi 0, %s208
      %s223 = sphi 0, %s209
      %s227 = sphi 0, %s227
      %s229 = sphi 0, %s227
      %s230 = sphi 0, %s229
      %s244 = sphi 0, %s230
      %s248 = sphi 0, %s248
      %s250 = sphi 0, %s248
      %s251 = sphi 0, %s250
      %s265 = sphi 0, %s251
      %s269 = sphi 0, %s269
      %s271 = sphi 0, %s269
      %s272 = sphi 0, %s271
      %s286 = sphi 0, %s272
      %s290 = sphi 0, %s290
      %s292 = sphi 0, %s290
      %s293 = sphi 0, %s292
      %s307 = sphi 0, %s293
      %s311 = sphi 0, %s311
      %s313 = sphi 0, %s311
      %s314 = sphi 0, %s313
      %s328 = sphi 0, %s314
      %s332 = sphi 0, %s332
      %s334 = sphi 0, %s332
      %s335 = sphi 0, %s334
      %s349 = sphi 0, %s335
      %s353 = sphi 0, %s353
      %s355 = sphi 0, %s353
      %s356 = sphi 0, %s355
      %s370 = sphi 0, %s356
      %s376 = sphi 0, %s378
      %s379 = sphi 0, %s376
      %s380 = sphi 0, %s379
      %s396 = sphi 0, %s380
    $region4: #{_lambda_.1} parent=1 // loop_header_branch
      %28 = sbr.rel (%p26) target = $region8
    $region5: #{_lambda_.1} parent=1 // loop_body
      %s30 = ssub.s32 %s25, 1
      %s31 = ssub.s32 %s25, 2
      %s32 = sadd.s32 %s25, 1
      %s33 = ssub.s32 %s25, %s32
      %p34 = scmp.eq.s32.totalorder %s33, 0
      %s36 = sadd.s32 %s35, 1
      %s37 = scalar_select %p34, %s35, %s36
      %p40 = pneg %p34
      %p41 = scmp.eq.s32.totalorder %s25, 1
      %p42 = por %p40, %p41
      %p43 = scmp.ne.s32.totalorder %s35, %s38
      %p44 = scmp.eq.s32.totalorder %s25, 0
      %p45 = por %p43, %p44
      %p46 = scmp.ne.s32.totalorder %s35, %s38
      %p47 = scmp.eq.s32.totalorder %s30, 1
      %p48 = por %p46, %p47
      %p49 = scmp.ne.s32.totalorder %s38, %s39
      %p50 = scmp.eq.s32.totalorder %s30, 0
      %p51 = por %p49, %p50
      %p52 = scmp.ne.s32.totalorder %s38, %s39
      %p53 = scmp.eq.s32.totalorder %s31, 1
      %p54 = por %p52, %p53
      %p56 = scmp.ne.s32.totalorder %s39, %s55
      %p57 = scmp.eq.s32.totalorder %s31, 0
      %p58 = por %p56, %p57
      %s60 = sadd.s32 %s59, 1
      %p63 = scmp.eq.s32.totalorder %s25, 1
      %p64 = scmp.ne.s32.totalorder %s59, %s61
      %p65 = scmp.eq.s32.totalorder %s25, 0
      %p66 = por %p64, %p65
      %p67 = scmp.ne.s32.totalorder %s59, %s61
      %p68 = scmp.eq.s32.totalorder %s30, 1
      %p69 = por %p67, %p68
      %p70 = scmp.ne.s32.totalorder %s61, %s62
      %p71 = scmp.eq.s32.totalorder %s30, 0
      %p72 = por %p70, %p71
      %p73 = scmp.ne.s32.totalorder %s61, %s62
      %p74 = scmp.eq.s32.totalorder %s31, 1
      %p75 = por %p73, %p74
      %p77 = scmp.ne.s32.totalorder %s62, %s76
      %p78 = scmp.eq.s32.totalorder %s31, 0
      %p79 = por %p77, %p78
      %s81 = sadd.s32 %s80, 1
      %p84 = scmp.eq.s32.totalorder %s25, 1
      %p85 = scmp.ne.s32.totalorder %s80, %s82
      %p86 = scmp.eq.s32.totalorder %s25, 0
      %p87 = por %p85, %p86
      %p88 = scmp.ne.s32.totalorder %s80, %s82
      %p89 = scmp.eq.s32.totalorder %s30, 1
      %p90 = por %p88, %p89
      %p91 = scmp.ne.s32.totalorder %s82, %s83
      %p92 = scmp.eq.s32.totalorder %s30, 0
      %p93 = por %p91, %p92
      %p94 = scmp.ne.s32.totalorder %s82, %s83
      %p95 = scmp.eq.s32.totalorder %s31, 1
      %p96 = por %p94, %p95
      %p98 = scmp.ne.s32.totalorder %s83, %s97
      %p99 = scmp.eq.s32.totalorder %s31, 0
      %p100 = por %p98, %p99
      %s102 = sadd.s32 %s101, 1
      %p105 = scmp.eq.s32.totalorder %s25, 1
      %p106 = scmp.ne.s32.totalorder %s101, %s103
      %p107 = scmp.eq.s32.totalorder %s25, 0
      %p108 = por %p106, %p107
      %p109 = scmp.ne.s32.totalorder %s101, %s103
      %p110 = scmp.eq.s32.totalorder %s30, 1
      %p111 = por %p109, %p110
      %p112 = scmp.ne.s32.totalorder %s103, %s104
      %p113 = scmp.eq.s32.totalorder %s30, 0
      %p114 = por %p112, %p113
      %p115 = scmp.ne.s32.totalorder %s103, %s104
      %p116 = scmp.eq.s32.totalorder %s31, 1
      %p117 = por %p115, %p116
      %p119 = scmp.ne.s32.totalorder %s104, %s118
      %p120 = scmp.eq.s32.totalorder %s31, 0
      %p121 = por %p119, %p120
      %s123 = sadd.s32 %s122, 1
      %p126 = scmp.eq.s32.totalorder %s25, 1
      %p127 = scmp.ne.s32.totalorder %s122, %s124
      %p128 = scmp.eq.s32.totalorder %s25, 0
      %p129 = por %p127, %p128
      %p130 = scmp.ne.s32.totalorder %s122, %s124
      %p131 = scmp.eq.s32.totalorder %s30, 1
      %p132 = por %p130, %p131
      %p133 = scmp.ne.s32.totalorder %s124, %s125
      %p134 = scmp.eq.s32.totalorder %s30, 0
      %p135 = por %p133, %p134
      %p136 = scmp.ne.s32.totalorder %s124, %s125
      %p137 = scmp.eq.s32.totalorder %s31, 1
      %p138 = por %p136, %p137
      %p140 = scmp.ne.s32.totalorder %s125, %s139
      %p141 = scmp.eq.s32.totalorder %s31, 0
      %p142 = por %p140, %p141
      %s144 = sadd.s32 %s143, 1
      %p147 = scmp.eq.s32.totalorder %s25, 1
      %p148 = scmp.ne.s32.totalorder %s143, %s145
      %p149 = scmp.eq.s32.totalorder %s25, 0
      %p150 = por %p148, %p149
      %p151 = scmp.ne.s32.totalorder %s143, %s145
      %p152 = scmp.eq.s32.totalorder %s30, 1
      %p153 = por %p151, %p152
      %p154 = scmp.ne.s32.totalorder %s145, %s146
      %p155 = scmp.eq.s32.totalorder %s30, 0
      %p156 = por %p154, %p155
      %p157 = scmp.ne.s32.totalorder %s145, %s146
      %p158 = scmp.eq.s32.totalorder %s31, 1
      %p159 = por %p157, %p158
      %p161 = scmp.ne.s32.totalorder %s146, %s160
      %p162 = scmp.eq.s32.totalorder %s31, 0
      %p163 = por %p161, %p162
      %s165 = sadd.s32 %s164, 1
      %p168 = scmp.eq.s32.totalorder %s25, 1
      %p169 = scmp.ne.s32.totalorder %s164, %s166
      %p170 = scmp.eq.s32.totalorder %s25, 0
      %p171 = por %p169, %p170
      %p172 = scmp.ne.s32.totalorder %s164, %s166
      %p173 = scmp.eq.s32.totalorder %s30, 1
      %p174 = por %p172, %p173
      %p175 = scmp.ne.s32.totalorder %s166, %s167
      %p176 = scmp.eq.s32.totalorder %s30, 0
      %p177 = por %p175, %p176
      %p178 = scmp.ne.s32.totalorder %s166, %s167
      %p179 = scmp.eq.s32.totalorder %s31, 1
      %p180 = por %p178, %p179
      %p182 = scmp.ne.s32.totalorder %s167, %s181
      %p183 = scmp.eq.s32.totalorder %s31, 0
      %p184 = por %p182, %p183
      %s186 = sadd.s32 %s185, 1
      %p189 = scmp.eq.s32.totalorder %s25, 1
      %p190 = scmp.ne.s32.totalorder %s185, %s187
      %p191 = scmp.eq.s32.totalorder %s25, 0
      %p192 = por %p190, %p191
      %p193 = scmp.ne.s32.totalorder %s185, %s187
      %p194 = scmp.eq.s32.totalorder %s30, 1
      %p195 = por %p193, %p194
      %p196 = scmp.ne.s32.totalorder %s187, %s188
      %p197 = scmp.eq.s32.totalorder %s30, 0
      %p198 = por %p196, %p197
      %p199 = scmp.ne.s32.totalorder %s187, %s188
      %p200 = scmp.eq.s32.totalorder %s31, 1
      %p201 = por %p199, %p200
      %p203 = scmp.ne.s32.totalorder %s188, %s202
      %p204 = scmp.eq.s32.totalorder %s31, 0
      %p205 = por %p203, %p204
      %s207 = sadd.s32 %s206, 1
      %p210 = scmp.eq.s32.totalorder %s25, 1
      %p211 = scmp.ne.s32.totalorder %s206, %s208
      %p212 = scmp.eq.s32.totalorder %s25, 0
      %p213 = por %p211, %p212
      %p214 = scmp.ne.s32.totalorder %s206, %s208
      %p215 = scmp.eq.s32.totalorder %s30, 1
      %p216 = por %p214, %p215
      %p217 = scmp.ne.s32.totalorder %s208, %s209
      %p218 = scmp.eq.s32.totalorder %s30, 0
      %p219 = por %p217, %p218
      %p220 = scmp.ne.s32.totalorder %s208, %s209
      %p221 = scmp.eq.s32.totalorder %s31, 1
      %p222 = por %p220, %p221
      %p224 = scmp.ne.s32.totalorder %s209, %s223
      %p225 = scmp.eq.s32.totalorder %s31, 0
      %p226 = por %p224, %p225
      %s228 = sadd.s32 %s227, 1
      %p231 = scmp.eq.s32.totalorder %s25, 1
      %p232 = scmp.ne.s32.totalorder %s227, %s229
      %p233 = scmp.eq.s32.totalorder %s25, 0
      %p234 = por %p232, %p233
      %p235 = scmp.ne.s32.totalorder %s227, %s229
      %p236 = scmp.eq.s32.totalorder %s30, 1
      %p237 = por %p235, %p236
      %p238 = scmp.ne.s32.totalorder %s229, %s230
      %p239 = scmp.eq.s32.totalorder %s30, 0
      %p240 = por %p238, %p239
      %p241 = scmp.ne.s32.totalorder %s229, %s230
      %p242 = scmp.eq.s32.totalorder %s31, 1
      %p243 = por %p241, %p242
      %p245 = scmp.ne.s32.totalorder %s230, %s244
      %p246 = scmp.eq.s32.totalorder %s31, 0
      %p247 = por %p245, %p246
      %s249 = sadd.s32 %s248, 1
      %p252 = scmp.eq.s32.totalorder %s25, 1
      %p253 = scmp.ne.s32.totalorder %s248, %s250
      %p254 = scmp.eq.s32.totalorder %s25, 0
      %p255 = por %p253, %p254
      %p256 = scmp.ne.s32.totalorder %s248, %s250
      %p257 = scmp.eq.s32.totalorder %s30, 1
      %p258 = por %p256, %p257
      %p259 = scmp.ne.s32.totalorder %s250, %s251
      %p260 = scmp.eq.s32.totalorder %s30, 0
      %p261 = por %p259, %p260
      %p262 = scmp.ne.s32.totalorder %s250, %s251
      %p263 = scmp.eq.s32.totalorder %s31, 1
      %p264 = por %p262, %p263
      %p266 = scmp.ne.s32.totalorder %s251, %s265
      %p267 = scmp.eq.s32.totalorder %s31, 0
      %p268 = por %p266, %p267
      %s270 = sadd.s32 %s269, 1
      %p273 = scmp.eq.s32.totalorder %s25, 1
      %p274 = scmp.ne.s32.totalorder %s269, %s271
      %p275 = scmp.eq.s32.totalorder %s25, 0
      %p276 = por %p274, %p275
      %p277 = scmp.ne.s32.totalorder %s269, %s271
      %p278 = scmp.eq.s32.totalorder %s30, 1
      %p279 = por %p277, %p278
      %p280 = scmp.ne.s32.totalorder %s271, %s272
      %p281 = scmp.eq.s32.totalorder %s30, 0
      %p282 = por %p280, %p281
      %p283 = scmp.ne.s32.totalorder %s271, %s272
      %p284 = scmp.eq.s32.totalorder %s31, 1
      %p285 = por %p283, %p284
      %p287 = scmp.ne.s32.totalorder %s272, %s286
      %p288 = scmp.eq.s32.totalorder %s31, 0
      %p289 = por %p287, %p288
      %s291 = sadd.s32 %s290, 1
      %p294 = scmp.eq.s32.totalorder %s25, 1
      %p295 = scmp.ne.s32.totalorder %s290, %s292
      %p296 = scmp.eq.s32.totalorder %s25, 0
      %p297 = por %p295, %p296
      %p298 = scmp.ne.s32.totalorder %s290, %s292
      %p299 = scmp.eq.s32.totalorder %s30, 1
      %p300 = por %p298, %p299
      %p301 = scmp.ne.s32.totalorder %s292, %s293
      %p302 = scmp.eq.s32.totalorder %s30, 0
      %p303 = por %p301, %p302
      %p304 = scmp.ne.s32.totalorder %s292, %s293
      %p305 = scmp.eq.s32.totalorder %s31, 1
      %p306 = por %p304, %p305
      %p308 = scmp.ne.s32.totalorder %s293, %s307
      %p309 = scmp.eq.s32.totalorder %s31, 0
      %p310 = por %p308, %p309
      %s312 = sadd.s32 %s311, 1
      %p315 = scmp.eq.s32.totalorder %s25, 1
      %p316 = scmp.ne.s32.totalorder %s311, %s313
      %p317 = scmp.eq.s32.totalorder %s25, 0
      %p318 = por %p316, %p317
      %p319 = scmp.ne.s32.totalorder %s311, %s313
      %p320 = scmp.eq.s32.totalorder %s30, 1
      %p321 = por %p319, %p320
      %p322 = scmp.ne.s32.totalorder %s313, %s314
      %p323 = scmp.eq.s32.totalorder %s30, 0
      %p324 = por %p322, %p323
      %p325 = scmp.ne.s32.totalorder %s313, %s314
      %p326 = scmp.eq.s32.totalorder %s31, 1
      %p327 = por %p325, %p326
      %p329 = scmp.ne.s32.totalorder %s314, %s328
      %p330 = scmp.eq.s32.totalorder %s31, 0
      %p331 = por %p329, %p330
      %s333 = sadd.s32 %s332, 1
      %p336 = scmp.eq.s32.totalorder %s25, 1
      %p337 = scmp.ne.s32.totalorder %s332, %s334
      %p338 = scmp.eq.s32.totalorder %s25, 0
      %p339 = por %p337, %p338
      %p340 = scmp.ne.s32.totalorder %s332, %s334
      %p341 = scmp.eq.s32.totalorder %s30, 1
      %p342 = por %p340, %p341
      %p343 = scmp.ne.s32.totalorder %s334, %s335
      %p344 = scmp.eq.s32.totalorder %s30, 0
      %p345 = por %p343, %p344
      %p346 = scmp.ne.s32.totalorder %s334, %s335
      %p347 = scmp.eq.s32.totalorder %s31, 1
      %p348 = por %p346, %p347
      %p350 = scmp.ne.s32.totalorder %s335, %s349
      %p351 = scmp.eq.s32.totalorder %s31, 0
      %p352 = por %p350, %p351
      %s354 = sadd.s32 %s353, 1
      %p357 = scmp.eq.s32.totalorder %s25, 1
      %p358 = scmp.ne.s32.totalorder %s353, %s355
      %p359 = scmp.eq.s32.totalorder %s25, 0
      %p360 = por %p358, %p359
      %p361 = scmp.ne.s32.totalorder %s353, %s355
      %p362 = scmp.eq.s32.totalorder %s30, 1
      %p363 = por %p361, %p362
      %p364 = scmp.ne.s32.totalorder %s355, %s356
      %p365 = scmp.eq.s32.totalorder %s30, 0
      %p366 = por %p364, %p365
      %p367 = scmp.ne.s32.totalorder %s355, %s356
      %p368 = scmp.eq.s32.totalorder %s31, 1
      %p369 = por %p367, %p368
      %p371 = scmp.ne.s32.totalorder %s356, %s370
      %p372 = scmp.eq.s32.totalorder %s31, 0
      %p373 = por %p371, %p372
      %s374 = ssub.s32 %s25, %s32
      %p375 = scmp.eq.s32.totalorder %s374, 0
      %s377 = sadd.s32 %s376, 1
      %s378 = scalar_select %p375, %s376, %s377
      %p381 = pneg %p375
      %p382 = scmp.eq.s32.totalorder %s25, 1
      %p383 = por %p381, %p382
      %p384 = scmp.ne.s32.totalorder %s376, %s379
      %p385 = scmp.eq.s32.totalorder %s25, 0
      %p386 = por %p384, %p385
      %p387 = scmp.ne.s32.totalorder %s376, %s379
      %p388 = scmp.eq.s32.totalorder %s30, 1
      %p389 = por %p387, %p388
      %p390 = scmp.ne.s32.totalorder %s379, %s380
      %p391 = scmp.eq.s32.totalorder %s30, 0
      %p392 = por %p390, %p391
      %p393 = scmp.ne.s32.totalorder %s379, %s380
      %p394 = scmp.eq.s32.totalorder %s31, 1
      %p395 = por %p393, %p394
      %p397 = scmp.ne.s32.totalorder %s380, %s396
      %p398 = scmp.eq.s32.totalorder %s31, 0
      %p399 = por %p397, %p398
      %p400 = scmp.le.s32.totalorder 1, %s25
      %p401 = scmp.lt.s32.totalorder %s25, 3
      %p402 = pnand %p400, %p401
      %p403 = pneg %p402
      // Predicated region
      $region9: #{_lambda_.1} parent=5 // pred_check
        _
      $region10: #{_lambda_.1} parent=5 // pred_check_branch
        %405 = sbr.rel (%p402) target = $region12
      $region11: #{_lambda_.1} parent=5 // pred_region
        %s406 = ssub.s32 %s25, 1
        // Predicated region
        $region13: #{_lambda_.1} parent=11 // pred_check
          %p407 = pneg %p72
        $region14: #{_lambda_.1} parent=11 // pred_check_branch
          %409 = sbr.rel (%p407) target = $region16
        $region15: #{_lambda_.1} parent=11 // pred_region
          _
        $region16: #{_lambda_.1} parent=11 // pred_fallthru
          _
        // Predicated region
        $region17: #{_lambda_.1} parent=11 // pred_check
          %p410 = pneg %p93
        $region18: #{_lambda_.1} parent=11 // pred_check_branch
          %412 = sbr.rel (%p410) target = $region20
        $region19: #{_lambda_.1} parent=11 // pred_region
          _
        $region20: #{_lambda_.1} parent=11 // pred_fallthru
          _
        // Predicated region
        $region21: #{_lambda_.1} parent=11 // pred_check
          %p413 = pneg %p114
        $region22: #{_lambda_.1} parent=11 // pred_check_branch
          %415 = sbr.rel (%p413) target = $region24
        $region23: #{_lambda_.1} parent=11 // pred_region
          _
        $region24: #{_lambda_.1} parent=11 // pred_fallthru
          _
        // Predicated region
        $region25: #{_lambda_.1} parent=11 // pred_check
          %p416 = pneg %p135
        $region26: #{_lambda_.1} parent=11 // pred_check_branch
          %418 = sbr.rel (%p416) target = $region28
        $region27: #{_lambda_.1} parent=11 // pred_region
          _
        $region28: #{_lambda_.1} parent=11 // pred_fallthru
          _
        // Predicated region
        $region29: #{_lambda_.1} parent=11 // pred_check
          %p419 = pneg %p156
        $region30: #{_lambda_.1} parent=11 // pred_check_branch
          %421 = sbr.rel (%p419) target = $region32
        $region31: #{_lambda_.1} parent=11 // pred_region
          _
        $region32: #{_lambda_.1} parent=11 // pred_fallthru
          _
        // Predicated region
        $region33: #{_lambda_.1} parent=11 // pred_check
          %p422 = pneg %p177
        $region34: #{_lambda_.1} parent=11 // pred_check_branch
          %424 = sbr.rel (%p422) target = $region36
        $region35: #{_lambda_.1} parent=11 // pred_region
          _
        $region36: #{_lambda_.1} parent=11 // pred_fallthru
          _
        // Predicated region
        $region37: #{_lambda_.1} parent=11 // pred_check
          %p425 = pneg %p198
        $region38: #{_lambda_.1} parent=11 // pred_check_branch
          %427 = sbr.rel (%p425) target = $region40
        $region39: #{_lambda_.1} parent=11 // pred_region
          _
        $region40: #{_lambda_.1} parent=11 // pred_fallthru
          _
        // Predicated region
        $region41: #{_lambda_.1} parent=11 // pred_check
          %p428 = pneg %p219
        $region42: #{_lambda_.1} parent=11 // pred_check_branch
          %430 = sbr.rel (%p428) target = $region44
        $region43: #{_lambda_.1} parent=11 // pred_region
          _
        $region44: #{_lambda_.1} parent=11 // pred_fallthru
          _
        // Predicated region
        $region45: #{_lambda_.1} parent=11 // pred_check
          %p431 = pneg %p240
        $region46: #{_lambda_.1} parent=11 // pred_check_branch
          %433 = sbr.rel (%p431) target = $region48
        $region47: #{_lambda_.1} parent=11 // pred_region
          _
        $region48: #{_lambda_.1} parent=11 // pred_fallthru
          _
        // Predicated region
        $region49: #{_lambda_.1} parent=11 // pred_check
          %p434 = pneg %p261
        $region50: #{_lambda_.1} parent=11 // pred_check_branch
          %436 = sbr.rel (%p434) target = $region52
        $region51: #{_lambda_.1} parent=11 // pred_region
          _
        $region52: #{_lambda_.1} parent=11 // pred_fallthru
          _
        // Predicated region
        $region53: #{_lambda_.1} parent=11 // pred_check
          %p437 = pneg %p282
        $region54: #{_lambda_.1} parent=11 // pred_check_branch
          %439 = sbr.rel (%p437) target = $region56
        $region55: #{_lambda_.1} parent=11 // pred_region
          _
        $region56: #{_lambda_.1} parent=11 // pred_fallthru
          _
        // Predicated region
        $region57: #{_lambda_.1} parent=11 // pred_check
          %p440 = pneg %p303
        $region58: #{_lambda_.1} parent=11 // pred_check_branch
          %442 = sbr.rel (%p440) target = $region60
        $region59: #{_lambda_.1} parent=11 // pred_region
          _
        $region60: #{_lambda_.1} parent=11 // pred_fallthru
          _
        // Predicated region
        $region61: #{_lambda_.1} parent=11 // pred_check
          %p443 = pneg %p324
        $region62: #{_lambda_.1} parent=11 // pred_check_branch
          %445 = sbr.rel (%p443) target = $region64
        $region63: #{_lambda_.1} parent=11 // pred_region
          _
        $region64: #{_lambda_.1} parent=11 // pred_fallthru
          _
        // Predicated region
        $region65: #{_lambda_.1} parent=11 // pred_check
          %p446 = pneg %p345
        $region66: #{_lambda_.1} parent=11 // pred_check_branch
          %448 = sbr.rel (%p446) target = $region68
        $region67: #{_lambda_.1} parent=11 // pred_region
          _
        $region68: #{_lambda_.1} parent=11 // pred_fallthru
          _
        // Predicated region
        $region69: #{_lambda_.1} parent=11 // pred_check
          %p449 = pneg %p366
        $region70: #{_lambda_.1} parent=11 // pred_check_branch
          %451 = sbr.rel (%p449) target = $region72
        $region71: #{_lambda_.1} parent=11 // pred_region
          _
        $region72: #{_lambda_.1} parent=11 // pred_fallthru
          _
      $region12: #{_lambda_.1} parent=5 // pred_fallthru
        _
      %p452 = scmp.lt.s32.totalorder %s25, 2
      // Predicated region
      $region73: #{_lambda_.1} parent=5 // pred_check
        %p453 = pneg %p452
      $region74: #{_lambda_.1} parent=5 // pred_check_branch
        %455 = sbr.rel (%p453) target = $region76
      $region75: #{_lambda_.1} parent=5 // pred_region
        // Predicated region
        $region77: #{_lambda_.1} parent=75 // pred_check
          %p456 = pneg %p45
        $region78: #{_lambda_.1} parent=75 // pred_check_branch
          %458 = sbr.rel (%p456) target = $region80
        $region79: #{_lambda_.1} parent=75 // pred_region
          %s459 = smul.u32 16, %s25
          %p460 = scmp.lt.s32.totalorder %s459, 31
          %s461 = scalar_select %p460, %s459, 31
          %s462 = smul.addr %s461, 8
          %s463 = scalar_lea.vmem %s0, %s462
          %s464 = smul.u32 16, %s25
        $region80: #{_lambda_.1} parent=75 // pred_fallthru
          _
      $region76: #{_lambda_.1} parent=5 // pred_fallthru
        _
      %p465 = scmp.le.s32.totalorder 1, %s25
      %p466 = scmp.lt.s32.totalorder %s25, 3
      %p467 = pnand %p465, %p466
      %p468 = pneg %p467
      // Predicated region
      $region81: #{_lambda_.1} parent=5 // pred_check
        _
      $region82: #{_lambda_.1} parent=5 // pred_check_branch
        %470 = sbr.rel (%p467) target = $region84
      $region83: #{_lambda_.1} parent=5 // pred_region
        %s471 = ssub.s32 %s25, 1
        %s472 = smul.u32 16, %s30
        %p473 = scmp.lt.s32.totalorder %s472, 31
        %s474 = scalar_select %p473, %s472, 31
        %s475 = smul.addr %s474, 8
        %s476 = scalar_lea.vmem %s0, %s475
        %p477 = pneg %p51
        %p478 = pneg %p48
        %p479 = pneg %p72
        %p480 = pneg %p69
        %p481 = pneg %p93
        %p482 = pneg %p90
        %p483 = pneg %p114
        %p484 = pneg %p111
        %p485 = pneg %p135
        %p486 = pneg %p132
        %p487 = pneg %p156
        %p488 = pneg %p153
        %p489 = pneg %p177
        %p490 = pneg %p174
        %p491 = pneg %p198
        %p492 = pneg %p195
        %p493 = pneg %p219
        %p494 = pneg %p216
        %p495 = pneg %p240
        %p496 = pneg %p237
        %p497 = pneg %p261
        %p498 = pneg %p258
        %p499 = pneg %p282
        %p500 = pneg %p279
        %p501 = pneg %p303
        %p502 = pneg %p300
        %p503 = pneg %p324
        %p504 = pneg %p321
        %p505 = pneg %p345
        %p506 = pneg %p342
        %p507 = pneg %p366
        %p508 = pneg %p363
        %p509 = pneg %p392
        %p510 = pneg %p389
        %s511 = sand.u32 %s379, 1
        %s512 = scalar_lea.sflag [#allocation3], %s511
        %s513 = sand.u32 %s379, 1
        %s514 = smul.addr %s513, 128
        %s515 = scalar_lea.vmem [#allocation2], %s514
        %s516 = smul.u32 16, %s30
        %p517 = scmp.lt.s32.totalorder %s516, 31
        %s518 = scalar_select %p517, %s516, 31
        %s519 = smul.addr %s518, 8
        %s520 = scalar_lea.vmem %s0, %s519
        %s521 = smul.u32 16, %s30
        %s522 = smul.u32 16, %s30
        %v524 = vld [vmem:[%s520] sm:$0xff]
        %v525 = vld [vmem:[%s520 + $0x8] sm:$0xff]
        %v526 = vld [vmem:[%s520 + $0x10] sm:$0xff]
        %v527 = vld [vmem:[%s520 + $0x18] sm:$0xff]
        %v528 = vld [vmem:[%s520 + $0x20] sm:$0xff]
        %v529 = vld [vmem:[%s520 + $0x28] sm:$0xff]
        %v530 = vld [vmem:[%s520 + $0x30] sm:$0xff]
        %v531 = vld [vmem:[%s520 + $0x38] sm:$0xff]
        %v532 = vld [vmem:[%s520 + $0x40] sm:$0xff]
        %v533 = vld [vmem:[%s520 + $0x48] sm:$0xff]
        %v534 = vld [vmem:[%s520 + $0x50] sm:$0xff]
        %v535 = vld [vmem:[%s520 + $0x58] sm:$0xff]
        %v536 = vld [vmem:[%s520 + $0x60] sm:$0xff]
        %v537 = vld [vmem:[%s520 + $0x68] sm:$0xff]
        %v538 = vld [vmem:[%s520 + $0x70] sm:$0xff]
        %v539 = vld [vmem:[%s520 + $0x78] sm:$0xff]
        %v540 = vlaneseq
        %v541 = vshrl.u32 %v540, 7
        %v542 = vadd.s32 %v541, 8
        %v543 = vadd.s32 %v541, 16
        %v544 = vadd.s32 %v541, 24
        %v545 = vlaneseq
        %v546 = vand.u32 %v545, 127
        %vm547 = vcmp.le.s32.totalorder %v546, %v541
        %vm548 = vcmp.le.s32.totalorder %v546, %v542
        %vm549 = vcmp.le.s32.totalorder %v546, %v543
        %vm550 = vcmp.le.s32.totalorder %v546, %v544
        %v551 = vsel %vm547, 0.0, -1e+30
        %v552 = vsel %vm548, 0.0, -1e+30
        %v553 = vsel %vm549, 0.0, -1e+30
        %v554 = vsel %vm550, 0.0, -1e+30
        %v555 = vld [vmem:[%s1] sm:$0x1]
        %v556 = vld [vmem:[%s2] sm:$0x1]
        %vm557 = vcmask 523264
        %v558 = vsel %vm557, %v524, 0.0
        %559 = vadd.xlane.f32.xlu0 %v558
        %v560 = vpop.xlane.xlu0 %559
        %v561 = vsel %vm557, %v525, 0.0
        %562 = vadd.xlane.f32.xlu0 %v561
        %v563 = vpop.xlane.xlu0 %562
        %v564 = vsel %vm557, %v526, 0.0
        %565 = vadd.xlane.f32.xlu0 %v564
        %v566 = vpop.xlane.xlu0 %565
        %v567 = vsel %vm557, %v527, 0.0
        %568 = vadd.xlane.f32.xlu0 %v567
        %v569 = vpop.xlane.xlu0 %568
        %v570 = vsel %vm557, %v528, 0.0
        %571 = vadd.xlane.f32.xlu0 %v570
        %v572 = vpop.xlane.xlu0 %571
        %v573 = vsel %vm557, %v529, 0.0
        %574 = vadd.xlane.f32.xlu0 %v573
        %v575 = vpop.xlane.xlu0 %574
        %v576 = vsel %vm557, %v530, 0.0
        %577 = vadd.xlane.f32.xlu0 %v576
        %v578 = vpop.xlane.xlu0 %577
        %v579 = vsel %vm557, %v531, 0.0
        %580 = vadd.xlane.f32.xlu0 %v579
        %v581 = vpop.xlane.xlu0 %580
        %v582 = vsel %vm557, %v532, 0.0
        %583 = vadd.xlane.f32.xlu0 %v582
        %v584 = vpop.xlane.xlu0 %583
        %v585 = vsel %vm557, %v533, 0.0
        %586 = vadd.xlane.f32.xlu0 %v585
        %v587 = vpop.xlane.xlu0 %586
        %v588 = vsel %vm557, %v534, 0.0
        %589 = vadd.xlane.f32.xlu0 %v588
        %v590 = vpop.xlane.xlu0 %589
        %v591 = vsel %vm557, %v535, 0.0
        %592 = vadd.xlane.f32.xlu0 %v591
        %v593 = vpop.xlane.xlu0 %592
        %v594 = vsel %vm557, %v536, 0.0
        %595 = vadd.xlane.f32.xlu0 %v594
        %v596 = vpop.xlane.xlu0 %595
        %v597 = vsel %vm557, %v537, 0.0
        %598 = vadd.xlane.f32.xlu0 %v597
        %v599 = vpop.xlane.xlu0 %598
        %v600 = vsel %vm557, %v538, 0.0
        %601 = vadd.xlane.f32.xlu0 %v600
        %v602 = vpop.xlane.xlu0 %601
        %v603 = vsel %vm557, %v539, 0.0
        %604 = vadd.xlane.f32.xlu0 %v603
        %v605 = vpop.xlane.xlu0 %604
        %v606 = vrcp.pop 64.0
        %v607 = vmul.f32 %v560, %v606
        %v608 = vmul.f32 %v563, %v606
        %v609 = vmul.f32 %v566, %v606
        %v610 = vmul.f32 %v569, %v606
        %v611 = vmul.f32 %v572, %v606
        %v612 = vmul.f32 %v575, %v606
        %v613 = vmul.f32 %v578, %v606
        %v614 = vmul.f32 %v581, %v606
        %v615 = vmul.f32 %v584, %v606
        %v616 = vmul.f32 %v587, %v606
        %v617 = vmul.f32 %v590, %v606
        %v618 = vmul.f32 %v593, %v606
        %v619 = vmul.f32 %v596, %v606
        %v620 = vmul.f32 %v599, %v606
        %v621 = vmul.f32 %v602, %v606
        %v622 = vmul.f32 %v605, %v606
        %v623 = vsub.f32 %v524, %v607
        %v624 = vsub.f32 %v525, %v608
        %v625 = vsub.f32 %v526, %v609
        %v626 = vsub.f32 %v527, %v610
        %v627 = vsub.f32 %v528, %v611
        %v628 = vsub.f32 %v529, %v612
        %v629 = vsub.f32 %v530, %v613
        %v630 = vsub.f32 %v531, %v614
        %v631 = vsub.f32 %v532, %v615
        %v632 = vsub.f32 %v533, %v616
        %v633 = vsub.f32 %v534, %v617
        %v634 = vsub.f32 %v535, %v618
        %v635 = vsub.f32 %v536, %v619
        %v636 = vsub.f32 %v537, %v620
        %v637 = vsub.f32 %v538, %v621
        %v638 = vsub.f32 %v539, %v622
        %v639 = vmul.f32 %v623, %v623
        %v640 = vmul.f32 %v624, %v624
        %v641 = vmul.f32 %v625, %v625
        %v642 = vmul.f32 %v626, %v626
        %v643 = vmul.f32 %v627, %v627
        %v644 = vmul.f32 %v628, %v628
        %v645 = vmul.f32 %v629, %v629
        %v646 = vmul.f32 %v630, %v630
        %v647 = vmul.f32 %v631, %v631
        %v648 = vmul.f32 %v632, %v632
        %v649 = vmul.f32 %v633, %v633
        %v650 = vmul.f32 %v634, %v634
        %v651 = vmul.f32 %v635, %v635
        %v652 = vmul.f32 %v636, %v636
        %v653 = vmul.f32 %v637, %v637
        %v654 = vmul.f32 %v638, %v638
        %v655 = vsel %vm557, %v639, 0.0
        %656 = vadd.xlane.f32.xlu0 %v655
        %v657 = vpop.xlane.xlu0 %656
        %v658 = vsel %vm557, %v640, 0.0
        %659 = vadd.xlane.f32.xlu0 %v658
        %v660 = vpop.xlane.xlu0 %659
        %v661 = vsel %vm557, %v641, 0.0
        %662 = vadd.xlane.f32.xlu0 %v661
        %v663 = vpop.xlane.xlu0 %662
        %v664 = vsel %vm557, %v642, 0.0
        %665 = vadd.xlane.f32.xlu0 %v664
        %v666 = vpop.xlane.xlu0 %665
        %v667 = vsel %vm557, %v643, 0.0
        %668 = vadd.xlane.f32.xlu0 %v667
        %v669 = vpop.xlane.xlu0 %668
        %v670 = vsel %vm557, %v644, 0.0
        %671 = vadd.xlane.f32.xlu0 %v670
        %v672 = vpop.xlane.xlu0 %671
        %v673 = vsel %vm557, %v645, 0.0
        %674 = vadd.xlane.f32.xlu0 %v673
        %v675 = vpop.xlane.xlu0 %674
        %v676 = vsel %vm557, %v646, 0.0
        %677 = vadd.xlane.f32.xlu0 %v676
        %v678 = vpop.xlane.xlu0 %677
        %v679 = vsel %vm557, %v647, 0.0
        %680 = vadd.xlane.f32.xlu0 %v679
        %v681 = vpop.xlane.xlu0 %680
        %v682 = vsel %vm557, %v648, 0.0
        %683 = vadd.xlane.f32.xlu0 %v682
        %v684 = vpop.xlane.xlu0 %683
        %v685 = vsel %vm557, %v649, 0.0
        %686 = vadd.xlane.f32.xlu0 %v685
        %v687 = vpop.xlane.xlu0 %686
        %v688 = vsel %vm557, %v650, 0.0
        %689 = vadd.xlane.f32.xlu0 %v688
        %v690 = vpop.xlane.xlu0 %689
        %v691 = vsel %vm557, %v651, 0.0
        %692 = vadd.xlane.f32.xlu0 %v691
        %v693 = vpop.xlane.xlu0 %692
        %v694 = vsel %vm557, %v652, 0.0
        %695 = vadd.xlane.f32.xlu0 %v694
        %v696 = vpop.xlane.xlu0 %695
        %v697 = vsel %vm557, %v653, 0.0
        %698 = vadd.xlane.f32.xlu0 %v697
        %v699 = vpop.xlane.xlu0 %698
        %v700 = vsel %vm557, %v654, 0.0
        %701 = vadd.xlane.f32.xlu0 %v700
        %v702 = vpop.xlane.xlu0 %701
        %v703 = vmul.f32 %v657, %v606
        %v704 = vmul.f32 %v660, %v606
        %v705 = vmul.f32 %v663, %v606
        %v706 = vmul.f32 %v666, %v606
        %v707 = vmul.f32 %v669, %v606
        %v708 = vmul.f32 %v672, %v606
        %v709 = vmul.f32 %v675, %v606
        %v710 = vmul.f32 %v678, %v606
        %v711 = vmul.f32 %v681, %v606
        %v712 = vmul.f32 %v684, %v606
        %v713 = vmul.f32 %v687, %v606
        %v714 = vmul.f32 %v690, %v606
        %v715 = vmul.f32 %v693, %v606
        %v716 = vmul.f32 %v696, %v606
        %v717 = vmul.f32 %v699, %v606
        %v718 = vmul.f32 %v702, %v606
        %v719 = vadd.f32 %v703, 1e-05
        %v720 = vadd.f32 %v704, 1e-05
        %v721 = vadd.f32 %v705, 1e-05
        %v722 = vadd.f32 %v706, 1e-05
        %v723 = vadd.f32 %v707, 1e-05
        %v724 = vadd.f32 %v708, 1e-05
        %v725 = vadd.f32 %v709, 1e-05
        %v726 = vadd.f32 %v710, 1e-05
        %v727 = vadd.f32 %v711, 1e-05
        %v728 = vadd.f32 %v712, 1e-05
        %v729 = vadd.f32 %v713, 1e-05
        %v730 = vadd.f32 %v714, 1e-05
        %v731 = vadd.f32 %v715, 1e-05
        %v732 = vadd.f32 %v716, 1e-05
        %v733 = vadd.f32 %v717, 1e-05
        %v734 = vadd.f32 %v718, 1e-05
        %v735 = vrsqrt.pop %v719
        %v736 = vrsqrt.pop %v720
        %v737 = vrsqrt.pop %v721
        %v738 = vrsqrt.pop %v722
        %v739 = vrsqrt.pop %v723
        %v740 = vrsqrt.pop %v724
        %v741 = vrsqrt.pop %v725
        %v742 = vrsqrt.pop %v726
        %v743 = vrsqrt.pop %v727
        %v744 = vrsqrt.pop %v728
        %v745 = vrsqrt.pop %v729
        %v746 = vrsqrt.pop %v730
        %v747 = vrsqrt.pop %v731
        %v748 = vrsqrt.pop %v732
        %v749 = vrsqrt.pop %v733
        %v750 = vrsqrt.pop %v734
        %v751 = vmul.f32 %v623, %v735
        %v752 = vmul.f32 %v624, %v736
        %v753 = vmul.f32 %v625, %v737
        %v754 = vmul.f32 %v626, %v738
        %v755 = vmul.f32 %v627, %v739
        %v756 = vmul.f32 %v628, %v740
        %v757 = vmul.f32 %v629, %v741
        %v758 = vmul.f32 %v630, %v742
        %v759 = vmul.f32 %v631, %v743
        %v760 = vmul.f32 %v632, %v744
        %v761 = vmul.f32 %v633, %v745
        %v762 = vmul.f32 %v634, %v746
        %v763 = vmul.f32 %v635, %v747
        %v764 = vmul.f32 %v636, %v748
        %v765 = vmul.f32 %v637, %v749
        %v766 = vmul.f32 %v638, %v750
        %v768 = vlaneseq
        %v769 = vshrl.u32 %v768, 7
        %v770 = vsub.s32 0, %v769
        %v771 = vrot.slane %v555, %v770
        %v773 = vmul.f32 %v751, %v771
        %v774 = vmul.f32 %v752, %v771
        %v775 = vmul.f32 %v753, %v771
        %v776 = vmul.f32 %v754, %v771
        %v777 = vmul.f32 %v755, %v771
        %v778 = vmul.f32 %v756, %v771
        %v779 = vmul.f32 %v757, %v771
        %v780 = vmul.f32 %v758, %v771
        %v781 = vmul.f32 %v759, %v771
        %v782 = vmul.f32 %v760, %v771
        %v783 = vmul.f32 %v761, %v771
        %v784 = vmul.f32 %v762, %v771
        %v785 = vmul.f32 %v763, %v771
        %v786 = vmul.f32 %v764, %v771
        %v787 = vmul.f32 %v765, %v771
        %v788 = vmul.f32 %v766, %v771
        %v790 = vlaneseq
        %v791 = vshrl.u32 %v790, 7
        %v792 = vsub.s32 0, %v791
        %v793 = vrot.slane %v556, %v792
        %v795 = vadd.f32 %v773, %v793
        %v796 = vadd.f32 %v774, %v793
        %v797 = vadd.f32 %v775, %v793
        %v798 = vadd.f32 %v776, %v793
        %v799 = vadd.f32 %v777, %v793
        %v800 = vadd.f32 %v778, %v793
        %v801 = vadd.f32 %v779, %v793
        %v802 = vadd.f32 %v780, %v793
        %v803 = vadd.f32 %v781, %v793
        %v804 = vadd.f32 %v782, %v793
        %v805 = vadd.f32 %v783, %v793
        %v806 = vadd.f32 %v784, %v793
        %v807 = vadd.f32 %v785, %v793
        %v808 = vadd.f32 %v786, %v793
        %v809 = vadd.f32 %v787, %v793
        %v810 = vadd.f32 %v788, %v793
        %v811 = vpack.c.bf16 %v796, %v795
        %v812 = vpack.c.bf16 %v798, %v797
        %v813 = vpack.c.bf16 %v800, %v799
        %v814 = vpack.c.bf16 %v802, %v801
        %v815 = vpack.c.bf16 %v804, %v803
        %v816 = vpack.c.bf16 %v806, %v805
        %v817 = vpack.c.bf16 %v808, %v807
        %v818 = vpack.c.bf16 %v810, %v809
        %v819 = vld [vmem:[%s3] sm:$0xff]
        %v820 = vld [vmem:[%s3 + $0x8] sm:$0xff]
        %v821 = vld [vmem:[%s3 + $0x10] sm:$0xff]
        %v822 = vld [vmem:[%s3 + $0x18] sm:$0xff]
        %v823 = vld [vmem:[%s3 + $0x20] sm:$0xff]
        %v824 = vld [vmem:[%s3 + $0x28] sm:$0xff]
        %v825 = vld [vmem:[%s3 + $0x30] sm:$0xff]
        %v826 = vld [vmem:[%s3 + $0x38] sm:$0xff]
        %v835 = vunpack.c.l.b16 %v819
        %v836 = vunpack.c.h.b16 %v819
        %v837 = vunpack.c.l.b16 %v820
        %v838 = vunpack.c.h.b16 %v820
        %v839 = vunpack.c.l.b16 %v821
        %v840 = vunpack.c.h.b16 %v821
        %v841 = vunpack.c.l.b16 %v822
        %v842 = vunpack.c.h.b16 %v822
        %v843 = vunpack.c.l.b16 %v823
        %v844 = vunpack.c.h.b16 %v823
        %v845 = vunpack.c.l.b16 %v824
        %v846 = vunpack.c.h.b16 %v824
        %v847 = vunpack.c.l.b16 %v825
        %v848 = vunpack.c.h.b16 %v825
        %v849 = vunpack.c.l.b16 %v826
        %v850 = vunpack.c.h.b16 %v826
        %v851 = vpack.c.b16 %v837, %v835
        %v852 = vpack.c.b16 %v838, %v836
        %v853 = vpack.c.b16 %v841, %v839
        %v854 = vpack.c.b16 %v842, %v840
        %v855 = vpack.c.b16 %v845, %v843
        %v856 = vpack.c.b16 %v846, %v844
        %v857 = vpack.c.b16 %v849, %v847
        %v858 = vpack.c.b16 %v850, %v848
        %v868 = vsel %vm557, %v811, 0
        %v871 = vsel %vm557, %v812, 0
        %v874 = vsel %vm557, %v813, 0
        %v877 = vsel %vm557, %v814, 0
        %v880 = vsel %vm557, %v815, 0
        %v883 = vsel %vm557, %v816, 0
        %v886 = vsel %vm557, %v817, 0
        %v889 = vsel %vm557, %v818, 0
        %891 = vmatprep.subr.bf16.mxu0 0
        %892 = vmatpush1.bf16.msra.mxu0 0
        %893 = vmatprep.subr.bf16.mxu0 0
        %894 = vmatpush1.bf16.msra.mxu0 0
        %895 = vmatprep.subr.bf16.mxu0 0
        %896 = vmatpush1.bf16.msra.mxu0 0
        %897 = vmatprep.subr.bf16.mxu0 0
        %898 = vmatpush1.bf16.msra.mxu0 0
        %899 = vmatprep.subr.bf16.mxu0 %v858
        %900 = vmatpush1.bf16.msra.mxu0 %v857
        %901 = vmatprep.subr.bf16.mxu0 %v856
        %902 = vmatpush1.bf16.msra.mxu0 %v855
        %903 = vmatprep.subr.bf16.mxu0 %v854
        %904 = vmatpush1.bf16.msra.mxu0 %v853
        %905 = vmatprep.subr.bf16.mxu0 %v852
        %906 = vmatpush1.bf16.msra.mxu0 %v851
        %907 = vmatprep.subr.bf16.mxu0 0
        %908 = vmatpush2.bf16.msra.mxu0 0
        %909 = vmatprep.subr.bf16.mxu0 0
        %910 = vmatpush2.bf16.msra.mxu0 0
        %911 = vmatprep.subr.bf16.mxu0 0
        %912 = vmatpush2.bf16.msra.mxu0 0
        %913 = vmatprep.subr.bf16.mxu0 0
        %914 = vmatpush2.bf16.msra.mxu0 0
        %915 = vmatprep.subr.bf16.mxu0 0
        %916 = vmatpush2.bf16.msra.mxu0 0
        %917 = vmatprep.subr.bf16.mxu0 0
        %918 = vmatpush2.bf16.msra.mxu0 0
        %919 = vmatprep.subr.bf16.mxu0 0
        %920 = vmatpush2.bf16.msra.mxu0 0
        %921 = vmatprep.subr.bf16.mxu0 0
        %922 = vmatpush2.bf16.msra.mxu0 0
        %923 = vmatprep.mubr.bf16.mxu0 0
        %924 = vmatmul.mubr.bf16.gmra.mxu0 %v868
        %v925 = vpop.f32.mrf.mxu0
        %v926 = vadd.f32 0.0, %v925
        %v927 = vpop.f32.mrf.mxu0
        %v928 = vadd.f32 0.0, %v927
        %v929 = vpop.f32.mrf.mxu0
        %v930 = vadd.f32 0.0, %v929
        %v931 = vpop.f32.mrf.mxu0
        %v932 = vadd.f32 0.0, %v931
        %933 = vmatprep.mubr.bf16.mxu0 0
        %934 = vmatmul.mubr.bf16.gmra.mxu0 %v871
        %v935 = vpop.f32.mrf.mxu0
        %v936 = vadd.f32 0.0, %v935
        %v937 = vpop.f32.mrf.mxu0
        %v938 = vadd.f32 0.0, %v937
        %v939 = vpop.f32.mrf.mxu0
        %v940 = vadd.f32 0.0, %v939
        %v941 = vpop.f32.mrf.mxu0
        %v942 = vadd.f32 0.0, %v941
        %943 = vmatprep.mubr.bf16.mxu0 0
        %944 = vmatmul.mubr.bf16.gmra.mxu0 %v874
        %v945 = vpop.f32.mrf.mxu0
        %v946 = vadd.f32 0.0, %v945
        %v947 = vpop.f32.mrf.mxu0
        %v948 = vadd.f32 0.0, %v947
        %v949 = vpop.f32.mrf.mxu0
        %v950 = vadd.f32 0.0, %v949
        %v951 = vpop.f32.mrf.mxu0
        %v952 = vadd.f32 0.0, %v951
        %953 = vmatprep.mubr.bf16.mxu0 0
        %954 = vmatmul.mubr.bf16.gmra.mxu0 %v877
        %v955 = vpop.f32.mrf.mxu0
        %v956 = vadd.f32 0.0, %v955
        %v957 = vpop.f32.mrf.mxu0
        %v958 = vadd.f32 0.0, %v957
        %v959 = vpop.f32.mrf.mxu0
        %v960 = vadd.f32 0.0, %v959
        %v961 = vpop.f32.mrf.mxu0
        %v962 = vadd.f32 0.0, %v961
        %963 = vmatprep.mubr.bf16.mxu0 0
        %964 = vmatmul.mubr.bf16.gmra.mxu0 %v880
        %v965 = vpop.f32.mrf.mxu0
        %v966 = vadd.f32 0.0, %v965
        %v967 = vpop.f32.mrf.mxu0
        %v968 = vadd.f32 0.0, %v967
        %v969 = vpop.f32.mrf.mxu0
        %v970 = vadd.f32 0.0, %v969
        %v971 = vpop.f32.mrf.mxu0
        %v972 = vadd.f32 0.0, %v971
        %973 = vmatprep.mubr.bf16.mxu0 0
        %974 = vmatmul.mubr.bf16.gmra.mxu0 %v883
        %v975 = vpop.f32.mrf.mxu0
        %v976 = vadd.f32 0.0, %v975
        %v977 = vpop.f32.mrf.mxu0
        %v978 = vadd.f32 0.0, %v977
        %v979 = vpop.f32.mrf.mxu0
        %v980 = vadd.f32 0.0, %v979
        %v981 = vpop.f32.mrf.mxu0
        %v982 = vadd.f32 0.0, %v981
        %983 = vmatprep.mubr.bf16.mxu0 0
        %984 = vmatmul.mubr.bf16.gmra.mxu0 %v886
        %v985 = vpop.f32.mrf.mxu0
        %v986 = vadd.f32 0.0, %v985
        %v987 = vpop.f32.mrf.mxu0
        %v988 = vadd.f32 0.0, %v987
        %v989 = vpop.f32.mrf.mxu0
        %v990 = vadd.f32 0.0, %v989
        %v991 = vpop.f32.mrf.mxu0
        %v992 = vadd.f32 0.0, %v991
        %993 = vmatprep.mubr.bf16.mxu0 0
        %994 = vmatmul.mubr.bf16.gmra.mxu0 %v889
        %v995 = vpop.f32.mrf.mxu0
        %v996 = vadd.f32 0.0, %v995
        %v997 = vpop.f32.mrf.mxu0
        %v998 = vadd.f32 0.0, %v997
        %v999 = vpop.f32.mrf.mxu0
        %v1000 = vadd.f32 0.0, %v999
        %v1001 = vpop.f32.mrf.mxu0
        %v1002 = vadd.f32 0.0, %v1001
        %1003 = vdwg.mxu0
        %v1004 = vpack.c.bf16 %v930, %v926
        %v1005 = vpack.c.bf16 %v940, %v936
        %v1006 = vpack.c.bf16 %v932, %v928
        %v1007 = vpack.c.bf16 %v942, %v938
        %1010 = vrot.lane.b32.xlu0 %v1004, 64
        %v1011 = vpop.permute.xlu0 %1010
        %1012 = vrot.lane.b32.xlu0 %v1005, 64
        %v1013 = vpop.permute.xlu0 %1012
        %vm1014 = vcmask 130048
        %v1016 = vsel %vm1014, %v1004, 0
        %v1019 = vsel %vm1014, %v1005, 0
        %v1022 = vsel %vm1014, %v1011, 0
        %v1025 = vsel %vm1014, %v1013, 0
        %1027 = vmatprep.subr.bf16.mxu0 0
        %1028 = vmatpush1.bf16.xpose.msra.mxu0 0
        %1029 = vmatprep.subr.bf16.mxu0 0
        %1030 = vmatpush1.bf16.xpose.msra.mxu0 0
        %1031 = vmatprep.subr.bf16.mxu0 0
        %1032 = vmatpush1.bf16.xpose.msra.mxu0 0
        %1033 = vmatprep.subr.bf16.mxu0 0
        %1034 = vmatpush1.bf16.xpose.msra.mxu0 0
        %1035 = vmatprep.subr.bf16.mxu0 0
        %1036 = vmatpush1.bf16.xpose.msra.mxu0 0
        %1037 = vmatprep.subr.bf16.mxu0 0
        %1038 = vmatpush1.bf16.xpose.msra.mxu0 0
        %1039 = vmatprep.subr.bf16.mxu0 0
        %1040 = vmatpush1.bf16.xpose.msra.mxu0 %v1025
        %1041 = vmatprep.subr.bf16.mxu0 0
        %1042 = vmatpush1.bf16.xpose.msra.mxu0 %v1022
        %1043 = vmatprep.subr.bf16.mxu0 0
        %1044 = vmatpush2.bf16.xpose.msra.mxu0 0
        %1045 = vmatprep.subr.bf16.mxu0 0
        %1046 = vmatpush2.bf16.xpose.msra.mxu0 0
        %1047 = vmatprep.subr.bf16.mxu0 0
        %1048 = vmatpush2.bf16.xpose.msra.mxu0 0
        %1049 = vmatprep.subr.bf16.mxu0 0
        %1050 = vmatpush2.bf16.xpose.msra.mxu0 0
        %1051 = vmatprep.subr.bf16.mxu0 0
        %1052 = vmatpush2.bf16.xpose.msra.mxu0 0
        %1053 = vmatprep.subr.bf16.mxu0 0
        %1054 = vmatpush2.bf16.xpose.msra.mxu0 0
        %1055 = vmatprep.subr.bf16.mxu0 0
        %1056 = vmatpush2.bf16.xpose.msra.mxu0 0
        %1057 = vmatprep.subr.bf16.mxu0 0
        %1058 = vmatpush2.bf16.xpose.msra.mxu0 0
        %1059 = vmatprep.mubr.bf16.mxu0 0
        %1060 = vmatmul.mubr.bf16.gmra.mxu0 %v1016
        %v1061 = vpop.f32.mrf.mxu0
        %v1062 = vadd.f32 0.0, %v1061
        %v1063 = vpop.f32.mrf.mxu0
        %v1064 = vpop.f32.mrf.mxu0
        %v1065 = vadd.f32 0.0, %v1064
        %v1066 = vpop.f32.mrf.mxu0
        %1067 = vmatprep.mubr.bf16.mxu0 0
        %1068 = vmatmul.mubr.bf16.gmra.mxu0 %v1019
        %v1069 = vpop.f32.mrf.mxu0
        %v1070 = vadd.f32 0.0, %v1069
        %v1071 = vpop.f32.mrf.mxu0
        %v1072 = vpop.f32.mrf.mxu0
        %v1073 = vadd.f32 0.0, %v1072
        %v1074 = vpop.f32.mrf.mxu0
        %1075 = vdwg.mxu0
        %1076 = vrot.lane.b32.xlu0 %v1004, 112
        %v1077 = vpop.permute.xlu0 %1076
        %1078 = vrot.lane.b32.xlu0 %v1005, 112
        %v1079 = vpop.permute.xlu0 %1078
        %1080 = vrot.lane.b32.xlu0 %v1004, 48
        %v1081 = vpop.permute.xlu0 %1080
        %1082 = vrot.lane.b32.xlu0 %v1005, 48
        %v1083 = vpop.permute.xlu0 %1082
        %v1085 = vsel %vm1014, %v1077, 0
        %v1088 = vsel %vm1014, %v1079, 0
        %v1091 = vsel %vm1014, %v1081, 0
        %v1094 = vsel %vm1014, %v1083, 0
        %1096 = vmatprep.subr.bf16.mxu0 0
        %1097 = vmatpush1.bf16.xpose.msra.mxu0 0
        %1098 = vmatprep.subr.bf16.mxu0 0
        %1099 = vmatpush1.bf16.xpose.msra.mxu0 0
        %1100 = vmatprep.subr.bf16.mxu0 0
        %1101 = vmatpush1.bf16.xpose.msra.mxu0 0
        %1102 = vmatprep.subr.bf16.mxu0 0
        %1103 = vmatpush1.bf16.xpose.msra.mxu0 0
        %1104 = vmatprep.subr.bf16.mxu0 0
        %1105 = vmatpush1.bf16.xpose.msra.mxu0 0
        %1106 = vmatprep.subr.bf16.mxu0 0
        %1107 = vmatpush1.bf16.xpose.msra.mxu0 0
        %1108 = vmatprep.subr.bf16.mxu0 0
        %1109 = vmatpush1.bf16.xpose.msra.mxu0 %v1094
        %1110 = vmatprep.subr.bf16.mxu0 0
        %1111 = vmatpush1.bf16.xpose.msra.mxu0 %v1091
        %1112 = vmatprep.subr.bf16.mxu0 0
        %1113 = vmatpush2.bf16.xpose.msra.mxu0 0
        %1114 = vmatprep.subr.bf16.mxu0 0
        %1115 = vmatpush2.bf16.xpose.msra.mxu0 0
        %1116 = vmatprep.subr.bf16.mxu0 0
        %1117 = vmatpush2.bf16.xpose.msra.mxu0 0
        %1118 = vmatprep.subr.bf16.mxu0 0
        %1119 = vmatpush2.bf16.xpose.msra.mxu0 0
        %1120 = vmatprep.subr.bf16.mxu0 0
        %1121 = vmatpush2.bf16.xpose.msra.mxu0 0
        %1122 = vmatprep.subr.bf16.mxu0 0
        %1123 = vmatpush2.bf16.xpose.msra.mxu0 0
        %1124 = vmatprep.subr.bf16.mxu0 0
        %1125 = vmatpush2.bf16.xpose.msra.mxu0 0
        %1126 = vmatprep.subr.bf16.mxu0 0
        %1127 = vmatpush2.bf16.xpose.msra.mxu0 0
        %1128 = vmatprep.mubr.bf16.mxu0 0
        %1129 = vmatmul.mubr.bf16.gmra.mxu0 %v1085
        %v1130 = vpop.f32.mrf.mxu0
        %v1131 = vadd.f32 0.0, %v1130
        %v1132 = vpop.f32.mrf.mxu0
        %v1133 = vpop.f32.mrf.mxu0
        %v1134 = vadd.f32 0.0, %v1133
        %v1135 = vpop.f32.mrf.mxu0
        %1136 = vmatprep.mubr.bf16.mxu0 0
        %1137 = vmatmul.mubr.bf16.gmra.mxu0 %v1088
        %v1138 = vpop.f32.mrf.mxu0
        %v1139 = vadd.f32 0.0, %v1138
        %v1140 = vpop.f32.mrf.mxu0
        %v1141 = vpop.f32.mrf.mxu0
        %v1142 = vadd.f32 0.0, %v1141
        %v1143 = vpop.f32.mrf.mxu0
        %1144 = vdwg.mxu0
        %1145 = vrot.lane.b32.xlu0 %v1004, 96
        %v1146 = vpop.permute.xlu0 %1145
        %1147 = vrot.lane.b32.xlu0 %v1005, 96
        %v1148 = vpop.permute.xlu0 %1147
        %1149 = vrot.lane.b32.xlu0 %v1004, 32
        %v1150 = vpop.permute.xlu0 %1149
        %1151 = vrot.lane.b32.xlu0 %v1005, 32
        %v1152 = vpop.permute.xlu0 %1151
        %v1154 = vsel %vm1014, %v1146, 0
        %v1157 = vsel %vm1014, %v1148, 0
        %v1160 = vsel %vm1014, %v1150, 0
        %v1163 = vsel %vm1014, %v1152, 0
        %1165 = vmatprep.subr.bf16.mxu0 0
        %1166 = vmatpush1.bf16.xpose.msra.mxu0 0
        %1167 = vmatprep.subr.bf16.mxu0 0
        %1168 = vmatpush1.bf16.xpose.msra.mxu0 0
        %1169 = vmatprep.subr.bf16.mxu0 0
        %1170 = vmatpush1.bf16.xpose.msra.mxu0 0
        %1171 = vmatprep.subr.bf16.mxu0 0
        %1172 = vmatpush1.bf16.xpose.msra.mxu0 0
        %1173 = vmatprep.subr.bf16.mxu0 0
        %1174 = vmatpush1.bf16.xpose.msra.mxu0 0
        %1175 = vmatprep.subr.bf16.mxu0 0
        %1176 = vmatpush1.bf16.xpose.msra.mxu0 0
        %1177 = vmatprep.subr.bf16.mxu0 0
        %1178 = vmatpush1.bf16.xpose.msra.mxu0 %v1163
        %1179 = vmatprep.subr.bf16.mxu0 0
        %1180 = vmatpush1.bf16.xpose.msra.mxu0 %v1160
        %1181 = vmatprep.subr.bf16.mxu0 0
        %1182 = vmatpush2.bf16.xpose.msra.mxu0 0
        %1183 = vmatprep.subr.bf16.mxu0 0
        %1184 = vmatpush2.bf16.xpose.msra.mxu0 0
        %1185 = vmatprep.subr.bf16.mxu0 0
        %1186 = vmatpush2.bf16.xpose.msra.mxu0 0
        %1187 = vmatprep.subr.bf16.mxu0 0
        %1188 = vmatpush2.bf16.xpose.msra.mxu0 0
        %1189 = vmatprep.subr.bf16.mxu0 0
        %1190 = vmatpush2.bf16.xpose.msra.mxu0 0
        %1191 = vmatprep.subr.bf16.mxu0 0
        %1192 = vmatpush2.bf16.xpose.msra.mxu0 0
        %1193 = vmatprep.subr.bf16.mxu0 0
        %1194 = vmatpush2.bf16.xpose.msra.mxu0 0
        %1195 = vmatprep.subr.bf16.mxu0 0
        %1196 = vmatpush2.bf16.xpose.msra.mxu0 0
        %1197 = vmatprep.mubr.bf16.mxu0 0
        %1198 = vmatmul.mubr.bf16.gmra.mxu0 %v1154
        %v1199 = vpop.f32.mrf.mxu0
        %v1200 = vadd.f32 0.0, %v1199
        %v1201 = vpop.f32.mrf.mxu0
        %v1202 = vpop.f32.mrf.mxu0
        %v1203 = vadd.f32 0.0, %v1202
        %v1204 = vpop.f32.mrf.mxu0
        %1205 = vmatprep.mubr.bf16.mxu0 0
        %1206 = vmatmul.mubr.bf16.gmra.mxu0 %v1157
        %v1207 = vpop.f32.mrf.mxu0
        %v1208 = vadd.f32 0.0, %v1207
        %v1209 = vpop.f32.mrf.mxu0
        %v1210 = vpop.f32.mrf.mxu0
        %v1211 = vadd.f32 0.0, %v1210
        %v1212 = vpop.f32.mrf.mxu0
        %1213 = vdwg.mxu0
        %1214 = vrot.lane.b32.xlu0 %v1004, 80
        %v1215 = vpop.permute.xlu0 %1214
        %1216 = vrot.lane.b32.xlu0 %v1005, 80
        %v1217 = vpop.permute.xlu0 %1216
        %1218 = vrot.lane.b32.xlu0 %v1004, 16
        %v1219 = vpop.permute.xlu0 %1218
        %1220 = vrot.lane.b32.xlu0 %v1005, 16
        %v1221 = vpop.permute.xlu0 %1220
        %v1223 = vsel %vm1014, %v1215, 0
        %v1226 = vsel %vm1014, %v1217, 0
        %v1229 = vsel %vm1014, %v1219, 0
        %v1232 = vsel %vm1014, %v1221, 0
        %1234 = vmatprep.subr.bf16.mxu0 0
        %1235 = vmatpush1.bf16.xpose.msra.mxu0 0
        %1236 = vmatprep.subr.bf16.mxu0 0
        %1237 = vmatpush1.bf16.xpose.msra.mxu0 0
        %1238 = vmatprep.subr.bf16.mxu0 0
        %1239 = vmatpush1.bf16.xpose.msra.mxu0 0
        %1240 = vmatprep.subr.bf16.mxu0 0
        %1241 = vmatpush1.bf16.xpose.msra.mxu0 0
        %1242 = vmatprep.subr.bf16.mxu0 0
        %1243 = vmatpush1.bf16.xpose.msra.mxu0 0
        %1244 = vmatprep.subr.bf16.mxu0 0
        %1245 = vmatpush1.bf16.xpose.msra.mxu0 0
        %1246 = vmatprep.subr.bf16.mxu0 0
        %1247 = vmatpush1.bf16.xpose.msra.mxu0 %v1232
        %1248 = vmatprep.subr.bf16.mxu0 0
        %1249 = vmatpush1.bf16.xpose.msra.mxu0 %v1229
        %1250 = vmatprep.subr.bf16.mxu0 0
        %1251 = vmatpush2.bf16.xpose.msra.mxu0 0
        %1252 = vmatprep.subr.bf16.mxu0 0
        %1253 = vmatpush2.bf16.xpose.msra.mxu0 0
        %1254 = vmatprep.subr.bf16.mxu0 0
        %1255 = vmatpush2.bf16.xpose.msra.mxu0 0
        %1256 = vmatprep.subr.bf16.mxu0 0
        %1257 = vmatpush2.bf16.xpose.msra.mxu0 0
        %1258 = vmatprep.subr.bf16.mxu0 0
        %1259 = vmatpush2.bf16.xpose.msra.mxu0 0
        %1260 = vmatprep.subr.bf16.mxu0 0
        %1261 = vmatpush2.bf16.xpose.msra.mxu0 0
        %1262 = vmatprep.subr.bf16.mxu0 0
        %1263 = vmatpush2.bf16.xpose.msra.mxu0 0
        %1264 = vmatprep.subr.bf16.mxu0 0
        %1265 = vmatpush2.bf16.xpose.msra.mxu0 0
        %1266 = vmatprep.mubr.bf16.mxu0 0
        %1267 = vmatmul.mubr.bf16.gmra.mxu0 %v1223
        %v1268 = vpop.f32.mrf.mxu0
        %v1269 = vadd.f32 0.0, %v1268
        %v1270 = vpop.f32.mrf.mxu0
        %v1271 = vpop.f32.mrf.mxu0
        %v1272 = vadd.f32 0.0, %v1271
        %v1273 = vpop.f32.mrf.mxu0
        %1274 = vmatprep.mubr.bf16.mxu0 0
        %1275 = vmatmul.mubr.bf16.gmra.mxu0 %v1226
        %v1276 = vpop.f32.mrf.mxu0
        %v1277 = vadd.f32 0.0, %v1276
        %v1278 = vpop.f32.mrf.mxu0
        %v1279 = vpop.f32.mrf.mxu0
        %v1280 = vadd.f32 0.0, %v1279
        %v1281 = vpop.f32.mrf.mxu0
        %1282 = vdwg.mxu0
        %v1283 = vmul.f32 %v1062, 0.25
        %v1284 = vmul.f32 %v1065, 0.25
        %v1285 = vmul.f32 %v1070, 0.25
        %v1286 = vmul.f32 %v1073, 0.25
        %v1287 = vmul.f32 %v1131, 0.25
        %v1288 = vmul.f32 %v1134, 0.25
        %v1289 = vmul.f32 %v1139, 0.25
        %v1290 = vmul.f32 %v1142, 0.25
        %v1291 = vmul.f32 %v1200, 0.25
        %v1292 = vmul.f32 %v1203, 0.25
        %v1293 = vmul.f32 %v1208, 0.25
        %v1294 = vmul.f32 %v1211, 0.25
        %v1295 = vmul.f32 %v1269, 0.25
        %v1296 = vmul.f32 %v1272, 0.25
        %v1297 = vmul.f32 %v1277, 0.25
        %v1298 = vmul.f32 %v1280, 0.25
        %v1299 = vadd.f32 %v1283, %v551
        %v1300 = vadd.f32 %v1284, %v552
        %v1301 = vadd.f32 %v1285, %v553
        %v1302 = vadd.f32 %v1286, %v554
        %v1303 = vadd.f32 %v1287, %v551
        %v1304 = vadd.f32 %v1288, %v552
        %v1305 = vadd.f32 %v1289, %v553
        %v1306 = vadd.f32 %v1290, %v554
        %v1307 = vadd.f32 %v1291, %v551
        %v1308 = vadd.f32 %v1292, %v552
        %v1309 = vadd.f32 %v1293, %v553
        %v1310 = vadd.f32 %v1294, %v554
        %v1311 = vadd.f32 %v1295, %v551
        %v1312 = vadd.f32 %v1296, %v552
        %v1313 = vadd.f32 %v1297, %v553
        %v1314 = vadd.f32 %v1298, %v554
        %vm1315 = vcmask 261120
        %v1316 = vsel %vm1315, %v1299, -inf
        %1317 = vmax.xlane.f32.xlu0 %v1316
        %v1318 = vpop.xlane.xlu0 %1317
        %v1319 = vsel %vm1315, %v1300, -inf
        %1320 = vmax.xlane.f32.xlu0 %v1319
        %v1321 = vpop.xlane.xlu0 %1320
        %v1322 = vsel %vm1315, %v1301, -inf
        %1323 = vmax.xlane.f32.xlu0 %v1322
        %v1324 = vpop.xlane.xlu0 %1323
        %v1325 = vsel %vm1315, %v1302, -inf
        %1326 = vmax.xlane.f32.xlu0 %v1325
        %v1327 = vpop.xlane.xlu0 %1326
        %v1328 = vsel %vm1315, %v1303, -inf
        %1329 = vmax.xlane.f32.xlu0 %v1328
        %v1330 = vpop.xlane.xlu0 %1329
        %v1331 = vsel %vm1315, %v1304, -inf
        %1332 = vmax.xlane.f32.xlu0 %v1331
        %v1333 = vpop.xlane.xlu0 %1332
        %v1334 = vsel %vm1315, %v1305, -inf
        %1335 = vmax.xlane.f32.xlu0 %v1334
        %v1336 = vpop.xlane.xlu0 %1335
        %v1337 = vsel %vm1315, %v1306, -inf
        %1338 = vmax.xlane.f32.xlu0 %v1337
        %v1339 = vpop.xlane.xlu0 %1338
        %v1340 = vsel %vm1315, %v1307, -inf
        %1341 = vmax.xlane.f32.xlu0 %v1340
        %v1342 = vpop.xlane.xlu0 %1341
        %v1343 = vsel %vm1315, %v1308, -inf
        %1344 = vmax.xlane.f32.xlu0 %v1343
        %v1345 = vpop.xlane.xlu0 %1344
        %v1346 = vsel %vm1315, %v1309, -inf
        %1347 = vmax.xlane.f32.xlu0 %v1346
        %v1348 = vpop.xlane.xlu0 %1347
        %v1349 = vsel %vm1315, %v1310, -inf
        %1350 = vmax.xlane.f32.xlu0 %v1349
        %v1351 = vpop.xlane.xlu0 %1350
        %v1352 = vsel %vm1315, %v1311, -inf
        %1353 = vmax.xlane.f32.xlu0 %v1352
        %v1354 = vpop.xlane.xlu0 %1353
        %v1355 = vsel %vm1315, %v1312, -inf
        %1356 = vmax.xlane.f32.xlu0 %v1355
        %v1357 = vpop.xlane.xlu0 %1356
        %v1358 = vsel %vm1315, %v1313, -inf
        %1359 = vmax.xlane.f32.xlu0 %v1358
        %v1360 = vpop.xlane.xlu0 %1359
        %v1361 = vsel %vm1315, %v1314, -inf
        %1362 = vmax.xlane.f32.xlu0 %v1361
        %v1363 = vpop.xlane.xlu0 %1362
        %v1364 = vsub.f32 %v1299, %v1318
        %v1365 = vsub.f32 %v1300, %v1321
        %v1366 = vsub.f32 %v1301, %v1324
        %v1367 = vsub.f32 %v1302, %v1327
        %v1368 = vsub.f32 %v1303, %v1330
        %v1369 = vsub.f32 %v1304, %v1333
        %v1370 = vsub.f32 %v1305, %v1336
        %v1371 = vsub.f32 %v1306, %v1339
        %v1372 = vsub.f32 %v1307, %v1342
        %v1373 = vsub.f32 %v1308, %v1345
        %v1374 = vsub.f32 %v1309, %v1348
        %v1375 = vsub.f32 %v1310, %v1351
        %v1376 = vsub.f32 %v1311, %v1354
        %v1377 = vsub.f32 %v1312, %v1357
        %v1378 = vsub.f32 %v1313, %v1360
        %v1379 = vsub.f32 %v1314, %v1363
        %v1380 = vmul.f32 %v1364, 1.442695
        %v1381 = vpow.pop %v1380
        %v1382 = vmul.f32 %v1365, 1.442695
        %v1383 = vpow.pop %v1382
        %v1384 = vmul.f32 %v1366, 1.442695
        %v1385 = vpow.pop %v1384
        %v1386 = vmul.f32 %v1367, 1.442695
        %v1387 = vpow.pop %v1386
        %v1388 = vmul.f32 %v1368, 1.442695
        %v1389 = vpow.pop %v1388
        %v1390 = vmul.f32 %v1369, 1.442695
        %v1391 = vpow.pop %v1390
        %v1392 = vmul.f32 %v1370, 1.442695
        %v1393 = vpow.pop %v1392
        %v1394 = vmul.f32 %v1371, 1.442695
        %v1395 = vpow.pop %v1394
        %v1396 = vmul.f32 %v1372, 1.442695
        %v1397 = vpow.pop %v1396
        %v1398 = vmul.f32 %v1373, 1.442695
        %v1399 = vpow.pop %v1398
        %v1400 = vmul.f32 %v1374, 1.442695
        %v1401 = vpow.pop %v1400
        %v1402 = vmul.f32 %v1375, 1.442695
        %v1403 = vpow.pop %v1402
        %v1404 = vmul.f32 %v1376, 1.442695
        %v1405 = vpow.pop %v1404
        %v1406 = vmul.f32 %v1377, 1.442695
        %v1407 = vpow.pop %v1406
        %v1408 = vmul.f32 %v1378, 1.442695
        %v1409 = vpow.pop %v1408
        %v1410 = vmul.f32 %v1379, 1.442695
        %v1411 = vpow.pop %v1410
        %v1412 = vsel %vm1315, %v1381, 0.0
        %1413 = vadd.xlane.f32.xlu0 %v1412
        %v1414 = vpop.xlane.xlu0 %1413
        %v1415 = vsel %vm1315, %v1383, 0.0
        %1416 = vadd.xlane.f32.xlu0 %v1415
        %v1417 = vpop.xlane.xlu0 %1416
        %v1418 = vsel %vm1315, %v1385, 0.0
        %1419 = vadd.xlane.f32.xlu0 %v1418
        %v1420 = vpop.xlane.xlu0 %1419
        %v1421 = vsel %vm1315, %v1387, 0.0
        %1422 = vadd.xlane.f32.xlu0 %v1421
        %v1423 = vpop.xlane.xlu0 %1422
        %v1424 = vsel %vm1315, %v1389, 0.0
        %1425 = vadd.xlane.f32.xlu0 %v1424
        %v1426 = vpop.xlane.xlu0 %1425
        %v1427 = vsel %vm1315, %v1391, 0.0
        %1428 = vadd.xlane.f32.xlu0 %v1427
        %v1429 = vpop.xlane.xlu0 %1428
        %v1430 = vsel %vm1315, %v1393, 0.0
        %1431 = vadd.xlane.f32.xlu0 %v1430
        %v1432 = vpop.xlane.xlu0 %1431
        %v1433 = vsel %vm1315, %v1395, 0.0
        %1434 = vadd.xlane.f32.xlu0 %v1433
        %v1435 = vpop.xlane.xlu0 %1434
        %v1436 = vsel %vm1315, %v1397, 0.0
        %1437 = vadd.xlane.f32.xlu0 %v1436
        %v1438 = vpop.xlane.xlu0 %1437
        %v1439 = vsel %vm1315, %v1399, 0.0
        %1440 = vadd.xlane.f32.xlu0 %v1439
        %v1441 = vpop.xlane.xlu0 %1440
        %v1442 = vsel %vm1315, %v1401, 0.0
        %1443 = vadd.xlane.f32.xlu0 %v1442
        %v1444 = vpop.xlane.xlu0 %1443
        %v1445 = vsel %vm1315, %v1403, 0.0
        %1446 = vadd.xlane.f32.xlu0 %v1445
        %v1447 = vpop.xlane.xlu0 %1446
        %v1448 = vsel %vm1315, %v1405, 0.0
        %1449 = vadd.xlane.f32.xlu0 %v1448
        %v1450 = vpop.xlane.xlu0 %1449
        %v1451 = vsel %vm1315, %v1407, 0.0
        %1452 = vadd.xlane.f32.xlu0 %v1451
        %v1453 = vpop.xlane.xlu0 %1452
        %v1454 = vsel %vm1315, %v1409, 0.0
        %1455 = vadd.xlane.f32.xlu0 %v1454
        %v1456 = vpop.xlane.xlu0 %1455
        %v1457 = vsel %vm1315, %v1411, 0.0
        %1458 = vadd.xlane.f32.xlu0 %v1457
        %v1459 = vpop.xlane.xlu0 %1458
        %v1460 = vrcp.pop %v1414
        %v1461 = vrcp.pop %v1417
        %v1462 = vrcp.pop %v1420
        %v1463 = vrcp.pop %v1423
        %v1464 = vrcp.pop %v1426
        %v1465 = vrcp.pop %v1429
        %v1466 = vrcp.pop %v1432
        %v1467 = vrcp.pop %v1435
        %v1468 = vrcp.pop %v1438
        %v1469 = vrcp.pop %v1441
        %v1470 = vrcp.pop %v1444
        %v1471 = vrcp.pop %v1447
        %v1472 = vrcp.pop %v1450
        %v1473 = vrcp.pop %v1453
        %v1474 = vrcp.pop %v1456
        %v1475 = vrcp.pop %v1459
        %v1476 = vmul.f32 %v1381, %v1460
        %v1477 = vmul.f32 %v1383, %v1461
        %v1478 = vmul.f32 %v1385, %v1462
        %v1479 = vmul.f32 %v1387, %v1463
        %v1480 = vmul.f32 %v1389, %v1464
        %v1481 = vmul.f32 %v1391, %v1465
        %v1482 = vmul.f32 %v1393, %v1466
        %v1483 = vmul.f32 %v1395, %v1467
        %v1484 = vmul.f32 %v1397, %v1468
        %v1485 = vmul.f32 %v1399, %v1469
        %v1486 = vmul.f32 %v1401, %v1470
        %v1487 = vmul.f32 %v1403, %v1471
        %v1488 = vmul.f32 %v1405, %v1472
        %v1489 = vmul.f32 %v1407, %v1473
        %v1490 = vmul.f32 %v1409, %v1474
        %v1491 = vmul.f32 %v1411, %v1475
        %v1492 = vpack.c.bf16 %v1477, %v1476
        %v1493 = vpack.c.bf16 %v1479, %v1478
        %v1494 = vpack.c.bf16 %v1481, %v1480
        %v1495 = vpack.c.bf16 %v1483, %v1482
        %v1496 = vpack.c.bf16 %v1485, %v1484
        %v1497 = vpack.c.bf16 %v1487, %v1486
        %v1498 = vpack.c.bf16 %v1489, %v1488
        %v1499 = vpack.c.bf16 %v1491, %v1490
        %v1501 = vsel %vm1315, %v1492, 0
        %v1504 = vsel %vm1315, %v1493, 0
        %1506 = vmatprep.subr.bf16.mxu0 0
        %1507 = vmatpush1.bf16.msra.mxu0 0
        %1508 = vmatprep.subr.bf16.mxu0 0
        %1509 = vmatpush1.bf16.msra.mxu0 0
        %1510 = vmatprep.subr.bf16.mxu0 0
        %1511 = vmatpush1.bf16.msra.mxu0 0
        %1512 = vmatprep.subr.bf16.mxu0 0
        %1513 = vmatpush1.bf16.msra.mxu0 0
        %1514 = vmatprep.subr.bf16.mxu0 0
        %1515 = vmatpush1.bf16.msra.mxu0 0
        %1516 = vmatprep.subr.bf16.mxu0 0
        %1517 = vmatpush1.bf16.msra.mxu0 0
        %1518 = vmatprep.subr.bf16.mxu0 0
        %1519 = vmatpush1.bf16.msra.mxu0 %v1007
        %1520 = vmatprep.subr.bf16.mxu0 0
        %1521 = vmatpush1.bf16.msra.mxu0 %v1006
        %1522 = vmatprep.subr.bf16.mxu0 0
        %1523 = vmatpush2.bf16.msra.mxu0 0
        %1524 = vmatprep.subr.bf16.mxu0 0
        %1525 = vmatpush2.bf16.msra.mxu0 0
        %1526 = vmatprep.subr.bf16.mxu0 0
        %1527 = vmatpush2.bf16.msra.mxu0 0
        %1528 = vmatprep.subr.bf16.mxu0 0
        %1529 = vmatpush2.bf16.msra.mxu0 0
        %1530 = vmatprep.subr.bf16.mxu0 0
        %1531 = vmatpush2.bf16.msra.mxu0 0
        %1532 = vmatprep.subr.bf16.mxu0 0
        %1533 = vmatpush2.bf16.msra.mxu0 0
        %1534 = vmatprep.subr.bf16.mxu0 0
        %1535 = vmatpush2.bf16.msra.mxu0 0
        %1536 = vmatprep.subr.bf16.mxu0 0
        %1537 = vmatpush2.bf16.msra.mxu0 0
        %1538 = vmatprep.mubr.bf16.mxu0 0
        %1539 = vmatmul.mubr.bf16.gmra.mxu0 %v1501
        %v1540 = vpop.f32.mrf.mxu0
        %v1541 = vadd.f32 0.0, %v1540
        %v1542 = vpop.f32.mrf.mxu0
        %v1543 = vpop.f32.mrf.mxu0
        %v1544 = vadd.f32 0.0, %v1543
        %v1545 = vpop.f32.mrf.mxu0
        %1546 = vmatprep.mubr.bf16.mxu0 0
        %1547 = vmatmul.mubr.bf16.gmra.mxu0 %v1504
        %v1548 = vpop.f32.mrf.mxu0
        %v1549 = vadd.f32 0.0, %v1548
        %v1550 = vpop.f32.mrf.mxu0
        %v1551 = vpop.f32.mrf.mxu0
        %v1552 = vadd.f32 0.0, %v1551
        %v1553 = vpop.f32.mrf.mxu0
        %1554 = vdwg.mxu0
        %1557 = vrot.lane.b32.xlu0 %v1006, 112
        %v1558 = vpop.permute.xlu0 %1557
        %1559 = vrot.lane.b32.xlu0 %v1007, 112
        %v1560 = vpop.permute.xlu0 %1559
        %v1564 = vsel %vm1315, %v1494, 0
        %v1567 = vsel %vm1315, %v1495, 0
        %1569 = vmatprep.subr.bf16.mxu0 0
        %1570 = vmatpush1.bf16.msra.mxu0 0
        %1571 = vmatprep.subr.bf16.mxu0 0
        %1572 = vmatpush1.bf16.msra.mxu0 0
        %1573 = vmatprep.subr.bf16.mxu0 0
        %1574 = vmatpush1.bf16.msra.mxu0 0
        %1575 = vmatprep.subr.bf16.mxu0 0
        %1576 = vmatpush1.bf16.msra.mxu0 0
        %1577 = vmatprep.subr.bf16.mxu0 0
        %1578 = vmatpush1.bf16.msra.mxu0 0
        %1579 = vmatprep.subr.bf16.mxu0 0
        %1580 = vmatpush1.bf16.msra.mxu0 0
        %1581 = vmatprep.subr.bf16.mxu0 0
        %1582 = vmatpush1.bf16.msra.mxu0 %v1560
        %1583 = vmatprep.subr.bf16.mxu0 0
        %1584 = vmatpush1.bf16.msra.mxu0 %v1558
        %1585 = vmatprep.subr.bf16.mxu0 0
        %1586 = vmatpush2.bf16.msra.mxu0 0
        %1587 = vmatprep.subr.bf16.mxu0 0
        %1588 = vmatpush2.bf16.msra.mxu0 0
        %1589 = vmatprep.subr.bf16.mxu0 0
        %1590 = vmatpush2.bf16.msra.mxu0 0
        %1591 = vmatprep.subr.bf16.mxu0 0
        %1592 = vmatpush2.bf16.msra.mxu0 0
        %1593 = vmatprep.subr.bf16.mxu0 0
        %1594 = vmatpush2.bf16.msra.mxu0 0
        %1595 = vmatprep.subr.bf16.mxu0 0
        %1596 = vmatpush2.bf16.msra.mxu0 0
        %1597 = vmatprep.subr.bf16.mxu0 0
        %1598 = vmatpush2.bf16.msra.mxu0 0
        %1599 = vmatprep.subr.bf16.mxu0 0
        %1600 = vmatpush2.bf16.msra.mxu0 0
        %1601 = vmatprep.mubr.bf16.mxu0 0
        %1602 = vmatmul.mubr.bf16.gmra.mxu0 %v1564
        %v1603 = vpop.f32.mrf.mxu0
        %v1604 = vadd.f32 0.0, %v1603
        %v1605 = vpop.f32.mrf.mxu0
        %v1606 = vpop.f32.mrf.mxu0
        %v1607 = vadd.f32 0.0, %v1606
        %v1608 = vpop.f32.mrf.mxu0
        %1609 = vmatprep.mubr.bf16.mxu0 0
        %1610 = vmatmul.mubr.bf16.gmra.mxu0 %v1567
        %v1611 = vpop.f32.mrf.mxu0
        %v1612 = vadd.f32 0.0, %v1611
        %v1613 = vpop.f32.mrf.mxu0
        %v1614 = vpop.f32.mrf.mxu0
        %v1615 = vadd.f32 0.0, %v1614
        %v1616 = vpop.f32.mrf.mxu0
        %1617 = vdwg.mxu0
        %1618 = vrot.lane.b32.xlu0 %v1006, 96
        %v1619 = vpop.permute.xlu0 %1618
        %1620 = vrot.lane.b32.xlu0 %v1007, 96
        %v1621 = vpop.permute.xlu0 %1620
        %v1625 = vsel %vm1315, %v1496, 0
        %v1628 = vsel %vm1315, %v1497, 0
        %1630 = vmatprep.subr.bf16.mxu0 0
        %1631 = vmatpush1.bf16.msra.mxu0 0
        %1632 = vmatprep.subr.bf16.mxu0 0
        %1633 = vmatpush1.bf16.msra.mxu0 0
        %1634 = vmatprep.subr.bf16.mxu0 0
        %1635 = vmatpush1.bf16.msra.mxu0 0
        %1636 = vmatprep.subr.bf16.mxu0 0
        %1637 = vmatpush1.bf16.msra.mxu0 0
        %1638 = vmatprep.subr.bf16.mxu0 0
        %1639 = vmatpush1.bf16.msra.mxu0 0
        %1640 = vmatprep.subr.bf16.mxu0 0
        %1641 = vmatpush1.bf16.msra.mxu0 0
        %1642 = vmatprep.subr.bf16.mxu0 0
        %1643 = vmatpush1.bf16.msra.mxu0 %v1621
        %1644 = vmatprep.subr.bf16.mxu0 0
        %1645 = vmatpush1.bf16.msra.mxu0 %v1619
        %1646 = vmatprep.subr.bf16.mxu0 0
        %1647 = vmatpush2.bf16.msra.mxu0 0
        %1648 = vmatprep.subr.bf16.mxu0 0
        %1649 = vmatpush2.bf16.msra.mxu0 0
        %1650 = vmatprep.subr.bf16.mxu0 0
        %1651 = vmatpush2.bf16.msra.mxu0 0
        %1652 = vmatprep.subr.bf16.mxu0 0
        %1653 = vmatpush2.bf16.msra.mxu0 0
        %1654 = vmatprep.subr.bf16.mxu0 0
        %1655 = vmatpush2.bf16.msra.mxu0 0
        %1656 = vmatprep.subr.bf16.mxu0 0
        %1657 = vmatpush2.bf16.msra.mxu0 0
        %1658 = vmatprep.subr.bf16.mxu0 0
        %1659 = vmatpush2.bf16.msra.mxu0 0
        %1660 = vmatprep.subr.bf16.mxu0 0
        %1661 = vmatpush2.bf16.msra.mxu0 0
        %1662 = vmatprep.mubr.bf16.mxu0 0
        %1663 = vmatmul.mubr.bf16.gmra.mxu0 %v1625
        %v1664 = vpop.f32.mrf.mxu0
        %v1665 = vadd.f32 0.0, %v1664
        %v1666 = vpop.f32.mrf.mxu0
        %v1667 = vpop.f32.mrf.mxu0
        %v1668 = vadd.f32 0.0, %v1667
        %v1669 = vpop.f32.mrf.mxu0
        %1670 = vmatprep.mubr.bf16.mxu0 0
        %1671 = vmatmul.mubr.bf16.gmra.mxu0 %v1628
        %v1672 = vpop.f32.mrf.mxu0
        %v1673 = vadd.f32 0.0, %v1672
        %v1674 = vpop.f32.mrf.mxu0
        %v1675 = vpop.f32.mrf.mxu0
        %v1676 = vadd.f32 0.0, %v1675
        %v1677 = vpop.f32.mrf.mxu0
        %1678 = vdwg.mxu0
        %1679 = vrot.lane.b32.xlu0 %v1006, 80
        %v1680 = vpop.permute.xlu0 %1679
        %1681 = vrot.lane.b32.xlu0 %v1007, 80
        %v1682 = vpop.permute.xlu0 %1681
        %v1686 = vsel %vm1315, %v1498, 0
        %v1689 = vsel %vm1315, %v1499, 0
        %1691 = vmatprep.subr.bf16.mxu0 0
        %1692 = vmatpush1.bf16.msra.mxu0 0
        %1693 = vmatprep.subr.bf16.mxu0 0
        %1694 = vmatpush1.bf16.msra.mxu0 0
        %1695 = vmatprep.subr.bf16.mxu0 0
        %1696 = vmatpush1.bf16.msra.mxu0 0
        %1697 = vmatprep.subr.bf16.mxu0 0
        %1698 = vmatpush1.bf16.msra.mxu0 0
        %1699 = vmatprep.subr.bf16.mxu0 0
        %1700 = vmatpush1.bf16.msra.mxu0 0
        %1701 = vmatprep.subr.bf16.mxu0 0
        %1702 = vmatpush1.bf16.msra.mxu0 0
        %1703 = vmatprep.subr.bf16.mxu0 0
        %1704 = vmatpush1.bf16.msra.mxu0 %v1682
        %1705 = vmatprep.subr.bf16.mxu0 0
        %1706 = vmatpush1.bf16.msra.mxu0 %v1680
        %1707 = vmatprep.subr.bf16.mxu0 0
        %1708 = vmatpush2.bf16.msra.mxu0 0
        %1709 = vmatprep.subr.bf16.mxu0 0
        %1710 = vmatpush2.bf16.msra.mxu0 0
        %1711 = vmatprep.subr.bf16.mxu0 0
        %1712 = vmatpush2.bf16.msra.mxu0 0
        %1713 = vmatprep.subr.bf16.mxu0 0
        %1714 = vmatpush2.bf16.msra.mxu0 0
        %1715 = vmatprep.subr.bf16.mxu0 0
        %1716 = vmatpush2.bf16.msra.mxu0 0
        %1717 = vmatprep.subr.bf16.mxu0 0
        %1718 = vmatpush2.bf16.msra.mxu0 0
        %1719 = vmatprep.subr.bf16.mxu0 0
        %1720 = vmatpush2.bf16.msra.mxu0 0
        %1721 = vmatprep.subr.bf16.mxu0 0
        %1722 = vmatpush2.bf16.msra.mxu0 0
        %1723 = vmatprep.mubr.bf16.mxu0 0
        %1724 = vmatmul.mubr.bf16.gmra.mxu0 %v1686
        %v1725 = vpop.f32.mrf.mxu0
        %v1726 = vadd.f32 0.0, %v1725
        %v1727 = vpop.f32.mrf.mxu0
        %v1728 = vpop.f32.mrf.mxu0
        %v1729 = vadd.f32 0.0, %v1728
        %v1730 = vpop.f32.mrf.mxu0
        %1731 = vmatprep.mubr.bf16.mxu0 0
        %1732 = vmatmul.mubr.bf16.gmra.mxu0 %v1689
        %v1733 = vpop.f32.mrf.mxu0
        %v1734 = vadd.f32 0.0, %v1733
        %v1735 = vpop.f32.mrf.mxu0
        %v1736 = vpop.f32.mrf.mxu0
        %v1737 = vadd.f32 0.0, %v1736
        %v1738 = vpop.f32.mrf.mxu0
        %1739 = vdwg.mxu0
        %1744 = vrot.lane.b32.xlu0 %v1604, 16
        %v1745 = vpop.permute.xlu0 %1744
        %1746 = vrot.lane.b32.xlu0 %v1607, 16
        %v1747 = vpop.permute.xlu0 %1746
        %1748 = vrot.lane.b32.xlu0 %v1612, 16
        %v1749 = vpop.permute.xlu0 %1748
        %1750 = vrot.lane.b32.xlu0 %v1615, 16
        %v1751 = vpop.permute.xlu0 %1750
        %1760 = vrot.lane.b32.xlu0 %v1665, 32
        %v1761 = vpop.permute.xlu0 %1760
        %1762 = vrot.lane.b32.xlu0 %v1668, 32
        %v1763 = vpop.permute.xlu0 %1762
        %1764 = vrot.lane.b32.xlu0 %v1673, 32
        %v1765 = vpop.permute.xlu0 %1764
        %1766 = vrot.lane.b32.xlu0 %v1676, 32
        %v1767 = vpop.permute.xlu0 %1766
        %1776 = vrot.lane.b32.xlu0 %v1726, 48
        %v1777 = vpop.permute.xlu0 %1776
        %1778 = vrot.lane.b32.xlu0 %v1729, 48
        %v1779 = vpop.permute.xlu0 %1778
        %1780 = vrot.lane.b32.xlu0 %v1734, 48
        %v1781 = vpop.permute.xlu0 %1780
        %1782 = vrot.lane.b32.xlu0 %v1737, 48
        %v1783 = vpop.permute.xlu0 %1782
        %v1788 = vsel %vm1014, %v1541, %v1745
        %v1789 = vsel %vm1014, %v1544, %v1747
        %v1790 = vsel %vm1014, %v1549, %v1749
        %v1791 = vsel %vm1014, %v1552, %v1751
        %v1792 = vsel %vm1315, %v1788, %v1761
        %v1793 = vsel %vm1315, %v1789, %v1763
        %v1794 = vsel %vm1315, %v1790, %v1765
        %v1795 = vsel %vm1315, %v1791, %v1767
        %vm1796 = vcmask 392192
        %v1797 = vsel %vm1796, %v1792, %v1777
        %v1798 = vsel %vm1796, %v1793, %v1779
        %v1799 = vsel %vm1796, %v1794, %v1781
        %v1800 = vsel %vm1796, %v1795, %v1783
        %v1801 = vpack.c.bf16 %v950, %v946
        %v1802 = vpack.c.bf16 %v960, %v956
        %v1803 = vpack.c.bf16 %v952, %v948
        %v1804 = vpack.c.bf16 %v962, %v958
        %1807 = vrot.lane.b32.xlu0 %v1801, 64
        %v1808 = vpop.permute.xlu0 %1807
        %1809 = vrot.lane.b32.xlu0 %v1802, 64
        %v1810 = vpop.permute.xlu0 %1809
        %v1812 = vsel %vm1014, %v1801, 0
        %v1815 = vsel %vm1014, %v1802, 0
        %v1818 = vsel %vm1014, %v1808, 0
        %v1821 = vsel %vm1014, %v1810, 0
        %1823 = vmatprep.subr.bf16.mxu0 0
        %1824 = vmatpush1.bf16.xpose.msra.mxu0 0
        %1825 = vmatprep.subr.bf16.mxu0 0
        %1826 = vmatpush1.bf16.xpose.msra.mxu0 0
        %1827 = vmatprep.subr.bf16.mxu0 0
        %1828 = vmatpush1.bf16.xpose.msra.mxu0 0
        %1829 = vmatprep.subr.bf16.mxu0 0
        %1830 = vmatpush1.bf16.xpose.msra.mxu0 0
        %1831 = vmatprep.subr.bf16.mxu0 0
        %1832 = vmatpush1.bf16.xpose.msra.mxu0 0
        %1833 = vmatprep.subr.bf16.mxu0 0
        %1834 = vmatpush1.bf16.xpose.msra.mxu0 0
        %1835 = vmatprep.subr.bf16.mxu0 0
        %1836 = vmatpush1.bf16.xpose.msra.mxu0 %v1821
        %1837 = vmatprep.subr.bf16.mxu0 0
        %1838 = vmatpush1.bf16.xpose.msra.mxu0 %v1818
        %1839 = vmatprep.subr.bf16.mxu0 0
        %1840 = vmatpush2.bf16.xpose.msra.mxu0 0
        %1841 = vmatprep.subr.bf16.mxu0 0
        %1842 = vmatpush2.bf16.xpose.msra.mxu0 0
        %1843 = vmatprep.subr.bf16.mxu0 0
        %1844 = vmatpush2.bf16.xpose.msra.mxu0 0
        %1845 = vmatprep.subr.bf16.mxu0 0
        %1846 = vmatpush2.bf16.xpose.msra.mxu0 0
        %1847 = vmatprep.subr.bf16.mxu0 0
        %1848 = vmatpush2.bf16.xpose.msra.mxu0 0
        %1849 = vmatprep.subr.bf16.mxu0 0
        %1850 = vmatpush2.bf16.xpose.msra.mxu0 0
        %1851 = vmatprep.subr.bf16.mxu0 0
        %1852 = vmatpush2.bf16.xpose.msra.mxu0 0
        %1853 = vmatprep.subr.bf16.mxu0 0
        %1854 = vmatpush2.bf16.xpose.msra.mxu0 0
        %1855 = vmatprep.mubr.bf16.mxu0 0
        %1856 = vmatmul.mubr.bf16.gmra.mxu0 %v1812
        %v1857 = vpop.f32.mrf.mxu0
        %v1858 = vadd.f32 0.0, %v1857
        %v1859 = vpop.f32.mrf.mxu0
        %v1860 = vpop.f32.mrf.mxu0
        %v1861 = vadd.f32 0.0, %v1860
        %v1862 = vpop.f32.mrf.mxu0
        %1863 = vmatprep.mubr.bf16.mxu0 0
        %1864 = vmatmul.mubr.bf16.gmra.mxu0 %v1815
        %v1865 = vpop.f32.mrf.mxu0
        %v1866 = vadd.f32 0.0, %v1865
        %v1867 = vpop.f32.mrf.mxu0
        %v1868 = vpop.f32.mrf.mxu0
        %v1869 = vadd.f32 0.0, %v1868
        %v1870 = vpop.f32.mrf.mxu0
        %1871 = vdwg.mxu0
        %1872 = vrot.lane.b32.xlu0 %v1801, 112
        %v1873 = vpop.permute.xlu0 %1872
        %1874 = vrot.lane.b32.xlu0 %v1802, 112
        %v1875 = vpop.permute.xlu0 %1874
        %1876 = vrot.lane.b32.xlu0 %v1801, 48
        %v1877 = vpop.permute.xlu0 %1876
        %1878 = vrot.lane.b32.xlu0 %v1802, 48
        %v1879 = vpop.permute.xlu0 %1878
        %v1881 = vsel %vm1014, %v1873, 0
        %v1884 = vsel %vm1014, %v1875, 0
        %v1887 = vsel %vm1014, %v1877, 0
        %v1890 = vsel %vm1014, %v1879, 0
        %1892 = vmatprep.subr.bf16.mxu0 0
        %1893 = vmatpush1.bf16.xpose.msra.mxu0 0
        %1894 = vmatprep.subr.bf16.mxu0 0
        %1895 = vmatpush1.bf16.xpose.msra.mxu0 0
        %1896 = vmatprep.subr.bf16.mxu0 0
        %1897 = vmatpush1.bf16.xpose.msra.mxu0 0
        %1898 = vmatprep.subr.bf16.mxu0 0
        %1899 = vmatpush1.bf16.xpose.msra.mxu0 0
        %1900 = vmatprep.subr.bf16.mxu0 0
        %1901 = vmatpush1.bf16.xpose.msra.mxu0 0
        %1902 = vmatprep.subr.bf16.mxu0 0
        %1903 = vmatpush1.bf16.xpose.msra.mxu0 0
        %1904 = vmatprep.subr.bf16.mxu0 0
        %1905 = vmatpush1.bf16.xpose.msra.mxu0 %v1890
        %1906 = vmatprep.subr.bf16.mxu0 0
        %1907 = vmatpush1.bf16.xpose.msra.mxu0 %v1887
        %1908 = vmatprep.subr.bf16.mxu0 0
        %1909 = vmatpush2.bf16.xpose.msra.mxu0 0
        %1910 = vmatprep.subr.bf16.mxu0 0
        %1911 = vmatpush2.bf16.xpose.msra.mxu0 0
        %1912 = vmatprep.subr.bf16.mxu0 0
        %1913 = vmatpush2.bf16.xpose.msra.mxu0 0
        %1914 = vmatprep.subr.bf16.mxu0 0
        %1915 = vmatpush2.bf16.xpose.msra.mxu0 0
        %1916 = vmatprep.subr.bf16.mxu0 0
        %1917 = vmatpush2.bf16.xpose.msra.mxu0 0
        %1918 = vmatprep.subr.bf16.mxu0 0
        %1919 = vmatpush2.bf16.xpose.msra.mxu0 0
        %1920 = vmatprep.subr.bf16.mxu0 0
        %1921 = vmatpush2.bf16.xpose.msra.mxu0 0
        %1922 = vmatprep.subr.bf16.mxu0 0
        %1923 = vmatpush2.bf16.xpose.msra.mxu0 0
        %1924 = vmatprep.mubr.bf16.mxu0 0
        %1925 = vmatmul.mubr.bf16.gmra.mxu0 %v1881
        %v1926 = vpop.f32.mrf.mxu0
        %v1927 = vadd.f32 0.0, %v1926
        %v1928 = vpop.f32.mrf.mxu0
        %v1929 = vpop.f32.mrf.mxu0
        %v1930 = vadd.f32 0.0, %v1929
        %v1931 = vpop.f32.mrf.mxu0
        %1932 = vmatprep.mubr.bf16.mxu0 0
        %1933 = vmatmul.mubr.bf16.gmra.mxu0 %v1884
        %v1934 = vpop.f32.mrf.mxu0
        %v1935 = vadd.f32 0.0, %v1934
        %v1936 = vpop.f32.mrf.mxu0
        %v1937 = vpop.f32.mrf.mxu0
        %v1938 = vadd.f32 0.0, %v1937
        %v1939 = vpop.f32.mrf.mxu0
        %1940 = vdwg.mxu0
        %1941 = vrot.lane.b32.xlu0 %v1801, 96
        %v1942 = vpop.permute.xlu0 %1941
        %1943 = vrot.lane.b32.xlu0 %v1802, 96
        %v1944 = vpop.permute.xlu0 %1943
        %1945 = vrot.lane.b32.xlu0 %v1801, 32
        %v1946 = vpop.permute.xlu0 %1945
        %1947 = vrot.lane.b32.xlu0 %v1802, 32
        %v1948 = vpop.permute.xlu0 %1947
        %v1950 = vsel %vm1014, %v1942, 0
        %v1953 = vsel %vm1014, %v1944, 0
        %v1956 = vsel %vm1014, %v1946, 0
        %v1959 = vsel %vm1014, %v1948, 0
        %1961 = vmatprep.subr.bf16.mxu0 0
        %1962 = vmatpush1.bf16.xpose.msra.mxu0 0
        %1963 = vmatprep.subr.bf16.mxu0 0
        %1964 = vmatpush1.bf16.xpose.msra.mxu0 0
        %1965 = vmatprep.subr.bf16.mxu0 0
        %1966 = vmatpush1.bf16.xpose.msra.mxu0 0
        %1967 = vmatprep.subr.bf16.mxu0 0
        %1968 = vmatpush1.bf16.xpose.msra.mxu0 0
        %1969 = vmatprep.subr.bf16.mxu0 0
        %1970 = vmatpush1.bf16.xpose.msra.mxu0 0
        %1971 = vmatprep.subr.bf16.mxu0 0
        %1972 = vmatpush1.bf16.xpose.msra.mxu0 0
        %1973 = vmatprep.subr.bf16.mxu0 0
        %1974 = vmatpush1.bf16.xpose.msra.mxu0 %v1959
        %1975 = vmatprep.subr.bf16.mxu0 0
        %1976 = vmatpush1.bf16.xpose.msra.mxu0 %v1956
        %1977 = vmatprep.subr.bf16.mxu0 0
        %1978 = vmatpush2.bf16.xpose.msra.mxu0 0
        %1979 = vmatprep.subr.bf16.mxu0 0
        %1980 = vmatpush2.bf16.xpose.msra.mxu0 0
        %1981 = vmatprep.subr.bf16.mxu0 0
        %1982 = vmatpush2.bf16.xpose.msra.mxu0 0
        %1983 = vmatprep.subr.bf16.mxu0 0
        %1984 = vmatpush2.bf16.xpose.msra.mxu0 0
        %1985 = vmatprep.subr.bf16.mxu0 0
        %1986 = vmatpush2.bf16.xpose.msra.mxu0 0
        %1987 = vmatprep.subr.bf16.mxu0 0
        %1988 = vmatpush2.bf16.xpose.msra.mxu0 0
        %1989 = vmatprep.subr.bf16.mxu0 0
        %1990 = vmatpush2.bf16.xpose.msra.mxu0 0
        %1991 = vmatprep.subr.bf16.mxu0 0
        %1992 = vmatpush2.bf16.xpose.msra.mxu0 0
        %1993 = vmatprep.mubr.bf16.mxu0 0
        %1994 = vmatmul.mubr.bf16.gmra.mxu0 %v1950
        %v1995 = vpop.f32.mrf.mxu0
        %v1996 = vadd.f32 0.0, %v1995
        %v1997 = vpop.f32.mrf.mxu0
        %v1998 = vpop.f32.mrf.mxu0
        %v1999 = vadd.f32 0.0, %v1998
        %v2000 = vpop.f32.mrf.mxu0
        %2001 = vmatprep.mubr.bf16.mxu0 0
        %2002 = vmatmul.mubr.bf16.gmra.mxu0 %v1953
        %v2003 = vpop.f32.mrf.mxu0
        %v2004 = vadd.f32 0.0, %v2003
        %v2005 = vpop.f32.mrf.mxu0
        %v2006 = vpop.f32.mrf.mxu0
        %v2007 = vadd.f32 0.0, %v2006
        %v2008 = vpop.f32.mrf.mxu0
        %2009 = vdwg.mxu0
        %2010 = vrot.lane.b32.xlu0 %v1801, 80
        %v2011 = vpop.permute.xlu0 %2010
        %2012 = vrot.lane.b32.xlu0 %v1802, 80
        %v2013 = vpop.permute.xlu0 %2012
        %2014 = vrot.lane.b32.xlu0 %v1801, 16
        %v2015 = vpop.permute.xlu0 %2014
        %2016 = vrot.lane.b32.xlu0 %v1802, 16
        %v2017 = vpop.permute.xlu0 %2016
        %v2019 = vsel %vm1014, %v2011, 0
        %v2022 = vsel %vm1014, %v2013, 0
        %v2025 = vsel %vm1014, %v2015, 0
        %v2028 = vsel %vm1014, %v2017, 0
        %2030 = vmatprep.subr.bf16.mxu0 0
        %2031 = vmatpush1.bf16.xpose.msra.mxu0 0
        %2032 = vmatprep.subr.bf16.mxu0 0
        %2033 = vmatpush1.bf16.xpose.msra.mxu0 0
        %2034 = vmatprep.subr.bf16.mxu0 0
        %2035 = vmatpush1.bf16.xpose.msra.mxu0 0
        %2036 = vmatprep.subr.bf16.mxu0 0
        %2037 = vmatpush1.bf16.xpose.msra.mxu0 0
        %2038 = vmatprep.subr.bf16.mxu0 0
        %2039 = vmatpush1.bf16.xpose.msra.mxu0 0
        %2040 = vmatprep.subr.bf16.mxu0 0
        %2041 = vmatpush1.bf16.xpose.msra.mxu0 0
        %2042 = vmatprep.subr.bf16.mxu0 0
        %2043 = vmatpush1.bf16.xpose.msra.mxu0 %v2028
        %2044 = vmatprep.subr.bf16.mxu0 0
        %2045 = vmatpush1.bf16.xpose.msra.mxu0 %v2025
        %2046 = vmatprep.subr.bf16.mxu0 0
        %2047 = vmatpush2.bf16.xpose.msra.mxu0 0
        %2048 = vmatprep.subr.bf16.mxu0 0
        %2049 = vmatpush2.bf16.xpose.msra.mxu0 0
        %2050 = vmatprep.subr.bf16.mxu0 0
        %2051 = vmatpush2.bf16.xpose.msra.mxu0 0
        %2052 = vmatprep.subr.bf16.mxu0 0
        %2053 = vmatpush2.bf16.xpose.msra.mxu0 0
        %2054 = vmatprep.subr.bf16.mxu0 0
        %2055 = vmatpush2.bf16.xpose.msra.mxu0 0
        %2056 = vmatprep.subr.bf16.mxu0 0
        %2057 = vmatpush2.bf16.xpose.msra.mxu0 0
        %2058 = vmatprep.subr.bf16.mxu0 0
        %2059 = vmatpush2.bf16.xpose.msra.mxu0 0
        %2060 = vmatprep.subr.bf16.mxu0 0
        %2061 = vmatpush2.bf16.xpose.msra.mxu0 0
        %2062 = vmatprep.mubr.bf16.mxu0 0
        %2063 = vmatmul.mubr.bf16.gmra.mxu0 %v2019
        %v2064 = vpop.f32.mrf.mxu0
        %v2065 = vadd.f32 0.0, %v2064
        %v2066 = vpop.f32.mrf.mxu0
        %v2067 = vpop.f32.mrf.mxu0
        %v2068 = vadd.f32 0.0, %v2067
        %v2069 = vpop.f32.mrf.mxu0
        %2070 = vmatprep.mubr.bf16.mxu0 0
        %2071 = vmatmul.mubr.bf16.gmra.mxu0 %v2022
        %v2072 = vpop.f32.mrf.mxu0
        %v2073 = vadd.f32 0.0, %v2072
        %v2074 = vpop.f32.mrf.mxu0
        %v2075 = vpop.f32.mrf.mxu0
        %v2076 = vadd.f32 0.0, %v2075
        %v2077 = vpop.f32.mrf.mxu0
        %2078 = vdwg.mxu0
        %v2079 = vmul.f32 %v1858, 0.25
        %v2080 = vmul.f32 %v1861, 0.25
        %v2081 = vmul.f32 %v1866, 0.25
        %v2082 = vmul.f32 %v1869, 0.25
        %v2083 = vmul.f32 %v1927, 0.25
        %v2084 = vmul.f32 %v1930, 0.25
        %v2085 = vmul.f32 %v1935, 0.25
        %v2086 = vmul.f32 %v1938, 0.25
        %v2087 = vmul.f32 %v1996, 0.25
        %v2088 = vmul.f32 %v1999, 0.25
        %v2089 = vmul.f32 %v2004, 0.25
        %v2090 = vmul.f32 %v2007, 0.25
        %v2091 = vmul.f32 %v2065, 0.25
        %v2092 = vmul.f32 %v2068, 0.25
        %v2093 = vmul.f32 %v2073, 0.25
        %v2094 = vmul.f32 %v2076, 0.25
        %v2095 = vadd.f32 %v2079, %v551
        %v2096 = vadd.f32 %v2080, %v552
        %v2097 = vadd.f32 %v2081, %v553
        %v2098 = vadd.f32 %v2082, %v554
        %v2099 = vadd.f32 %v2083, %v551
        %v2100 = vadd.f32 %v2084, %v552
        %v2101 = vadd.f32 %v2085, %v553
        %v2102 = vadd.f32 %v2086, %v554
        %v2103 = vadd.f32 %v2087, %v551
        %v2104 = vadd.f32 %v2088, %v552
        %v2105 = vadd.f32 %v2089, %v553
        %v2106 = vadd.f32 %v2090, %v554
        %v2107 = vadd.f32 %v2091, %v551
        %v2108 = vadd.f32 %v2092, %v552
        %v2109 = vadd.f32 %v2093, %v553
        %v2110 = vadd.f32 %v2094, %v554
        %v2111 = vsel %vm1315, %v2095, -inf
        %2112 = vmax.xlane.f32.xlu0 %v2111
        %v2113 = vpop.xlane.xlu0 %2112
        %v2114 = vsel %vm1315, %v2096, -inf
        %2115 = vmax.xlane.f32.xlu0 %v2114
        %v2116 = vpop.xlane.xlu0 %2115
        %v2117 = vsel %vm1315, %v2097, -inf
        %2118 = vmax.xlane.f32.xlu0 %v2117
        %v2119 = vpop.xlane.xlu0 %2118
        %v2120 = vsel %vm1315, %v2098, -inf
        %2121 = vmax.xlane.f32.xlu0 %v2120
        %v2122 = vpop.xlane.xlu0 %2121
        %v2123 = vsel %vm1315, %v2099, -inf
        %2124 = vmax.xlane.f32.xlu0 %v2123
        %v2125 = vpop.xlane.xlu0 %2124
        %v2126 = vsel %vm1315, %v2100, -inf
        %2127 = vmax.xlane.f32.xlu0 %v2126
        %v2128 = vpop.xlane.xlu0 %2127
        %v2129 = vsel %vm1315, %v2101, -inf
        %2130 = vmax.xlane.f32.xlu0 %v2129
        %v2131 = vpop.xlane.xlu0 %2130
        %v2132 = vsel %vm1315, %v2102, -inf
        %2133 = vmax.xlane.f32.xlu0 %v2132
        %v2134 = vpop.xlane.xlu0 %2133
        %v2135 = vsel %vm1315, %v2103, -inf
        %2136 = vmax.xlane.f32.xlu0 %v2135
        %v2137 = vpop.xlane.xlu0 %2136
        %v2138 = vsel %vm1315, %v2104, -inf
        %2139 = vmax.xlane.f32.xlu0 %v2138
        %v2140 = vpop.xlane.xlu0 %2139
        %v2141 = vsel %vm1315, %v2105, -inf
        %2142 = vmax.xlane.f32.xlu0 %v2141
        %v2143 = vpop.xlane.xlu0 %2142
        %v2144 = vsel %vm1315, %v2106, -inf
        %2145 = vmax.xlane.f32.xlu0 %v2144
        %v2146 = vpop.xlane.xlu0 %2145
        %v2147 = vsel %vm1315, %v2107, -inf
        %2148 = vmax.xlane.f32.xlu0 %v2147
        %v2149 = vpop.xlane.xlu0 %2148
        %v2150 = vsel %vm1315, %v2108, -inf
        %2151 = vmax.xlane.f32.xlu0 %v2150
        %v2152 = vpop.xlane.xlu0 %2151
        %v2153 = vsel %vm1315, %v2109, -inf
        %2154 = vmax.xlane.f32.xlu0 %v2153
        %v2155 = vpop.xlane.xlu0 %2154
        %v2156 = vsel %vm1315, %v2110, -inf
        %2157 = vmax.xlane.f32.xlu0 %v2156
        %v2158 = vpop.xlane.xlu0 %2157
        %v2159 = vsub.f32 %v2095, %v2113
        %v2160 = vsub.f32 %v2096, %v2116
        %v2161 = vsub.f32 %v2097, %v2119
        %v2162 = vsub.f32 %v2098, %v2122
        %v2163 = vsub.f32 %v2099, %v2125
        %v2164 = vsub.f32 %v2100, %v2128
        %v2165 = vsub.f32 %v2101, %v2131
        %v2166 = vsub.f32 %v2102, %v2134
        %v2167 = vsub.f32 %v2103, %v2137
        %v2168 = vsub.f32 %v2104, %v2140
        %v2169 = vsub.f32 %v2105, %v2143
        %v2170 = vsub.f32 %v2106, %v2146
        %v2171 = vsub.f32 %v2107, %v2149
        %v2172 = vsub.f32 %v2108, %v2152
        %v2173 = vsub.f32 %v2109, %v2155
        %v2174 = vsub.f32 %v2110, %v2158
        %v2175 = vmul.f32 %v2159, 1.442695
        %v2176 = vpow.pop %v2175
        %v2177 = vmul.f32 %v2160, 1.442695
        %v2178 = vpow.pop %v2177
        %v2179 = vmul.f32 %v2161, 1.442695
        %v2180 = vpow.pop %v2179
        %v2181 = vmul.f32 %v2162, 1.442695
        %v2182 = vpow.pop %v2181
        %v2183 = vmul.f32 %v2163, 1.442695
        %v2184 = vpow.pop %v2183
        %v2185 = vmul.f32 %v2164, 1.442695
        %v2186 = vpow.pop %v2185
        %v2187 = vmul.f32 %v2165, 1.442695
        %v2188 = vpow.pop %v2187
        %v2189 = vmul.f32 %v2166, 1.442695
        %v2190 = vpow.pop %v2189
        %v2191 = vmul.f32 %v2167, 1.442695
        %v2192 = vpow.pop %v2191
        %v2193 = vmul.f32 %v2168, 1.442695
        %v2194 = vpow.pop %v2193
        %v2195 = vmul.f32 %v2169, 1.442695
        %v2196 = vpow.pop %v2195
        %v2197 = vmul.f32 %v2170, 1.442695
        %v2198 = vpow.pop %v2197
        %v2199 = vmul.f32 %v2171, 1.442695
        %v2200 = vpow.pop %v2199
        %v2201 = vmul.f32 %v2172, 1.442695
        %v2202 = vpow.pop %v2201
        %v2203 = vmul.f32 %v2173, 1.442695
        %v2204 = vpow.pop %v2203
        %v2205 = vmul.f32 %v2174, 1.442695
        %v2206 = vpow.pop %v2205
        %v2207 = vsel %vm1315, %v2176, 0.0
        %2208 = vadd.xlane.f32.xlu0 %v2207
        %v2209 = vpop.xlane.xlu0 %2208
        %v2210 = vsel %vm1315, %v2178, 0.0
        %2211 = vadd.xlane.f32.xlu0 %v2210
        %v2212 = vpop.xlane.xlu0 %2211
        %v2213 = vsel %vm1315, %v2180, 0.0
        %2214 = vadd.xlane.f32.xlu0 %v2213
        %v2215 = vpop.xlane.xlu0 %2214
        %v2216 = vsel %vm1315, %v2182, 0.0
        %2217 = vadd.xlane.f32.xlu0 %v2216
        %v2218 = vpop.xlane.xlu0 %2217
        %v2219 = vsel %vm1315, %v2184, 0.0
        %2220 = vadd.xlane.f32.xlu0 %v2219
        %v2221 = vpop.xlane.xlu0 %2220
        %v2222 = vsel %vm1315, %v2186, 0.0
        %2223 = vadd.xlane.f32.xlu0 %v2222
        %v2224 = vpop.xlane.xlu0 %2223
        %v2225 = vsel %vm1315, %v2188, 0.0
        %2226 = vadd.xlane.f32.xlu0 %v2225
        %v2227 = vpop.xlane.xlu0 %2226
        %v2228 = vsel %vm1315, %v2190, 0.0
        %2229 = vadd.xlane.f32.xlu0 %v2228
        %v2230 = vpop.xlane.xlu0 %2229
        %v2231 = vsel %vm1315, %v2192, 0.0
        %2232 = vadd.xlane.f32.xlu0 %v2231
        %v2233 = vpop.xlane.xlu0 %2232
        %v2234 = vsel %vm1315, %v2194, 0.0
        %2235 = vadd.xlane.f32.xlu0 %v2234
        %v2236 = vpop.xlane.xlu0 %2235
        %v2237 = vsel %vm1315, %v2196, 0.0
        %2238 = vadd.xlane.f32.xlu0 %v2237
        %v2239 = vpop.xlane.xlu0 %2238
        %v2240 = vsel %vm1315, %v2198, 0.0
        %2241 = vadd.xlane.f32.xlu0 %v2240
        %v2242 = vpop.xlane.xlu0 %2241
        %v2243 = vsel %vm1315, %v2200, 0.0
        %2244 = vadd.xlane.f32.xlu0 %v2243
        %v2245 = vpop.xlane.xlu0 %2244
        %v2246 = vsel %vm1315, %v2202, 0.0
        %2247 = vadd.xlane.f32.xlu0 %v2246
        %v2248 = vpop.xlane.xlu0 %2247
        %v2249 = vsel %vm1315, %v2204, 0.0
        %2250 = vadd.xlane.f32.xlu0 %v2249
        %v2251 = vpop.xlane.xlu0 %2250
        %v2252 = vsel %vm1315, %v2206, 0.0
        %2253 = vadd.xlane.f32.xlu0 %v2252
        %v2254 = vpop.xlane.xlu0 %2253
        %v2255 = vrcp.pop %v2209
        %v2256 = vrcp.pop %v2212
        %v2257 = vrcp.pop %v2215
        %v2258 = vrcp.pop %v2218
        %v2259 = vrcp.pop %v2221
        %v2260 = vrcp.pop %v2224
        %v2261 = vrcp.pop %v2227
        %v2262 = vrcp.pop %v2230
        %v2263 = vrcp.pop %v2233
        %v2264 = vrcp.pop %v2236
        %v2265 = vrcp.pop %v2239
        %v2266 = vrcp.pop %v2242
        %v2267 = vrcp.pop %v2245
        %v2268 = vrcp.pop %v2248
        %v2269 = vrcp.pop %v2251
        %v2270 = vrcp.pop %v2254
        %v2271 = vmul.f32 %v2176, %v2255
        %v2272 = vmul.f32 %v2178, %v2256
        %v2273 = vmul.f32 %v2180, %v2257
        %v2274 = vmul.f32 %v2182, %v2258
        %v2275 = vmul.f32 %v2184, %v2259
        %v2276 = vmul.f32 %v2186, %v2260
        %v2277 = vmul.f32 %v2188, %v2261
        %v2278 = vmul.f32 %v2190, %v2262
        %v2279 = vmul.f32 %v2192, %v2263
        %v2280 = vmul.f32 %v2194, %v2264
        %v2281 = vmul.f32 %v2196, %v2265
        %v2282 = vmul.f32 %v2198, %v2266
        %v2283 = vmul.f32 %v2200, %v2267
        %v2284 = vmul.f32 %v2202, %v2268
        %v2285 = vmul.f32 %v2204, %v2269
        %v2286 = vmul.f32 %v2206, %v2270
        %v2287 = vpack.c.bf16 %v2272, %v2271
        %v2288 = vpack.c.bf16 %v2274, %v2273
        %v2289 = vpack.c.bf16 %v2276, %v2275
        %v2290 = vpack.c.bf16 %v2278, %v2277
        %v2291 = vpack.c.bf16 %v2280, %v2279
        %v2292 = vpack.c.bf16 %v2282, %v2281
        %v2293 = vpack.c.bf16 %v2284, %v2283
        %v2294 = vpack.c.bf16 %v2286, %v2285
        %v2296 = vsel %vm1315, %v2287, 0
        %v2299 = vsel %vm1315, %v2288, 0
        %2301 = vmatprep.subr.bf16.mxu0 0
        %2302 = vmatpush1.bf16.msra.mxu0 0
        %2303 = vmatprep.subr.bf16.mxu0 0
        %2304 = vmatpush1.bf16.msra.mxu0 0
        %2305 = vmatprep.subr.bf16.mxu0 0
        %2306 = vmatpush1.bf16.msra.mxu0 0
        %2307 = vmatprep.subr.bf16.mxu0 0
        %2308 = vmatpush1.bf16.msra.mxu0 0
        %2309 = vmatprep.subr.bf16.mxu0 0
        %2310 = vmatpush1.bf16.msra.mxu0 0
        %2311 = vmatprep.subr.bf16.mxu0 0
        %2312 = vmatpush1.bf16.msra.mxu0 0
        %2313 = vmatprep.subr.bf16.mxu0 0
        %2314 = vmatpush1.bf16.msra.mxu0 %v1804
        %2315 = vmatprep.subr.bf16.mxu0 0
        %2316 = vmatpush1.bf16.msra.mxu0 %v1803
        %2317 = vmatprep.subr.bf16.mxu0 0
        %2318 = vmatpush2.bf16.msra.mxu0 0
        %2319 = vmatprep.subr.bf16.mxu0 0
        %2320 = vmatpush2.bf16.msra.mxu0 0
        %2321 = vmatprep.subr.bf16.mxu0 0
        %2322 = vmatpush2.bf16.msra.mxu0 0
        %2323 = vmatprep.subr.bf16.mxu0 0
        %2324 = vmatpush2.bf16.msra.mxu0 0
        %2325 = vmatprep.subr.bf16.mxu0 0
        %2326 = vmatpush2.bf16.msra.mxu0 0
        %2327 = vmatprep.subr.bf16.mxu0 0
        %2328 = vmatpush2.bf16.msra.mxu0 0
        %2329 = vmatprep.subr.bf16.mxu0 0
        %2330 = vmatpush2.bf16.msra.mxu0 0
        %2331 = vmatprep.subr.bf16.mxu0 0
        %2332 = vmatpush2.bf16.msra.mxu0 0
        %2333 = vmatprep.mubr.bf16.mxu0 0
        %2334 = vmatmul.mubr.bf16.gmra.mxu0 %v2296
        %v2335 = vpop.f32.mrf.mxu0
        %v2336 = vadd.f32 0.0, %v2335
        %v2337 = vpop.f32.mrf.mxu0
        %v2338 = vpop.f32.mrf.mxu0
        %v2339 = vadd.f32 0.0, %v2338
        %v2340 = vpop.f32.mrf.mxu0
        %2341 = vmatprep.mubr.bf16.mxu0 0
        %2342 = vmatmul.mubr.bf16.gmra.mxu0 %v2299
        %v2343 = vpop.f32.mrf.mxu0
        %v2344 = vadd.f32 0.0, %v2343
        %v2345 = vpop.f32.mrf.mxu0
        %v2346 = vpop.f32.mrf.mxu0
        %v2347 = vadd.f32 0.0, %v2346
        %v2348 = vpop.f32.mrf.mxu0
        %2349 = vdwg.mxu0
        %2352 = vrot.lane.b32.xlu0 %v1803, 112
        %v2353 = vpop.permute.xlu0 %2352
        %2354 = vrot.lane.b32.xlu0 %v1804, 112
        %v2355 = vpop.permute.xlu0 %2354
        %v2359 = vsel %vm1315, %v2289, 0
        %v2362 = vsel %vm1315, %v2290, 0
        %2364 = vmatprep.subr.bf16.mxu0 0
        %2365 = vmatpush1.bf16.msra.mxu0 0
        %2366 = vmatprep.subr.bf16.mxu0 0
        %2367 = vmatpush1.bf16.msra.mxu0 0
        %2368 = vmatprep.subr.bf16.mxu0 0
        %2369 = vmatpush1.bf16.msra.mxu0 0
        %2370 = vmatprep.subr.bf16.mxu0 0
        %2371 = vmatpush1.bf16.msra.mxu0 0
        %2372 = vmatprep.subr.bf16.mxu0 0
        %2373 = vmatpush1.bf16.msra.mxu0 0
        %2374 = vmatprep.subr.bf16.mxu0 0
        %2375 = vmatpush1.bf16.msra.mxu0 0
        %2376 = vmatprep.subr.bf16.mxu0 0
        %2377 = vmatpush1.bf16.msra.mxu0 %v2355
        %2378 = vmatprep.subr.bf16.mxu0 0
        %2379 = vmatpush1.bf16.msra.mxu0 %v2353
        %2380 = vmatprep.subr.bf16.mxu0 0
        %2381 = vmatpush2.bf16.msra.mxu0 0
        %2382 = vmatprep.subr.bf16.mxu0 0
        %2383 = vmatpush2.bf16.msra.mxu0 0
        %2384 = vmatprep.subr.bf16.mxu0 0
        %2385 = vmatpush2.bf16.msra.mxu0 0
        %2386 = vmatprep.subr.bf16.mxu0 0
        %2387 = vmatpush2.bf16.msra.mxu0 0
        %2388 = vmatprep.subr.bf16.mxu0 0
        %2389 = vmatpush2.bf16.msra.mxu0 0
        %2390 = vmatprep.subr.bf16.mxu0 0
        %2391 = vmatpush2.bf16.msra.mxu0 0
        %2392 = vmatprep.subr.bf16.mxu0 0
        %2393 = vmatpush2.bf16.msra.mxu0 0
        %2394 = vmatprep.subr.bf16.mxu0 0
        %2395 = vmatpush2.bf16.msra.mxu0 0
        %2396 = vmatprep.mubr.bf16.mxu0 0
        %2397 = vmatmul.mubr.bf16.gmra.mxu0 %v2359
        %v2398 = vpop.f32.mrf.mxu0
        %v2399 = vadd.f32 0.0, %v2398
        %v2400 = vpop.f32.mrf.mxu0
        %v2401 = vpop.f32.mrf.mxu0
        %v2402 = vadd.f32 0.0, %v2401
        %v2403 = vpop.f32.mrf.mxu0
        %2404 = vmatprep.mubr.bf16.mxu0 0
        %2405 = vmatmul.mubr.bf16.gmra.mxu0 %v2362
        %v2406 = vpop.f32.mrf.mxu0
        %v2407 = vadd.f32 0.0, %v2406
        %v2408 = vpop.f32.mrf.mxu0
        %v2409 = vpop.f32.mrf.mxu0
        %v2410 = vadd.f32 0.0, %v2409
        %v2411 = vpop.f32.mrf.mxu0
        %2412 = vdwg.mxu0
        %2413 = vrot.lane.b32.xlu0 %v1803, 96
        %v2414 = vpop.permute.xlu0 %2413
        %2415 = vrot.lane.b32.xlu0 %v1804, 96
        %v2416 = vpop.permute.xlu0 %2415
        %v2420 = vsel %vm1315, %v2291, 0
        %v2423 = vsel %vm1315, %v2292, 0
        %2425 = vmatprep.subr.bf16.mxu0 0
        %2426 = vmatpush1.bf16.msra.mxu0 0
        %2427 = vmatprep.subr.bf16.mxu0 0
        %2428 = vmatpush1.bf16.msra.mxu0 0
        %2429 = vmatprep.subr.bf16.mxu0 0
        %2430 = vmatpush1.bf16.msra.mxu0 0
        %2431 = vmatprep.subr.bf16.mxu0 0
        %2432 = vmatpush1.bf16.msra.mxu0 0
        %2433 = vmatprep.subr.bf16.mxu0 0
        %2434 = vmatpush1.bf16.msra.mxu0 0
        %2435 = vmatprep.subr.bf16.mxu0 0
        %2436 = vmatpush1.bf16.msra.mxu0 0
        %2437 = vmatprep.subr.bf16.mxu0 0
        %2438 = vmatpush1.bf16.msra.mxu0 %v2416
        %2439 = vmatprep.subr.bf16.mxu0 0
        %2440 = vmatpush1.bf16.msra.mxu0 %v2414
        %2441 = vmatprep.subr.bf16.mxu0 0
        %2442 = vmatpush2.bf16.msra.mxu0 0
        %2443 = vmatprep.subr.bf16.mxu0 0
        %2444 = vmatpush2.bf16.msra.mxu0 0
        %2445 = vmatprep.subr.bf16.mxu0 0
        %2446 = vmatpush2.bf16.msra.mxu0 0
        %2447 = vmatprep.subr.bf16.mxu0 0
        %2448 = vmatpush2.bf16.msra.mxu0 0
        %2449 = vmatprep.subr.bf16.mxu0 0
        %2450 = vmatpush2.bf16.msra.mxu0 0
        %2451 = vmatprep.subr.bf16.mxu0 0
        %2452 = vmatpush2.bf16.msra.mxu0 0
        %2453 = vmatprep.subr.bf16.mxu0 0
        %2454 = vmatpush2.bf16.msra.mxu0 0
        %2455 = vmatprep.subr.bf16.mxu0 0
        %2456 = vmatpush2.bf16.msra.mxu0 0
        %2457 = vmatprep.mubr.bf16.mxu0 0
        %2458 = vmatmul.mubr.bf16.gmra.mxu0 %v2420
        %v2459 = vpop.f32.mrf.mxu0
        %v2460 = vadd.f32 0.0, %v2459
        %v2461 = vpop.f32.mrf.mxu0
        %v2462 = vpop.f32.mrf.mxu0
        %v2463 = vadd.f32 0.0, %v2462
        %v2464 = vpop.f32.mrf.mxu0
        %2465 = vmatprep.mubr.bf16.mxu0 0
        %2466 = vmatmul.mubr.bf16.gmra.mxu0 %v2423
        %v2467 = vpop.f32.mrf.mxu0
        %v2468 = vadd.f32 0.0, %v2467
        %v2469 = vpop.f32.mrf.mxu0
        %v2470 = vpop.f32.mrf.mxu0
        %v2471 = vadd.f32 0.0, %v2470
        %v2472 = vpop.f32.mrf.mxu0
        %2473 = vdwg.mxu0
        %2474 = vrot.lane.b32.xlu0 %v1803, 80
        %v2475 = vpop.permute.xlu0 %2474
        %2476 = vrot.lane.b32.xlu0 %v1804, 80
        %v2477 = vpop.permute.xlu0 %2476
        %v2481 = vsel %vm1315, %v2293, 0
        %v2484 = vsel %vm1315, %v2294, 0
        %2486 = vmatprep.subr.bf16.mxu0 0
        %2487 = vmatpush1.bf16.msra.mxu0 0
        %2488 = vmatprep.subr.bf16.mxu0 0
        %2489 = vmatpush1.bf16.msra.mxu0 0
        %2490 = vmatprep.subr.bf16.mxu0 0
        %2491 = vmatpush1.bf16.msra.mxu0 0
        %2492 = vmatprep.subr.bf16.mxu0 0
        %2493 = vmatpush1.bf16.msra.mxu0 0
        %2494 = vmatprep.subr.bf16.mxu0 0
        %2495 = vmatpush1.bf16.msra.mxu0 0
        %2496 = vmatprep.subr.bf16.mxu0 0
        %2497 = vmatpush1.bf16.msra.mxu0 0
        %2498 = vmatprep.subr.bf16.mxu0 0
        %2499 = vmatpush1.bf16.msra.mxu0 %v2477
        %2500 = vmatprep.subr.bf16.mxu0 0
        %2501 = vmatpush1.bf16.msra.mxu0 %v2475
        %2502 = vmatprep.subr.bf16.mxu0 0
        %2503 = vmatpush2.bf16.msra.mxu0 0
        %2504 = vmatprep.subr.bf16.mxu0 0
        %2505 = vmatpush2.bf16.msra.mxu0 0
        %2506 = vmatprep.subr.bf16.mxu0 0
        %2507 = vmatpush2.bf16.msra.mxu0 0
        %2508 = vmatprep.subr.bf16.mxu0 0
        %2509 = vmatpush2.bf16.msra.mxu0 0
        %2510 = vmatprep.subr.bf16.mxu0 0
        %2511 = vmatpush2.bf16.msra.mxu0 0
        %2512 = vmatprep.subr.bf16.mxu0 0
        %2513 = vmatpush2.bf16.msra.mxu0 0
        %2514 = vmatprep.subr.bf16.mxu0 0
        %2515 = vmatpush2.bf16.msra.mxu0 0
        %2516 = vmatprep.subr.bf16.mxu0 0
        %2517 = vmatpush2.bf16.msra.mxu0 0
        %2518 = vmatprep.mubr.bf16.mxu0 0
        %2519 = vmatmul.mubr.bf16.gmra.mxu0 %v2481
        %v2520 = vpop.f32.mrf.mxu0
        %v2521 = vadd.f32 0.0, %v2520
        %v2522 = vpop.f32.mrf.mxu0
        %v2523 = vpop.f32.mrf.mxu0
        %v2524 = vadd.f32 0.0, %v2523
        %v2525 = vpop.f32.mrf.mxu0
        %2526 = vmatprep.mubr.bf16.mxu0 0
        %2527 = vmatmul.mubr.bf16.gmra.mxu0 %v2484
        %v2528 = vpop.f32.mrf.mxu0
        %v2529 = vadd.f32 0.0, %v2528
        %v2530 = vpop.f32.mrf.mxu0
        %v2531 = vpop.f32.mrf.mxu0
        %v2532 = vadd.f32 0.0, %v2531
        %v2533 = vpop.f32.mrf.mxu0
        %2534 = vdwg.mxu0
        %2539 = vrot.lane.b32.xlu0 %v2399, 16
        %v2540 = vpop.permute.xlu0 %2539
        %2541 = vrot.lane.b32.xlu0 %v2402, 16
        %v2542 = vpop.permute.xlu0 %2541
        %2543 = vrot.lane.b32.xlu0 %v2407, 16
        %v2544 = vpop.permute.xlu0 %2543
        %2545 = vrot.lane.b32.xlu0 %v2410, 16
        %v2546 = vpop.permute.xlu0 %2545
        %2555 = vrot.lane.b32.xlu0 %v2460, 32
        %v2556 = vpop.permute.xlu0 %2555
        %2557 = vrot.lane.b32.xlu0 %v2463, 32
        %v2558 = vpop.permute.xlu0 %2557
        %2559 = vrot.lane.b32.xlu0 %v2468, 32
        %v2560 = vpop.permute.xlu0 %2559
        %2561 = vrot.lane.b32.xlu0 %v2471, 32
        %v2562 = vpop.permute.xlu0 %2561
        %2571 = vrot.lane.b32.xlu0 %v2521, 48
        %v2572 = vpop.permute.xlu0 %2571
        %2573 = vrot.lane.b32.xlu0 %v2524, 48
        %v2574 = vpop.permute.xlu0 %2573
        %2575 = vrot.lane.b32.xlu0 %v2529, 48
        %v2576 = vpop.permute.xlu0 %2575
        %2577 = vrot.lane.b32.xlu0 %v2532, 48
        %v2578 = vpop.permute.xlu0 %2577
        %v2583 = vsel %vm1014, %v2336, %v2540
        %v2584 = vsel %vm1014, %v2339, %v2542
        %v2585 = vsel %vm1014, %v2344, %v2544
        %v2586 = vsel %vm1014, %v2347, %v2546
        %v2587 = vsel %vm1315, %v2583, %v2556
        %v2588 = vsel %vm1315, %v2584, %v2558
        %v2589 = vsel %vm1315, %v2585, %v2560
        %v2590 = vsel %vm1315, %v2586, %v2562
        %v2591 = vsel %vm1796, %v2587, %v2572
        %v2592 = vsel %vm1796, %v2588, %v2574
        %v2593 = vsel %vm1796, %v2589, %v2576
        %v2594 = vsel %vm1796, %v2590, %v2578
        %v2595 = vpack.c.bf16 %v970, %v966
        %v2596 = vpack.c.bf16 %v980, %v976
        %v2597 = vpack.c.bf16 %v972, %v968
        %v2598 = vpack.c.bf16 %v982, %v978
        %2601 = vrot.lane.b32.xlu0 %v2595, 64
        %v2602 = vpop.permute.xlu0 %2601
        %2603 = vrot.lane.b32.xlu0 %v2596, 64
        %v2604 = vpop.permute.xlu0 %2603
        %v2606 = vsel %vm1014, %v2595, 0
        %v2609 = vsel %vm1014, %v2596, 0
        %v2612 = vsel %vm1014, %v2602, 0
        %v2615 = vsel %vm1014, %v2604, 0
        %2617 = vmatprep.subr.bf16.mxu0 0
        %2618 = vmatpush1.bf16.xpose.msra.mxu0 0
        %2619 = vmatprep.subr.bf16.mxu0 0
        %2620 = vmatpush1.bf16.xpose.msra.mxu0 0
        %2621 = vmatprep.subr.bf16.mxu0 0
        %2622 = vmatpush1.bf16.xpose.msra.mxu0 0
        %2623 = vmatprep.subr.bf16.mxu0 0
        %2624 = vmatpush1.bf16.xpose.msra.mxu0 0
        %2625 = vmatprep.subr.bf16.mxu0 0
        %2626 = vmatpush1.bf16.xpose.msra.mxu0 0
        %2627 = vmatprep.subr.bf16.mxu0 0
        %2628 = vmatpush1.bf16.xpose.msra.mxu0 0
        %2629 = vmatprep.subr.bf16.mxu0 0
        %2630 = vmatpush1.bf16.xpose.msra.mxu0 %v2615
        %2631 = vmatprep.subr.bf16.mxu0 0
        %2632 = vmatpush1.bf16.xpose.msra.mxu0 %v2612
        %2633 = vmatprep.subr.bf16.mxu0 0
        %2634 = vmatpush2.bf16.xpose.msra.mxu0 0
        %2635 = vmatprep.subr.bf16.mxu0 0
        %2636 = vmatpush2.bf16.xpose.msra.mxu0 0
        %2637 = vmatprep.subr.bf16.mxu0 0
        %2638 = vmatpush2.bf16.xpose.msra.mxu0 0
        %2639 = vmatprep.subr.bf16.mxu0 0
        %2640 = vmatpush2.bf16.xpose.msra.mxu0 0
        %2641 = vmatprep.subr.bf16.mxu0 0
        %2642 = vmatpush2.bf16.xpose.msra.mxu0 0
        %2643 = vmatprep.subr.bf16.mxu0 0
        %2644 = vmatpush2.bf16.xpose.msra.mxu0 0
        %2645 = vmatprep.subr.bf16.mxu0 0
        %2646 = vmatpush2.bf16.xpose.msra.mxu0 0
        %2647 = vmatprep.subr.bf16.mxu0 0
        %2648 = vmatpush2.bf16.xpose.msra.mxu0 0
        %2649 = vmatprep.mubr.bf16.mxu0 0
        %2650 = vmatmul.mubr.bf16.gmra.mxu0 %v2606
        %v2651 = vpop.f32.mrf.mxu0
        %v2652 = vadd.f32 0.0, %v2651
        %v2653 = vpop.f32.mrf.mxu0
        %v2654 = vpop.f32.mrf.mxu0
        %v2655 = vadd.f32 0.0, %v2654
        %v2656 = vpop.f32.mrf.mxu0
        %2657 = vmatprep.mubr.bf16.mxu0 0
        %2658 = vmatmul.mubr.bf16.gmra.mxu0 %v2609
        %v2659 = vpop.f32.mrf.mxu0
        %v2660 = vadd.f32 0.0, %v2659
        %v2661 = vpop.f32.mrf.mxu0
        %v2662 = vpop.f32.mrf.mxu0
        %v2663 = vadd.f32 0.0, %v2662
        %v2664 = vpop.f32.mrf.mxu0
        %2665 = vdwg.mxu0
        %2666 = vrot.lane.b32.xlu0 %v2595, 112
        %v2667 = vpop.permute.xlu0 %2666
        %2668 = vrot.lane.b32.xlu0 %v2596, 112
        %v2669 = vpop.permute.xlu0 %2668
        %2670 = vrot.lane.b32.xlu0 %v2595, 48
        %v2671 = vpop.permute.xlu0 %2670
        %2672 = vrot.lane.b32.xlu0 %v2596, 48
        %v2673 = vpop.permute.xlu0 %2672
        %v2675 = vsel %vm1014, %v2667, 0
        %v2678 = vsel %vm1014, %v2669, 0
        %v2681 = vsel %vm1014, %v2671, 0
        %v2684 = vsel %vm1014, %v2673, 0
        %2686 = vmatprep.subr.bf16.mxu0 0
        %2687 = vmatpush1.bf16.xpose.msra.mxu0 0
        %2688 = vmatprep.subr.bf16.mxu0 0
        %2689 = vmatpush1.bf16.xpose.msra.mxu0 0
        %2690 = vmatprep.subr.bf16.mxu0 0
        %2691 = vmatpush1.bf16.xpose.msra.mxu0 0
        %2692 = vmatprep.subr.bf16.mxu0 0
        %2693 = vmatpush1.bf16.xpose.msra.mxu0 0
        %2694 = vmatprep.subr.bf16.mxu0 0
        %2695 = vmatpush1.bf16.xpose.msra.mxu0 0
        %2696 = vmatprep.subr.bf16.mxu0 0
        %2697 = vmatpush1.bf16.xpose.msra.mxu0 0
        %2698 = vmatprep.subr.bf16.mxu0 0
        %2699 = vmatpush1.bf16.xpose.msra.mxu0 %v2684
        %2700 = vmatprep.subr.bf16.mxu0 0
        %2701 = vmatpush1.bf16.xpose.msra.mxu0 %v2681
        %2702 = vmatprep.subr.bf16.mxu0 0
        %2703 = vmatpush2.bf16.xpose.msra.mxu0 0
        %2704 = vmatprep.subr.bf16.mxu0 0
        %2705 = vmatpush2.bf16.xpose.msra.mxu0 0
        %2706 = vmatprep.subr.bf16.mxu0 0
        %2707 = vmatpush2.bf16.xpose.msra.mxu0 0
        %2708 = vmatprep.subr.bf16.mxu0 0
        %2709 = vmatpush2.bf16.xpose.msra.mxu0 0
        %2710 = vmatprep.subr.bf16.mxu0 0
        %2711 = vmatpush2.bf16.xpose.msra.mxu0 0
        %2712 = vmatprep.subr.bf16.mxu0 0
        %2713 = vmatpush2.bf16.xpose.msra.mxu0 0
        %2714 = vmatprep.subr.bf16.mxu0 0
        %2715 = vmatpush2.bf16.xpose.msra.mxu0 0
        %2716 = vmatprep.subr.bf16.mxu0 0
        %2717 = vmatpush2.bf16.xpose.msra.mxu0 0
        %2718 = vmatprep.mubr.bf16.mxu0 0
        %2719 = vmatmul.mubr.bf16.gmra.mxu0 %v2675
        %v2720 = vpop.f32.mrf.mxu0
        %v2721 = vadd.f32 0.0, %v2720
        %v2722 = vpop.f32.mrf.mxu0
        %v2723 = vpop.f32.mrf.mxu0
        %v2724 = vadd.f32 0.0, %v2723
        %v2725 = vpop.f32.mrf.mxu0
        %2726 = vmatprep.mubr.bf16.mxu0 0
        %2727 = vmatmul.mubr.bf16.gmra.mxu0 %v2678
        %v2728 = vpop.f32.mrf.mxu0
        %v2729 = vadd.f32 0.0, %v2728
        %v2730 = vpop.f32.mrf.mxu0
        %v2731 = vpop.f32.mrf.mxu0
        %v2732 = vadd.f32 0.0, %v2731
        %v2733 = vpop.f32.mrf.mxu0
        %2734 = vdwg.mxu0
        %2735 = vrot.lane.b32.xlu0 %v2595, 96
        %v2736 = vpop.permute.xlu0 %2735
        %2737 = vrot.lane.b32.xlu0 %v2596, 96
        %v2738 = vpop.permute.xlu0 %2737
        %2739 = vrot.lane.b32.xlu0 %v2595, 32
        %v2740 = vpop.permute.xlu0 %2739
        %2741 = vrot.lane.b32.xlu0 %v2596, 32
        %v2742 = vpop.permute.xlu0 %2741
        %v2744 = vsel %vm1014, %v2736, 0
        %v2747 = vsel %vm1014, %v2738, 0
        %v2750 = vsel %vm1014, %v2740, 0
        %v2753 = vsel %vm1014, %v2742, 0
        %2755 = vmatprep.subr.bf16.mxu0 0
        %2756 = vmatpush1.bf16.xpose.msra.mxu0 0
        %2757 = vmatprep.subr.bf16.mxu0 0
        %2758 = vmatpush1.bf16.xpose.msra.mxu0 0
        %2759 = vmatprep.subr.bf16.mxu0 0
        %2760 = vmatpush1.bf16.xpose.msra.mxu0 0
        %2761 = vmatprep.subr.bf16.mxu0 0
        %2762 = vmatpush1.bf16.xpose.msra.mxu0 0
        %2763 = vmatprep.subr.bf16.mxu0 0
        %2764 = vmatpush1.bf16.xpose.msra.mxu0 0
        %2765 = vmatprep.subr.bf16.mxu0 0
        %2766 = vmatpush1.bf16.xpose.msra.mxu0 0
        %2767 = vmatprep.subr.bf16.mxu0 0
        %2768 = vmatpush1.bf16.xpose.msra.mxu0 %v2753
        %2769 = vmatprep.subr.bf16.mxu0 0
        %2770 = vmatpush1.bf16.xpose.msra.mxu0 %v2750
        %2771 = vmatprep.subr.bf16.mxu0 0
        %2772 = vmatpush2.bf16.xpose.msra.mxu0 0
        %2773 = vmatprep.subr.bf16.mxu0 0
        %2774 = vmatpush2.bf16.xpose.msra.mxu0 0
        %2775 = vmatprep.subr.bf16.mxu0 0
        %2776 = vmatpush2.bf16.xpose.msra.mxu0 0
        %2777 = vmatprep.subr.bf16.mxu0 0
        %2778 = vmatpush2.bf16.xpose.msra.mxu0 0
        %2779 = vmatprep.subr.bf16.mxu0 0
        %2780 = vmatpush2.bf16.xpose.msra.mxu0 0
        %2781 = vmatprep.subr.bf16.mxu0 0
        %2782 = vmatpush2.bf16.xpose.msra.mxu0 0
        %2783 = vmatprep.subr.bf16.mxu0 0
        %2784 = vmatpush2.bf16.xpose.msra.mxu0 0
        %2785 = vmatprep.subr.bf16.mxu0 0
        %2786 = vmatpush2.bf16.xpose.msra.mxu0 0
        %2787 = vmatprep.mubr.bf16.mxu0 0
        %2788 = vmatmul.mubr.bf16.gmra.mxu0 %v2744
        %v2789 = vpop.f32.mrf.mxu0
        %v2790 = vadd.f32 0.0, %v2789
        %v2791 = vpop.f32.mrf.mxu0
        %v2792 = vpop.f32.mrf.mxu0
        %v2793 = vadd.f32 0.0, %v2792
        %v2794 = vpop.f32.mrf.mxu0
        %2795 = vmatprep.mubr.bf16.mxu0 0
        %2796 = vmatmul.mubr.bf16.gmra.mxu0 %v2747
        %v2797 = vpop.f32.mrf.mxu0
        %v2798 = vadd.f32 0.0, %v2797
        %v2799 = vpop.f32.mrf.mxu0
        %v2800 = vpop.f32.mrf.mxu0
        %v2801 = vadd.f32 0.0, %v2800
        %v2802 = vpop.f32.mrf.mxu0
        %2803 = vdwg.mxu0
        %2804 = vrot.lane.b32.xlu0 %v2595, 80
        %v2805 = vpop.permute.xlu0 %2804
        %2806 = vrot.lane.b32.xlu0 %v2596, 80
        %v2807 = vpop.permute.xlu0 %2806
        %2808 = vrot.lane.b32.xlu0 %v2595, 16
        %v2809 = vpop.permute.xlu0 %2808
        %2810 = vrot.lane.b32.xlu0 %v2596, 16
        %v2811 = vpop.permute.xlu0 %2810
        %v2813 = vsel %vm1014, %v2805, 0
        %v2816 = vsel %vm1014, %v2807, 0
        %v2819 = vsel %vm1014, %v2809, 0
        %v2822 = vsel %vm1014, %v2811, 0
        %2824 = vmatprep.subr.bf16.mxu0 0
        %2825 = vmatpush1.bf16.xpose.msra.mxu0 0
        %2826 = vmatprep.subr.bf16.mxu0 0
        %2827 = vmatpush1.bf16.xpose.msra.mxu0 0
        %2828 = vmatprep.subr.bf16.mxu0 0
        %2829 = vmatpush1.bf16.xpose.msra.mxu0 0
        %2830 = vmatprep.subr.bf16.mxu0 0
        %2831 = vmatpush1.bf16.xpose.msra.mxu0 0
        %2832 = vmatprep.subr.bf16.mxu0 0
        %2833 = vmatpush1.bf16.xpose.msra.mxu0 0
        %2834 = vmatprep.subr.bf16.mxu0 0
        %2835 = vmatpush1.bf16.xpose.msra.mxu0 0
        %2836 = vmatprep.subr.bf16.mxu0 0
        %2837 = vmatpush1.bf16.xpose.msra.mxu0 %v2822
        %2838 = vmatprep.subr.bf16.mxu0 0
        %2839 = vmatpush1.bf16.xpose.msra.mxu0 %v2819
        %2840 = vmatprep.subr.bf16.mxu0 0
        %2841 = vmatpush2.bf16.xpose.msra.mxu0 0
        %2842 = vmatprep.subr.bf16.mxu0 0
        %2843 = vmatpush2.bf16.xpose.msra.mxu0 0
        %2844 = vmatprep.subr.bf16.mxu0 0
        %2845 = vmatpush2.bf16.xpose.msra.mxu0 0
        %2846 = vmatprep.subr.bf16.mxu0 0
        %2847 = vmatpush2.bf16.xpose.msra.mxu0 0
        %2848 = vmatprep.subr.bf16.mxu0 0
        %2849 = vmatpush2.bf16.xpose.msra.mxu0 0
        %2850 = vmatprep.subr.bf16.mxu0 0
        %2851 = vmatpush2.bf16.xpose.msra.mxu0 0
        %2852 = vmatprep.subr.bf16.mxu0 0
        %2853 = vmatpush2.bf16.xpose.msra.mxu0 0
        %2854 = vmatprep.subr.bf16.mxu0 0
        %2855 = vmatpush2.bf16.xpose.msra.mxu0 0
        %2856 = vmatprep.mubr.bf16.mxu0 0
        %2857 = vmatmul.mubr.bf16.gmra.mxu0 %v2813
        %v2858 = vpop.f32.mrf.mxu0
        %v2859 = vadd.f32 0.0, %v2858
        %v2860 = vpop.f32.mrf.mxu0
        %v2861 = vpop.f32.mrf.mxu0
        %v2862 = vadd.f32 0.0, %v2861
        %v2863 = vpop.f32.mrf.mxu0
        %2864 = vmatprep.mubr.bf16.mxu0 0
        %2865 = vmatmul.mubr.bf16.gmra.mxu0 %v2816
        %v2866 = vpop.f32.mrf.mxu0
        %v2867 = vadd.f32 0.0, %v2866
        %v2868 = vpop.f32.mrf.mxu0
        %v2869 = vpop.f32.mrf.mxu0
        %v2870 = vadd.f32 0.0, %v2869
        %v2871 = vpop.f32.mrf.mxu0
        %2872 = vdwg.mxu0
        %v2873 = vmul.f32 %v2652, 0.25
        %v2874 = vmul.f32 %v2655, 0.25
        %v2875 = vmul.f32 %v2660, 0.25
        %v2876 = vmul.f32 %v2663, 0.25
        %v2877 = vmul.f32 %v2721, 0.25
        %v2878 = vmul.f32 %v2724, 0.25
        %v2879 = vmul.f32 %v2729, 0.25
        %v2880 = vmul.f32 %v2732, 0.25
        %v2881 = vmul.f32 %v2790, 0.25
        %v2882 = vmul.f32 %v2793, 0.25
        %v2883 = vmul.f32 %v2798, 0.25
        %v2884 = vmul.f32 %v2801, 0.25
        %v2885 = vmul.f32 %v2859, 0.25
        %v2886 = vmul.f32 %v2862, 0.25
        %v2887 = vmul.f32 %v2867, 0.25
        %v2888 = vmul.f32 %v2870, 0.25
        %v2889 = vadd.f32 %v2873, %v551
        %v2890 = vadd.f32 %v2874, %v552
        %v2891 = vadd.f32 %v2875, %v553
        %v2892 = vadd.f32 %v2876, %v554
        %v2893 = vadd.f32 %v2877, %v551
        %v2894 = vadd.f32 %v2878, %v552
        %v2895 = vadd.f32 %v2879, %v553
        %v2896 = vadd.f32 %v2880, %v554
        %v2897 = vadd.f32 %v2881, %v551
        %v2898 = vadd.f32 %v2882, %v552
        %v2899 = vadd.f32 %v2883, %v553
        %v2900 = vadd.f32 %v2884, %v554
        %v2901 = vadd.f32 %v2885, %v551
        %v2902 = vadd.f32 %v2886, %v552
        %v2903 = vadd.f32 %v2887, %v553
        %v2904 = vadd.f32 %v2888, %v554
        %v2905 = vsel %vm1315, %v2889, -inf
        %2906 = vmax.xlane.f32.xlu0 %v2905
        %v2907 = vpop.xlane.xlu0 %2906
        %v2908 = vsel %vm1315, %v2890, -inf
        %2909 = vmax.xlane.f32.xlu0 %v2908
        %v2910 = vpop.xlane.xlu0 %2909
        %v2911 = vsel %vm1315, %v2891, -inf
        %2912 = vmax.xlane.f32.xlu0 %v2911
        %v2913 = vpop.xlane.xlu0 %2912
        %v2914 = vsel %vm1315, %v2892, -inf
        %2915 = vmax.xlane.f32.xlu0 %v2914
        %v2916 = vpop.xlane.xlu0 %2915
        %v2917 = vsel %vm1315, %v2893, -inf
        %2918 = vmax.xlane.f32.xlu0 %v2917
        %v2919 = vpop.xlane.xlu0 %2918
        %v2920 = vsel %vm1315, %v2894, -inf
        %2921 = vmax.xlane.f32.xlu0 %v2920
        %v2922 = vpop.xlane.xlu0 %2921
        %v2923 = vsel %vm1315, %v2895, -inf
        %2924 = vmax.xlane.f32.xlu0 %v2923
        %v2925 = vpop.xlane.xlu0 %2924
        %v2926 = vsel %vm1315, %v2896, -inf
        %2927 = vmax.xlane.f32.xlu0 %v2926
        %v2928 = vpop.xlane.xlu0 %2927
        %v2929 = vsel %vm1315, %v2897, -inf
        %2930 = vmax.xlane.f32.xlu0 %v2929
        %v2931 = vpop.xlane.xlu0 %2930
        %v2932 = vsel %vm1315, %v2898, -inf
        %2933 = vmax.xlane.f32.xlu0 %v2932
        %v2934 = vpop.xlane.xlu0 %2933
        %v2935 = vsel %vm1315, %v2899, -inf
        %2936 = vmax.xlane.f32.xlu0 %v2935
        %v2937 = vpop.xlane.xlu0 %2936
        %v2938 = vsel %vm1315, %v2900, -inf
        %2939 = vmax.xlane.f32.xlu0 %v2938
        %v2940 = vpop.xlane.xlu0 %2939
        %v2941 = vsel %vm1315, %v2901, -inf
        %2942 = vmax.xlane.f32.xlu0 %v2941
        %v2943 = vpop.xlane.xlu0 %2942
        %v2944 = vsel %vm1315, %v2902, -inf
        %2945 = vmax.xlane.f32.xlu0 %v2944
        %v2946 = vpop.xlane.xlu0 %2945
        %v2947 = vsel %vm1315, %v2903, -inf
        %2948 = vmax.xlane.f32.xlu0 %v2947
        %v2949 = vpop.xlane.xlu0 %2948
        %v2950 = vsel %vm1315, %v2904, -inf
        %2951 = vmax.xlane.f32.xlu0 %v2950
        %v2952 = vpop.xlane.xlu0 %2951
        %v2953 = vsub.f32 %v2889, %v2907
        %v2954 = vsub.f32 %v2890, %v2910
        %v2955 = vsub.f32 %v2891, %v2913
        %v2956 = vsub.f32 %v2892, %v2916
        %v2957 = vsub.f32 %v2893, %v2919
        %v2958 = vsub.f32 %v2894, %v2922
        %v2959 = vsub.f32 %v2895, %v2925
        %v2960 = vsub.f32 %v2896, %v2928
        %v2961 = vsub.f32 %v2897, %v2931
        %v2962 = vsub.f32 %v2898, %v2934
        %v2963 = vsub.f32 %v2899, %v2937
        %v2964 = vsub.f32 %v2900, %v2940
        %v2965 = vsub.f32 %v2901, %v2943
        %v2966 = vsub.f32 %v2902, %v2946
        %v2967 = vsub.f32 %v2903, %v2949
        %v2968 = vsub.f32 %v2904, %v2952
        %v2969 = vmul.f32 %v2953, 1.442695
        %v2970 = vpow.pop %v2969
        %v2971 = vmul.f32 %v2954, 1.442695
        %v2972 = vpow.pop %v2971
        %v2973 = vmul.f32 %v2955, 1.442695
        %v2974 = vpow.pop %v2973
        %v2975 = vmul.f32 %v2956, 1.442695
        %v2976 = vpow.pop %v2975
        %v2977 = vmul.f32 %v2957, 1.442695
        %v2978 = vpow.pop %v2977
        %v2979 = vmul.f32 %v2958, 1.442695
        %v2980 = vpow.pop %v2979
        %v2981 = vmul.f32 %v2959, 1.442695
        %v2982 = vpow.pop %v2981
        %v2983 = vmul.f32 %v2960, 1.442695
        %v2984 = vpow.pop %v2983
        %v2985 = vmul.f32 %v2961, 1.442695
        %v2986 = vpow.pop %v2985
        %v2987 = vmul.f32 %v2962, 1.442695
        %v2988 = vpow.pop %v2987
        %v2989 = vmul.f32 %v2963, 1.442695
        %v2990 = vpow.pop %v2989
        %v2991 = vmul.f32 %v2964, 1.442695
        %v2992 = vpow.pop %v2991
        %v2993 = vmul.f32 %v2965, 1.442695
        %v2994 = vpow.pop %v2993
        %v2995 = vmul.f32 %v2966, 1.442695
        %v2996 = vpow.pop %v2995
        %v2997 = vmul.f32 %v2967, 1.442695
        %v2998 = vpow.pop %v2997
        %v2999 = vmul.f32 %v2968, 1.442695
        %v3000 = vpow.pop %v2999
        %v3001 = vsel %vm1315, %v2970, 0.0
        %3002 = vadd.xlane.f32.xlu0 %v3001
        %v3003 = vpop.xlane.xlu0 %3002
        %v3004 = vsel %vm1315, %v2972, 0.0
        %3005 = vadd.xlane.f32.xlu0 %v3004
        %v3006 = vpop.xlane.xlu0 %3005
        %v3007 = vsel %vm1315, %v2974, 0.0
        %3008 = vadd.xlane.f32.xlu0 %v3007
        %v3009 = vpop.xlane.xlu0 %3008
        %v3010 = vsel %vm1315, %v2976, 0.0
        %3011 = vadd.xlane.f32.xlu0 %v3010
        %v3012 = vpop.xlane.xlu0 %3011
        %v3013 = vsel %vm1315, %v2978, 0.0
        %3014 = vadd.xlane.f32.xlu0 %v3013
        %v3015 = vpop.xlane.xlu0 %3014
        %v3016 = vsel %vm1315, %v2980, 0.0
        %3017 = vadd.xlane.f32.xlu0 %v3016
        %v3018 = vpop.xlane.xlu0 %3017
        %v3019 = vsel %vm1315, %v2982, 0.0
        %3020 = vadd.xlane.f32.xlu0 %v3019
        %v3021 = vpop.xlane.xlu0 %3020
        %v3022 = vsel %vm1315, %v2984, 0.0
        %3023 = vadd.xlane.f32.xlu0 %v3022
        %v3024 = vpop.xlane.xlu0 %3023
        %v3025 = vsel %vm1315, %v2986, 0.0
        %3026 = vadd.xlane.f32.xlu0 %v3025
        %v3027 = vpop.xlane.xlu0 %3026
        %v3028 = vsel %vm1315, %v2988, 0.0
        %3029 = vadd.xlane.f32.xlu0 %v3028
        %v3030 = vpop.xlane.xlu0 %3029
        %v3031 = vsel %vm1315, %v2990, 0.0
        %3032 = vadd.xlane.f32.xlu0 %v3031
        %v3033 = vpop.xlane.xlu0 %3032
        %v3034 = vsel %vm1315, %v2992, 0.0
        %3035 = vadd.xlane.f32.xlu0 %v3034
        %v3036 = vpop.xlane.xlu0 %3035
        %v3037 = vsel %vm1315, %v2994, 0.0
        %3038 = vadd.xlane.f32.xlu0 %v3037
        %v3039 = vpop.xlane.xlu0 %3038
        %v3040 = vsel %vm1315, %v2996, 0.0
        %3041 = vadd.xlane.f32.xlu0 %v3040
        %v3042 = vpop.xlane.xlu0 %3041
        %v3043 = vsel %vm1315, %v2998, 0.0
        %3044 = vadd.xlane.f32.xlu0 %v3043
        %v3045 = vpop.xlane.xlu0 %3044
        %v3046 = vsel %vm1315, %v3000, 0.0
        %3047 = vadd.xlane.f32.xlu0 %v3046
        %v3048 = vpop.xlane.xlu0 %3047
        %v3049 = vrcp.pop %v3003
        %v3050 = vrcp.pop %v3006
        %v3051 = vrcp.pop %v3009
        %v3052 = vrcp.pop %v3012
        %v3053 = vrcp.pop %v3015
        %v3054 = vrcp.pop %v3018
        %v3055 = vrcp.pop %v3021
        %v3056 = vrcp.pop %v3024
        %v3057 = vrcp.pop %v3027
        %v3058 = vrcp.pop %v3030
        %v3059 = vrcp.pop %v3033
        %v3060 = vrcp.pop %v3036
        %v3061 = vrcp.pop %v3039
        %v3062 = vrcp.pop %v3042
        %v3063 = vrcp.pop %v3045
        %v3064 = vrcp.pop %v3048
        %v3065 = vmul.f32 %v2970, %v3049
        %v3066 = vmul.f32 %v2972, %v3050
        %v3067 = vmul.f32 %v2974, %v3051
        %v3068 = vmul.f32 %v2976, %v3052
        %v3069 = vmul.f32 %v2978, %v3053
        %v3070 = vmul.f32 %v2980, %v3054
        %v3071 = vmul.f32 %v2982, %v3055
        %v3072 = vmul.f32 %v2984, %v3056
        %v3073 = vmul.f32 %v2986, %v3057
        %v3074 = vmul.f32 %v2988, %v3058
        %v3075 = vmul.f32 %v2990, %v3059
        %v3076 = vmul.f32 %v2992, %v3060
        %v3077 = vmul.f32 %v2994, %v3061
        %v3078 = vmul.f32 %v2996, %v3062
        %v3079 = vmul.f32 %v2998, %v3063
        %v3080 = vmul.f32 %v3000, %v3064
        %v3081 = vpack.c.bf16 %v3066, %v3065
        %v3082 = vpack.c.bf16 %v3068, %v3067
        %v3083 = vpack.c.bf16 %v3070, %v3069
        %v3084 = vpack.c.bf16 %v3072, %v3071
        %v3085 = vpack.c.bf16 %v3074, %v3073
        %v3086 = vpack.c.bf16 %v3076, %v3075
        %v3087 = vpack.c.bf16 %v3078, %v3077
        %v3088 = vpack.c.bf16 %v3080, %v3079
        %v3090 = vsel %vm1315, %v3081, 0
        %v3093 = vsel %vm1315, %v3082, 0
        %3095 = vmatprep.subr.bf16.mxu0 0
        %3096 = vmatpush1.bf16.msra.mxu0 0
        %3097 = vmatprep.subr.bf16.mxu0 0
        %3098 = vmatpush1.bf16.msra.mxu0 0
        %3099 = vmatprep.subr.bf16.mxu0 0
        %3100 = vmatpush1.bf16.msra.mxu0 0
        %3101 = vmatprep.subr.bf16.mxu0 0
        %3102 = vmatpush1.bf16.msra.mxu0 0
        %3103 = vmatprep.subr.bf16.mxu0 0
        %3104 = vmatpush1.bf16.msra.mxu0 0
        %3105 = vmatprep.subr.bf16.mxu0 0
        %3106 = vmatpush1.bf16.msra.mxu0 0
        %3107 = vmatprep.subr.bf16.mxu0 0
        %3108 = vmatpush1.bf16.msra.mxu0 %v2598
        %3109 = vmatprep.subr.bf16.mxu0 0
        %3110 = vmatpush1.bf16.msra.mxu0 %v2597
        %3111 = vmatprep.subr.bf16.mxu0 0
        %3112 = vmatpush2.bf16.msra.mxu0 0
        %3113 = vmatprep.subr.bf16.mxu0 0
        %3114 = vmatpush2.bf16.msra.mxu0 0
        %3115 = vmatprep.subr.bf16.mxu0 0
        %3116 = vmatpush2.bf16.msra.mxu0 0
        %3117 = vmatprep.subr.bf16.mxu0 0
        %3118 = vmatpush2.bf16.msra.mxu0 0
        %3119 = vmatprep.subr.bf16.mxu0 0
        %3120 = vmatpush2.bf16.msra.mxu0 0
        %3121 = vmatprep.subr.bf16.mxu0 0
        %3122 = vmatpush2.bf16.msra.mxu0 0
        %3123 = vmatprep.subr.bf16.mxu0 0
        %3124 = vmatpush2.bf16.msra.mxu0 0
        %3125 = vmatprep.subr.bf16.mxu0 0
        %3126 = vmatpush2.bf16.msra.mxu0 0
        %3127 = vmatprep.mubr.bf16.mxu0 0
        %3128 = vmatmul.mubr.bf16.gmra.mxu0 %v3090
        %v3129 = vpop.f32.mrf.mxu0
        %v3130 = vadd.f32 0.0, %v3129
        %v3131 = vpop.f32.mrf.mxu0
        %v3132 = vpop.f32.mrf.mxu0
        %v3133 = vadd.f32 0.0, %v3132
        %v3134 = vpop.f32.mrf.mxu0
        %3135 = vmatprep.mubr.bf16.mxu0 0
        %3136 = vmatmul.mubr.bf16.gmra.mxu0 %v3093
        %v3137 = vpop.f32.mrf.mxu0
        %v3138 = vadd.f32 0.0, %v3137
        %v3139 = vpop.f32.mrf.mxu0
        %v3140 = vpop.f32.mrf.mxu0
        %v3141 = vadd.f32 0.0, %v3140
        %v3142 = vpop.f32.mrf.mxu0
        %3143 = vdwg.mxu0
        %3146 = vrot.lane.b32.xlu0 %v2597, 112
        %v3147 = vpop.permute.xlu0 %3146
        %3148 = vrot.lane.b32.xlu0 %v2598, 112
        %v3149 = vpop.permute.xlu0 %3148
        %v3153 = vsel %vm1315, %v3083, 0
        %v3156 = vsel %vm1315, %v3084, 0
        %3158 = vmatprep.subr.bf16.mxu0 0
        %3159 = vmatpush1.bf16.msra.mxu0 0
        %3160 = vmatprep.subr.bf16.mxu0 0
        %3161 = vmatpush1.bf16.msra.mxu0 0
        %3162 = vmatprep.subr.bf16.mxu0 0
        %3163 = vmatpush1.bf16.msra.mxu0 0
        %3164 = vmatprep.subr.bf16.mxu0 0
        %3165 = vmatpush1.bf16.msra.mxu0 0
        %3166 = vmatprep.subr.bf16.mxu0 0
        %3167 = vmatpush1.bf16.msra.mxu0 0
        %3168 = vmatprep.subr.bf16.mxu0 0
        %3169 = vmatpush1.bf16.msra.mxu0 0
        %3170 = vmatprep.subr.bf16.mxu0 0
        %3171 = vmatpush1.bf16.msra.mxu0 %v3149
        %3172 = vmatprep.subr.bf16.mxu0 0
        %3173 = vmatpush1.bf16.msra.mxu0 %v3147
        %3174 = vmatprep.subr.bf16.mxu0 0
        %3175 = vmatpush2.bf16.msra.mxu0 0
        %3176 = vmatprep.subr.bf16.mxu0 0
        %3177 = vmatpush2.bf16.msra.mxu0 0
        %3178 = vmatprep.subr.bf16.mxu0 0
        %3179 = vmatpush2.bf16.msra.mxu0 0
        %3180 = vmatprep.subr.bf16.mxu0 0
        %3181 = vmatpush2.bf16.msra.mxu0 0
        %3182 = vmatprep.subr.bf16.mxu0 0
        %3183 = vmatpush2.bf16.msra.mxu0 0
        %3184 = vmatprep.subr.bf16.mxu0 0
        %3185 = vmatpush2.bf16.msra.mxu0 0
        %3186 = vmatprep.subr.bf16.mxu0 0
        %3187 = vmatpush2.bf16.msra.mxu0 0
        %3188 = vmatprep.subr.bf16.mxu0 0
        %3189 = vmatpush2.bf16.msra.mxu0 0
        %3190 = vmatprep.mubr.bf16.mxu0 0
        %3191 = vmatmul.mubr.bf16.gmra.mxu0 %v3153
        %v3192 = vpop.f32.mrf.mxu0
        %v3193 = vadd.f32 0.0, %v3192
        %v3194 = vpop.f32.mrf.mxu0
        %v3195 = vpop.f32.mrf.mxu0
        %v3196 = vadd.f32 0.0, %v3195
        %v3197 = vpop.f32.mrf.mxu0
        %3198 = vmatprep.mubr.bf16.mxu0 0
        %3199 = vmatmul.mubr.bf16.gmra.mxu0 %v3156
        %v3200 = vpop.f32.mrf.mxu0
        %v3201 = vadd.f32 0.0, %v3200
        %v3202 = vpop.f32.mrf.mxu0
        %v3203 = vpop.f32.mrf.mxu0
        %v3204 = vadd.f32 0.0, %v3203
        %v3205 = vpop.f32.mrf.mxu0
        %3206 = vdwg.mxu0
        %3207 = vrot.lane.b32.xlu0 %v2597, 96
        %v3208 = vpop.permute.xlu0 %3207
        %3209 = vrot.lane.b32.xlu0 %v2598, 96
        %v3210 = vpop.permute.xlu0 %3209
        %v3214 = vsel %vm1315, %v3085, 0
        %v3217 = vsel %vm1315, %v3086, 0
        %3219 = vmatprep.subr.bf16.mxu0 0
        %3220 = vmatpush1.bf16.msra.mxu0 0
        %3221 = vmatprep.subr.bf16.mxu0 0
        %3222 = vmatpush1.bf16.msra.mxu0 0
        %3223 = vmatprep.subr.bf16.mxu0 0
        %3224 = vmatpush1.bf16.msra.mxu0 0
        %3225 = vmatprep.subr.bf16.mxu0 0
        %3226 = vmatpush1.bf16.msra.mxu0 0
        %3227 = vmatprep.subr.bf16.mxu0 0
        %3228 = vmatpush1.bf16.msra.mxu0 0
        %3229 = vmatprep.subr.bf16.mxu0 0
        %3230 = vmatpush1.bf16.msra.mxu0 0
        %3231 = vmatprep.subr.bf16.mxu0 0
        %3232 = vmatpush1.bf16.msra.mxu0 %v3210
        %3233 = vmatprep.subr.bf16.mxu0 0
        %3234 = vmatpush1.bf16.msra.mxu0 %v3208
        %3235 = vmatprep.subr.bf16.mxu0 0
        %3236 = vmatpush2.bf16.msra.mxu0 0
        %3237 = vmatprep.subr.bf16.mxu0 0
        %3238 = vmatpush2.bf16.msra.mxu0 0
        %3239 = vmatprep.subr.bf16.mxu0 0
        %3240 = vmatpush2.bf16.msra.mxu0 0
        %3241 = vmatprep.subr.bf16.mxu0 0
        %3242 = vmatpush2.bf16.msra.mxu0 0
        %3243 = vmatprep.subr.bf16.mxu0 0
        %3244 = vmatpush2.bf16.msra.mxu0 0
        %3245 = vmatprep.subr.bf16.mxu0 0
        %3246 = vmatpush2.bf16.msra.mxu0 0
        %3247 = vmatprep.subr.bf16.mxu0 0
        %3248 = vmatpush2.bf16.msra.mxu0 0
        %3249 = vmatprep.subr.bf16.mxu0 0
        %3250 = vmatpush2.bf16.msra.mxu0 0
        %3251 = vmatprep.mubr.bf16.mxu0 0
        %3252 = vmatmul.mubr.bf16.gmra.mxu0 %v3214
        %v3253 = vpop.f32.mrf.mxu0
        %v3254 = vadd.f32 0.0, %v3253
        %v3255 = vpop.f32.mrf.mxu0
        %v3256 = vpop.f32.mrf.mxu0
        %v3257 = vadd.f32 0.0, %v3256
        %v3258 = vpop.f32.mrf.mxu0
        %3259 = vmatprep.mubr.bf16.mxu0 0
        %3260 = vmatmul.mubr.bf16.gmra.mxu0 %v3217
        %v3261 = vpop.f32.mrf.mxu0
        %v3262 = vadd.f32 0.0, %v3261
        %v3263 = vpop.f32.mrf.mxu0
        %v3264 = vpop.f32.mrf.mxu0
        %v3265 = vadd.f32 0.0, %v3264
        %v3266 = vpop.f32.mrf.mxu0
        %3267 = vdwg.mxu0
        %3268 = vrot.lane.b32.xlu0 %v2597, 80
        %v3269 = vpop.permute.xlu0 %3268
        %3270 = vrot.lane.b32.xlu0 %v2598, 80
        %v3271 = vpop.permute.xlu0 %3270
        %v3275 = vsel %vm1315, %v3087, 0
        %v3278 = vsel %vm1315, %v3088, 0
        %3280 = vmatprep.subr.bf16.mxu0 0
        %3281 = vmatpush1.bf16.msra.mxu0 0
        %3282 = vmatprep.subr.bf16.mxu0 0
        %3283 = vmatpush1.bf16.msra.mxu0 0
        %3284 = vmatprep.subr.bf16.mxu0 0
        %3285 = vmatpush1.bf16.msra.mxu0 0
        %3286 = vmatprep.subr.bf16.mxu0 0
        %3287 = vmatpush1.bf16.msra.mxu0 0
        %3288 = vmatprep.subr.bf16.mxu0 0
        %3289 = vmatpush1.bf16.msra.mxu0 0
        %3290 = vmatprep.subr.bf16.mxu0 0
        %3291 = vmatpush1.bf16.msra.mxu0 0
        %3292 = vmatprep.subr.bf16.mxu0 0
        %3293 = vmatpush1.bf16.msra.mxu0 %v3271
        %3294 = vmatprep.subr.bf16.mxu0 0
        %3295 = vmatpush1.bf16.msra.mxu0 %v3269
        %3296 = vmatprep.subr.bf16.mxu0 0
        %3297 = vmatpush2.bf16.msra.mxu0 0
        %3298 = vmatprep.subr.bf16.mxu0 0
        %3299 = vmatpush2.bf16.msra.mxu0 0
        %3300 = vmatprep.subr.bf16.mxu0 0
        %3301 = vmatpush2.bf16.msra.mxu0 0
        %3302 = vmatprep.subr.bf16.mxu0 0
        %3303 = vmatpush2.bf16.msra.mxu0 0
        %3304 = vmatprep.subr.bf16.mxu0 0
        %3305 = vmatpush2.bf16.msra.mxu0 0
        %3306 = vmatprep.subr.bf16.mxu0 0
        %3307 = vmatpush2.bf16.msra.mxu0 0
        %3308 = vmatprep.subr.bf16.mxu0 0
        %3309 = vmatpush2.bf16.msra.mxu0 0
        %3310 = vmatprep.subr.bf16.mxu0 0
        %3311 = vmatpush2.bf16.msra.mxu0 0
        %3312 = vmatprep.mubr.bf16.mxu0 0
        %3313 = vmatmul.mubr.bf16.gmra.mxu0 %v3275
        %v3314 = vpop.f32.mrf.mxu0
        %v3315 = vadd.f32 0.0, %v3314
        %v3316 = vpop.f32.mrf.mxu0
        %v3317 = vpop.f32.mrf.mxu0
        %v3318 = vadd.f32 0.0, %v3317
        %v3319 = vpop.f32.mrf.mxu0
        %3320 = vmatprep.mubr.bf16.mxu0 0
        %3321 = vmatmul.mubr.bf16.gmra.mxu0 %v3278
        %v3322 = vpop.f32.mrf.mxu0
        %v3323 = vadd.f32 0.0, %v3322
        %v3324 = vpop.f32.mrf.mxu0
        %v3325 = vpop.f32.mrf.mxu0
        %v3326 = vadd.f32 0.0, %v3325
        %v3327 = vpop.f32.mrf.mxu0
        %3328 = vdwg.mxu0
        %3333 = vrot.lane.b32.xlu0 %v3193, 16
        %v3334 = vpop.permute.xlu0 %3333
        %3335 = vrot.lane.b32.xlu0 %v3196, 16
        %v3336 = vpop.permute.xlu0 %3335
        %3337 = vrot.lane.b32.xlu0 %v3201, 16
        %v3338 = vpop.permute.xlu0 %3337
        %3339 = vrot.lane.b32.xlu0 %v3204, 16
        %v3340 = vpop.permute.xlu0 %3339
        %3349 = vrot.lane.b32.xlu0 %v3254, 32
        %v3350 = vpop.permute.xlu0 %3349
        %3351 = vrot.lane.b32.xlu0 %v3257, 32
        %v3352 = vpop.permute.xlu0 %3351
        %3353 = vrot.lane.b32.xlu0 %v3262, 32
        %v3354 = vpop.permute.xlu0 %3353
        %3355 = vrot.lane.b32.xlu0 %v3265, 32
        %v3356 = vpop.permute.xlu0 %3355
        %3365 = vrot.lane.b32.xlu0 %v3315, 48
        %v3366 = vpop.permute.xlu0 %3365
        %3367 = vrot.lane.b32.xlu0 %v3318, 48
        %v3368 = vpop.permute.xlu0 %3367
        %3369 = vrot.lane.b32.xlu0 %v3323, 48
        %v3370 = vpop.permute.xlu0 %3369
        %3371 = vrot.lane.b32.xlu0 %v3326, 48
        %v3372 = vpop.permute.xlu0 %3371
        %v3377 = vsel %vm1014, %v3130, %v3334
        %v3378 = vsel %vm1014, %v3133, %v3336
        %v3379 = vsel %vm1014, %v3138, %v3338
        %v3380 = vsel %vm1014, %v3141, %v3340
        %v3381 = vsel %vm1315, %v3377, %v3350
        %v3382 = vsel %vm1315, %v3378, %v3352
        %v3383 = vsel %vm1315, %v3379, %v3354
        %v3384 = vsel %vm1315, %v3380, %v3356
        %v3385 = vsel %vm1796, %v3381, %v3366
        %v3386 = vsel %vm1796, %v3382, %v3368
        %v3387 = vsel %vm1796, %v3383, %v3370
        %v3388 = vsel %vm1796, %v3384, %v3372
        %v3389 = vpack.c.bf16 %v990, %v986
        %v3390 = vpack.c.bf16 %v1000, %v996
        %v3391 = vpack.c.bf16 %v992, %v988
        %v3392 = vpack.c.bf16 %v1002, %v998
        %3395 = vrot.lane.b32.xlu0 %v3389, 64
        %v3396 = vpop.permute.xlu0 %3395
        %3397 = vrot.lane.b32.xlu0 %v3390, 64
        %v3398 = vpop.permute.xlu0 %3397
        %v3400 = vsel %vm1014, %v3389, 0
        %v3403 = vsel %vm1014, %v3390, 0
        %v3406 = vsel %vm1014, %v3396, 0
        %v3409 = vsel %vm1014, %v3398, 0
        %3411 = vmatprep.subr.bf16.mxu0 0
        %3412 = vmatpush1.bf16.xpose.msra.mxu0 0
        %3413 = vmatprep.subr.bf16.mxu0 0
        %3414 = vmatpush1.bf16.xpose.msra.mxu0 0
        %3415 = vmatprep.subr.bf16.mxu0 0
        %3416 = vmatpush1.bf16.xpose.msra.mxu0 0
        %3417 = vmatprep.subr.bf16.mxu0 0
        %3418 = vmatpush1.bf16.xpose.msra.mxu0 0
        %3419 = vmatprep.subr.bf16.mxu0 0
        %3420 = vmatpush1.bf16.xpose.msra.mxu0 0
        %3421 = vmatprep.subr.bf16.mxu0 0
        %3422 = vmatpush1.bf16.xpose.msra.mxu0 0
        %3423 = vmatprep.subr.bf16.mxu0 0
        %3424 = vmatpush1.bf16.xpose.msra.mxu0 %v3409
        %3425 = vmatprep.subr.bf16.mxu0 0
        %3426 = vmatpush1.bf16.xpose.msra.mxu0 %v3406
        %3427 = vmatprep.subr.bf16.mxu0 0
        %3428 = vmatpush2.bf16.xpose.msra.mxu0 0
        %3429 = vmatprep.subr.bf16.mxu0 0
        %3430 = vmatpush2.bf16.xpose.msra.mxu0 0
        %3431 = vmatprep.subr.bf16.mxu0 0
        %3432 = vmatpush2.bf16.xpose.msra.mxu0 0
        %3433 = vmatprep.subr.bf16.mxu0 0
        %3434 = vmatpush2.bf16.xpose.msra.mxu0 0
        %3435 = vmatprep.subr.bf16.mxu0 0
        %3436 = vmatpush2.bf16.xpose.msra.mxu0 0
        %3437 = vmatprep.subr.bf16.mxu0 0
        %3438 = vmatpush2.bf16.xpose.msra.mxu0 0
        %3439 = vmatprep.subr.bf16.mxu0 0
        %3440 = vmatpush2.bf16.xpose.msra.mxu0 0
        %3441 = vmatprep.subr.bf16.mxu0 0
        %3442 = vmatpush2.bf16.xpose.msra.mxu0 0
        %3443 = vmatprep.mubr.bf16.mxu0 0
        %3444 = vmatmul.mubr.bf16.gmra.mxu0 %v3400
        %v3445 = vpop.f32.mrf.mxu0
        %v3446 = vadd.f32 0.0, %v3445
        %v3447 = vpop.f32.mrf.mxu0
        %v3448 = vpop.f32.mrf.mxu0
        %v3449 = vadd.f32 0.0, %v3448
        %v3450 = vpop.f32.mrf.mxu0
        %3451 = vmatprep.mubr.bf16.mxu0 0
        %3452 = vmatmul.mubr.bf16.gmra.mxu0 %v3403
        %v3453 = vpop.f32.mrf.mxu0
        %v3454 = vadd.f32 0.0, %v3453
        %v3455 = vpop.f32.mrf.mxu0
        %v3456 = vpop.f32.mrf.mxu0
        %v3457 = vadd.f32 0.0, %v3456
        %v3458 = vpop.f32.mrf.mxu0
        %3459 = vdwg.mxu0
        %3460 = vrot.lane.b32.xlu0 %v3389, 112
        %v3461 = vpop.permute.xlu0 %3460
        %3462 = vrot.lane.b32.xlu0 %v3390, 112
        %v3463 = vpop.permute.xlu0 %3462
        %3464 = vrot.lane.b32.xlu0 %v3389, 48
        %v3465 = vpop.permute.xlu0 %3464
        %3466 = vrot.lane.b32.xlu0 %v3390, 48
        %v3467 = vpop.permute.xlu0 %3466
        %v3469 = vsel %vm1014, %v3461, 0
        %v3472 = vsel %vm1014, %v3463, 0
        %v3475 = vsel %vm1014, %v3465, 0
        %v3478 = vsel %vm1014, %v3467, 0
        %3480 = vmatprep.subr.bf16.mxu0 0
        %3481 = vmatpush1.bf16.xpose.msra.mxu0 0
        %3482 = vmatprep.subr.bf16.mxu0 0
        %3483 = vmatpush1.bf16.xpose.msra.mxu0 0
        %3484 = vmatprep.subr.bf16.mxu0 0
        %3485 = vmatpush1.bf16.xpose.msra.mxu0 0
        %3486 = vmatprep.subr.bf16.mxu0 0
        %3487 = vmatpush1.bf16.xpose.msra.mxu0 0
        %3488 = vmatprep.subr.bf16.mxu0 0
        %3489 = vmatpush1.bf16.xpose.msra.mxu0 0
        %3490 = vmatprep.subr.bf16.mxu0 0
        %3491 = vmatpush1.bf16.xpose.msra.mxu0 0
        %3492 = vmatprep.subr.bf16.mxu0 0
        %3493 = vmatpush1.bf16.xpose.msra.mxu0 %v3478
        %3494 = vmatprep.subr.bf16.mxu0 0
        %3495 = vmatpush1.bf16.xpose.msra.mxu0 %v3475
        %3496 = vmatprep.subr.bf16.mxu0 0
        %3497 = vmatpush2.bf16.xpose.msra.mxu0 0
        %3498 = vmatprep.subr.bf16.mxu0 0
        %3499 = vmatpush2.bf16.xpose.msra.mxu0 0
        %3500 = vmatprep.subr.bf16.mxu0 0
        %3501 = vmatpush2.bf16.xpose.msra.mxu0 0
        %3502 = vmatprep.subr.bf16.mxu0 0
        %3503 = vmatpush2.bf16.xpose.msra.mxu0 0
        %3504 = vmatprep.subr.bf16.mxu0 0
        %3505 = vmatpush2.bf16.xpose.msra.mxu0 0
        %3506 = vmatprep.subr.bf16.mxu0 0
        %3507 = vmatpush2.bf16.xpose.msra.mxu0 0
        %3508 = vmatprep.subr.bf16.mxu0 0
        %3509 = vmatpush2.bf16.xpose.msra.mxu0 0
        %3510 = vmatprep.subr.bf16.mxu0 0
        %3511 = vmatpush2.bf16.xpose.msra.mxu0 0
        %3512 = vmatprep.mubr.bf16.mxu0 0
        %3513 = vmatmul.mubr.bf16.gmra.mxu0 %v3469
        %v3514 = vpop.f32.mrf.mxu0
        %v3515 = vadd.f32 0.0, %v3514
        %v3516 = vpop.f32.mrf.mxu0
        %v3517 = vpop.f32.mrf.mxu0
        %v3518 = vadd.f32 0.0, %v3517
        %v3519 = vpop.f32.mrf.mxu0
        %3520 = vmatprep.mubr.bf16.mxu0 0
        %3521 = vmatmul.mubr.bf16.gmra.mxu0 %v3472
        %v3522 = vpop.f32.mrf.mxu0
        %v3523 = vadd.f32 0.0, %v3522
        %v3524 = vpop.f32.mrf.mxu0
        %v3525 = vpop.f32.mrf.mxu0
        %v3526 = vadd.f32 0.0, %v3525
        %v3527 = vpop.f32.mrf.mxu0
        %3528 = vdwg.mxu0
        %3529 = vrot.lane.b32.xlu0 %v3389, 96
        %v3530 = vpop.permute.xlu0 %3529
        %3531 = vrot.lane.b32.xlu0 %v3390, 96
        %v3532 = vpop.permute.xlu0 %3531
        %3533 = vrot.lane.b32.xlu0 %v3389, 32
        %v3534 = vpop.permute.xlu0 %3533
        %3535 = vrot.lane.b32.xlu0 %v3390, 32
        %v3536 = vpop.permute.xlu0 %3535
        %v3538 = vsel %vm1014, %v3530, 0
        %v3541 = vsel %vm1014, %v3532, 0
        %v3544 = vsel %vm1014, %v3534, 0
        %v3547 = vsel %vm1014, %v3536, 0
        %3549 = vmatprep.subr.bf16.mxu0 0
        %3550 = vmatpush1.bf16.xpose.msra.mxu0 0
        %3551 = vmatprep.subr.bf16.mxu0 0
        %3552 = vmatpush1.bf16.xpose.msra.mxu0 0
        %3553 = vmatprep.subr.bf16.mxu0 0
        %3554 = vmatpush1.bf16.xpose.msra.mxu0 0
        %3555 = vmatprep.subr.bf16.mxu0 0
        %3556 = vmatpush1.bf16.xpose.msra.mxu0 0
        %3557 = vmatprep.subr.bf16.mxu0 0
        %3558 = vmatpush1.bf16.xpose.msra.mxu0 0
        %3559 = vmatprep.subr.bf16.mxu0 0
        %3560 = vmatpush1.bf16.xpose.msra.mxu0 0
        %3561 = vmatprep.subr.bf16.mxu0 0
        %3562 = vmatpush1.bf16.xpose.msra.mxu0 %v3547
        %3563 = vmatprep.subr.bf16.mxu0 0
        %3564 = vmatpush1.bf16.xpose.msra.mxu0 %v3544
        %3565 = vmatprep.subr.bf16.mxu0 0
        %3566 = vmatpush2.bf16.xpose.msra.mxu0 0
        %3567 = vmatprep.subr.bf16.mxu0 0
        %3568 = vmatpush2.bf16.xpose.msra.mxu0 0
        %3569 = vmatprep.subr.bf16.mxu0 0
        %3570 = vmatpush2.bf16.xpose.msra.mxu0 0
        %3571 = vmatprep.subr.bf16.mxu0 0
        %3572 = vmatpush2.bf16.xpose.msra.mxu0 0
        %3573 = vmatprep.subr.bf16.mxu0 0
        %3574 = vmatpush2.bf16.xpose.msra.mxu0 0
        %3575 = vmatprep.subr.bf16.mxu0 0
        %3576 = vmatpush2.bf16.xpose.msra.mxu0 0
        %3577 = vmatprep.subr.bf16.mxu0 0
        %3578 = vmatpush2.bf16.xpose.msra.mxu0 0
        %3579 = vmatprep.subr.bf16.mxu0 0
        %3580 = vmatpush2.bf16.xpose.msra.mxu0 0
        %3581 = vmatprep.mubr.bf16.mxu0 0
        %3582 = vmatmul.mubr.bf16.gmra.mxu0 %v3538
        %v3583 = vpop.f32.mrf.mxu0
        %v3584 = vadd.f32 0.0, %v3583
        %v3585 = vpop.f32.mrf.mxu0
        %v3586 = vpop.f32.mrf.mxu0
        %v3587 = vadd.f32 0.0, %v3586
        %v3588 = vpop.f32.mrf.mxu0
        %3589 = vmatprep.mubr.bf16.mxu0 0
        %3590 = vmatmul.mubr.bf16.gmra.mxu0 %v3541
        %v3591 = vpop.f32.mrf.mxu0
        %v3592 = vadd.f32 0.0, %v3591
        %v3593 = vpop.f32.mrf.mxu0
        %v3594 = vpop.f32.mrf.mxu0
        %v3595 = vadd.f32 0.0, %v3594
        %v3596 = vpop.f32.mrf.mxu0
        %3597 = vdwg.mxu0
        %3598 = vrot.lane.b32.xlu0 %v3389, 80
        %v3599 = vpop.permute.xlu0 %3598
        %3600 = vrot.lane.b32.xlu0 %v3390, 80
        %v3601 = vpop.permute.xlu0 %3600
        %3602 = vrot.lane.b32.xlu0 %v3389, 16
        %v3603 = vpop.permute.xlu0 %3602
        %3604 = vrot.lane.b32.xlu0 %v3390, 16
        %v3605 = vpop.permute.xlu0 %3604
        %v3607 = vsel %vm1014, %v3599, 0
        %v3610 = vsel %vm1014, %v3601, 0
        %v3613 = vsel %vm1014, %v3603, 0
        %v3616 = vsel %vm1014, %v3605, 0
        %3618 = vmatprep.subr.bf16.mxu0 0
        %3619 = vmatpush1.bf16.xpose.msra.mxu0 0
        %3620 = vmatprep.subr.bf16.mxu0 0
        %3621 = vmatpush1.bf16.xpose.msra.mxu0 0
        %3622 = vmatprep.subr.bf16.mxu0 0
        %3623 = vmatpush1.bf16.xpose.msra.mxu0 0
        %3624 = vmatprep.subr.bf16.mxu0 0
        %3625 = vmatpush1.bf16.xpose.msra.mxu0 0
        %3626 = vmatprep.subr.bf16.mxu0 0
        %3627 = vmatpush1.bf16.xpose.msra.mxu0 0
        %3628 = vmatprep.subr.bf16.mxu0 0
        %3629 = vmatpush1.bf16.xpose.msra.mxu0 0
        %3630 = vmatprep.subr.bf16.mxu0 0
        %3631 = vmatpush1.bf16.xpose.msra.mxu0 %v3616
        %3632 = vmatprep.subr.bf16.mxu0 0
        %3633 = vmatpush1.bf16.xpose.msra.mxu0 %v3613
        %3634 = vmatprep.subr.bf16.mxu0 0
        %3635 = vmatpush2.bf16.xpose.msra.mxu0 0
        %3636 = vmatprep.subr.bf16.mxu0 0
        %3637 = vmatpush2.bf16.xpose.msra.mxu0 0
        %3638 = vmatprep.subr.bf16.mxu0 0
        %3639 = vmatpush2.bf16.xpose.msra.mxu0 0
        %3640 = vmatprep.subr.bf16.mxu0 0
        %3641 = vmatpush2.bf16.xpose.msra.mxu0 0
        %3642 = vmatprep.subr.bf16.mxu0 0
        %3643 = vmatpush2.bf16.xpose.msra.mxu0 0
        %3644 = vmatprep.subr.bf16.mxu0 0
        %3645 = vmatpush2.bf16.xpose.msra.mxu0 0
        %3646 = vmatprep.subr.bf16.mxu0 0
        %3647 = vmatpush2.bf16.xpose.msra.mxu0 0
        %3648 = vmatprep.subr.bf16.mxu0 0
        %3649 = vmatpush2.bf16.xpose.msra.mxu0 0
        %3650 = vmatprep.mubr.bf16.mxu0 0
        %3651 = vmatmul.mubr.bf16.gmra.mxu0 %v3607
        %v3652 = vpop.f32.mrf.mxu0
        %v3653 = vadd.f32 0.0, %v3652
        %v3654 = vpop.f32.mrf.mxu0
        %v3655 = vpop.f32.mrf.mxu0
        %v3656 = vadd.f32 0.0, %v3655
        %v3657 = vpop.f32.mrf.mxu0
        %3658 = vmatprep.mubr.bf16.mxu0 0
        %3659 = vmatmul.mubr.bf16.gmra.mxu0 %v3610
        %v3660 = vpop.f32.mrf.mxu0
        %v3661 = vadd.f32 0.0, %v3660
        %v3662 = vpop.f32.mrf.mxu0
        %v3663 = vpop.f32.mrf.mxu0
        %v3664 = vadd.f32 0.0, %v3663
        %v3665 = vpop.f32.mrf.mxu0
        %3666 = vdwg.mxu0
        %v3667 = vmul.f32 %v3446, 0.25
        %v3668 = vmul.f32 %v3449, 0.25
        %v3669 = vmul.f32 %v3454, 0.25
        %v3670 = vmul.f32 %v3457, 0.25
        %v3671 = vmul.f32 %v3515, 0.25
        %v3672 = vmul.f32 %v3518, 0.25
        %v3673 = vmul.f32 %v3523, 0.25
        %v3674 = vmul.f32 %v3526, 0.25
        %v3675 = vmul.f32 %v3584, 0.25
        %v3676 = vmul.f32 %v3587, 0.25
        %v3677 = vmul.f32 %v3592, 0.25
        %v3678 = vmul.f32 %v3595, 0.25
        %v3679 = vmul.f32 %v3653, 0.25
        %v3680 = vmul.f32 %v3656, 0.25
        %v3681 = vmul.f32 %v3661, 0.25
        %v3682 = vmul.f32 %v3664, 0.25
        %v3683 = vadd.f32 %v3667, %v551
        %v3684 = vadd.f32 %v3668, %v552
        %v3685 = vadd.f32 %v3669, %v553
        %v3686 = vadd.f32 %v3670, %v554
        %v3687 = vadd.f32 %v3671, %v551
        %v3688 = vadd.f32 %v3672, %v552
        %v3689 = vadd.f32 %v3673, %v553
        %v3690 = vadd.f32 %v3674, %v554
        %v3691 = vadd.f32 %v3675, %v551
        %v3692 = vadd.f32 %v3676, %v552
        %v3693 = vadd.f32 %v3677, %v553
        %v3694 = vadd.f32 %v3678, %v554
        %v3695 = vadd.f32 %v3679, %v551
        %v3696 = vadd.f32 %v3680, %v552
        %v3697 = vadd.f32 %v3681, %v553
        %v3698 = vadd.f32 %v3682, %v554
        %v3699 = vsel %vm1315, %v3683, -inf
        %3700 = vmax.xlane.f32.xlu0 %v3699
        %v3701 = vpop.xlane.xlu0 %3700
        %v3702 = vsel %vm1315, %v3684, -inf
        %3703 = vmax.xlane.f32.xlu0 %v3702
        %v3704 = vpop.xlane.xlu0 %3703
        %v3705 = vsel %vm1315, %v3685, -inf
        %3706 = vmax.xlane.f32.xlu0 %v3705
        %v3707 = vpop.xlane.xlu0 %3706
        %v3708 = vsel %vm1315, %v3686, -inf
        %3709 = vmax.xlane.f32.xlu0 %v3708
        %v3710 = vpop.xlane.xlu0 %3709
        %v3711 = vsel %vm1315, %v3687, -inf
        %3712 = vmax.xlane.f32.xlu0 %v3711
        %v3713 = vpop.xlane.xlu0 %3712
        %v3714 = vsel %vm1315, %v3688, -inf
        %3715 = vmax.xlane.f32.xlu0 %v3714
        %v3716 = vpop.xlane.xlu0 %3715
        %v3717 = vsel %vm1315, %v3689, -inf
        %3718 = vmax.xlane.f32.xlu0 %v3717
        %v3719 = vpop.xlane.xlu0 %3718
        %v3720 = vsel %vm1315, %v3690, -inf
        %3721 = vmax.xlane.f32.xlu0 %v3720
        %v3722 = vpop.xlane.xlu0 %3721
        %v3723 = vsel %vm1315, %v3691, -inf
        %3724 = vmax.xlane.f32.xlu0 %v3723
        %v3725 = vpop.xlane.xlu0 %3724
        %v3726 = vsel %vm1315, %v3692, -inf
        %3727 = vmax.xlane.f32.xlu0 %v3726
        %v3728 = vpop.xlane.xlu0 %3727
        %v3729 = vsel %vm1315, %v3693, -inf
        %3730 = vmax.xlane.f32.xlu0 %v3729
        %v3731 = vpop.xlane.xlu0 %3730
        %v3732 = vsel %vm1315, %v3694, -inf
        %3733 = vmax.xlane.f32.xlu0 %v3732
        %v3734 = vpop.xlane.xlu0 %3733
        %v3735 = vsel %vm1315, %v3695, -inf
        %3736 = vmax.xlane.f32.xlu0 %v3735
        %v3737 = vpop.xlane.xlu0 %3736
        %v3738 = vsel %vm1315, %v3696, -inf
        %3739 = vmax.xlane.f32.xlu0 %v3738
        %v3740 = vpop.xlane.xlu0 %3739
        %v3741 = vsel %vm1315, %v3697, -inf
        %3742 = vmax.xlane.f32.xlu0 %v3741
        %v3743 = vpop.xlane.xlu0 %3742
        %v3744 = vsel %vm1315, %v3698, -inf
        %3745 = vmax.xlane.f32.xlu0 %v3744
        %v3746 = vpop.xlane.xlu0 %3745
        %v3747 = vsub.f32 %v3683, %v3701
        %v3748 = vsub.f32 %v3684, %v3704
        %v3749 = vsub.f32 %v3685, %v3707
        %v3750 = vsub.f32 %v3686, %v3710
        %v3751 = vsub.f32 %v3687, %v3713
        %v3752 = vsub.f32 %v3688, %v3716
        %v3753 = vsub.f32 %v3689, %v3719
        %v3754 = vsub.f32 %v3690, %v3722
        %v3755 = vsub.f32 %v3691, %v3725
        %v3756 = vsub.f32 %v3692, %v3728
        %v3757 = vsub.f32 %v3693, %v3731
        %v3758 = vsub.f32 %v3694, %v3734
        %v3759 = vsub.f32 %v3695, %v3737
        %v3760 = vsub.f32 %v3696, %v3740
        %v3761 = vsub.f32 %v3697, %v3743
        %v3762 = vsub.f32 %v3698, %v3746
        %v3763 = vmul.f32 %v3747, 1.442695
        %v3764 = vpow.pop %v3763
        %v3765 = vmul.f32 %v3748, 1.442695
        %v3766 = vpow.pop %v3765
        %v3767 = vmul.f32 %v3749, 1.442695
        %v3768 = vpow.pop %v3767
        %v3769 = vmul.f32 %v3750, 1.442695
        %v3770 = vpow.pop %v3769
        %v3771 = vmul.f32 %v3751, 1.442695
        %v3772 = vpow.pop %v3771
        %v3773 = vmul.f32 %v3752, 1.442695
        %v3774 = vpow.pop %v3773
        %v3775 = vmul.f32 %v3753, 1.442695
        %v3776 = vpow.pop %v3775
        %v3777 = vmul.f32 %v3754, 1.442695
        %v3778 = vpow.pop %v3777
        %v3779 = vmul.f32 %v3755, 1.442695
        %v3780 = vpow.pop %v3779
        %v3781 = vmul.f32 %v3756, 1.442695
        %v3782 = vpow.pop %v3781
        %v3783 = vmul.f32 %v3757, 1.442695
        %v3784 = vpow.pop %v3783
        %v3785 = vmul.f32 %v3758, 1.442695
        %v3786 = vpow.pop %v3785
        %v3787 = vmul.f32 %v3759, 1.442695
        %v3788 = vpow.pop %v3787
        %v3789 = vmul.f32 %v3760, 1.442695
        %v3790 = vpow.pop %v3789
        %v3791 = vmul.f32 %v3761, 1.442695
        %v3792 = vpow.pop %v3791
        %v3793 = vmul.f32 %v3762, 1.442695
        %v3794 = vpow.pop %v3793
        %v3795 = vsel %vm1315, %v3764, 0.0
        %3796 = vadd.xlane.f32.xlu0 %v3795
        %v3797 = vpop.xlane.xlu0 %3796
        %v3798 = vsel %vm1315, %v3766, 0.0
        %3799 = vadd.xlane.f32.xlu0 %v3798
        %v3800 = vpop.xlane.xlu0 %3799
        %v3801 = vsel %vm1315, %v3768, 0.0
        %3802 = vadd.xlane.f32.xlu0 %v3801
        %v3803 = vpop.xlane.xlu0 %3802
        %v3804 = vsel %vm1315, %v3770, 0.0
        %3805 = vadd.xlane.f32.xlu0 %v3804
        %v3806 = vpop.xlane.xlu0 %3805
        %v3807 = vsel %vm1315, %v3772, 0.0
        %3808 = vadd.xlane.f32.xlu0 %v3807
        %v3809 = vpop.xlane.xlu0 %3808
        %v3810 = vsel %vm1315, %v3774, 0.0
        %3811 = vadd.xlane.f32.xlu0 %v3810
        %v3812 = vpop.xlane.xlu0 %3811
        %v3813 = vsel %vm1315, %v3776, 0.0
        %3814 = vadd.xlane.f32.xlu0 %v3813
        %v3815 = vpop.xlane.xlu0 %3814
        %v3816 = vsel %vm1315, %v3778, 0.0
        %3817 = vadd.xlane.f32.xlu0 %v3816
        %v3818 = vpop.xlane.xlu0 %3817
        %v3819 = vsel %vm1315, %v3780, 0.0
        %3820 = vadd.xlane.f32.xlu0 %v3819
        %v3821 = vpop.xlane.xlu0 %3820
        %v3822 = vsel %vm1315, %v3782, 0.0
        %3823 = vadd.xlane.f32.xlu0 %v3822
        %v3824 = vpop.xlane.xlu0 %3823
        %v3825 = vsel %vm1315, %v3784, 0.0
        %3826 = vadd.xlane.f32.xlu0 %v3825
        %v3827 = vpop.xlane.xlu0 %3826
        %v3828 = vsel %vm1315, %v3786, 0.0
        %3829 = vadd.xlane.f32.xlu0 %v3828
        %v3830 = vpop.xlane.xlu0 %3829
        %v3831 = vsel %vm1315, %v3788, 0.0
        %3832 = vadd.xlane.f32.xlu0 %v3831
        %v3833 = vpop.xlane.xlu0 %3832
        %v3834 = vsel %vm1315, %v3790, 0.0
        %3835 = vadd.xlane.f32.xlu0 %v3834
        %v3836 = vpop.xlane.xlu0 %3835
        %v3837 = vsel %vm1315, %v3792, 0.0
        %3838 = vadd.xlane.f32.xlu0 %v3837
        %v3839 = vpop.xlane.xlu0 %3838
        %v3840 = vsel %vm1315, %v3794, 0.0
        %3841 = vadd.xlane.f32.xlu0 %v3840
        %v3842 = vpop.xlane.xlu0 %3841
        %v3843 = vrcp.pop %v3797
        %v3844 = vrcp.pop %v3800
        %v3845 = vrcp.pop %v3803
        %v3846 = vrcp.pop %v3806
        %v3847 = vrcp.pop %v3809
        %v3848 = vrcp.pop %v3812
        %v3849 = vrcp.pop %v3815
        %v3850 = vrcp.pop %v3818
        %v3851 = vrcp.pop %v3821
        %v3852 = vrcp.pop %v3824
        %v3853 = vrcp.pop %v3827
        %v3854 = vrcp.pop %v3830
        %v3855 = vrcp.pop %v3833
        %v3856 = vrcp.pop %v3836
        %v3857 = vrcp.pop %v3839
        %v3858 = vrcp.pop %v3842
        %v3859 = vmul.f32 %v3764, %v3843
        %v3860 = vmul.f32 %v3766, %v3844
        %v3861 = vmul.f32 %v3768, %v3845
        %v3862 = vmul.f32 %v3770, %v3846
        %v3863 = vmul.f32 %v3772, %v3847
        %v3864 = vmul.f32 %v3774, %v3848
        %v3865 = vmul.f32 %v3776, %v3849
        %v3866 = vmul.f32 %v3778, %v3850
        %v3867 = vmul.f32 %v3780, %v3851
        %v3868 = vmul.f32 %v3782, %v3852
        %v3869 = vmul.f32 %v3784, %v3853
        %v3870 = vmul.f32 %v3786, %v3854
        %v3871 = vmul.f32 %v3788, %v3855
        %v3872 = vmul.f32 %v3790, %v3856
        %v3873 = vmul.f32 %v3792, %v3857
        %v3874 = vmul.f32 %v3794, %v3858
        %v3875 = vpack.c.bf16 %v3860, %v3859
        %v3876 = vpack.c.bf16 %v3862, %v3861
        %v3877 = vpack.c.bf16 %v3864, %v3863
        %v3878 = vpack.c.bf16 %v3866, %v3865
        %v3879 = vpack.c.bf16 %v3868, %v3867
        %v3880 = vpack.c.bf16 %v3870, %v3869
        %v3881 = vpack.c.bf16 %v3872, %v3871
        %v3882 = vpack.c.bf16 %v3874, %v3873
        %v3884 = vsel %vm1315, %v3875, 0
        %v3887 = vsel %vm1315, %v3876, 0
        %3889 = vmatprep.subr.bf16.mxu0 0
        %3890 = vmatpush1.bf16.msra.mxu0 0
        %3891 = vmatprep.subr.bf16.mxu0 0
        %3892 = vmatpush1.bf16.msra.mxu0 0
        %3893 = vmatprep.subr.bf16.mxu0 0
        %3894 = vmatpush1.bf16.msra.mxu0 0
        %3895 = vmatprep.subr.bf16.mxu0 0
        %3896 = vmatpush1.bf16.msra.mxu0 0
        %3897 = vmatprep.subr.bf16.mxu0 0
        %3898 = vmatpush1.bf16.msra.mxu0 0
        %3899 = vmatprep.subr.bf16.mxu0 0
        %3900 = vmatpush1.bf16.msra.mxu0 0
        %3901 = vmatprep.subr.bf16.mxu0 0
        %3902 = vmatpush1.bf16.msra.mxu0 %v3392
        %3903 = vmatprep.subr.bf16.mxu0 0
        %3904 = vmatpush1.bf16.msra.mxu0 %v3391
        %3905 = vmatprep.subr.bf16.mxu0 0
        %3906 = vmatpush2.bf16.msra.mxu0 0
        %3907 = vmatprep.subr.bf16.mxu0 0
        %3908 = vmatpush2.bf16.msra.mxu0 0
        %3909 = vmatprep.subr.bf16.mxu0 0
        %3910 = vmatpush2.bf16.msra.mxu0 0
        %3911 = vmatprep.subr.bf16.mxu0 0
        %3912 = vmatpush2.bf16.msra.mxu0 0
        %3913 = vmatprep.subr.bf16.mxu0 0
        %3914 = vmatpush2.bf16.msra.mxu0 0
        %3915 = vmatprep.subr.bf16.mxu0 0
        %3916 = vmatpush2.bf16.msra.mxu0 0
        %3917 = vmatprep.subr.bf16.mxu0 0
        %3918 = vmatpush2.bf16.msra.mxu0 0
        %3919 = vmatprep.subr.bf16.mxu0 0
        %3920 = vmatpush2.bf16.msra.mxu0 0
        %3921 = vmatprep.mubr.bf16.mxu0 0
        %3922 = vmatmul.mubr.bf16.gmra.mxu0 %v3884
        %v3923 = vpop.f32.mrf.mxu0
        %v3924 = vadd.f32 0.0, %v3923
        %v3925 = vpop.f32.mrf.mxu0
        %v3926 = vpop.f32.mrf.mxu0
        %v3927 = vadd.f32 0.0, %v3926
        %v3928 = vpop.f32.mrf.mxu0
        %3929 = vmatprep.mubr.bf16.mxu0 0
        %3930 = vmatmul.mubr.bf16.gmra.mxu0 %v3887
        %v3931 = vpop.f32.mrf.mxu0
        %v3932 = vadd.f32 0.0, %v3931
        %v3933 = vpop.f32.mrf.mxu0
        %v3934 = vpop.f32.mrf.mxu0
        %v3935 = vadd.f32 0.0, %v3934
        %v3936 = vpop.f32.mrf.mxu0
        %3937 = vdwg.mxu0
        %3940 = vrot.lane.b32.xlu0 %v3391, 112
        %v3941 = vpop.permute.xlu0 %3940
        %3942 = vrot.lane.b32.xlu0 %v3392, 112
        %v3943 = vpop.permute.xlu0 %3942
        %v3947 = vsel %vm1315, %v3877, 0
        %v3950 = vsel %vm1315, %v3878, 0
        %3952 = vmatprep.subr.bf16.mxu0 0
        %3953 = vmatpush1.bf16.msra.mxu0 0
        %3954 = vmatprep.subr.bf16.mxu0 0
        %3955 = vmatpush1.bf16.msra.mxu0 0
        %3956 = vmatprep.subr.bf16.mxu0 0
        %3957 = vmatpush1.bf16.msra.mxu0 0
        %3958 = vmatprep.subr.bf16.mxu0 0
        %3959 = vmatpush1.bf16.msra.mxu0 0
        %3960 = vmatprep.subr.bf16.mxu0 0
        %3961 = vmatpush1.bf16.msra.mxu0 0
        %3962 = vmatprep.subr.bf16.mxu0 0
        %3963 = vmatpush1.bf16.msra.mxu0 0
        %3964 = vmatprep.subr.bf16.mxu0 0
        %3965 = vmatpush1.bf16.msra.mxu0 %v3943
        %3966 = vmatprep.subr.bf16.mxu0 0
        %3967 = vmatpush1.bf16.msra.mxu0 %v3941
        %3968 = vmatprep.subr.bf16.mxu0 0
        %3969 = vmatpush2.bf16.msra.mxu0 0
        %3970 = vmatprep.subr.bf16.mxu0 0
        %3971 = vmatpush2.bf16.msra.mxu0 0
        %3972 = vmatprep.subr.bf16.mxu0 0
        %3973 = vmatpush2.bf16.msra.mxu0 0
        %3974 = vmatprep.subr.bf16.mxu0 0
        %3975 = vmatpush2.bf16.msra.mxu0 0
        %3976 = vmatprep.subr.bf16.mxu0 0
        %3977 = vmatpush2.bf16.msra.mxu0 0
        %3978 = vmatprep.subr.bf16.mxu0 0
        %3979 = vmatpush2.bf16.msra.mxu0 0
        %3980 = vmatprep.subr.bf16.mxu0 0
        %3981 = vmatpush2.bf16.msra.mxu0 0
        %3982 = vmatprep.subr.bf16.mxu0 0
        %3983 = vmatpush2.bf16.msra.mxu0 0
        %3984 = vmatprep.mubr.bf16.mxu0 0
        %3985 = vmatmul.mubr.bf16.gmra.mxu0 %v3947
        %v3986 = vpop.f32.mrf.mxu0
        %v3987 = vadd.f32 0.0, %v3986
        %v3988 = vpop.f32.mrf.mxu0
        %v3989 = vpop.f32.mrf.mxu0
        %v3990 = vadd.f32 0.0, %v3989
        %v3991 = vpop.f32.mrf.mxu0
        %3992 = vmatprep.mubr.bf16.mxu0 0
        %3993 = vmatmul.mubr.bf16.gmra.mxu0 %v3950
        %v3994 = vpop.f32.mrf.mxu0
        %v3995 = vadd.f32 0.0, %v3994
        %v3996 = vpop.f32.mrf.mxu0
        %v3997 = vpop.f32.mrf.mxu0
        %v3998 = vadd.f32 0.0, %v3997
        %v3999 = vpop.f32.mrf.mxu0
        %4000 = vdwg.mxu0
        %4001 = vrot.lane.b32.xlu0 %v3391, 96
        %v4002 = vpop.permute.xlu0 %4001
        %4003 = vrot.lane.b32.xlu0 %v3392, 96
        %v4004 = vpop.permute.xlu0 %4003
        %v4008 = vsel %vm1315, %v3879, 0
        %v4011 = vsel %vm1315, %v3880, 0
        %4013 = vmatprep.subr.bf16.mxu0 0
        %4014 = vmatpush1.bf16.msra.mxu0 0
        %4015 = vmatprep.subr.bf16.mxu0 0
        %4016 = vmatpush1.bf16.msra.mxu0 0
        %4017 = vmatprep.subr.bf16.mxu0 0
        %4018 = vmatpush1.bf16.msra.mxu0 0
        %4019 = vmatprep.subr.bf16.mxu0 0
        %4020 = vmatpush1.bf16.msra.mxu0 0
        %4021 = vmatprep.subr.bf16.mxu0 0
        %4022 = vmatpush1.bf16.msra.mxu0 0
        %4023 = vmatprep.subr.bf16.mxu0 0
        %4024 = vmatpush1.bf16.msra.mxu0 0
        %4025 = vmatprep.subr.bf16.mxu0 0
        %4026 = vmatpush1.bf16.msra.mxu0 %v4004
        %4027 = vmatprep.subr.bf16.mxu0 0
        %4028 = vmatpush1.bf16.msra.mxu0 %v4002
        %4029 = vmatprep.subr.bf16.mxu0 0
        %4030 = vmatpush2.bf16.msra.mxu0 0
        %4031 = vmatprep.subr.bf16.mxu0 0
        %4032 = vmatpush2.bf16.msra.mxu0 0
        %4033 = vmatprep.subr.bf16.mxu0 0
        %4034 = vmatpush2.bf16.msra.mxu0 0
        %4035 = vmatprep.subr.bf16.mxu0 0
        %4036 = vmatpush2.bf16.msra.mxu0 0
        %4037 = vmatprep.subr.bf16.mxu0 0
        %4038 = vmatpush2.bf16.msra.mxu0 0
        %4039 = vmatprep.subr.bf16.mxu0 0
        %4040 = vmatpush2.bf16.msra.mxu0 0
        %4041 = vmatprep.subr.bf16.mxu0 0
        %4042 = vmatpush2.bf16.msra.mxu0 0
        %4043 = vmatprep.subr.bf16.mxu0 0
        %4044 = vmatpush2.bf16.msra.mxu0 0
        %4045 = vmatprep.mubr.bf16.mxu0 0
        %4046 = vmatmul.mubr.bf16.gmra.mxu0 %v4008
        %v4047 = vpop.f32.mrf.mxu0
        %v4048 = vadd.f32 0.0, %v4047
        %v4049 = vpop.f32.mrf.mxu0
        %v4050 = vpop.f32.mrf.mxu0
        %v4051 = vadd.f32 0.0, %v4050
        %v4052 = vpop.f32.mrf.mxu0
        %4053 = vmatprep.mubr.bf16.mxu0 0
        %4054 = vmatmul.mubr.bf16.gmra.mxu0 %v4011
        %v4055 = vpop.f32.mrf.mxu0
        %v4056 = vadd.f32 0.0, %v4055
        %v4057 = vpop.f32.mrf.mxu0
        %v4058 = vpop.f32.mrf.mxu0
        %v4059 = vadd.f32 0.0, %v4058
        %v4060 = vpop.f32.mrf.mxu0
        %4061 = vdwg.mxu0
        %4062 = vrot.lane.b32.xlu0 %v3391, 80
        %v4063 = vpop.permute.xlu0 %4062
        %4064 = vrot.lane.b32.xlu0 %v3392, 80
        %v4065 = vpop.permute.xlu0 %4064
        %v4069 = vsel %vm1315, %v3881, 0
        %v4072 = vsel %vm1315, %v3882, 0
        %4074 = vmatprep.subr.bf16.mxu0 0
        %4075 = vmatpush1.bf16.msra.mxu0 0
        %4076 = vmatprep.subr.bf16.mxu0 0
        %4077 = vmatpush1.bf16.msra.mxu0 0
        %4078 = vmatprep.subr.bf16.mxu0 0
        %4079 = vmatpush1.bf16.msra.mxu0 0
        %4080 = vmatprep.subr.bf16.mxu0 0
        %4081 = vmatpush1.bf16.msra.mxu0 0
        %4082 = vmatprep.subr.bf16.mxu0 0
        %4083 = vmatpush1.bf16.msra.mxu0 0
        %4084 = vmatprep.subr.bf16.mxu0 0
        %4085 = vmatpush1.bf16.msra.mxu0 0
        %4086 = vmatprep.subr.bf16.mxu0 0
        %4087 = vmatpush1.bf16.msra.mxu0 %v4065
        %4088 = vmatprep.subr.bf16.mxu0 0
        %4089 = vmatpush1.bf16.msra.mxu0 %v4063
        %4090 = vmatprep.subr.bf16.mxu0 0
        %4091 = vmatpush2.bf16.msra.mxu0 0
        %4092 = vmatprep.subr.bf16.mxu0 0
        %4093 = vmatpush2.bf16.msra.mxu0 0
        %4094 = vmatprep.subr.bf16.mxu0 0
        %4095 = vmatpush2.bf16.msra.mxu0 0
        %4096 = vmatprep.subr.bf16.mxu0 0
        %4097 = vmatpush2.bf16.msra.mxu0 0
        %4098 = vmatprep.subr.bf16.mxu0 0
        %4099 = vmatpush2.bf16.msra.mxu0 0
        %4100 = vmatprep.subr.bf16.mxu0 0
        %4101 = vmatpush2.bf16.msra.mxu0 0
        %4102 = vmatprep.subr.bf16.mxu0 0
        %4103 = vmatpush2.bf16.msra.mxu0 0
        %4104 = vmatprep.subr.bf16.mxu0 0
        %4105 = vmatpush2.bf16.msra.mxu0 0
        %4106 = vmatprep.mubr.bf16.mxu0 0
        %4107 = vmatmul.mubr.bf16.gmra.mxu0 %v4069
        %v4108 = vpop.f32.mrf.mxu0
        %v4109 = vadd.f32 0.0, %v4108
        %v4110 = vpop.f32.mrf.mxu0
        %v4111 = vpop.f32.mrf.mxu0
        %v4112 = vadd.f32 0.0, %v4111
        %v4113 = vpop.f32.mrf.mxu0
        %4114 = vmatprep.mubr.bf16.mxu0 0
        %4115 = vmatmul.mubr.bf16.gmra.mxu0 %v4072
        %v4116 = vpop.f32.mrf.mxu0
        %v4117 = vadd.f32 0.0, %v4116
        %v4118 = vpop.f32.mrf.mxu0
        %v4119 = vpop.f32.mrf.mxu0
        %v4120 = vadd.f32 0.0, %v4119
        %v4121 = vpop.f32.mrf.mxu0
        %4122 = vdwg.mxu0
        %4127 = vrot.lane.b32.xlu0 %v3987, 16
        %v4128 = vpop.permute.xlu0 %4127
        %4129 = vrot.lane.b32.xlu0 %v3990, 16
        %v4130 = vpop.permute.xlu0 %4129
        %4131 = vrot.lane.b32.xlu0 %v3995, 16
        %v4132 = vpop.permute.xlu0 %4131
        %4133 = vrot.lane.b32.xlu0 %v3998, 16
        %v4134 = vpop.permute.xlu0 %4133
        %4143 = vrot.lane.b32.xlu0 %v4048, 32
        %v4144 = vpop.permute.xlu0 %4143
        %4145 = vrot.lane.b32.xlu0 %v4051, 32
        %v4146 = vpop.permute.xlu0 %4145
        %4147 = vrot.lane.b32.xlu0 %v4056, 32
        %v4148 = vpop.permute.xlu0 %4147
        %4149 = vrot.lane.b32.xlu0 %v4059, 32
        %v4150 = vpop.permute.xlu0 %4149
        %4159 = vrot.lane.b32.xlu0 %v4109, 48
        %v4160 = vpop.permute.xlu0 %4159
        %4161 = vrot.lane.b32.xlu0 %v4112, 48
        %v4162 = vpop.permute.xlu0 %4161
        %4163 = vrot.lane.b32.xlu0 %v4117, 48
        %v4164 = vpop.permute.xlu0 %4163
        %4165 = vrot.lane.b32.xlu0 %v4120, 48
        %v4166 = vpop.permute.xlu0 %4165
        %v4171 = vsel %vm1014, %v3924, %v4128
        %v4172 = vsel %vm1014, %v3927, %v4130
        %v4173 = vsel %vm1014, %v3932, %v4132
        %v4174 = vsel %vm1014, %v3935, %v4134
        %v4175 = vsel %vm1315, %v4171, %v4144
        %v4176 = vsel %vm1315, %v4172, %v4146
        %v4177 = vsel %vm1315, %v4173, %v4148
        %v4178 = vsel %vm1315, %v4174, %v4150
        %v4179 = vsel %vm1796, %v4175, %v4160
        %v4180 = vsel %vm1796, %v4176, %v4162
        %v4181 = vsel %vm1796, %v4177, %v4164
        %v4182 = vsel %vm1796, %v4178, %v4166
        %v4183 = vpack.c.bf16 %v1798, %v1797
        %v4184 = vpack.c.bf16 %v1800, %v1799
        %v4185 = vpack.c.bf16 %v2592, %v2591
        %v4186 = vpack.c.bf16 %v2594, %v2593
        %v4187 = vpack.c.bf16 %v3386, %v3385
        %v4188 = vpack.c.bf16 %v3388, %v3387
        %v4189 = vpack.c.bf16 %v4180, %v4179
        %v4190 = vpack.c.bf16 %v4182, %v4181
        %v4191 = vld [vmem:[%s4] sm:$0xf]
        %v4192 = vld [vmem:[%s4 + $0x4] sm:$0xf]
        %v4193 = vld [vmem:[%s4 + $0x8] sm:$0xf]
        %v4194 = vld [vmem:[%s4 + $0xc] sm:$0xf]
        %v4195 = vld [vmem:[%s4 + $0x10] sm:$0xf]
        %v4196 = vld [vmem:[%s4 + $0x14] sm:$0xf]
        %v4197 = vld [vmem:[%s4 + $0x18] sm:$0xf]
        %v4198 = vld [vmem:[%s4 + $0x1c] sm:$0xf]
        %v4207 = vunpack.c.l.b16 %v4191
        %v4208 = vunpack.c.l.b16 %v4192
        %v4209 = vunpack.c.l.b16 %v4193
        %v4210 = vunpack.c.l.b16 %v4194
        %v4211 = vunpack.c.l.b16 %v4195
        %v4212 = vunpack.c.l.b16 %v4196
        %v4213 = vunpack.c.l.b16 %v4197
        %v4214 = vunpack.c.l.b16 %v4198
        %v4215 = vpack.c.b16 %v4208, %v4207
        %v4216 = vpack.c.b16 %v4210, %v4209
        %v4217 = vpack.c.b16 %v4212, %v4211
        %v4218 = vpack.c.b16 %v4214, %v4213
        %v4224 = vsel %vm557, %v4183, 0
        %v4227 = vsel %vm557, %v4184, 0
        %v4230 = vsel %vm557, %v4185, 0
        %v4233 = vsel %vm557, %v4186, 0
        %v4236 = vsel %vm557, %v4187, 0
        %v4239 = vsel %vm557, %v4188, 0
        %v4242 = vsel %vm557, %v4189, 0
        %v4245 = vsel %vm557, %v4190, 0
        %4247 = vmatprep.subr.bf16.mxu0 0
        %4248 = vmatpush1.bf16.msra.mxu0 0
        %4249 = vmatprep.subr.bf16.mxu0 0
        %4250 = vmatpush1.bf16.msra.mxu0 0
        %4251 = vmatprep.subr.bf16.mxu0 0
        %4252 = vmatpush1.bf16.msra.mxu0 0
        %4253 = vmatprep.subr.bf16.mxu0 0
        %4254 = vmatpush1.bf16.msra.mxu0 0
        %4255 = vmatprep.subr.bf16.mxu0 0
        %4256 = vmatpush1.bf16.msra.mxu0 %v4218
        %4257 = vmatprep.subr.bf16.mxu0 0
        %4258 = vmatpush1.bf16.msra.mxu0 %v4217
        %4259 = vmatprep.subr.bf16.mxu0 0
        %4260 = vmatpush1.bf16.msra.mxu0 %v4216
        %4261 = vmatprep.subr.bf16.mxu0 0
        %4262 = vmatpush1.bf16.msra.mxu0 %v4215
        %4263 = vmatprep.subr.bf16.mxu0 0
        %4264 = vmatpush2.bf16.msra.mxu0 0
        %4265 = vmatprep.subr.bf16.mxu0 0
        %4266 = vmatpush2.bf16.msra.mxu0 0
        %4267 = vmatprep.subr.bf16.mxu0 0
        %4268 = vmatpush2.bf16.msra.mxu0 0
        %4269 = vmatprep.subr.bf16.mxu0 0
        %4270 = vmatpush2.bf16.msra.mxu0 0
        %4271 = vmatprep.subr.bf16.mxu0 0
        %4272 = vmatpush2.bf16.msra.mxu0 0
        %4273 = vmatprep.subr.bf16.mxu0 0
        %4274 = vmatpush2.bf16.msra.mxu0 0
        %4275 = vmatprep.subr.bf16.mxu0 0
        %4276 = vmatpush2.bf16.msra.mxu0 0
        %4277 = vmatprep.subr.bf16.mxu0 0
        %4278 = vmatpush2.bf16.msra.mxu0 0
        %4279 = vmatprep.mubr.bf16.mxu0 0
        %4280 = vmatmul.mubr.bf16.gmra.mxu0 %v4224
        %v4281 = vpop.f32.mrf.mxu0
        %v4282 = vadd.f32 0.0, %v4281
        %v4283 = vpop.f32.mrf.mxu0
        %v4284 = vpop.f32.mrf.mxu0
        %v4285 = vadd.f32 0.0, %v4284
        %v4286 = vpop.f32.mrf.mxu0
        %4287 = vmatprep.mubr.bf16.mxu0 0
        %4288 = vmatmul.mubr.bf16.gmra.mxu0 %v4227
        %v4289 = vpop.f32.mrf.mxu0
        %v4290 = vadd.f32 0.0, %v4289
        %v4291 = vpop.f32.mrf.mxu0
        %v4292 = vpop.f32.mrf.mxu0
        %v4293 = vadd.f32 0.0, %v4292
        %v4294 = vpop.f32.mrf.mxu0
        %4295 = vmatprep.mubr.bf16.mxu0 0
        %4296 = vmatmul.mubr.bf16.gmra.mxu0 %v4230
        %v4297 = vpop.f32.mrf.mxu0
        %v4298 = vadd.f32 0.0, %v4297
        %v4299 = vpop.f32.mrf.mxu0
        %v4300 = vpop.f32.mrf.mxu0
        %v4301 = vadd.f32 0.0, %v4300
        %v4302 = vpop.f32.mrf.mxu0
        %4303 = vmatprep.mubr.bf16.mxu0 0
        %4304 = vmatmul.mubr.bf16.gmra.mxu0 %v4233
        %v4305 = vpop.f32.mrf.mxu0
        %v4306 = vadd.f32 0.0, %v4305
        %v4307 = vpop.f32.mrf.mxu0
        %v4308 = vpop.f32.mrf.mxu0
        %v4309 = vadd.f32 0.0, %v4308
        %v4310 = vpop.f32.mrf.mxu0
        %4311 = vmatprep.mubr.bf16.mxu0 0
        %4312 = vmatmul.mubr.bf16.gmra.mxu0 %v4236
        %v4313 = vpop.f32.mrf.mxu0
        %v4314 = vadd.f32 0.0, %v4313
        %v4315 = vpop.f32.mrf.mxu0
        %v4316 = vpop.f32.mrf.mxu0
        %v4317 = vadd.f32 0.0, %v4316
        %v4318 = vpop.f32.mrf.mxu0
        %4319 = vmatprep.mubr.bf16.mxu0 0
        %4320 = vmatmul.mubr.bf16.gmra.mxu0 %v4239
        %v4321 = vpop.f32.mrf.mxu0
        %v4322 = vadd.f32 0.0, %v4321
        %v4323 = vpop.f32.mrf.mxu0
        %v4324 = vpop.f32.mrf.mxu0
        %v4325 = vadd.f32 0.0, %v4324
        %v4326 = vpop.f32.mrf.mxu0
        %4327 = vmatprep.mubr.bf16.mxu0 0
        %4328 = vmatmul.mubr.bf16.gmra.mxu0 %v4242
        %v4329 = vpop.f32.mrf.mxu0
        %v4330 = vadd.f32 0.0, %v4329
        %v4331 = vpop.f32.mrf.mxu0
        %v4332 = vpop.f32.mrf.mxu0
        %v4333 = vadd.f32 0.0, %v4332
        %v4334 = vpop.f32.mrf.mxu0
        %4335 = vmatprep.mubr.bf16.mxu0 0
        %4336 = vmatmul.mubr.bf16.gmra.mxu0 %v4245
        %v4337 = vpop.f32.mrf.mxu0
        %v4338 = vadd.f32 0.0, %v4337
        %v4339 = vpop.f32.mrf.mxu0
        %v4340 = vpop.f32.mrf.mxu0
        %v4341 = vadd.f32 0.0, %v4340
        %v4342 = vpop.f32.mrf.mxu0
        %4343 = vdwg.mxu0
        %v4344 = vadd.f32 %v524, %v4282
        %v4345 = vadd.f32 %v525, %v4285
        %v4346 = vadd.f32 %v526, %v4290
        %v4347 = vadd.f32 %v527, %v4293
        %v4348 = vadd.f32 %v528, %v4298
        %v4349 = vadd.f32 %v529, %v4301
        %v4350 = vadd.f32 %v530, %v4306
        %v4351 = vadd.f32 %v531, %v4309
        %v4352 = vadd.f32 %v532, %v4314
        %v4353 = vadd.f32 %v533, %v4317
        %v4354 = vadd.f32 %v534, %v4322
        %v4355 = vadd.f32 %v535, %v4325
        %v4356 = vadd.f32 %v536, %v4330
        %v4357 = vadd.f32 %v537, %v4333
        %v4358 = vadd.f32 %v538, %v4338
        %v4359 = vadd.f32 %v539, %v4341
        %v4360 = vld [vmem:[%s5] sm:$0x1]
        %v4362 = vlaneseq
        %v4363 = vshrl.u32 %v4362, 7
        %v4364 = vsub.s32 0, %v4363
        %v4365 = vrot.slane %v4360, %v4364
        %v4367 = vadd.f32 %v4344, %v4365
        %v4368 = vadd.f32 %v4345, %v4365
        %v4369 = vadd.f32 %v4346, %v4365
        %v4370 = vadd.f32 %v4347, %v4365
        %v4371 = vadd.f32 %v4348, %v4365
        %v4372 = vadd.f32 %v4349, %v4365
        %v4373 = vadd.f32 %v4350, %v4365
        %v4374 = vadd.f32 %v4351, %v4365
        %v4375 = vadd.f32 %v4352, %v4365
        %v4376 = vadd.f32 %v4353, %v4365
        %v4377 = vadd.f32 %v4354, %v4365
        %v4378 = vadd.f32 %v4355, %v4365
        %v4379 = vadd.f32 %v4356, %v4365
        %v4380 = vadd.f32 %v4357, %v4365
        %v4381 = vadd.f32 %v4358, %v4365
        %v4382 = vadd.f32 %v4359, %v4365
        %v4383 = vld [vmem:[%s6] sm:$0x1]
        %v4384 = vld [vmem:[%s7] sm:$0x1]
        %v4385 = vsel %vm557, %v4367, 0.0
        %4386 = vadd.xlane.f32.xlu0 %v4385
        %v4387 = vpop.xlane.xlu0 %4386
        %v4388 = vsel %vm557, %v4368, 0.0
        %4389 = vadd.xlane.f32.xlu0 %v4388
        %v4390 = vpop.xlane.xlu0 %4389
        %v4391 = vsel %vm557, %v4369, 0.0
        %4392 = vadd.xlane.f32.xlu0 %v4391
        %v4393 = vpop.xlane.xlu0 %4392
        %v4394 = vsel %vm557, %v4370, 0.0
        %4395 = vadd.xlane.f32.xlu0 %v4394
        %v4396 = vpop.xlane.xlu0 %4395
        %v4397 = vsel %vm557, %v4371, 0.0
        %4398 = vadd.xlane.f32.xlu0 %v4397
        %v4399 = vpop.xlane.xlu0 %4398
        %v4400 = vsel %vm557, %v4372, 0.0
        %4401 = vadd.xlane.f32.xlu0 %v4400
        %v4402 = vpop.xlane.xlu0 %4401
        %v4403 = vsel %vm557, %v4373, 0.0
        %4404 = vadd.xlane.f32.xlu0 %v4403
        %v4405 = vpop.xlane.xlu0 %4404
        %v4406 = vsel %vm557, %v4374, 0.0
        %4407 = vadd.xlane.f32.xlu0 %v4406
        %v4408 = vpop.xlane.xlu0 %4407
        %v4409 = vsel %vm557, %v4375, 0.0
        %4410 = vadd.xlane.f32.xlu0 %v4409
        %v4411 = vpop.xlane.xlu0 %4410
        %v4412 = vsel %vm557, %v4376, 0.0
        %4413 = vadd.xlane.f32.xlu0 %v4412
        %v4414 = vpop.xlane.xlu0 %4413
        %v4415 = vsel %vm557, %v4377, 0.0
        %4416 = vadd.xlane.f32.xlu0 %v4415
        %v4417 = vpop.xlane.xlu0 %4416
        %v4418 = vsel %vm557, %v4378, 0.0
        %4419 = vadd.xlane.f32.xlu0 %v4418
        %v4420 = vpop.xlane.xlu0 %4419
        %v4421 = vsel %vm557, %v4379, 0.0
        %4422 = vadd.xlane.f32.xlu0 %v4421
        %v4423 = vpop.xlane.xlu0 %4422
        %v4424 = vsel %vm557, %v4380, 0.0
        %4425 = vadd.xlane.f32.xlu0 %v4424
        %v4426 = vpop.xlane.xlu0 %4425
        %v4427 = vsel %vm557, %v4381, 0.0
        %4428 = vadd.xlane.f32.xlu0 %v4427
        %v4429 = vpop.xlane.xlu0 %4428
        %v4430 = vsel %vm557, %v4382, 0.0
        %4431 = vadd.xlane.f32.xlu0 %v4430
        %v4432 = vpop.xlane.xlu0 %4431
        %v4433 = vmul.f32 %v4387, %v606
        %v4434 = vmul.f32 %v4390, %v606
        %v4435 = vmul.f32 %v4393, %v606
        %v4436 = vmul.f32 %v4396, %v606
        %v4437 = vmul.f32 %v4399, %v606
        %v4438 = vmul.f32 %v4402, %v606
        %v4439 = vmul.f32 %v4405, %v606
        %v4440 = vmul.f32 %v4408, %v606
        %v4441 = vmul.f32 %v4411, %v606
        %v4442 = vmul.f32 %v4414, %v606
        %v4443 = vmul.f32 %v4417, %v606
        %v4444 = vmul.f32 %v4420, %v606
        %v4445 = vmul.f32 %v4423, %v606
        %v4446 = vmul.f32 %v4426, %v606
        %v4447 = vmul.f32 %v4429, %v606
        %v4448 = vmul.f32 %v4432, %v606
        %v4449 = vsub.f32 %v4367, %v4433
        %v4450 = vsub.f32 %v4368, %v4434
        %v4451 = vsub.f32 %v4369, %v4435
        %v4452 = vsub.f32 %v4370, %v4436
        %v4453 = vsub.f32 %v4371, %v4437
        %v4454 = vsub.f32 %v4372, %v4438
        %v4455 = vsub.f32 %v4373, %v4439
        %v4456 = vsub.f32 %v4374, %v4440
        %v4457 = vsub.f32 %v4375, %v4441
        %v4458 = vsub.f32 %v4376, %v4442
        %v4459 = vsub.f32 %v4377, %v4443
        %v4460 = vsub.f32 %v4378, %v4444
        %v4461 = vsub.f32 %v4379, %v4445
        %v4462 = vsub.f32 %v4380, %v4446
        %v4463 = vsub.f32 %v4381, %v4447
        %v4464 = vsub.f32 %v4382, %v4448
        %v4465 = vmul.f32 %v4449, %v4449
        %v4466 = vmul.f32 %v4450, %v4450
        %v4467 = vmul.f32 %v4451, %v4451
        %v4468 = vmul.f32 %v4452, %v4452
        %v4469 = vmul.f32 %v4453, %v4453
        %v4470 = vmul.f32 %v4454, %v4454
        %v4471 = vmul.f32 %v4455, %v4455
        %v4472 = vmul.f32 %v4456, %v4456
        %v4473 = vmul.f32 %v4457, %v4457
        %v4474 = vmul.f32 %v4458, %v4458
        %v4475 = vmul.f32 %v4459, %v4459
        %v4476 = vmul.f32 %v4460, %v4460
        %v4477 = vmul.f32 %v4461, %v4461
        %v4478 = vmul.f32 %v4462, %v4462
        %v4479 = vmul.f32 %v4463, %v4463
        %v4480 = vmul.f32 %v4464, %v4464
        %v4481 = vsel %vm557, %v4465, 0.0
        %4482 = vadd.xlane.f32.xlu0 %v4481
        %v4483 = vpop.xlane.xlu0 %4482
        %v4484 = vsel %vm557, %v4466, 0.0
        %4485 = vadd.xlane.f32.xlu0 %v4484
        %v4486 = vpop.xlane.xlu0 %4485
        %v4487 = vsel %vm557, %v4467, 0.0
        %4488 = vadd.xlane.f32.xlu0 %v4487
        %v4489 = vpop.xlane.xlu0 %4488
        %v4490 = vsel %vm557, %v4468, 0.0
        %4491 = vadd.xlane.f32.xlu0 %v4490
        %v4492 = vpop.xlane.xlu0 %4491
        %v4493 = vsel %vm557, %v4469, 0.0
        %4494 = vadd.xlane.f32.xlu0 %v4493
        %v4495 = vpop.xlane.xlu0 %4494
        %v4496 = vsel %vm557, %v4470, 0.0
        %4497 = vadd.xlane.f32.xlu0 %v4496
        %v4498 = vpop.xlane.xlu0 %4497
        %v4499 = vsel %vm557, %v4471, 0.0
        %4500 = vadd.xlane.f32.xlu0 %v4499
        %v4501 = vpop.xlane.xlu0 %4500
        %v4502 = vsel %vm557, %v4472, 0.0
        %4503 = vadd.xlane.f32.xlu0 %v4502
        %v4504 = vpop.xlane.xlu0 %4503
        %v4505 = vsel %vm557, %v4473, 0.0
        %4506 = vadd.xlane.f32.xlu0 %v4505
        %v4507 = vpop.xlane.xlu0 %4506
        %v4508 = vsel %vm557, %v4474, 0.0
        %4509 = vadd.xlane.f32.xlu0 %v4508
        %v4510 = vpop.xlane.xlu0 %4509
        %v4511 = vsel %vm557, %v4475, 0.0
        %4512 = vadd.xlane.f32.xlu0 %v4511
        %v4513 = vpop.xlane.xlu0 %4512
        %v4514 = vsel %vm557, %v4476, 0.0
        %4515 = vadd.xlane.f32.xlu0 %v4514
        %v4516 = vpop.xlane.xlu0 %4515
        %v4517 = vsel %vm557, %v4477, 0.0
        %4518 = vadd.xlane.f32.xlu0 %v4517
        %v4519 = vpop.xlane.xlu0 %4518
        %v4520 = vsel %vm557, %v4478, 0.0
        %4521 = vadd.xlane.f32.xlu0 %v4520
        %v4522 = vpop.xlane.xlu0 %4521
        %v4523 = vsel %vm557, %v4479, 0.0
        %4524 = vadd.xlane.f32.xlu0 %v4523
        %v4525 = vpop.xlane.xlu0 %4524
        %v4526 = vsel %vm557, %v4480, 0.0
        %4527 = vadd.xlane.f32.xlu0 %v4526
        %v4528 = vpop.xlane.xlu0 %4527
        %v4529 = vmul.f32 %v4483, %v606
        %v4530 = vmul.f32 %v4486, %v606
        %v4531 = vmul.f32 %v4489, %v606
        %v4532 = vmul.f32 %v4492, %v606
        %v4533 = vmul.f32 %v4495, %v606
        %v4534 = vmul.f32 %v4498, %v606
        %v4535 = vmul.f32 %v4501, %v606
        %v4536 = vmul.f32 %v4504, %v606
        %v4537 = vmul.f32 %v4507, %v606
        %v4538 = vmul.f32 %v4510, %v606
        %v4539 = vmul.f32 %v4513, %v606
        %v4540 = vmul.f32 %v4516, %v606
        %v4541 = vmul.f32 %v4519, %v606
        %v4542 = vmul.f32 %v4522, %v606
        %v4543 = vmul.f32 %v4525, %v606
        %v4544 = vmul.f32 %v4528, %v606
        %v4545 = vadd.f32 %v4529, 1e-05
        %v4546 = vadd.f32 %v4530, 1e-05
        %v4547 = vadd.f32 %v4531, 1e-05
        %v4548 = vadd.f32 %v4532, 1e-05
        %v4549 = vadd.f32 %v4533, 1e-05
        %v4550 = vadd.f32 %v4534, 1e-05
        %v4551 = vadd.f32 %v4535, 1e-05
        %v4552 = vadd.f32 %v4536, 1e-05
        %v4553 = vadd.f32 %v4537, 1e-05
        %v4554 = vadd.f32 %v4538, 1e-05
        %v4555 = vadd.f32 %v4539, 1e-05
        %v4556 = vadd.f32 %v4540, 1e-05
        %v4557 = vadd.f32 %v4541, 1e-05
        %v4558 = vadd.f32 %v4542, 1e-05
        %v4559 = vadd.f32 %v4543, 1e-05
        %v4560 = vadd.f32 %v4544, 1e-05
        %v4561 = vrsqrt.pop %v4545
        %v4562 = vrsqrt.pop %v4546
        %v4563 = vrsqrt.pop %v4547
        %v4564 = vrsqrt.pop %v4548
        %v4565 = vrsqrt.pop %v4549
        %v4566 = vrsqrt.pop %v4550
        %v4567 = vrsqrt.pop %v4551
        %v4568 = vrsqrt.pop %v4552
        %v4569 = vrsqrt.pop %v4553
        %v4570 = vrsqrt.pop %v4554
        %v4571 = vrsqrt.pop %v4555
        %v4572 = vrsqrt.pop %v4556
        %v4573 = vrsqrt.pop %v4557
        %v4574 = vrsqrt.pop %v4558
        %v4575 = vrsqrt.pop %v4559
        %v4576 = vrsqrt.pop %v4560
        %v4577 = vmul.f32 %v4449, %v4561
        %v4578 = vmul.f32 %v4450, %v4562
        %v4579 = vmul.f32 %v4451, %v4563
        %v4580 = vmul.f32 %v4452, %v4564
        %v4581 = vmul.f32 %v4453, %v4565
        %v4582 = vmul.f32 %v4454, %v4566
        %v4583 = vmul.f32 %v4455, %v4567
        %v4584 = vmul.f32 %v4456, %v4568
        %v4585 = vmul.f32 %v4457, %v4569
        %v4586 = vmul.f32 %v4458, %v4570
        %v4587 = vmul.f32 %v4459, %v4571
        %v4588 = vmul.f32 %v4460, %v4572
        %v4589 = vmul.f32 %v4461, %v4573
        %v4590 = vmul.f32 %v4462, %v4574
        %v4591 = vmul.f32 %v4463, %v4575
        %v4592 = vmul.f32 %v4464, %v4576
        %v4594 = vlaneseq
        %v4595 = vshrl.u32 %v4594, 7
        %v4596 = vsub.s32 0, %v4595
        %v4597 = vrot.slane %v4383, %v4596
        %v4599 = vmul.f32 %v4577, %v4597
        %v4600 = vmul.f32 %v4578, %v4597
        %v4601 = vmul.f32 %v4579, %v4597
        %v4602 = vmul.f32 %v4580, %v4597
        %v4603 = vmul.f32 %v4581, %v4597
        %v4604 = vmul.f32 %v4582, %v4597
        %v4605 = vmul.f32 %v4583, %v4597
        %v4606 = vmul.f32 %v4584, %v4597
        %v4607 = vmul.f32 %v4585, %v4597
        %v4608 = vmul.f32 %v4586, %v4597
        %v4609 = vmul.f32 %v4587, %v4597
        %v4610 = vmul.f32 %v4588, %v4597
        %v4611 = vmul.f32 %v4589, %v4597
        %v4612 = vmul.f32 %v4590, %v4597
        %v4613 = vmul.f32 %v4591, %v4597
        %v4614 = vmul.f32 %v4592, %v4597
        %v4616 = vlaneseq
        %v4617 = vshrl.u32 %v4616, 7
        %v4618 = vsub.s32 0, %v4617
        %v4619 = vrot.slane %v4384, %v4618
        %v4621 = vadd.f32 %v4599, %v4619
        %v4622 = vadd.f32 %v4600, %v4619
        %v4623 = vadd.f32 %v4601, %v4619
        %v4624 = vadd.f32 %v4602, %v4619
        %v4625 = vadd.f32 %v4603, %v4619
        %v4626 = vadd.f32 %v4604, %v4619
        %v4627 = vadd.f32 %v4605, %v4619
        %v4628 = vadd.f32 %v4606, %v4619
        %v4629 = vadd.f32 %v4607, %v4619
        %v4630 = vadd.f32 %v4608, %v4619
        %v4631 = vadd.f32 %v4609, %v4619
        %v4632 = vadd.f32 %v4610, %v4619
        %v4633 = vadd.f32 %v4611, %v4619
        %v4634 = vadd.f32 %v4612, %v4619
        %v4635 = vadd.f32 %v4613, %v4619
        %v4636 = vadd.f32 %v4614, %v4619
        %v4637 = vpack.c.bf16 %v4622, %v4621
        %v4638 = vpack.c.bf16 %v4624, %v4623
        %v4639 = vpack.c.bf16 %v4626, %v4625
        %v4640 = vpack.c.bf16 %v4628, %v4627
        %v4641 = vpack.c.bf16 %v4630, %v4629
        %v4642 = vpack.c.bf16 %v4632, %v4631
        %v4643 = vpack.c.bf16 %v4634, %v4633
        %v4644 = vpack.c.bf16 %v4636, %v4635
        %v4645 = vld [vmem:[%s8] sm:$0xff]
        %v4646 = vld [vmem:[%s8 + $0x8] sm:$0xff]
        %v4647 = vld [vmem:[%s8 + $0x10] sm:$0xff]
        %v4648 = vld [vmem:[%s8 + $0x18] sm:$0xff]
        %v4649 = vld [vmem:[%s8 + $0x20] sm:$0xff]
        %v4650 = vld [vmem:[%s8 + $0x28] sm:$0xff]
        %v4651 = vld [vmem:[%s8 + $0x30] sm:$0xff]
        %v4652 = vld [vmem:[%s8 + $0x38] sm:$0xff]
        %v4653 = vld [vmem:[%s9] sm:$0x3]
        %v4655 = vlaneseq
        %v4656 = vshrl.u32 %v4655, 7
        %v4657 = vsub.s32 0, %v4656
        %v4658 = vrot.slane %v4653, %v4657
        %v4659 = vlaneseq
        %v4660 = vshrl.u32 %v4659, 7
        %v4661 = vsub.s32 1, %v4660
        %v4662 = vrot.slane %v4653, %v4661
        %v4673 = vunpack.c.l.b16 %v4645
        %v4674 = vunpack.c.h.b16 %v4645
        %v4675 = vunpack.c.l.b16 %v4646
        %v4676 = vunpack.c.h.b16 %v4646
        %v4677 = vunpack.c.l.b16 %v4647
        %v4678 = vunpack.c.h.b16 %v4647
        %v4679 = vunpack.c.l.b16 %v4648
        %v4680 = vunpack.c.h.b16 %v4648
        %v4681 = vunpack.c.l.b16 %v4649
        %v4682 = vunpack.c.h.b16 %v4649
        %v4683 = vunpack.c.l.b16 %v4650
        %v4684 = vunpack.c.h.b16 %v4650
        %v4685 = vunpack.c.l.b16 %v4651
        %v4686 = vunpack.c.h.b16 %v4651
        %v4687 = vunpack.c.l.b16 %v4652
        %v4688 = vunpack.c.h.b16 %v4652
        %v4689 = vpack.c.b16 %v4675, %v4673
        %v4690 = vpack.c.b16 %v4676, %v4674
        %v4691 = vpack.c.b16 %v4679, %v4677
        %v4692 = vpack.c.b16 %v4680, %v4678
        %v4693 = vpack.c.b16 %v4683, %v4681
        %v4694 = vpack.c.b16 %v4684, %v4682
        %v4695 = vpack.c.b16 %v4687, %v4685
        %v4696 = vpack.c.b16 %v4688, %v4686
        %v4706 = vsel %vm557, %v4637, 0
        %v4709 = vsel %vm557, %v4638, 0
        %v4712 = vsel %vm557, %v4639, 0
        %v4715 = vsel %vm557, %v4640, 0
        %v4718 = vsel %vm557, %v4641, 0
        %v4721 = vsel %vm557, %v4642, 0
        %v4724 = vsel %vm557, %v4643, 0
        %v4727 = vsel %vm557, %v4644, 0
        %4729 = vmatprep.subr.bf16.mxu0 0
        %4730 = vmatpush1.bf16.msra.mxu0 0
        %4731 = vmatprep.subr.bf16.mxu0 0
        %4732 = vmatpush1.bf16.msra.mxu0 0
        %4733 = vmatprep.subr.bf16.mxu0 0
        %4734 = vmatpush1.bf16.msra.mxu0 0
        %4735 = vmatprep.subr.bf16.mxu0 0
        %4736 = vmatpush1.bf16.msra.mxu0 0
        %4737 = vmatprep.subr.bf16.mxu0 %v4696
        %4738 = vmatpush1.bf16.msra.mxu0 %v4695
        %4739 = vmatprep.subr.bf16.mxu0 %v4694
        %4740 = vmatpush1.bf16.msra.mxu0 %v4693
        %4741 = vmatprep.subr.bf16.mxu0 %v4692
        %4742 = vmatpush1.bf16.msra.mxu0 %v4691
        %4743 = vmatprep.subr.bf16.mxu0 %v4690
        %4744 = vmatpush1.bf16.msra.mxu0 %v4689
        %4745 = vmatprep.subr.bf16.mxu0 0
        %4746 = vmatpush2.bf16.msra.mxu0 0
        %4747 = vmatprep.subr.bf16.mxu0 0
        %4748 = vmatpush2.bf16.msra.mxu0 0
        %4749 = vmatprep.subr.bf16.mxu0 0
        %4750 = vmatpush2.bf16.msra.mxu0 0
        %4751 = vmatprep.subr.bf16.mxu0 0
        %4752 = vmatpush2.bf16.msra.mxu0 0
        %4753 = vmatprep.subr.bf16.mxu0 0
        %4754 = vmatpush2.bf16.msra.mxu0 0
        %4755 = vmatprep.subr.bf16.mxu0 0
        %4756 = vmatpush2.bf16.msra.mxu0 0
        %4757 = vmatprep.subr.bf16.mxu0 0
        %4758 = vmatpush2.bf16.msra.mxu0 0
        %4759 = vmatprep.subr.bf16.mxu0 0
        %4760 = vmatpush2.bf16.msra.mxu0 0
        %4761 = vmatprep.mubr.bf16.mxu0 0
        %4762 = vmatmul.mubr.bf16.gmra.mxu0 %v4706
        %v4763 = vpop.f32.mrf.mxu0
        %v4764 = vadd.f32 %v4658, %v4763
        %v4765 = vpop.f32.mrf.mxu0
        %v4766 = vadd.f32 %v4662, %v4765
        %v4767 = vpop.f32.mrf.mxu0
        %v4768 = vadd.f32 %v4658, %v4767
        %v4769 = vpop.f32.mrf.mxu0
        %v4770 = vadd.f32 %v4662, %v4769
        %4771 = vmatprep.mubr.bf16.mxu0 0
        %4772 = vmatmul.mubr.bf16.gmra.mxu0 %v4709
        %v4773 = vpop.f32.mrf.mxu0
        %v4774 = vadd.f32 %v4658, %v4773
        %v4775 = vpop.f32.mrf.mxu0
        %v4776 = vadd.f32 %v4662, %v4775
        %v4777 = vpop.f32.mrf.mxu0
        %v4778 = vadd.f32 %v4658, %v4777
        %v4779 = vpop.f32.mrf.mxu0
        %v4780 = vadd.f32 %v4662, %v4779
        %4781 = vmatprep.mubr.bf16.mxu0 0
        %4782 = vmatmul.mubr.bf16.gmra.mxu0 %v4712
        %v4783 = vpop.f32.mrf.mxu0
        %v4784 = vadd.f32 %v4658, %v4783
        %v4785 = vpop.f32.mrf.mxu0
        %v4786 = vadd.f32 %v4662, %v4785
        %v4787 = vpop.f32.mrf.mxu0
        %v4788 = vadd.f32 %v4658, %v4787
        %v4789 = vpop.f32.mrf.mxu0
        %v4790 = vadd.f32 %v4662, %v4789
        %4791 = vmatprep.mubr.bf16.mxu0 0
        %4792 = vmatmul.mubr.bf16.gmra.mxu0 %v4715
        %v4793 = vpop.f32.mrf.mxu0
        %v4794 = vadd.f32 %v4658, %v4793
        %v4795 = vpop.f32.mrf.mxu0
        %v4796 = vadd.f32 %v4662, %v4795
        %v4797 = vpop.f32.mrf.mxu0
        %v4798 = vadd.f32 %v4658, %v4797
        %v4799 = vpop.f32.mrf.mxu0
        %v4800 = vadd.f32 %v4662, %v4799
        %4801 = vmatprep.mubr.bf16.mxu0 0
        %4802 = vmatmul.mubr.bf16.gmra.mxu0 %v4718
        %v4803 = vpop.f32.mrf.mxu0
        %v4804 = vadd.f32 %v4658, %v4803
        %v4805 = vpop.f32.mrf.mxu0
        %v4806 = vadd.f32 %v4662, %v4805
        %v4807 = vpop.f32.mrf.mxu0
        %v4808 = vadd.f32 %v4658, %v4807
        %v4809 = vpop.f32.mrf.mxu0
        %v4810 = vadd.f32 %v4662, %v4809
        %4811 = vmatprep.mubr.bf16.mxu0 0
        %4812 = vmatmul.mubr.bf16.gmra.mxu0 %v4721
        %v4813 = vpop.f32.mrf.mxu0
        %v4814 = vadd.f32 %v4658, %v4813
        %v4815 = vpop.f32.mrf.mxu0
        %v4816 = vadd.f32 %v4662, %v4815
        %v4817 = vpop.f32.mrf.mxu0
        %v4818 = vadd.f32 %v4658, %v4817
        %v4819 = vpop.f32.mrf.mxu0
        %v4820 = vadd.f32 %v4662, %v4819
        %4821 = vmatprep.mubr.bf16.mxu0 0
        %4822 = vmatmul.mubr.bf16.gmra.mxu0 %v4724
        %v4823 = vpop.f32.mrf.mxu0
        %v4824 = vadd.f32 %v4658, %v4823
        %v4825 = vpop.f32.mrf.mxu0
        %v4826 = vadd.f32 %v4662, %v4825
        %v4827 = vpop.f32.mrf.mxu0
        %v4828 = vadd.f32 %v4658, %v4827
        %v4829 = vpop.f32.mrf.mxu0
        %v4830 = vadd.f32 %v4662, %v4829
        %4831 = vmatprep.mubr.bf16.mxu0 0
        %4832 = vmatmul.mubr.bf16.gmra.mxu0 %v4727
        %v4833 = vpop.f32.mrf.mxu0
        %v4834 = vadd.f32 %v4658, %v4833
        %v4835 = vpop.f32.mrf.mxu0
        %v4836 = vadd.f32 %v4662, %v4835
        %v4837 = vpop.f32.mrf.mxu0
        %v4838 = vadd.f32 %v4658, %v4837
        %v4839 = vpop.f32.mrf.mxu0
        %v4840 = vadd.f32 %v4662, %v4839
        %4841 = vdwg.mxu0
        %vm4842 = vcmp.gt.f32.partialorder %v4764, 0.0
        %vm4843 = vcmp.gt.f32.partialorder %v4766, 0.0
        %vm4844 = vcmp.gt.f32.partialorder %v4768, 0.0
        %vm4845 = vcmp.gt.f32.partialorder %v4770, 0.0
        %vm4846 = vcmp.gt.f32.partialorder %v4774, 0.0
        %vm4847 = vcmp.gt.f32.partialorder %v4776, 0.0
        %vm4848 = vcmp.gt.f32.partialorder %v4778, 0.0
        %vm4849 = vcmp.gt.f32.partialorder %v4780, 0.0
        %vm4850 = vcmp.gt.f32.partialorder %v4784, 0.0
        %vm4851 = vcmp.gt.f32.partialorder %v4786, 0.0
        %vm4852 = vcmp.gt.f32.partialorder %v4788, 0.0
        %vm4853 = vcmp.gt.f32.partialorder %v4790, 0.0
        %vm4854 = vcmp.gt.f32.partialorder %v4794, 0.0
        %vm4855 = vcmp.gt.f32.partialorder %v4796, 0.0
        %vm4856 = vcmp.gt.f32.partialorder %v4798, 0.0
        %vm4857 = vcmp.gt.f32.partialorder %v4800, 0.0
        %vm4858 = vcmp.gt.f32.partialorder %v4804, 0.0
        %vm4859 = vcmp.gt.f32.partialorder %v4806, 0.0
        %vm4860 = vcmp.gt.f32.partialorder %v4808, 0.0
        %vm4861 = vcmp.gt.f32.partialorder %v4810, 0.0
        %vm4862 = vcmp.gt.f32.partialorder %v4814, 0.0
        %vm4863 = vcmp.gt.f32.partialorder %v4816, 0.0
        %vm4864 = vcmp.gt.f32.partialorder %v4818, 0.0
        %vm4865 = vcmp.gt.f32.partialorder %v4820, 0.0
        %vm4866 = vcmp.gt.f32.partialorder %v4824, 0.0
        %vm4867 = vcmp.gt.f32.partialorder %v4826, 0.0
        %vm4868 = vcmp.gt.f32.partialorder %v4828, 0.0
        %vm4869 = vcmp.gt.f32.partialorder %v4830, 0.0
        %vm4870 = vcmp.gt.f32.partialorder %v4834, 0.0
        %vm4871 = vcmp.gt.f32.partialorder %v4836, 0.0
        %vm4872 = vcmp.gt.f32.partialorder %v4838, 0.0
        %vm4873 = vcmp.gt.f32.partialorder %v4840, 0.0
        %v4874 = vmul.f32 %v4764, 0.01
        %v4875 = vmul.f32 %v4766, 0.01
        %v4876 = vmul.f32 %v4768, 0.01
        %v4877 = vmul.f32 %v4770, 0.01
        %v4878 = vmul.f32 %v4774, 0.01
        %v4879 = vmul.f32 %v4776, 0.01
        %v4880 = vmul.f32 %v4778, 0.01
        %v4881 = vmul.f32 %v4780, 0.01
        %v4882 = vmul.f32 %v4784, 0.01
        %v4883 = vmul.f32 %v4786, 0.01
        %v4884 = vmul.f32 %v4788, 0.01
        %v4885 = vmul.f32 %v4790, 0.01
        %v4886 = vmul.f32 %v4794, 0.01
        %v4887 = vmul.f32 %v4796, 0.01
        %v4888 = vmul.f32 %v4798, 0.01
        %v4889 = vmul.f32 %v4800, 0.01
        %v4890 = vmul.f32 %v4804, 0.01
        %v4891 = vmul.f32 %v4806, 0.01
        %v4892 = vmul.f32 %v4808, 0.01
        %v4893 = vmul.f32 %v4810, 0.01
        %v4894 = vmul.f32 %v4814, 0.01
        %v4895 = vmul.f32 %v4816, 0.01
        %v4896 = vmul.f32 %v4818, 0.01
        %v4897 = vmul.f32 %v4820, 0.01
        %v4898 = vmul.f32 %v4824, 0.01
        %v4899 = vmul.f32 %v4826, 0.01
        %v4900 = vmul.f32 %v4828, 0.01
        %v4901 = vmul.f32 %v4830, 0.01
        %v4902 = vmul.f32 %v4834, 0.01
        %v4903 = vmul.f32 %v4836, 0.01
        %v4904 = vmul.f32 %v4838, 0.01
        %v4905 = vmul.f32 %v4840, 0.01
        %v4906 = vsel %vm4842, %v4764, %v4874
        %v4907 = vsel %vm4843, %v4766, %v4875
        %v4908 = vsel %vm4844, %v4768, %v4876
        %v4909 = vsel %vm4845, %v4770, %v4877
        %v4910 = vsel %vm4846, %v4774, %v4878
        %v4911 = vsel %vm4847, %v4776, %v4879
        %v4912 = vsel %vm4848, %v4778, %v4880
        %v4913 = vsel %vm4849, %v4780, %v4881
        %v4914 = vsel %vm4850, %v4784, %v4882
        %v4915 = vsel %vm4851, %v4786, %v4883
        %v4916 = vsel %vm4852, %v4788, %v4884
        %v4917 = vsel %vm4853, %v4790, %v4885
        %v4918 = vsel %vm4854, %v4794, %v4886
        %v4919 = vsel %vm4855, %v4796, %v4887
        %v4920 = vsel %vm4856, %v4798, %v4888
        %v4921 = vsel %vm4857, %v4800, %v4889
        %v4922 = vsel %vm4858, %v4804, %v4890
        %v4923 = vsel %vm4859, %v4806, %v4891
        %v4924 = vsel %vm4860, %v4808, %v4892
        %v4925 = vsel %vm4861, %v4810, %v4893
        %v4926 = vsel %vm4862, %v4814, %v4894
        %v4927 = vsel %vm4863, %v4816, %v4895
        %v4928 = vsel %vm4864, %v4818, %v4896
        %v4929 = vsel %vm4865, %v4820, %v4897
        %v4930 = vsel %vm4866, %v4824, %v4898
        %v4931 = vsel %vm4867, %v4826, %v4899
        %v4932 = vsel %vm4868, %v4828, %v4900
        %v4933 = vsel %vm4869, %v4830, %v4901
        %v4934 = vsel %vm4870, %v4834, %v4902
        %v4935 = vsel %vm4871, %v4836, %v4903
        %v4936 = vsel %vm4872, %v4838, %v4904
        %v4937 = vsel %vm4873, %v4840, %v4905
        %v4938 = vpack.c.bf16 %v4908, %v4906
        %v4939 = vpack.c.bf16 %v4909, %v4907
        %v4940 = vpack.c.bf16 %v4912, %v4910
        %v4941 = vpack.c.bf16 %v4913, %v4911
        %v4942 = vpack.c.bf16 %v4916, %v4914
        %v4943 = vpack.c.bf16 %v4917, %v4915
        %v4944 = vpack.c.bf16 %v4920, %v4918
        %v4945 = vpack.c.bf16 %v4921, %v4919
        %v4946 = vpack.c.bf16 %v4924, %v4922
        %v4947 = vpack.c.bf16 %v4925, %v4923
        %v4948 = vpack.c.bf16 %v4928, %v4926
        %v4949 = vpack.c.bf16 %v4929, %v4927
        %v4950 = vpack.c.bf16 %v4932, %v4930
        %v4951 = vpack.c.bf16 %v4933, %v4931
        %v4952 = vpack.c.bf16 %v4936, %v4934
        %v4953 = vpack.c.bf16 %v4937, %v4935
        %v4954 = vld [vmem:[%s10] sm:$0xf]
        %v4955 = vld [vmem:[%s10 + $0x4] sm:$0xf]
        %v4956 = vld [vmem:[%s10 + $0x8] sm:$0xf]
        %v4957 = vld [vmem:[%s10 + $0xc] sm:$0xf]
        %v4958 = vld [vmem:[%s10 + $0x10] sm:$0xf]
        %v4959 = vld [vmem:[%s10 + $0x14] sm:$0xf]
        %v4960 = vld [vmem:[%s10 + $0x18] sm:$0xf]
        %v4961 = vld [vmem:[%s10 + $0x1c] sm:$0xf]
        %v4962 = vld [vmem:[%s10 + $0x20] sm:$0xf]
        %v4963 = vld [vmem:[%s10 + $0x24] sm:$0xf]
        %v4964 = vld [vmem:[%s10 + $0x28] sm:$0xf]
        %v4965 = vld [vmem:[%s10 + $0x2c] sm:$0xf]
        %v4966 = vld [vmem:[%s10 + $0x30] sm:$0xf]
        %v4967 = vld [vmem:[%s10 + $0x34] sm:$0xf]
        %v4968 = vld [vmem:[%s10 + $0x38] sm:$0xf]
        %v4969 = vld [vmem:[%s10 + $0x3c] sm:$0xf]
        %v4970 = vld [vmem:[%s10 + $0x40] sm:$0xf]
        %v4971 = vld [vmem:[%s10 + $0x44] sm:$0xf]
        %v4972 = vld [vmem:[%s10 + $0x48] sm:$0xf]
        %v4973 = vld [vmem:[%s10 + $0x4c] sm:$0xf]
        %v4974 = vld [vmem:[%s10 + $0x50] sm:$0xf]
        %v4975 = vld [vmem:[%s10 + $0x54] sm:$0xf]
        %v4976 = vld [vmem:[%s10 + $0x58] sm:$0xf]
        %v4977 = vld [vmem:[%s10 + $0x5c] sm:$0xf]
        %v4978 = vld [vmem:[%s10 + $0x60] sm:$0xf]
        %v4979 = vld [vmem:[%s10 + $0x64] sm:$0xf]
        %v4980 = vld [vmem:[%s10 + $0x68] sm:$0xf]
        %v4981 = vld [vmem:[%s10 + $0x6c] sm:$0xf]
        %v4982 = vld [vmem:[%s10 + $0x70] sm:$0xf]
        %v4983 = vld [vmem:[%s10 + $0x74] sm:$0xf]
        %v4984 = vld [vmem:[%s10 + $0x78] sm:$0xf]
        %v4985 = vld [vmem:[%s10 + $0x7c] sm:$0xf]
        %v4986 = vld [vmem:[%s11] sm:$0x1]
        %v4988 = vlaneseq
        %v4989 = vshrl.u32 %v4988, 7
        %v4990 = vsub.s32 0, %v4989
        %v4991 = vrot.slane %v4986, %v4990
        %v5025 = vunpack.c.l.b16 %v4954
        %v5026 = vunpack.c.l.b16 %v4955
        %v5027 = vunpack.c.l.b16 %v4956
        %v5028 = vunpack.c.l.b16 %v4957
        %v5029 = vunpack.c.l.b16 %v4958
        %v5030 = vunpack.c.l.b16 %v4959
        %v5031 = vunpack.c.l.b16 %v4960
        %v5032 = vunpack.c.l.b16 %v4961
        %v5033 = vunpack.c.l.b16 %v4962
        %v5034 = vunpack.c.l.b16 %v4963
        %v5035 = vunpack.c.l.b16 %v4964
        %v5036 = vunpack.c.l.b16 %v4965
        %v5037 = vunpack.c.l.b16 %v4966
        %v5038 = vunpack.c.l.b16 %v4967
        %v5039 = vunpack.c.l.b16 %v4968
        %v5040 = vunpack.c.l.b16 %v4969
        %v5041 = vunpack.c.l.b16 %v4970
        %v5042 = vunpack.c.l.b16 %v4971
        %v5043 = vunpack.c.l.b16 %v4972
        %v5044 = vunpack.c.l.b16 %v4973
        %v5045 = vunpack.c.l.b16 %v4974
        %v5046 = vunpack.c.l.b16 %v4975
        %v5047 = vunpack.c.l.b16 %v4976
        %v5048 = vunpack.c.l.b16 %v4977
        %v5049 = vunpack.c.l.b16 %v4978
        %v5050 = vunpack.c.l.b16 %v4979
        %v5051 = vunpack.c.l.b16 %v4980
        %v5052 = vunpack.c.l.b16 %v4981
        %v5053 = vunpack.c.l.b16 %v4982
        %v5054 = vunpack.c.l.b16 %v4983
        %v5055 = vunpack.c.l.b16 %v4984
        %v5056 = vunpack.c.l.b16 %v4985
        %v5057 = vpack.c.b16 %v5026, %v5025
        %v5058 = vpack.c.b16 %v5028, %v5027
        %v5059 = vpack.c.b16 %v5030, %v5029
        %v5060 = vpack.c.b16 %v5032, %v5031
        %v5061 = vpack.c.b16 %v5034, %v5033
        %v5062 = vpack.c.b16 %v5036, %v5035
        %v5063 = vpack.c.b16 %v5038, %v5037
        %v5064 = vpack.c.b16 %v5040, %v5039
        %v5065 = vpack.c.b16 %v5042, %v5041
        %v5066 = vpack.c.b16 %v5044, %v5043
        %v5067 = vpack.c.b16 %v5046, %v5045
        %v5068 = vpack.c.b16 %v5048, %v5047
        %v5069 = vpack.c.b16 %v5050, %v5049
        %v5070 = vpack.c.b16 %v5052, %v5051
        %v5071 = vpack.c.b16 %v5054, %v5053
        %v5072 = vpack.c.b16 %v5056, %v5055
        %5089 = vmatprep.subr.bf16.mxu0 0
        %5090 = vmatpush1.bf16.msra.mxu0 %v5064
        %5091 = vmatprep.subr.bf16.mxu0 0
        %5092 = vmatpush1.bf16.msra.mxu0 %v5063
        %5093 = vmatprep.subr.bf16.mxu0 0
        %5094 = vmatpush1.bf16.msra.mxu0 %v5062
        %5095 = vmatprep.subr.bf16.mxu0 0
        %5096 = vmatpush1.bf16.msra.mxu0 %v5061
        %5097 = vmatprep.subr.bf16.mxu0 0
        %5098 = vmatpush1.bf16.msra.mxu0 %v5060
        %5099 = vmatprep.subr.bf16.mxu0 0
        %5100 = vmatpush1.bf16.msra.mxu0 %v5059
        %5101 = vmatprep.subr.bf16.mxu0 0
        %5102 = vmatpush1.bf16.msra.mxu0 %v5058
        %5103 = vmatprep.subr.bf16.mxu0 0
        %5104 = vmatpush1.bf16.msra.mxu0 %v5057
        %5105 = vmatprep.subr.bf16.mxu0 0
        %5106 = vmatpush2.bf16.msra.mxu0 %v5072
        %5107 = vmatprep.subr.bf16.mxu0 0
        %5108 = vmatpush2.bf16.msra.mxu0 %v5071
        %5109 = vmatprep.subr.bf16.mxu0 0
        %5110 = vmatpush2.bf16.msra.mxu0 %v5070
        %5111 = vmatprep.subr.bf16.mxu0 0
        %5112 = vmatpush2.bf16.msra.mxu0 %v5069
        %5113 = vmatprep.subr.bf16.mxu0 0
        %5114 = vmatpush2.bf16.msra.mxu0 %v5068
        %5115 = vmatprep.subr.bf16.mxu0 0
        %5116 = vmatpush2.bf16.msra.mxu0 %v5067
        %5117 = vmatprep.subr.bf16.mxu0 0
        %5118 = vmatpush2.bf16.msra.mxu0 %v5066
        %5119 = vmatprep.subr.bf16.mxu0 0
        %5120 = vmatpush2.bf16.msra.mxu0 %v5065
        %5121 = vmatprep.mubr.bf16.mxu0 %v4939
        %5122 = vmatmul.mubr.bf16.gmra.mxu0 %v4938
        %v5123 = vpop.f32.mrf.mxu0
        %v5124 = vadd.f32 %v4991, %v5123
        %v5125 = vpop.f32.mrf.mxu0
        %v5126 = vpop.f32.mrf.mxu0
        %v5127 = vadd.f32 %v4991, %v5126
        %v5128 = vpop.f32.mrf.mxu0
        %5129 = vmatprep.mubr.bf16.mxu0 %v4941
        %5130 = vmatmul.mubr.bf16.gmra.mxu0 %v4940
        %v5131 = vpop.f32.mrf.mxu0
        %v5132 = vadd.f32 %v4991, %v5131
        %v5133 = vpop.f32.mrf.mxu0
        %v5134 = vpop.f32.mrf.mxu0
        %v5135 = vadd.f32 %v4991, %v5134
        %v5136 = vpop.f32.mrf.mxu0
        %5137 = vmatprep.mubr.bf16.mxu0 %v4943
        %5138 = vmatmul.mubr.bf16.gmra.mxu0 %v4942
        %v5139 = vpop.f32.mrf.mxu0
        %v5140 = vadd.f32 %v4991, %v5139
        %v5141 = vpop.f32.mrf.mxu0
        %v5142 = vpop.f32.mrf.mxu0
        %v5143 = vadd.f32 %v4991, %v5142
        %v5144 = vpop.f32.mrf.mxu0
        %5145 = vmatprep.mubr.bf16.mxu0 %v4945
        %5146 = vmatmul.mubr.bf16.gmra.mxu0 %v4944
        %v5147 = vpop.f32.mrf.mxu0
        %v5148 = vadd.f32 %v4991, %v5147
        %v5149 = vpop.f32.mrf.mxu0
        %v5150 = vpop.f32.mrf.mxu0
        %v5151 = vadd.f32 %v4991, %v5150
        %v5152 = vpop.f32.mrf.mxu0
        %5153 = vmatprep.mubr.bf16.mxu0 %v4947
        %5154 = vmatmul.mubr.bf16.gmra.mxu0 %v4946
        %v5155 = vpop.f32.mrf.mxu0
        %v5156 = vadd.f32 %v4991, %v5155
        %v5157 = vpop.f32.mrf.mxu0
        %v5158 = vpop.f32.mrf.mxu0
        %v5159 = vadd.f32 %v4991, %v5158
        %v5160 = vpop.f32.mrf.mxu0
        %5161 = vmatprep.mubr.bf16.mxu0 %v4949
        %5162 = vmatmul.mubr.bf16.gmra.mxu0 %v4948
        %v5163 = vpop.f32.mrf.mxu0
        %v5164 = vadd.f32 %v4991, %v5163
        %v5165 = vpop.f32.mrf.mxu0
        %v5166 = vpop.f32.mrf.mxu0
        %v5167 = vadd.f32 %v4991, %v5166
        %v5168 = vpop.f32.mrf.mxu0
        %5169 = vmatprep.mubr.bf16.mxu0 %v4951
        %5170 = vmatmul.mubr.bf16.gmra.mxu0 %v4950
        %v5171 = vpop.f32.mrf.mxu0
        %v5172 = vadd.f32 %v4991, %v5171
        %v5173 = vpop.f32.mrf.mxu0
        %v5174 = vpop.f32.mrf.mxu0
        %v5175 = vadd.f32 %v4991, %v5174
        %v5176 = vpop.f32.mrf.mxu0
        %5177 = vmatprep.mubr.bf16.mxu0 %v4953
        %5178 = vmatmul.mubr.bf16.gmra.mxu0 %v4952
        %v5179 = vpop.f32.mrf.mxu0
        %v5180 = vadd.f32 %v4991, %v5179
        %v5181 = vpop.f32.mrf.mxu0
        %v5182 = vpop.f32.mrf.mxu0
        %v5183 = vadd.f32 %v4991, %v5182
        %v5184 = vpop.f32.mrf.mxu0
        %5185 = vdwg.mxu0
        %v5186 = vadd.f32 %v4367, %v5124
        %v5187 = vadd.f32 %v4368, %v5127
        %v5188 = vadd.f32 %v4369, %v5132
        %v5189 = vadd.f32 %v4370, %v5135
        %v5190 = vadd.f32 %v4371, %v5140
        %v5191 = vadd.f32 %v4372, %v5143
        %v5192 = vadd.f32 %v4373, %v5148
        %v5193 = vadd.f32 %v4374, %v5151
        %v5194 = vadd.f32 %v4375, %v5156
        %v5195 = vadd.f32 %v4376, %v5159
        %v5196 = vadd.f32 %v4377, %v5164
        %v5197 = vadd.f32 %v4378, %v5167
        %v5198 = vadd.f32 %v4379, %v5172
        %v5199 = vadd.f32 %v4380, %v5175
        %v5200 = vadd.f32 %v4381, %v5180
        %v5201 = vadd.f32 %v4382, %v5183
        %s5202 = scalar_lea.vmem %s1, 1
        %v5203 = vld [vmem:[%s5202] sm:$0x1]
        %s5204 = scalar_lea.vmem %s2, 1
        %v5205 = vld [vmem:[%s5204] sm:$0x1]
        %v5206 = vsel %vm557, %v5186, 0.0
        %5207 = vadd.xlane.f32.xlu0 %v5206
        %v5208 = vpop.xlane.xlu0 %5207
        %v5209 = vsel %vm557, %v5187, 0.0
        %5210 = vadd.xlane.f32.xlu0 %v5209
        %v5211 = vpop.xlane.xlu0 %5210
        %v5212 = vsel %vm557, %v5188, 0.0
        %5213 = vadd.xlane.f32.xlu0 %v5212
        %v5214 = vpop.xlane.xlu0 %5213
        %v5215 = vsel %vm557, %v5189, 0.0
        %5216 = vadd.xlane.f32.xlu0 %v5215
        %v5217 = vpop.xlane.xlu0 %5216
        %v5218 = vsel %vm557, %v5190, 0.0
        %5219 = vadd.xlane.f32.xlu0 %v5218
        %v5220 = vpop.xlane.xlu0 %5219
        %v5221 = vsel %vm557, %v5191, 0.0
        %5222 = vadd.xlane.f32.xlu0 %v5221
        %v5223 = vpop.xlane.xlu0 %5222
        %v5224 = vsel %vm557, %v5192, 0.0
        %5225 = vadd.xlane.f32.xlu0 %v5224
        %v5226 = vpop.xlane.xlu0 %5225
        %v5227 = vsel %vm557, %v5193, 0.0
        %5228 = vadd.xlane.f32.xlu0 %v5227
        %v5229 = vpop.xlane.xlu0 %5228
        %v5230 = vsel %vm557, %v5194, 0.0
        %5231 = vadd.xlane.f32.xlu0 %v5230
        %v5232 = vpop.xlane.xlu0 %5231
        %v5233 = vsel %vm557, %v5195, 0.0
        %5234 = vadd.xlane.f32.xlu0 %v5233
        %v5235 = vpop.xlane.xlu0 %5234
        %v5236 = vsel %vm557, %v5196, 0.0
        %5237 = vadd.xlane.f32.xlu0 %v5236
        %v5238 = vpop.xlane.xlu0 %5237
        %v5239 = vsel %vm557, %v5197, 0.0
        %5240 = vadd.xlane.f32.xlu0 %v5239
        %v5241 = vpop.xlane.xlu0 %5240
        %v5242 = vsel %vm557, %v5198, 0.0
        %5243 = vadd.xlane.f32.xlu0 %v5242
        %v5244 = vpop.xlane.xlu0 %5243
        %v5245 = vsel %vm557, %v5199, 0.0
        %5246 = vadd.xlane.f32.xlu0 %v5245
        %v5247 = vpop.xlane.xlu0 %5246
        %v5248 = vsel %vm557, %v5200, 0.0
        %5249 = vadd.xlane.f32.xlu0 %v5248
        %v5250 = vpop.xlane.xlu0 %5249
        %v5251 = vsel %vm557, %v5201, 0.0
        %5252 = vadd.xlane.f32.xlu0 %v5251
        %v5253 = vpop.xlane.xlu0 %5252
        %v5254 = vmul.f32 %v5208, %v606
        %v5255 = vmul.f32 %v5211, %v606
        %v5256 = vmul.f32 %v5214, %v606
        %v5257 = vmul.f32 %v5217, %v606
        %v5258 = vmul.f32 %v5220, %v606
        %v5259 = vmul.f32 %v5223, %v606
        %v5260 = vmul.f32 %v5226, %v606
        %v5261 = vmul.f32 %v5229, %v606
        %v5262 = vmul.f32 %v5232, %v606
        %v5263 = vmul.f32 %v5235, %v606
        %v5264 = vmul.f32 %v5238, %v606
        %v5265 = vmul.f32 %v5241, %v606
        %v5266 = vmul.f32 %v5244, %v606
        %v5267 = vmul.f32 %v5247, %v606
        %v5268 = vmul.f32 %v5250, %v606
        %v5269 = vmul.f32 %v5253, %v606
        %v5270 = vsub.f32 %v5186, %v5254
        %v5271 = vsub.f32 %v5187, %v5255
        %v5272 = vsub.f32 %v5188, %v5256
        %v5273 = vsub.f32 %v5189, %v5257
        %v5274 = vsub.f32 %v5190, %v5258
        %v5275 = vsub.f32 %v5191, %v5259
        %v5276 = vsub.f32 %v5192, %v5260
        %v5277 = vsub.f32 %v5193, %v5261
        %v5278 = vsub.f32 %v5194, %v5262
        %v5279 = vsub.f32 %v5195, %v5263
        %v5280 = vsub.f32 %v5196, %v5264
        %v5281 = vsub.f32 %v5197, %v5265
        %v5282 = vsub.f32 %v5198, %v5266
        %v5283 = vsub.f32 %v5199, %v5267
        %v5284 = vsub.f32 %v5200, %v5268
        %v5285 = vsub.f32 %v5201, %v5269
        %v5286 = vmul.f32 %v5270, %v5270
        %v5287 = vmul.f32 %v5271, %v5271
        %v5288 = vmul.f32 %v5272, %v5272
        %v5289 = vmul.f32 %v5273, %v5273
        %v5290 = vmul.f32 %v5274, %v5274
        %v5291 = vmul.f32 %v5275, %v5275
        %v5292 = vmul.f32 %v5276, %v5276
        %v5293 = vmul.f32 %v5277, %v5277
        %v5294 = vmul.f32 %v5278, %v5278
        %v5295 = vmul.f32 %v5279, %v5279
        %v5296 = vmul.f32 %v5280, %v5280
        %v5297 = vmul.f32 %v5281, %v5281
        %v5298 = vmul.f32 %v5282, %v5282
        %v5299 = vmul.f32 %v5283, %v5283
        %v5300 = vmul.f32 %v5284, %v5284
        %v5301 = vmul.f32 %v5285, %v5285
        %v5302 = vsel %vm557, %v5286, 0.0
        %5303 = vadd.xlane.f32.xlu0 %v5302
        %v5304 = vpop.xlane.xlu0 %5303
        %v5305 = vsel %vm557, %v5287, 0.0
        %5306 = vadd.xlane.f32.xlu0 %v5305
        %v5307 = vpop.xlane.xlu0 %5306
        %v5308 = vsel %vm557, %v5288, 0.0
        %5309 = vadd.xlane.f32.xlu0 %v5308
        %v5310 = vpop.xlane.xlu0 %5309
        %v5311 = vsel %vm557, %v5289, 0.0
        %5312 = vadd.xlane.f32.xlu0 %v5311
        %v5313 = vpop.xlane.xlu0 %5312
        %v5314 = vsel %vm557, %v5290, 0.0
        %5315 = vadd.xlane.f32.xlu0 %v5314
        %v5316 = vpop.xlane.xlu0 %5315
        %v5317 = vsel %vm557, %v5291, 0.0
        %5318 = vadd.xlane.f32.xlu0 %v5317
        %v5319 = vpop.xlane.xlu0 %5318
        %v5320 = vsel %vm557, %v5292, 0.0
        %5321 = vadd.xlane.f32.xlu0 %v5320
        %v5322 = vpop.xlane.xlu0 %5321
        %v5323 = vsel %vm557, %v5293, 0.0
        %5324 = vadd.xlane.f32.xlu0 %v5323
        %v5325 = vpop.xlane.xlu0 %5324
        %v5326 = vsel %vm557, %v5294, 0.0
        %5327 = vadd.xlane.f32.xlu0 %v5326
        %v5328 = vpop.xlane.xlu0 %5327
        %v5329 = vsel %vm557, %v5295, 0.0
        %5330 = vadd.xlane.f32.xlu0 %v5329
        %v5331 = vpop.xlane.xlu0 %5330
        %v5332 = vsel %vm557, %v5296, 0.0
        %5333 = vadd.xlane.f32.xlu0 %v5332
        %v5334 = vpop.xlane.xlu0 %5333
        %v5335 = vsel %vm557, %v5297, 0.0
        %5336 = vadd.xlane.f32.xlu0 %v5335
        %v5337 = vpop.xlane.xlu0 %5336
        %v5338 = vsel %vm557, %v5298, 0.0
        %5339 = vadd.xlane.f32.xlu0 %v5338
        %v5340 = vpop.xlane.xlu0 %5339
        %v5341 = vsel %vm557, %v5299, 0.0
        %5342 = vadd.xlane.f32.xlu0 %v5341
        %v5343 = vpop.xlane.xlu0 %5342
        %v5344 = vsel %vm557, %v5300, 0.0
        %5345 = vadd.xlane.f32.xlu0 %v5344
        %v5346 = vpop.xlane.xlu0 %5345
        %v5347 = vsel %vm557, %v5301, 0.0
        %5348 = vadd.xlane.f32.xlu0 %v5347
        %v5349 = vpop.xlane.xlu0 %5348
        %v5350 = vmul.f32 %v5304, %v606
        %v5351 = vmul.f32 %v5307, %v606
        %v5352 = vmul.f32 %v5310, %v606
        %v5353 = vmul.f32 %v5313, %v606
        %v5354 = vmul.f32 %v5316, %v606
        %v5355 = vmul.f32 %v5319, %v606
        %v5356 = vmul.f32 %v5322, %v606
        %v5357 = vmul.f32 %v5325, %v606
        %v5358 = vmul.f32 %v5328, %v606
        %v5359 = vmul.f32 %v5331, %v606
        %v5360 = vmul.f32 %v5334, %v606
        %v5361 = vmul.f32 %v5337, %v606
        %v5362 = vmul.f32 %v5340, %v606
        %v5363 = vmul.f32 %v5343, %v606
        %v5364 = vmul.f32 %v5346, %v606
        %v5365 = vmul.f32 %v5349, %v606
        %v5366 = vadd.f32 %v5350, 1e-05
        %v5367 = vadd.f32 %v5351, 1e-05
        %v5368 = vadd.f32 %v5352, 1e-05
        %v5369 = vadd.f32 %v5353, 1e-05
        %v5370 = vadd.f32 %v5354, 1e-05
        %v5371 = vadd.f32 %v5355, 1e-05
        %v5372 = vadd.f32 %v5356, 1e-05
        %v5373 = vadd.f32 %v5357, 1e-05
        %v5374 = vadd.f32 %v5358, 1e-05
        %v5375 = vadd.f32 %v5359, 1e-05
        %v5376 = vadd.f32 %v5360, 1e-05
        %v5377 = vadd.f32 %v5361, 1e-05
        %v5378 = vadd.f32 %v5362, 1e-05
        %v5379 = vadd.f32 %v5363, 1e-05
        %v5380 = vadd.f32 %v5364, 1e-05
        %v5381 = vadd.f32 %v5365, 1e-05
        %v5382 = vrsqrt.pop %v5366
        %v5383 = vrsqrt.pop %v5367
        %v5384 = vrsqrt.pop %v5368
        %v5385 = vrsqrt.pop %v5369
        %v5386 = vrsqrt.pop %v5370
        %v5387 = vrsqrt.pop %v5371
        %v5388 = vrsqrt.pop %v5372
        %v5389 = vrsqrt.pop %v5373
        %v5390 = vrsqrt.pop %v5374
        %v5391 = vrsqrt.pop %v5375
        %v5392 = vrsqrt.pop %v5376
        %v5393 = vrsqrt.pop %v5377
        %v5394 = vrsqrt.pop %v5378
        %v5395 = vrsqrt.pop %v5379
        %v5396 = vrsqrt.pop %v5380
        %v5397 = vrsqrt.pop %v5381
        %v5398 = vmul.f32 %v5270, %v5382
        %v5399 = vmul.f32 %v5271, %v5383
        %v5400 = vmul.f32 %v5272, %v5384
        %v5401 = vmul.f32 %v5273, %v5385
        %v5402 = vmul.f32 %v5274, %v5386
        %v5403 = vmul.f32 %v5275, %v5387
        %v5404 = vmul.f32 %v5276, %v5388
        %v5405 = vmul.f32 %v5277, %v5389
        %v5406 = vmul.f32 %v5278, %v5390
        %v5407 = vmul.f32 %v5279, %v5391
        %v5408 = vmul.f32 %v5280, %v5392
        %v5409 = vmul.f32 %v5281, %v5393
        %v5410 = vmul.f32 %v5282, %v5394
        %v5411 = vmul.f32 %v5283, %v5395
        %v5412 = vmul.f32 %v5284, %v5396
        %v5413 = vmul.f32 %v5285, %v5397
        %v5415 = vlaneseq
        %v5416 = vshrl.u32 %v5415, 7
        %v5417 = vsub.s32 0, %v5416
        %v5418 = vrot.slane %v5203, %v5417
        %v5420 = vmul.f32 %v5398, %v5418
        %v5421 = vmul.f32 %v5399, %v5418
        %v5422 = vmul.f32 %v5400, %v5418
        %v5423 = vmul.f32 %v5401, %v5418
        %v5424 = vmul.f32 %v5402, %v5418
        %v5425 = vmul.f32 %v5403, %v5418
        %v5426 = vmul.f32 %v5404, %v5418
        %v5427 = vmul.f32 %v5405, %v5418
        %v5428 = vmul.f32 %v5406, %v5418
        %v5429 = vmul.f32 %v5407, %v5418
        %v5430 = vmul.f32 %v5408, %v5418
        %v5431 = vmul.f32 %v5409, %v5418
        %v5432 = vmul.f32 %v5410, %v5418
        %v5433 = vmul.f32 %v5411, %v5418
        %v5434 = vmul.f32 %v5412, %v5418
        %v5435 = vmul.f32 %v5413, %v5418
        %v5437 = vlaneseq
        %v5438 = vshrl.u32 %v5437, 7
        %v5439 = vsub.s32 0, %v5438
        %v5440 = vrot.slane %v5205, %v5439
        %v5442 = vadd.f32 %v5420, %v5440
        %v5443 = vadd.f32 %v5421, %v5440
        %v5444 = vadd.f32 %v5422, %v5440
        %v5445 = vadd.f32 %v5423, %v5440
        %v5446 = vadd.f32 %v5424, %v5440
        %v5447 = vadd.f32 %v5425, %v5440
        %v5448 = vadd.f32 %v5426, %v5440
        %v5449 = vadd.f32 %v5427, %v5440
        %v5450 = vadd.f32 %v5428, %v5440
        %v5451 = vadd.f32 %v5429, %v5440
        %v5452 = vadd.f32 %v5430, %v5440
        %v5453 = vadd.f32 %v5431, %v5440
        %v5454 = vadd.f32 %v5432, %v5440
        %v5455 = vadd.f32 %v5433, %v5440
        %v5456 = vadd.f32 %v5434, %v5440
        %v5457 = vadd.f32 %v5435, %v5440
        %v5458 = vpack.c.bf16 %v5443, %v5442
        %v5459 = vpack.c.bf16 %v5445, %v5444
        %v5460 = vpack.c.bf16 %v5447, %v5446
        %v5461 = vpack.c.bf16 %v5449, %v5448
        %v5462 = vpack.c.bf16 %v5451, %v5450
        %v5463 = vpack.c.bf16 %v5453, %v5452
        %v5464 = vpack.c.bf16 %v5455, %v5454
        %v5465 = vpack.c.bf16 %v5457, %v5456
        %s5466 = scalar_lea.vmem %s3, 64
        %v5467 = vld [vmem:[%s5466] sm:$0xff]
        %v5468 = vld [vmem:[%s5466 + $0x8] sm:$0xff]
        %v5469 = vld [vmem:[%s5466 + $0x10] sm:$0xff]
        %v5470 = vld [vmem:[%s5466 + $0x18] sm:$0xff]
        %v5471 = vld [vmem:[%s5466 + $0x20] sm:$0xff]
        %v5472 = vld [vmem:[%s5466 + $0x28] sm:$0xff]
        %v5473 = vld [vmem:[%s5466 + $0x30] sm:$0xff]
        %v5474 = vld [vmem:[%s5466 + $0x38] sm:$0xff]
        %v5483 = vunpack.c.l.b16 %v5467
        %v5484 = vunpack.c.h.b16 %v5467
        %v5485 = vunpack.c.l.b16 %v5468
        %v5486 = vunpack.c.h.b16 %v5468
        %v5487 = vunpack.c.l.b16 %v5469
        %v5488 = vunpack.c.h.b16 %v5469
        %v5489 = vunpack.c.l.b16 %v5470
        %v5490 = vunpack.c.h.b16 %v5470
        %v5491 = vunpack.c.l.b16 %v5471
        %v5492 = vunpack.c.h.b16 %v5471
        %v5493 = vunpack.c.l.b16 %v5472
        %v5494 = vunpack.c.h.b16 %v5472
        %v5495 = vunpack.c.l.b16 %v5473
        %v5496 = vunpack.c.h.b16 %v5473
        %v5497 = vunpack.c.l.b16 %v5474
        %v5498 = vunpack.c.h.b16 %v5474
        %v5499 = vpack.c.b16 %v5485, %v5483
        %v5500 = vpack.c.b16 %v5486, %v5484
        %v5501 = vpack.c.b16 %v5489, %v5487
        %v5502 = vpack.c.b16 %v5490, %v5488
        %v5503 = vpack.c.b16 %v5493, %v5491
        %v5504 = vpack.c.b16 %v5494, %v5492
        %v5505 = vpack.c.b16 %v5497, %v5495
        %v5506 = vpack.c.b16 %v5498, %v5496
        %v5516 = vsel %vm557, %v5458, 0
        %v5519 = vsel %vm557, %v5459, 0
        %v5522 = vsel %vm557, %v5460, 0
        %v5525 = vsel %vm557, %v5461, 0
        %v5528 = vsel %vm557, %v5462, 0
        %v5531 = vsel %vm557, %v5463, 0
        %v5534 = vsel %vm557, %v5464, 0
        %v5537 = vsel %vm557, %v5465, 0
        %5539 = vmatprep.subr.bf16.mxu0 0
        %5540 = vmatpush1.bf16.msra.mxu0 0
        %5541 = vmatprep.subr.bf16.mxu0 0
        %5542 = vmatpush1.bf16.msra.mxu0 0
        %5543 = vmatprep.subr.bf16.mxu0 0
        %5544 = vmatpush1.bf16.msra.mxu0 0
        %5545 = vmatprep.subr.bf16.mxu0 0
        %5546 = vmatpush1.bf16.msra.mxu0 0
        %5547 = vmatprep.subr.bf16.mxu0 %v5506
        %5548 = vmatpush1.bf16.msra.mxu0 %v5505
        %5549 = vmatprep.subr.bf16.mxu0 %v5504
        %5550 = vmatpush1.bf16.msra.mxu0 %v5503
        %5551 = vmatprep.subr.bf16.mxu0 %v5502
        %5552 = vmatpush1.bf16.msra.mxu0 %v5501
        %5553 = vmatprep.subr.bf16.mxu0 %v5500
        %5554 = vmatpush1.bf16.msra.mxu0 %v5499
        %5555 = vmatprep.subr.bf16.mxu0 0
        %5556 = vmatpush2.bf16.msra.mxu0 0
        %5557 = vmatprep.subr.bf16.mxu0 0
        %5558 = vmatpush2.bf16.msra.mxu0 0
        %5559 = vmatprep.subr.bf16.mxu0 0
        %5560 = vmatpush2.bf16.msra.mxu0 0
        %5561 = vmatprep.subr.bf16.mxu0 0
        %5562 = vmatpush2.bf16.msra.mxu0 0
        %5563 = vmatprep.subr.bf16.mxu0 0
        %5564 = vmatpush2.bf16.msra.mxu0 0
        %5565 = vmatprep.subr.bf16.mxu0 0
        %5566 = vmatpush2.bf16.msra.mxu0 0
        %5567 = vmatprep.subr.bf16.mxu0 0
        %5568 = vmatpush2.bf16.msra.mxu0 0
        %5569 = vmatprep.subr.bf16.mxu0 0
        %5570 = vmatpush2.bf16.msra.mxu0 0
        %5571 = vmatprep.mubr.bf16.mxu0 0
        %5572 = vmatmul.mubr.bf16.gmra.mxu0 %v5516
        %v5573 = vpop.f32.mrf.mxu0
        %v5574 = vadd.f32 0.0, %v5573
        %v5575 = vpop.f32.mrf.mxu0
        %v5576 = vadd.f32 0.0, %v5575
        %v5577 = vpop.f32.mrf.mxu0
        %v5578 = vadd.f32 0.0, %v5577
        %v5579 = vpop.f32.mrf.mxu0
        %v5580 = vadd.f32 0.0, %v5579
        %5581 = vmatprep.mubr.bf16.mxu0 0
        %5582 = vmatmul.mubr.bf16.gmra.mxu0 %v5519
        %v5583 = vpop.f32.mrf.mxu0
        %v5584 = vadd.f32 0.0, %v5583
        %v5585 = vpop.f32.mrf.mxu0
        %v5586 = vadd.f32 0.0, %v5585
        %v5587 = vpop.f32.mrf.mxu0
        %v5588 = vadd.f32 0.0, %v5587
        %v5589 = vpop.f32.mrf.mxu0
        %v5590 = vadd.f32 0.0, %v5589
        %5591 = vmatprep.mubr.bf16.mxu0 0
        %5592 = vmatmul.mubr.bf16.gmra.mxu0 %v5522
        %v5593 = vpop.f32.mrf.mxu0
        %v5594 = vadd.f32 0.0, %v5593
        %v5595 = vpop.f32.mrf.mxu0
        %v5596 = vadd.f32 0.0, %v5595
        %v5597 = vpop.f32.mrf.mxu0
        %v5598 = vadd.f32 0.0, %v5597
        %v5599 = vpop.f32.mrf.mxu0
        %v5600 = vadd.f32 0.0, %v5599
        %5601 = vmatprep.mubr.bf16.mxu0 0
        %5602 = vmatmul.mubr.bf16.gmra.mxu0 %v5525
        %v5603 = vpop.f32.mrf.mxu0
        %v5604 = vadd.f32 0.0, %v5603
        %v5605 = vpop.f32.mrf.mxu0
        %v5606 = vadd.f32 0.0, %v5605
        %v5607 = vpop.f32.mrf.mxu0
        %v5608 = vadd.f32 0.0, %v5607
        %v5609 = vpop.f32.mrf.mxu0
        %v5610 = vadd.f32 0.0, %v5609
        %5611 = vmatprep.mubr.bf16.mxu0 0
        %5612 = vmatmul.mubr.bf16.gmra.mxu0 %v5528
        %v5613 = vpop.f32.mrf.mxu0
        %v5614 = vadd.f32 0.0, %v5613
        %v5615 = vpop.f32.mrf.mxu0
        %v5616 = vadd.f32 0.0, %v5615
        %v5617 = vpop.f32.mrf.mxu0
        %v5618 = vadd.f32 0.0, %v5617
        %v5619 = vpop.f32.mrf.mxu0
        %v5620 = vadd.f32 0.0, %v5619
        %5621 = vmatprep.mubr.bf16.mxu0 0
        %5622 = vmatmul.mubr.bf16.gmra.mxu0 %v5531
        %v5623 = vpop.f32.mrf.mxu0
        %v5624 = vadd.f32 0.0, %v5623
        %v5625 = vpop.f32.mrf.mxu0
        %v5626 = vadd.f32 0.0, %v5625
        %v5627 = vpop.f32.mrf.mxu0
        %v5628 = vadd.f32 0.0, %v5627
        %v5629 = vpop.f32.mrf.mxu0
        %v5630 = vadd.f32 0.0, %v5629
        %5631 = vmatprep.mubr.bf16.mxu0 0
        %5632 = vmatmul.mubr.bf16.gmra.mxu0 %v5534
        %v5633 = vpop.f32.mrf.mxu0
        %v5634 = vadd.f32 0.0, %v5633
        %v5635 = vpop.f32.mrf.mxu0
        %v5636 = vadd.f32 0.0, %v5635
        %v5637 = vpop.f32.mrf.mxu0
        %v5638 = vadd.f32 0.0, %v5637
        %v5639 = vpop.f32.mrf.mxu0
        %v5640 = vadd.f32 0.0, %v5639
        %5641 = vmatprep.mubr.bf16.mxu0 0
        %5642 = vmatmul.mubr.bf16.gmra.mxu0 %v5537
        %v5643 = vpop.f32.mrf.mxu0
        %v5644 = vadd.f32 0.0, %v5643
        %v5645 = vpop.f32.mrf.mxu0
        %v5646 = vadd.f32 0.0, %v5645
        %v5647 = vpop.f32.mrf.mxu0
        %v5648 = vadd.f32 0.0, %v5647
        %v5649 = vpop.f32.mrf.mxu0
        %v5650 = vadd.f32 0.0, %v5649
        %5651 = vdwg.mxu0
        %v5652 = vpack.c.bf16 %v5578, %v5574
        %v5653 = vpack.c.bf16 %v5588, %v5584
        %v5654 = vpack.c.bf16 %v5580, %v5576
        %v5655 = vpack.c.bf16 %v5590, %v5586
        %5658 = vrot.lane.b32.xlu0 %v5652, 64
        %v5659 = vpop.permute.xlu0 %5658
        %5660 = vrot.lane.b32.xlu0 %v5653, 64
        %v5661 = vpop.permute.xlu0 %5660
        %v5663 = vsel %vm1014, %v5652, 0
        %v5666 = vsel %vm1014, %v5653, 0
        %v5669 = vsel %vm1014, %v5659, 0
        %v5672 = vsel %vm1014, %v5661, 0
        %5674 = vmatprep.subr.bf16.mxu0 0
        %5675 = vmatpush1.bf16.xpose.msra.mxu0 0
        %5676 = vmatprep.subr.bf16.mxu0 0
        %5677 = vmatpush1.bf16.xpose.msra.mxu0 0
        %5678 = vmatprep.subr.bf16.mxu0 0
        %5679 = vmatpush1.bf16.xpose.msra.mxu0 0
        %5680 = vmatprep.subr.bf16.mxu0 0
        %5681 = vmatpush1.bf16.xpose.msra.mxu0 0
        %5682 = vmatprep.subr.bf16.mxu0 0
        %5683 = vmatpush1.bf16.xpose.msra.mxu0 0
        %5684 = vmatprep.subr.bf16.mxu0 0
        %5685 = vmatpush1.bf16.xpose.msra.mxu0 0
        %5686 = vmatprep.subr.bf16.mxu0 0
        %5687 = vmatpush1.bf16.xpose.msra.mxu0 %v5672
        %5688 = vmatprep.subr.bf16.mxu0 0
        %5689 = vmatpush1.bf16.xpose.msra.mxu0 %v5669
        %5690 = vmatprep.subr.bf16.mxu0 0
        %5691 = vmatpush2.bf16.xpose.msra.mxu0 0
        %5692 = vmatprep.subr.bf16.mxu0 0
        %5693 = vmatpush2.bf16.xpose.msra.mxu0 0
        %5694 = vmatprep.subr.bf16.mxu0 0
        %5695 = vmatpush2.bf16.xpose.msra.mxu0 0
        %5696 = vmatprep.subr.bf16.mxu0 0
        %5697 = vmatpush2.bf16.xpose.msra.mxu0 0
        %5698 = vmatprep.subr.bf16.mxu0 0
        %5699 = vmatpush2.bf16.xpose.msra.mxu0 0
        %5700 = vmatprep.subr.bf16.mxu0 0
        %5701 = vmatpush2.bf16.xpose.msra.mxu0 0
        %5702 = vmatprep.subr.bf16.mxu0 0
        %5703 = vmatpush2.bf16.xpose.msra.mxu0 0
        %5704 = vmatprep.subr.bf16.mxu0 0
        %5705 = vmatpush2.bf16.xpose.msra.mxu0 0
        %5706 = vmatprep.mubr.bf16.mxu0 0
        %5707 = vmatmul.mubr.bf16.gmra.mxu0 %v5663
        %v5708 = vpop.f32.mrf.mxu0
        %v5709 = vadd.f32 0.0, %v5708
        %v5710 = vpop.f32.mrf.mxu0
        %v5711 = vpop.f32.mrf.mxu0
        %v5712 = vadd.f32 0.0, %v5711
        %v5713 = vpop.f32.mrf.mxu0
        %5714 = vmatprep.mubr.bf16.mxu0 0
        %5715 = vmatmul.mubr.bf16.gmra.mxu0 %v5666
        %v5716 = vpop.f32.mrf.mxu0
        %v5717 = vadd.f32 0.0, %v5716
        %v5718 = vpop.f32.mrf.mxu0
        %v5719 = vpop.f32.mrf.mxu0
        %v5720 = vadd.f32 0.0, %v5719
        %v5721 = vpop.f32.mrf.mxu0
        %5722 = vdwg.mxu0
        %5723 = vrot.lane.b32.xlu0 %v5652, 112
        %v5724 = vpop.permute.xlu0 %5723
        %5725 = vrot.lane.b32.xlu0 %v5653, 112
        %v5726 = vpop.permute.xlu0 %5725
        %5727 = vrot.lane.b32.xlu0 %v5652, 48
        %v5728 = vpop.permute.xlu0 %5727
        %5729 = vrot.lane.b32.xlu0 %v5653, 48
        %v5730 = vpop.permute.xlu0 %5729
        %v5732 = vsel %vm1014, %v5724, 0
        %v5735 = vsel %vm1014, %v5726, 0
        %v5738 = vsel %vm1014, %v5728, 0
        %v5741 = vsel %vm1014, %v5730, 0
        %5743 = vmatprep.subr.bf16.mxu0 0
        %5744 = vmatpush1.bf16.xpose.msra.mxu0 0
        %5745 = vmatprep.subr.bf16.mxu0 0
        %5746 = vmatpush1.bf16.xpose.msra.mxu0 0
        %5747 = vmatprep.subr.bf16.mxu0 0
        %5748 = vmatpush1.bf16.xpose.msra.mxu0 0
        %5749 = vmatprep.subr.bf16.mxu0 0
        %5750 = vmatpush1.bf16.xpose.msra.mxu0 0
        %5751 = vmatprep.subr.bf16.mxu0 0
        %5752 = vmatpush1.bf16.xpose.msra.mxu0 0
        %5753 = vmatprep.subr.bf16.mxu0 0
        %5754 = vmatpush1.bf16.xpose.msra.mxu0 0
        %5755 = vmatprep.subr.bf16.mxu0 0
        %5756 = vmatpush1.bf16.xpose.msra.mxu0 %v5741
        %5757 = vmatprep.subr.bf16.mxu0 0
        %5758 = vmatpush1.bf16.xpose.msra.mxu0 %v5738
        %5759 = vmatprep.subr.bf16.mxu0 0
        %5760 = vmatpush2.bf16.xpose.msra.mxu0 0
        %5761 = vmatprep.subr.bf16.mxu0 0
        %5762 = vmatpush2.bf16.xpose.msra.mxu0 0
        %5763 = vmatprep.subr.bf16.mxu0 0
        %5764 = vmatpush2.bf16.xpose.msra.mxu0 0
        %5765 = vmatprep.subr.bf16.mxu0 0
        %5766 = vmatpush2.bf16.xpose.msra.mxu0 0
        %5767 = vmatprep.subr.bf16.mxu0 0
        %5768 = vmatpush2.bf16.xpose.msra.mxu0 0
        %5769 = vmatprep.subr.bf16.mxu0 0
        %5770 = vmatpush2.bf16.xpose.msra.mxu0 0
        %5771 = vmatprep.subr.bf16.mxu0 0
        %5772 = vmatpush2.bf16.xpose.msra.mxu0 0
        %5773 = vmatprep.subr.bf16.mxu0 0
        %5774 = vmatpush2.bf16.xpose.msra.mxu0 0
        %5775 = vmatprep.mubr.bf16.mxu0 0
        %5776 = vmatmul.mubr.bf16.gmra.mxu0 %v5732
        %v5777 = vpop.f32.mrf.mxu0
        %v5778 = vadd.f32 0.0, %v5777
        %v5779 = vpop.f32.mrf.mxu0
        %v5780 = vpop.f32.mrf.mxu0
        %v5781 = vadd.f32 0.0, %v5780
        %v5782 = vpop.f32.mrf.mxu0
        %5783 = vmatprep.mubr.bf16.mxu0 0
        %5784 = vmatmul.mubr.bf16.gmra.mxu0 %v5735
        %v5785 = vpop.f32.mrf.mxu0
        %v5786 = vadd.f32 0.0, %v5785
        %v5787 = vpop.f32.mrf.mxu0
        %v5788 = vpop.f32.mrf.mxu0
        %v5789 = vadd.f32 0.0, %v5788
        %v5790 = vpop.f32.mrf.mxu0
        %5791 = vdwg.mxu0
        %5792 = vrot.lane.b32.xlu0 %v5652, 96
        %v5793 = vpop.permute.xlu0 %5792
        %5794 = vrot.lane.b32.xlu0 %v5653, 96
        %v5795 = vpop.permute.xlu0 %5794
        %5796 = vrot.lane.b32.xlu0 %v5652, 32
        %v5797 = vpop.permute.xlu0 %5796
        %5798 = vrot.lane.b32.xlu0 %v5653, 32
        %v5799 = vpop.permute.xlu0 %5798
        %v5801 = vsel %vm1014, %v5793, 0
        %v5804 = vsel %vm1014, %v5795, 0
        %v5807 = vsel %vm1014, %v5797, 0
        %v5810 = vsel %vm1014, %v5799, 0
        %5812 = vmatprep.subr.bf16.mxu0 0
        %5813 = vmatpush1.bf16.xpose.msra.mxu0 0
        %5814 = vmatprep.subr.bf16.mxu0 0
        %5815 = vmatpush1.bf16.xpose.msra.mxu0 0
        %5816 = vmatprep.subr.bf16.mxu0 0
        %5817 = vmatpush1.bf16.xpose.msra.mxu0 0
        %5818 = vmatprep.subr.bf16.mxu0 0
        %5819 = vmatpush1.bf16.xpose.msra.mxu0 0
        %5820 = vmatprep.subr.bf16.mxu0 0
        %5821 = vmatpush1.bf16.xpose.msra.mxu0 0
        %5822 = vmatprep.subr.bf16.mxu0 0
        %5823 = vmatpush1.bf16.xpose.msra.mxu0 0
        %5824 = vmatprep.subr.bf16.mxu0 0
        %5825 = vmatpush1.bf16.xpose.msra.mxu0 %v5810
        %5826 = vmatprep.subr.bf16.mxu0 0
        %5827 = vmatpush1.bf16.xpose.msra.mxu0 %v5807
        %5828 = vmatprep.subr.bf16.mxu0 0
        %5829 = vmatpush2.bf16.xpose.msra.mxu0 0
        %5830 = vmatprep.subr.bf16.mxu0 0
        %5831 = vmatpush2.bf16.xpose.msra.mxu0 0
        %5832 = vmatprep.subr.bf16.mxu0 0
        %5833 = vmatpush2.bf16.xpose.msra.mxu0 0
        %5834 = vmatprep.subr.bf16.mxu0 0
        %5835 = vmatpush2.bf16.xpose.msra.mxu0 0
        %5836 = vmatprep.subr.bf16.mxu0 0
        %5837 = vmatpush2.bf16.xpose.msra.mxu0 0
        %5838 = vmatprep.subr.bf16.mxu0 0
        %5839 = vmatpush2.bf16.xpose.msra.mxu0 0
        %5840 = vmatprep.subr.bf16.mxu0 0
        %5841 = vmatpush2.bf16.xpose.msra.mxu0 0
        %5842 = vmatprep.subr.bf16.mxu0 0
        %5843 = vmatpush2.bf16.xpose.msra.mxu0 0
        %5844 = vmatprep.mubr.bf16.mxu0 0
        %5845 = vmatmul.mubr.bf16.gmra.mxu0 %v5801
        %v5846 = vpop.f32.mrf.mxu0
        %v5847 = vadd.f32 0.0, %v5846
        %v5848 = vpop.f32.mrf.mxu0
        %v5849 = vpop.f32.mrf.mxu0
        %v5850 = vadd.f32 0.0, %v5849
        %v5851 = vpop.f32.mrf.mxu0
        %5852 = vmatprep.mubr.bf16.mxu0 0
        %5853 = vmatmul.mubr.bf16.gmra.mxu0 %v5804
        %v5854 = vpop.f32.mrf.mxu0
        %v5855 = vadd.f32 0.0, %v5854
        %v5856 = vpop.f32.mrf.mxu0
        %v5857 = vpop.f32.mrf.mxu0
        %v5858 = vadd.f32 0.0, %v5857
        %v5859 = vpop.f32.mrf.mxu0
        %5860 = vdwg.mxu0
        %5861 = vrot.lane.b32.xlu0 %v5652, 80
        %v5862 = vpop.permute.xlu0 %5861
        %5863 = vrot.lane.b32.xlu0 %v5653, 80
        %v5864 = vpop.permute.xlu0 %5863
        %5865 = vrot.lane.b32.xlu0 %v5652, 16
        %v5866 = vpop.permute.xlu0 %5865
        %5867 = vrot.lane.b32.xlu0 %v5653, 16
        %v5868 = vpop.permute.xlu0 %5867
        %v5870 = vsel %vm1014, %v5862, 0
        %v5873 = vsel %vm1014, %v5864, 0
        %v5876 = vsel %vm1014, %v5866, 0
        %v5879 = vsel %vm1014, %v5868, 0
        %5881 = vmatprep.subr.bf16.mxu0 0
        %5882 = vmatpush1.bf16.xpose.msra.mxu0 0
        %5883 = vmatprep.subr.bf16.mxu0 0
        %5884 = vmatpush1.bf16.xpose.msra.mxu0 0
        %5885 = vmatprep.subr.bf16.mxu0 0
        %5886 = vmatpush1.bf16.xpose.msra.mxu0 0
        %5887 = vmatprep.subr.bf16.mxu0 0
        %5888 = vmatpush1.bf16.xpose.msra.mxu0 0
        %5889 = vmatprep.subr.bf16.mxu0 0
        %5890 = vmatpush1.bf16.xpose.msra.mxu0 0
        %5891 = vmatprep.subr.bf16.mxu0 0
        %5892 = vmatpush1.bf16.xpose.msra.mxu0 0
        %5893 = vmatprep.subr.bf16.mxu0 0
        %5894 = vmatpush1.bf16.xpose.msra.mxu0 %v5879
        %5895 = vmatprep.subr.bf16.mxu0 0
        %5896 = vmatpush1.bf16.xpose.msra.mxu0 %v5876
        %5897 = vmatprep.subr.bf16.mxu0 0
        %5898 = vmatpush2.bf16.xpose.msra.mxu0 0
        %5899 = vmatprep.subr.bf16.mxu0 0
        %5900 = vmatpush2.bf16.xpose.msra.mxu0 0
        %5901 = vmatprep.subr.bf16.mxu0 0
        %5902 = vmatpush2.bf16.xpose.msra.mxu0 0
        %5903 = vmatprep.subr.bf16.mxu0 0
        %5904 = vmatpush2.bf16.xpose.msra.mxu0 0
        %5905 = vmatprep.subr.bf16.mxu0 0
        %5906 = vmatpush2.bf16.xpose.msra.mxu0 0
        %5907 = vmatprep.subr.bf16.mxu0 0
        %5908 = vmatpush2.bf16.xpose.msra.mxu0 0
        %5909 = vmatprep.subr.bf16.mxu0 0
        %5910 = vmatpush2.bf16.xpose.msra.mxu0 0
        %5911 = vmatprep.subr.bf16.mxu0 0
        %5912 = vmatpush2.bf16.xpose.msra.mxu0 0
        %5913 = vmatprep.mubr.bf16.mxu0 0
        %5914 = vmatmul.mubr.bf16.gmra.mxu0 %v5870
        %v5915 = vpop.f32.mrf.mxu0
        %v5916 = vadd.f32 0.0, %v5915
        %v5917 = vpop.f32.mrf.mxu0
        %v5918 = vpop.f32.mrf.mxu0
        %v5919 = vadd.f32 0.0, %v5918
        %v5920 = vpop.f32.mrf.mxu0
        %5921 = vmatprep.mubr.bf16.mxu0 0
        %5922 = vmatmul.mubr.bf16.gmra.mxu0 %v5873
        %v5923 = vpop.f32.mrf.mxu0
        %v5924 = vadd.f32 0.0, %v5923
        %v5925 = vpop.f32.mrf.mxu0
        %v5926 = vpop.f32.mrf.mxu0
        %v5927 = vadd.f32 0.0, %v5926
        %v5928 = vpop.f32.mrf.mxu0
        %5929 = vdwg.mxu0
        %v5930 = vmul.f32 %v5709, 0.25
        %v5931 = vmul.f32 %v5712, 0.25
        %v5932 = vmul.f32 %v5717, 0.25
        %v5933 = vmul.f32 %v5720, 0.25
        %v5934 = vmul.f32 %v5778, 0.25
        %v5935 = vmul.f32 %v5781, 0.25
        %v5936 = vmul.f32 %v5786, 0.25
        %v5937 = vmul.f32 %v5789, 0.25
        %v5938 = vmul.f32 %v5847, 0.25
        %v5939 = vmul.f32 %v5850, 0.25
        %v5940 = vmul.f32 %v5855, 0.25
        %v5941 = vmul.f32 %v5858, 0.25
        %v5942 = vmul.f32 %v5916, 0.25
        %v5943 = vmul.f32 %v5919, 0.25
        %v5944 = vmul.f32 %v5924, 0.25
        %v5945 = vmul.f32 %v5927, 0.25
        %v5946 = vadd.f32 %v5930, %v551
        %v5947 = vadd.f32 %v5931, %v552
        %v5948 = vadd.f32 %v5932, %v553
        %v5949 = vadd.f32 %v5933, %v554
        %v5950 = vadd.f32 %v5934, %v551
        %v5951 = vadd.f32 %v5935, %v552
        %v5952 = vadd.f32 %v5936, %v553
        %v5953 = vadd.f32 %v5937, %v554
        %v5954 = vadd.f32 %v5938, %v551
        %v5955 = vadd.f32 %v5939, %v552
        %v5956 = vadd.f32 %v5940, %v553
        %v5957 = vadd.f32 %v5941, %v554
        %v5958 = vadd.f32 %v5942, %v551
        %v5959 = vadd.f32 %v5943, %v552
        %v5960 = vadd.f32 %v5944, %v553
        %v5961 = vadd.f32 %v5945, %v554
        %v5962 = vsel %vm1315, %v5946, -inf
        %5963 = vmax.xlane.f32.xlu0 %v5962
        %v5964 = vpop.xlane.xlu0 %5963
        %v5965 = vsel %vm1315, %v5947, -inf
        %5966 = vmax.xlane.f32.xlu0 %v5965
        %v5967 = vpop.xlane.xlu0 %5966
        %v5968 = vsel %vm1315, %v5948, -inf
        %5969 = vmax.xlane.f32.xlu0 %v5968
        %v5970 = vpop.xlane.xlu0 %5969
        %v5971 = vsel %vm1315, %v5949, -inf
        %5972 = vmax.xlane.f32.xlu0 %v5971
        %v5973 = vpop.xlane.xlu0 %5972
        %v5974 = vsel %vm1315, %v5950, -inf
        %5975 = vmax.xlane.f32.xlu0 %v5974
        %v5976 = vpop.xlane.xlu0 %5975
        %v5977 = vsel %vm1315, %v5951, -inf
        %5978 = vmax.xlane.f32.xlu0 %v5977
        %v5979 = vpop.xlane.xlu0 %5978
        %v5980 = vsel %vm1315, %v5952, -inf
        %5981 = vmax.xlane.f32.xlu0 %v5980
        %v5982 = vpop.xlane.xlu0 %5981
        %v5983 = vsel %vm1315, %v5953, -inf
        %5984 = vmax.xlane.f32.xlu0 %v5983
        %v5985 = vpop.xlane.xlu0 %5984
        %v5986 = vsel %vm1315, %v5954, -inf
        %5987 = vmax.xlane.f32.xlu0 %v5986
        %v5988 = vpop.xlane.xlu0 %5987
        %v5989 = vsel %vm1315, %v5955, -inf
        %5990 = vmax.xlane.f32.xlu0 %v5989
        %v5991 = vpop.xlane.xlu0 %5990
        %v5992 = vsel %vm1315, %v5956, -inf
        %5993 = vmax.xlane.f32.xlu0 %v5992
        %v5994 = vpop.xlane.xlu0 %5993
        %v5995 = vsel %vm1315, %v5957, -inf
        %5996 = vmax.xlane.f32.xlu0 %v5995
        %v5997 = vpop.xlane.xlu0 %5996
        %v5998 = vsel %vm1315, %v5958, -inf
        %5999 = vmax.xlane.f32.xlu0 %v5998
        %v6000 = vpop.xlane.xlu0 %5999
        %v6001 = vsel %vm1315, %v5959, -inf
        %6002 = vmax.xlane.f32.xlu0 %v6001
        %v6003 = vpop.xlane.xlu0 %6002
        %v6004 = vsel %vm1315, %v5960, -inf
        %6005 = vmax.xlane.f32.xlu0 %v6004
        %v6006 = vpop.xlane.xlu0 %6005
        %v6007 = vsel %vm1315, %v5961, -inf
        %6008 = vmax.xlane.f32.xlu0 %v6007
        %v6009 = vpop.xlane.xlu0 %6008
        %v6010 = vsub.f32 %v5946, %v5964
        %v6011 = vsub.f32 %v5947, %v5967
        %v6012 = vsub.f32 %v5948, %v5970
        %v6013 = vsub.f32 %v5949, %v5973
        %v6014 = vsub.f32 %v5950, %v5976
        %v6015 = vsub.f32 %v5951, %v5979
        %v6016 = vsub.f32 %v5952, %v5982
        %v6017 = vsub.f32 %v5953, %v5985
        %v6018 = vsub.f32 %v5954, %v5988
        %v6019 = vsub.f32 %v5955, %v5991
        %v6020 = vsub.f32 %v5956, %v5994
        %v6021 = vsub.f32 %v5957, %v5997
        %v6022 = vsub.f32 %v5958, %v6000
        %v6023 = vsub.f32 %v5959, %v6003
        %v6024 = vsub.f32 %v5960, %v6006
        %v6025 = vsub.f32 %v5961, %v6009
        %v6026 = vmul.f32 %v6010, 1.442695
        %v6027 = vpow.pop %v6026
        %v6028 = vmul.f32 %v6011, 1.442695
        %v6029 = vpow.pop %v6028
        %v6030 = vmul.f32 %v6012, 1.442695
        %v6031 = vpow.pop %v6030
        %v6032 = vmul.f32 %v6013, 1.442695
        %v6033 = vpow.pop %v6032
        %v6034 = vmul.f32 %v6014, 1.442695
        %v6035 = vpow.pop %v6034
        %v6036 = vmul.f32 %v6015, 1.442695
        %v6037 = vpow.pop %v6036
        %v6038 = vmul.f32 %v6016, 1.442695
        %v6039 = vpow.pop %v6038
        %v6040 = vmul.f32 %v6017, 1.442695
        %v6041 = vpow.pop %v6040
        %v6042 = vmul.f32 %v6018, 1.442695
        %v6043 = vpow.pop %v6042
        %v6044 = vmul.f32 %v6019, 1.442695
        %v6045 = vpow.pop %v6044
        %v6046 = vmul.f32 %v6020, 1.442695
        %v6047 = vpow.pop %v6046
        %v6048 = vmul.f32 %v6021, 1.442695
        %v6049 = vpow.pop %v6048
        %v6050 = vmul.f32 %v6022, 1.442695
        %v6051 = vpow.pop %v6050
        %v6052 = vmul.f32 %v6023, 1.442695
        %v6053 = vpow.pop %v6052
        %v6054 = vmul.f32 %v6024, 1.442695
        %v6055 = vpow.pop %v6054
        %v6056 = vmul.f32 %v6025, 1.442695
        %v6057 = vpow.pop %v6056
        %v6058 = vsel %vm1315, %v6027, 0.0
        %6059 = vadd.xlane.f32.xlu0 %v6058
        %v6060 = vpop.xlane.xlu0 %6059
        %v6061 = vsel %vm1315, %v6029, 0.0
        %6062 = vadd.xlane.f32.xlu0 %v6061
        %v6063 = vpop.xlane.xlu0 %6062
        %v6064 = vsel %vm1315, %v6031, 0.0
        %6065 = vadd.xlane.f32.xlu0 %v6064
        %v6066 = vpop.xlane.xlu0 %6065
        %v6067 = vsel %vm1315, %v6033, 0.0
        %6068 = vadd.xlane.f32.xlu0 %v6067
        %v6069 = vpop.xlane.xlu0 %6068
        %v6070 = vsel %vm1315, %v6035, 0.0
        %6071 = vadd.xlane.f32.xlu0 %v6070
        %v6072 = vpop.xlane.xlu0 %6071
        %v6073 = vsel %vm1315, %v6037, 0.0
        %6074 = vadd.xlane.f32.xlu0 %v6073
        %v6075 = vpop.xlane.xlu0 %6074
        %v6076 = vsel %vm1315, %v6039, 0.0
        %6077 = vadd.xlane.f32.xlu0 %v6076
        %v6078 = vpop.xlane.xlu0 %6077
        %v6079 = vsel %vm1315, %v6041, 0.0
        %6080 = vadd.xlane.f32.xlu0 %v6079
        %v6081 = vpop.xlane.xlu0 %6080
        %v6082 = vsel %vm1315, %v6043, 0.0
        %6083 = vadd.xlane.f32.xlu0 %v6082
        %v6084 = vpop.xlane.xlu0 %6083
        %v6085 = vsel %vm1315, %v6045, 0.0
        %6086 = vadd.xlane.f32.xlu0 %v6085
        %v6087 = vpop.xlane.xlu0 %6086
        %v6088 = vsel %vm1315, %v6047, 0.0
        %6089 = vadd.xlane.f32.xlu0 %v6088
        %v6090 = vpop.xlane.xlu0 %6089
        %v6091 = vsel %vm1315, %v6049, 0.0
        %6092 = vadd.xlane.f32.xlu0 %v6091
        %v6093 = vpop.xlane.xlu0 %6092
        %v6094 = vsel %vm1315, %v6051, 0.0
        %6095 = vadd.xlane.f32.xlu0 %v6094
        %v6096 = vpop.xlane.xlu0 %6095
        %v6097 = vsel %vm1315, %v6053, 0.0
        %6098 = vadd.xlane.f32.xlu0 %v6097
        %v6099 = vpop.xlane.xlu0 %6098
        %v6100 = vsel %vm1315, %v6055, 0.0
        %6101 = vadd.xlane.f32.xlu0 %v6100
        %v6102 = vpop.xlane.xlu0 %6101
        %v6103 = vsel %vm1315, %v6057, 0.0
        %6104 = vadd.xlane.f32.xlu0 %v6103
        %v6105 = vpop.xlane.xlu0 %6104
        %v6106 = vrcp.pop %v6060
        %v6107 = vrcp.pop %v6063
        %v6108 = vrcp.pop %v6066
        %v6109 = vrcp.pop %v6069
        %v6110 = vrcp.pop %v6072
        %v6111 = vrcp.pop %v6075
        %v6112 = vrcp.pop %v6078
        %v6113 = vrcp.pop %v6081
        %v6114 = vrcp.pop %v6084
        %v6115 = vrcp.pop %v6087
        %v6116 = vrcp.pop %v6090
        %v6117 = vrcp.pop %v6093
        %v6118 = vrcp.pop %v6096
        %v6119 = vrcp.pop %v6099
        %v6120 = vrcp.pop %v6102
        %v6121 = vrcp.pop %v6105
        %v6122 = vmul.f32 %v6027, %v6106
        %v6123 = vmul.f32 %v6029, %v6107
        %v6124 = vmul.f32 %v6031, %v6108
        %v6125 = vmul.f32 %v6033, %v6109
        %v6126 = vmul.f32 %v6035, %v6110
        %v6127 = vmul.f32 %v6037, %v6111
        %v6128 = vmul.f32 %v6039, %v6112
        %v6129 = vmul.f32 %v6041, %v6113
        %v6130 = vmul.f32 %v6043, %v6114
        %v6131 = vmul.f32 %v6045, %v6115
        %v6132 = vmul.f32 %v6047, %v6116
        %v6133 = vmul.f32 %v6049, %v6117
        %v6134 = vmul.f32 %v6051, %v6118
        %v6135 = vmul.f32 %v6053, %v6119
        %v6136 = vmul.f32 %v6055, %v6120
        %v6137 = vmul.f32 %v6057, %v6121
        %v6138 = vpack.c.bf16 %v6123, %v6122
        %v6139 = vpack.c.bf16 %v6125, %v6124
        %v6140 = vpack.c.bf16 %v6127, %v6126
        %v6141 = vpack.c.bf16 %v6129, %v6128
        %v6142 = vpack.c.bf16 %v6131, %v6130
        %v6143 = vpack.c.bf16 %v6133, %v6132
        %v6144 = vpack.c.bf16 %v6135, %v6134
        %v6145 = vpack.c.bf16 %v6137, %v6136
        %v6147 = vsel %vm1315, %v6138, 0
        %v6150 = vsel %vm1315, %v6139, 0
        %6152 = vmatprep.subr.bf16.mxu0 0
        %6153 = vmatpush1.bf16.msra.mxu0 0
        %6154 = vmatprep.subr.bf16.mxu0 0
        %6155 = vmatpush1.bf16.msra.mxu0 0
        %6156 = vmatprep.subr.bf16.mxu0 0
        %6157 = vmatpush1.bf16.msra.mxu0 0
        %6158 = vmatprep.subr.bf16.mxu0 0
        %6159 = vmatpush1.bf16.msra.mxu0 0
        %6160 = vmatprep.subr.bf16.mxu0 0
        %6161 = vmatpush1.bf16.msra.mxu0 0
        %6162 = vmatprep.subr.bf16.mxu0 0
        %6163 = vmatpush1.bf16.msra.mxu0 0
        %6164 = vmatprep.subr.bf16.mxu0 0
        %6165 = vmatpush1.bf16.msra.mxu0 %v5655
        %6166 = vmatprep.subr.bf16.mxu0 0
        %6167 = vmatpush1.bf16.msra.mxu0 %v5654
        %6168 = vmatprep.subr.bf16.mxu0 0
        %6169 = vmatpush2.bf16.msra.mxu0 0
        %6170 = vmatprep.subr.bf16.mxu0 0
        %6171 = vmatpush2.bf16.msra.mxu0 0
        %6172 = vmatprep.subr.bf16.mxu0 0
        %6173 = vmatpush2.bf16.msra.mxu0 0
        %6174 = vmatprep.subr.bf16.mxu0 0
        %6175 = vmatpush2.bf16.msra.mxu0 0
        %6176 = vmatprep.subr.bf16.mxu0 0
        %6177 = vmatpush2.bf16.msra.mxu0 0
        %6178 = vmatprep.subr.bf16.mxu0 0
        %6179 = vmatpush2.bf16.msra.mxu0 0
        %6180 = vmatprep.subr.bf16.mxu0 0
        %6181 = vmatpush2.bf16.msra.mxu0 0
        %6182 = vmatprep.subr.bf16.mxu0 0
        %6183 = vmatpush2.bf16.msra.mxu0 0
        %6184 = vmatprep.mubr.bf16.mxu0 0
        %6185 = vmatmul.mubr.bf16.gmra.mxu0 %v6147
        %v6186 = vpop.f32.mrf.mxu0
        %v6187 = vadd.f32 0.0, %v6186
        %v6188 = vpop.f32.mrf.mxu0
        %v6189 = vpop.f32.mrf.mxu0
        %v6190 = vadd.f32 0.0, %v6189
        %v6191 = vpop.f32.mrf.mxu0
        %6192 = vmatprep.mubr.bf16.mxu0 0
        %6193 = vmatmul.mubr.bf16.gmra.mxu0 %v6150
        %v6194 = vpop.f32.mrf.mxu0
        %v6195 = vadd.f32 0.0, %v6194
        %v6196 = vpop.f32.mrf.mxu0
        %v6197 = vpop.f32.mrf.mxu0
        %v6198 = vadd.f32 0.0, %v6197
        %v6199 = vpop.f32.mrf.mxu0
        %6200 = vdwg.mxu0
        %6203 = vrot.lane.b32.xlu0 %v5654, 112
        %v6204 = vpop.permute.xlu0 %6203
        %6205 = vrot.lane.b32.xlu0 %v5655, 112
        %v6206 = vpop.permute.xlu0 %6205
        %v6210 = vsel %vm1315, %v6140, 0
        %v6213 = vsel %vm1315, %v6141, 0
        %6215 = vmatprep.subr.bf16.mxu0 0
        %6216 = vmatpush1.bf16.msra.mxu0 0
        %6217 = vmatprep.subr.bf16.mxu0 0
        %6218 = vmatpush1.bf16.msra.mxu0 0
        %6219 = vmatprep.subr.bf16.mxu0 0
        %6220 = vmatpush1.bf16.msra.mxu0 0
        %6221 = vmatprep.subr.bf16.mxu0 0
        %6222 = vmatpush1.bf16.msra.mxu0 0
        %6223 = vmatprep.subr.bf16.mxu0 0
        %6224 = vmatpush1.bf16.msra.mxu0 0
        %6225 = vmatprep.subr.bf16.mxu0 0
        %6226 = vmatpush1.bf16.msra.mxu0 0
        %6227 = vmatprep.subr.bf16.mxu0 0
        %6228 = vmatpush1.bf16.msra.mxu0 %v6206
        %6229 = vmatprep.subr.bf16.mxu0 0
        %6230 = vmatpush1.bf16.msra.mxu0 %v6204
        %6231 = vmatprep.subr.bf16.mxu0 0
        %6232 = vmatpush2.bf16.msra.mxu0 0
        %6233 = vmatprep.subr.bf16.mxu0 0
        %6234 = vmatpush2.bf16.msra.mxu0 0
        %6235 = vmatprep.subr.bf16.mxu0 0
        %6236 = vmatpush2.bf16.msra.mxu0 0
        %6237 = vmatprep.subr.bf16.mxu0 0
        %6238 = vmatpush2.bf16.msra.mxu0 0
        %6239 = vmatprep.subr.bf16.mxu0 0
        %6240 = vmatpush2.bf16.msra.mxu0 0
        %6241 = vmatprep.subr.bf16.mxu0 0
        %6242 = vmatpush2.bf16.msra.mxu0 0
        %6243 = vmatprep.subr.bf16.mxu0 0
        %6244 = vmatpush2.bf16.msra.mxu0 0
        %6245 = vmatprep.subr.bf16.mxu0 0
        %6246 = vmatpush2.bf16.msra.mxu0 0
        %6247 = vmatprep.mubr.bf16.mxu0 0
        %6248 = vmatmul.mubr.bf16.gmra.mxu0 %v6210
        %v6249 = vpop.f32.mrf.mxu0
        %v6250 = vadd.f32 0.0, %v6249
        %v6251 = vpop.f32.mrf.mxu0
        %v6252 = vpop.f32.mrf.mxu0
        %v6253 = vadd.f32 0.0, %v6252
        %v6254 = vpop.f32.mrf.mxu0
        %6255 = vmatprep.mubr.bf16.mxu0 0
        %6256 = vmatmul.mubr.bf16.gmra.mxu0 %v6213
        %v6257 = vpop.f32.mrf.mxu0
        %v6258 = vadd.f32 0.0, %v6257
        %v6259 = vpop.f32.mrf.mxu0
        %v6260 = vpop.f32.mrf.mxu0
        %v6261 = vadd.f32 0.0, %v6260
        %v6262 = vpop.f32.mrf.mxu0
        %6263 = vdwg.mxu0
        %6264 = vrot.lane.b32.xlu0 %v5654, 96
        %v6265 = vpop.permute.xlu0 %6264
        %6266 = vrot.lane.b32.xlu0 %v5655, 96
        %v6267 = vpop.permute.xlu0 %6266
        %v6271 = vsel %vm1315, %v6142, 0
        %v6274 = vsel %vm1315, %v6143, 0
        %6276 = vmatprep.subr.bf16.mxu0 0
        %6277 = vmatpush1.bf16.msra.mxu0 0
        %6278 = vmatprep.subr.bf16.mxu0 0
        %6279 = vmatpush1.bf16.msra.mxu0 0
        %6280 = vmatprep.subr.bf16.mxu0 0
        %6281 = vmatpush1.bf16.msra.mxu0 0
        %6282 = vmatprep.subr.bf16.mxu0 0
        %6283 = vmatpush1.bf16.msra.mxu0 0
        %6284 = vmatprep.subr.bf16.mxu0 0
        %6285 = vmatpush1.bf16.msra.mxu0 0
        %6286 = vmatprep.subr.bf16.mxu0 0
        %6287 = vmatpush1.bf16.msra.mxu0 0
        %6288 = vmatprep.subr.bf16.mxu0 0
        %6289 = vmatpush1.bf16.msra.mxu0 %v6267
        %6290 = vmatprep.subr.bf16.mxu0 0
        %6291 = vmatpush1.bf16.msra.mxu0 %v6265
        %6292 = vmatprep.subr.bf16.mxu0 0
        %6293 = vmatpush2.bf16.msra.mxu0 0
        %6294 = vmatprep.subr.bf16.mxu0 0
        %6295 = vmatpush2.bf16.msra.mxu0 0
        %6296 = vmatprep.subr.bf16.mxu0 0
        %6297 = vmatpush2.bf16.msra.mxu0 0
        %6298 = vmatprep.subr.bf16.mxu0 0
        %6299 = vmatpush2.bf16.msra.mxu0 0
        %6300 = vmatprep.subr.bf16.mxu0 0
        %6301 = vmatpush2.bf16.msra.mxu0 0
        %6302 = vmatprep.subr.bf16.mxu0 0
        %6303 = vmatpush2.bf16.msra.mxu0 0
        %6304 = vmatprep.subr.bf16.mxu0 0
        %6305 = vmatpush2.bf16.msra.mxu0 0
        %6306 = vmatprep.subr.bf16.mxu0 0
        %6307 = vmatpush2.bf16.msra.mxu0 0
        %6308 = vmatprep.mubr.bf16.mxu0 0
        %6309 = vmatmul.mubr.bf16.gmra.mxu0 %v6271
        %v6310 = vpop.f32.mrf.mxu0
        %v6311 = vadd.f32 0.0, %v6310
        %v6312 = vpop.f32.mrf.mxu0
        %v6313 = vpop.f32.mrf.mxu0
        %v6314 = vadd.f32 0.0, %v6313
        %v6315 = vpop.f32.mrf.mxu0
        %6316 = vmatprep.mubr.bf16.mxu0 0
        %6317 = vmatmul.mubr.bf16.gmra.mxu0 %v6274
        %v6318 = vpop.f32.mrf.mxu0
        %v6319 = vadd.f32 0.0, %v6318
        %v6320 = vpop.f32.mrf.mxu0
        %v6321 = vpop.f32.mrf.mxu0
        %v6322 = vadd.f32 0.0, %v6321
        %v6323 = vpop.f32.mrf.mxu0
        %6324 = vdwg.mxu0
        %6325 = vrot.lane.b32.xlu0 %v5654, 80
        %v6326 = vpop.permute.xlu0 %6325
        %6327 = vrot.lane.b32.xlu0 %v5655, 80
        %v6328 = vpop.permute.xlu0 %6327
        %v6332 = vsel %vm1315, %v6144, 0
        %v6335 = vsel %vm1315, %v6145, 0
        %6337 = vmatprep.subr.bf16.mxu0 0
        %6338 = vmatpush1.bf16.msra.mxu0 0
        %6339 = vmatprep.subr.bf16.mxu0 0
        %6340 = vmatpush1.bf16.msra.mxu0 0
        %6341 = vmatprep.subr.bf16.mxu0 0
        %6342 = vmatpush1.bf16.msra.mxu0 0
        %6343 = vmatprep.subr.bf16.mxu0 0
        %6344 = vmatpush1.bf16.msra.mxu0 0
        %6345 = vmatprep.subr.bf16.mxu0 0
        %6346 = vmatpush1.bf16.msra.mxu0 0
        %6347 = vmatprep.subr.bf16.mxu0 0
        %6348 = vmatpush1.bf16.msra.mxu0 0
        %6349 = vmatprep.subr.bf16.mxu0 0
        %6350 = vmatpush1.bf16.msra.mxu0 %v6328
        %6351 = vmatprep.subr.bf16.mxu0 0
        %6352 = vmatpush1.bf16.msra.mxu0 %v6326
        %6353 = vmatprep.subr.bf16.mxu0 0
        %6354 = vmatpush2.bf16.msra.mxu0 0
        %6355 = vmatprep.subr.bf16.mxu0 0
        %6356 = vmatpush2.bf16.msra.mxu0 0
        %6357 = vmatprep.subr.bf16.mxu0 0
        %6358 = vmatpush2.bf16.msra.mxu0 0
        %6359 = vmatprep.subr.bf16.mxu0 0
        %6360 = vmatpush2.bf16.msra.mxu0 0
        %6361 = vmatprep.subr.bf16.mxu0 0
        %6362 = vmatpush2.bf16.msra.mxu0 0
        %6363 = vmatprep.subr.bf16.mxu0 0
        %6364 = vmatpush2.bf16.msra.mxu0 0
        %6365 = vmatprep.subr.bf16.mxu0 0
        %6366 = vmatpush2.bf16.msra.mxu0 0
        %6367 = vmatprep.subr.bf16.mxu0 0
        %6368 = vmatpush2.bf16.msra.mxu0 0
        %6369 = vmatprep.mubr.bf16.mxu0 0
        %6370 = vmatmul.mubr.bf16.gmra.mxu0 %v6332
        %v6371 = vpop.f32.mrf.mxu0
        %v6372 = vadd.f32 0.0, %v6371
        %v6373 = vpop.f32.mrf.mxu0
        %v6374 = vpop.f32.mrf.mxu0
        %v6375 = vadd.f32 0.0, %v6374
        %v6376 = vpop.f32.mrf.mxu0
        %6377 = vmatprep.mubr.bf16.mxu0 0
        %6378 = vmatmul.mubr.bf16.gmra.mxu0 %v6335
        %v6379 = vpop.f32.mrf.mxu0
        %v6380 = vadd.f32 0.0, %v6379
        %v6381 = vpop.f32.mrf.mxu0
        %v6382 = vpop.f32.mrf.mxu0
        %v6383 = vadd.f32 0.0, %v6382
        %v6384 = vpop.f32.mrf.mxu0
        %6385 = vdwg.mxu0
        %6390 = vrot.lane.b32.xlu0 %v6250, 16
        %v6391 = vpop.permute.xlu0 %6390
        %6392 = vrot.lane.b32.xlu0 %v6253, 16
        %v6393 = vpop.permute.xlu0 %6392
        %6394 = vrot.lane.b32.xlu0 %v6258, 16
        %v6395 = vpop.permute.xlu0 %6394
        %6396 = vrot.lane.b32.xlu0 %v6261, 16
        %v6397 = vpop.permute.xlu0 %6396
        %6406 = vrot.lane.b32.xlu0 %v6311, 32
        %v6407 = vpop.permute.xlu0 %6406
        %6408 = vrot.lane.b32.xlu0 %v6314, 32
        %v6409 = vpop.permute.xlu0 %6408
        %6410 = vrot.lane.b32.xlu0 %v6319, 32
        %v6411 = vpop.permute.xlu0 %6410
        %6412 = vrot.lane.b32.xlu0 %v6322, 32
        %v6413 = vpop.permute.xlu0 %6412
        %6422 = vrot.lane.b32.xlu0 %v6372, 48
        %v6423 = vpop.permute.xlu0 %6422
        %6424 = vrot.lane.b32.xlu0 %v6375, 48
        %v6425 = vpop.permute.xlu0 %6424
        %6426 = vrot.lane.b32.xlu0 %v6380, 48
        %v6427 = vpop.permute.xlu0 %6426
        %6428 = vrot.lane.b32.xlu0 %v6383, 48
        %v6429 = vpop.permute.xlu0 %6428
        %v6434 = vsel %vm1014, %v6187, %v6391
        %v6435 = vsel %vm1014, %v6190, %v6393
        %v6436 = vsel %vm1014, %v6195, %v6395
        %v6437 = vsel %vm1014, %v6198, %v6397
        %v6438 = vsel %vm1315, %v6434, %v6407
        %v6439 = vsel %vm1315, %v6435, %v6409
        %v6440 = vsel %vm1315, %v6436, %v6411
        %v6441 = vsel %vm1315, %v6437, %v6413
        %v6442 = vsel %vm1796, %v6438, %v6423
        %v6443 = vsel %vm1796, %v6439, %v6425
        %v6444 = vsel %vm1796, %v6440, %v6427
        %v6445 = vsel %vm1796, %v6441, %v6429
        %v6446 = vpack.c.bf16 %v5598, %v5594
        %v6447 = vpack.c.bf16 %v5608, %v5604
        %v6448 = vpack.c.bf16 %v5600, %v5596
        %v6449 = vpack.c.bf16 %v5610, %v5606
        %6452 = vrot.lane.b32.xlu0 %v6446, 64
        %v6453 = vpop.permute.xlu0 %6452
        %6454 = vrot.lane.b32.xlu0 %v6447, 64
        %v6455 = vpop.permute.xlu0 %6454
        %v6457 = vsel %vm1014, %v6446, 0
        %v6460 = vsel %vm1014, %v6447, 0
        %v6463 = vsel %vm1014, %v6453, 0
        %v6466 = vsel %vm1014, %v6455, 0
        %6468 = vmatprep.subr.bf16.mxu0 0
        %6469 = vmatpush1.bf16.xpose.msra.mxu0 0
        %6470 = vmatprep.subr.bf16.mxu0 0
        %6471 = vmatpush1.bf16.xpose.msra.mxu0 0
        %6472 = vmatprep.subr.bf16.mxu0 0
        %6473 = vmatpush1.bf16.xpose.msra.mxu0 0
        %6474 = vmatprep.subr.bf16.mxu0 0
        %6475 = vmatpush1.bf16.xpose.msra.mxu0 0
        %6476 = vmatprep.subr.bf16.mxu0 0
        %6477 = vmatpush1.bf16.xpose.msra.mxu0 0
        %6478 = vmatprep.subr.bf16.mxu0 0
        %6479 = vmatpush1.bf16.xpose.msra.mxu0 0
        %6480 = vmatprep.subr.bf16.mxu0 0
        %6481 = vmatpush1.bf16.xpose.msra.mxu0 %v6466
        %6482 = vmatprep.subr.bf16.mxu0 0
        %6483 = vmatpush1.bf16.xpose.msra.mxu0 %v6463
        %6484 = vmatprep.subr.bf16.mxu0 0
        %6485 = vmatpush2.bf16.xpose.msra.mxu0 0
        %6486 = vmatprep.subr.bf16.mxu0 0
        %6487 = vmatpush2.bf16.xpose.msra.mxu0 0
        %6488 = vmatprep.subr.bf16.mxu0 0
        %6489 = vmatpush2.bf16.xpose.msra.mxu0 0
        %6490 = vmatprep.subr.bf16.mxu0 0
        %6491 = vmatpush2.bf16.xpose.msra.mxu0 0
        %6492 = vmatprep.subr.bf16.mxu0 0
        %6493 = vmatpush2.bf16.xpose.msra.mxu0 0
        %6494 = vmatprep.subr.bf16.mxu0 0
        %6495 = vmatpush2.bf16.xpose.msra.mxu0 0
        %6496 = vmatprep.subr.bf16.mxu0 0
        %6497 = vmatpush2.bf16.xpose.msra.mxu0 0
        %6498 = vmatprep.subr.bf16.mxu0 0
        %6499 = vmatpush2.bf16.xpose.msra.mxu0 0
        %6500 = vmatprep.mubr.bf16.mxu0 0
        %6501 = vmatmul.mubr.bf16.gmra.mxu0 %v6457
        %v6502 = vpop.f32.mrf.mxu0
        %v6503 = vadd.f32 0.0, %v6502
        %v6504 = vpop.f32.mrf.mxu0
        %v6505 = vpop.f32.mrf.mxu0
        %v6506 = vadd.f32 0.0, %v6505
        %v6507 = vpop.f32.mrf.mxu0
        %6508 = vmatprep.mubr.bf16.mxu0 0
        %6509 = vmatmul.mubr.bf16.gmra.mxu0 %v6460
        %v6510 = vpop.f32.mrf.mxu0
        %v6511 = vadd.f32 0.0, %v6510
        %v6512 = vpop.f32.mrf.mxu0
        %v6513 = vpop.f32.mrf.mxu0
        %v6514 = vadd.f32 0.0, %v6513
        %v6515 = vpop.f32.mrf.mxu0
        %6516 = vdwg.mxu0
        %6517 = vrot.lane.b32.xlu0 %v6446, 112
        %v6518 = vpop.permute.xlu0 %6517
        %6519 = vrot.lane.b32.xlu0 %v6447, 112
        %v6520 = vpop.permute.xlu0 %6519
        %6521 = vrot.lane.b32.xlu0 %v6446, 48
        %v6522 = vpop.permute.xlu0 %6521
        %6523 = vrot.lane.b32.xlu0 %v6447, 48
        %v6524 = vpop.permute.xlu0 %6523
        %v6526 = vsel %vm1014, %v6518, 0
        %v6529 = vsel %vm1014, %v6520, 0
        %v6532 = vsel %vm1014, %v6522, 0
        %v6535 = vsel %vm1014, %v6524, 0
        %6537 = vmatprep.subr.bf16.mxu0 0
        %6538 = vmatpush1.bf16.xpose.msra.mxu0 0
        %6539 = vmatprep.subr.bf16.mxu0 0
        %6540 = vmatpush1.bf16.xpose.msra.mxu0 0
        %6541 = vmatprep.subr.bf16.mxu0 0
        %6542 = vmatpush1.bf16.xpose.msra.mxu0 0
        %6543 = vmatprep.subr.bf16.mxu0 0
        %6544 = vmatpush1.bf16.xpose.msra.mxu0 0
        %6545 = vmatprep.subr.bf16.mxu0 0
        %6546 = vmatpush1.bf16.xpose.msra.mxu0 0
        %6547 = vmatprep.subr.bf16.mxu0 0
        %6548 = vmatpush1.bf16.xpose.msra.mxu0 0
        %6549 = vmatprep.subr.bf16.mxu0 0
        %6550 = vmatpush1.bf16.xpose.msra.mxu0 %v6535
        %6551 = vmatprep.subr.bf16.mxu0 0
        %6552 = vmatpush1.bf16.xpose.msra.mxu0 %v6532
        %6553 = vmatprep.subr.bf16.mxu0 0
        %6554 = vmatpush2.bf16.xpose.msra.mxu0 0
        %6555 = vmatprep.subr.bf16.mxu0 0
        %6556 = vmatpush2.bf16.xpose.msra.mxu0 0
        %6557 = vmatprep.subr.bf16.mxu0 0
        %6558 = vmatpush2.bf16.xpose.msra.mxu0 0
        %6559 = vmatprep.subr.bf16.mxu0 0
        %6560 = vmatpush2.bf16.xpose.msra.mxu0 0
        %6561 = vmatprep.subr.bf16.mxu0 0
        %6562 = vmatpush2.bf16.xpose.msra.mxu0 0
        %6563 = vmatprep.subr.bf16.mxu0 0
        %6564 = vmatpush2.bf16.xpose.msra.mxu0 0
        %6565 = vmatprep.subr.bf16.mxu0 0
        %6566 = vmatpush2.bf16.xpose.msra.mxu0 0
        %6567 = vmatprep.subr.bf16.mxu0 0
        %6568 = vmatpush2.bf16.xpose.msra.mxu0 0
        %6569 = vmatprep.mubr.bf16.mxu0 0
        %6570 = vmatmul.mubr.bf16.gmra.mxu0 %v6526
        %v6571 = vpop.f32.mrf.mxu0
        %v6572 = vadd.f32 0.0, %v6571
        %v6573 = vpop.f32.mrf.mxu0
        %v6574 = vpop.f32.mrf.mxu0
        %v6575 = vadd.f32 0.0, %v6574
        %v6576 = vpop.f32.mrf.mxu0
        %6577 = vmatprep.mubr.bf16.mxu0 0
        %6578 = vmatmul.mubr.bf16.gmra.mxu0 %v6529
        %v6579 = vpop.f32.mrf.mxu0
        %v6580 = vadd.f32 0.0, %v6579
        %v6581 = vpop.f32.mrf.mxu0
        %v6582 = vpop.f32.mrf.mxu0
        %v6583 = vadd.f32 0.0, %v6582
        %v6584 = vpop.f32.mrf.mxu0
        %6585 = vdwg.mxu0
        %6586 = vrot.lane.b32.xlu0 %v6446, 96
        %v6587 = vpop.permute.xlu0 %6586
        %6588 = vrot.lane.b32.xlu0 %v6447, 96
        %v6589 = vpop.permute.xlu0 %6588
        %6590 = vrot.lane.b32.xlu0 %v6446, 32
        %v6591 = vpop.permute.xlu0 %6590
        %6592 = vrot.lane.b32.xlu0 %v6447, 32
        %v6593 = vpop.permute.xlu0 %6592
        %v6595 = vsel %vm1014, %v6587, 0
        %v6598 = vsel %vm1014, %v6589, 0
        %v6601 = vsel %vm1014, %v6591, 0
        %v6604 = vsel %vm1014, %v6593, 0
        %6606 = vmatprep.subr.bf16.mxu0 0
        %6607 = vmatpush1.bf16.xpose.msra.mxu0 0
        %6608 = vmatprep.subr.bf16.mxu0 0
        %6609 = vmatpush1.bf16.xpose.msra.mxu0 0
        %6610 = vmatprep.subr.bf16.mxu0 0
        %6611 = vmatpush1.bf16.xpose.msra.mxu0 0
        %6612 = vmatprep.subr.bf16.mxu0 0
        %6613 = vmatpush1.bf16.xpose.msra.mxu0 0
        %6614 = vmatprep.subr.bf16.mxu0 0
        %6615 = vmatpush1.bf16.xpose.msra.mxu0 0
        %6616 = vmatprep.subr.bf16.mxu0 0
        %6617 = vmatpush1.bf16.xpose.msra.mxu0 0
        %6618 = vmatprep.subr.bf16.mxu0 0
        %6619 = vmatpush1.bf16.xpose.msra.mxu0 %v6604
        %6620 = vmatprep.subr.bf16.mxu0 0
        %6621 = vmatpush1.bf16.xpose.msra.mxu0 %v6601
        %6622 = vmatprep.subr.bf16.mxu0 0
        %6623 = vmatpush2.bf16.xpose.msra.mxu0 0
        %6624 = vmatprep.subr.bf16.mxu0 0
        %6625 = vmatpush2.bf16.xpose.msra.mxu0 0
        %6626 = vmatprep.subr.bf16.mxu0 0
        %6627 = vmatpush2.bf16.xpose.msra.mxu0 0
        %6628 = vmatprep.subr.bf16.mxu0 0
        %6629 = vmatpush2.bf16.xpose.msra.mxu0 0
        %6630 = vmatprep.subr.bf16.mxu0 0
        %6631 = vmatpush2.bf16.xpose.msra.mxu0 0
        %6632 = vmatprep.subr.bf16.mxu0 0
        %6633 = vmatpush2.bf16.xpose.msra.mxu0 0
        %6634 = vmatprep.subr.bf16.mxu0 0
        %6635 = vmatpush2.bf16.xpose.msra.mxu0 0
        %6636 = vmatprep.subr.bf16.mxu0 0
        %6637 = vmatpush2.bf16.xpose.msra.mxu0 0
        %6638 = vmatprep.mubr.bf16.mxu0 0
        %6639 = vmatmul.mubr.bf16.gmra.mxu0 %v6595
        %v6640 = vpop.f32.mrf.mxu0
        %v6641 = vadd.f32 0.0, %v6640
        %v6642 = vpop.f32.mrf.mxu0
        %v6643 = vpop.f32.mrf.mxu0
        %v6644 = vadd.f32 0.0, %v6643
        %v6645 = vpop.f32.mrf.mxu0
        %6646 = vmatprep.mubr.bf16.mxu0 0
        %6647 = vmatmul.mubr.bf16.gmra.mxu0 %v6598
        %v6648 = vpop.f32.mrf.mxu0
        %v6649 = vadd.f32 0.0, %v6648
        %v6650 = vpop.f32.mrf.mxu0
        %v6651 = vpop.f32.mrf.mxu0
        %v6652 = vadd.f32 0.0, %v6651
        %v6653 = vpop.f32.mrf.mxu0
        %6654 = vdwg.mxu0
        %6655 = vrot.lane.b32.xlu0 %v6446, 80
        %v6656 = vpop.permute.xlu0 %6655
        %6657 = vrot.lane.b32.xlu0 %v6447, 80
        %v6658 = vpop.permute.xlu0 %6657
        %6659 = vrot.lane.b32.xlu0 %v6446, 16
        %v6660 = vpop.permute.xlu0 %6659
        %6661 = vrot.lane.b32.xlu0 %v6447, 16
        %v6662 = vpop.permute.xlu0 %6661
        %v6664 = vsel %vm1014, %v6656, 0
        %v6667 = vsel %vm1014, %v6658, 0
        %v6670 = vsel %vm1014, %v6660, 0
        %v6673 = vsel %vm1014, %v6662, 0
        %6675 = vmatprep.subr.bf16.mxu0 0
        %6676 = vmatpush1.bf16.xpose.msra.mxu0 0
        %6677 = vmatprep.subr.bf16.mxu0 0
        %6678 = vmatpush1.bf16.xpose.msra.mxu0 0
        %6679 = vmatprep.subr.bf16.mxu0 0
        %6680 = vmatpush1.bf16.xpose.msra.mxu0 0
        %6681 = vmatprep.subr.bf16.mxu0 0
        %6682 = vmatpush1.bf16.xpose.msra.mxu0 0
        %6683 = vmatprep.subr.bf16.mxu0 0
        %6684 = vmatpush1.bf16.xpose.msra.mxu0 0
        %6685 = vmatprep.subr.bf16.mxu0 0
        %6686 = vmatpush1.bf16.xpose.msra.mxu0 0
        %6687 = vmatprep.subr.bf16.mxu0 0
        %6688 = vmatpush1.bf16.xpose.msra.mxu0 %v6673
        %6689 = vmatprep.subr.bf16.mxu0 0
        %6690 = vmatpush1.bf16.xpose.msra.mxu0 %v6670
        %6691 = vmatprep.subr.bf16.mxu0 0
        %6692 = vmatpush2.bf16.xpose.msra.mxu0 0
        %6693 = vmatprep.subr.bf16.mxu0 0
        %6694 = vmatpush2.bf16.xpose.msra.mxu0 0
        %6695 = vmatprep.subr.bf16.mxu0 0
        %6696 = vmatpush2.bf16.xpose.msra.mxu0 0
        %6697 = vmatprep.subr.bf16.mxu0 0
        %6698 = vmatpush2.bf16.xpose.msra.mxu0 0
        %6699 = vmatprep.subr.bf16.mxu0 0
        %6700 = vmatpush2.bf16.xpose.msra.mxu0 0
        %6701 = vmatprep.subr.bf16.mxu0 0
        %6702 = vmatpush2.bf16.xpose.msra.mxu0 0
        %6703 = vmatprep.subr.bf16.mxu0 0
        %6704 = vmatpush2.bf16.xpose.msra.mxu0 0
        %6705 = vmatprep.subr.bf16.mxu0 0
        %6706 = vmatpush2.bf16.xpose.msra.mxu0 0
        %6707 = vmatprep.mubr.bf16.mxu0 0
        %6708 = vmatmul.mubr.bf16.gmra.mxu0 %v6664
        %v6709 = vpop.f32.mrf.mxu0
        %v6710 = vadd.f32 0.0, %v6709
        %v6711 = vpop.f32.mrf.mxu0
        %v6712 = vpop.f32.mrf.mxu0
        %v6713 = vadd.f32 0.0, %v6712
        %v6714 = vpop.f32.mrf.mxu0
        %6715 = vmatprep.mubr.bf16.mxu0 0
        %6716 = vmatmul.mubr.bf16.gmra.mxu0 %v6667
        %v6717 = vpop.f32.mrf.mxu0
        %v6718 = vadd.f32 0.0, %v6717
        %v6719 = vpop.f32.mrf.mxu0
        %v6720 = vpop.f32.mrf.mxu0
        %v6721 = vadd.f32 0.0, %v6720
        %v6722 = vpop.f32.mrf.mxu0
        %6723 = vdwg.mxu0
        %v6724 = vmul.f32 %v6503, 0.25
        %v6725 = vmul.f32 %v6506, 0.25
        %v6726 = vmul.f32 %v6511, 0.25
        %v6727 = vmul.f32 %v6514, 0.25
        %v6728 = vmul.f32 %v6572, 0.25
        %v6729 = vmul.f32 %v6575, 0.25
        %v6730 = vmul.f32 %v6580, 0.25
        %v6731 = vmul.f32 %v6583, 0.25
        %v6732 = vmul.f32 %v6641, 0.25
        %v6733 = vmul.f32 %v6644, 0.25
        %v6734 = vmul.f32 %v6649, 0.25
        %v6735 = vmul.f32 %v6652, 0.25
        %v6736 = vmul.f32 %v6710, 0.25
        %v6737 = vmul.f32 %v6713, 0.25
        %v6738 = vmul.f32 %v6718, 0.25
        %v6739 = vmul.f32 %v6721, 0.25
        %v6740 = vadd.f32 %v6724, %v551
        %v6741 = vadd.f32 %v6725, %v552
        %v6742 = vadd.f32 %v6726, %v553
        %v6743 = vadd.f32 %v6727, %v554
        %v6744 = vadd.f32 %v6728, %v551
        %v6745 = vadd.f32 %v6729, %v552
        %v6746 = vadd.f32 %v6730, %v553
        %v6747 = vadd.f32 %v6731, %v554
        %v6748 = vadd.f32 %v6732, %v551
        %v6749 = vadd.f32 %v6733, %v552
        %v6750 = vadd.f32 %v6734, %v553
        %v6751 = vadd.f32 %v6735, %v554
        %v6752 = vadd.f32 %v6736, %v551
        %v6753 = vadd.f32 %v6737, %v552
        %v6754 = vadd.f32 %v6738, %v553
        %v6755 = vadd.f32 %v6739, %v554
        %v6756 = vsel %vm1315, %v6740, -inf
        %6757 = vmax.xlane.f32.xlu0 %v6756
        %v6758 = vpop.xlane.xlu0 %6757
        %v6759 = vsel %vm1315, %v6741, -inf
        %6760 = vmax.xlane.f32.xlu0 %v6759
        %v6761 = vpop.xlane.xlu0 %6760
        %v6762 = vsel %vm1315, %v6742, -inf
        %6763 = vmax.xlane.f32.xlu0 %v6762
        %v6764 = vpop.xlane.xlu0 %6763
        %v6765 = vsel %vm1315, %v6743, -inf
        %6766 = vmax.xlane.f32.xlu0 %v6765
        %v6767 = vpop.xlane.xlu0 %6766
        %v6768 = vsel %vm1315, %v6744, -inf
        %6769 = vmax.xlane.f32.xlu0 %v6768
        %v6770 = vpop.xlane.xlu0 %6769
        %v6771 = vsel %vm1315, %v6745, -inf
        %6772 = vmax.xlane.f32.xlu0 %v6771
        %v6773 = vpop.xlane.xlu0 %6772
        %v6774 = vsel %vm1315, %v6746, -inf
        %6775 = vmax.xlane.f32.xlu0 %v6774
        %v6776 = vpop.xlane.xlu0 %6775
        %v6777 = vsel %vm1315, %v6747, -inf
        %6778 = vmax.xlane.f32.xlu0 %v6777
        %v6779 = vpop.xlane.xlu0 %6778
        %v6780 = vsel %vm1315, %v6748, -inf
        %6781 = vmax.xlane.f32.xlu0 %v6780
        %v6782 = vpop.xlane.xlu0 %6781
        %v6783 = vsel %vm1315, %v6749, -inf
        %6784 = vmax.xlane.f32.xlu0 %v6783
        %v6785 = vpop.xlane.xlu0 %6784
        %v6786 = vsel %vm1315, %v6750, -inf
        %6787 = vmax.xlane.f32.xlu0 %v6786
        %v6788 = vpop.xlane.xlu0 %6787
        %v6789 = vsel %vm1315, %v6751, -inf
        %6790 = vmax.xlane.f32.xlu0 %v6789
        %v6791 = vpop.xlane.xlu0 %6790
        %v6792 = vsel %vm1315, %v6752, -inf
        %6793 = vmax.xlane.f32.xlu0 %v6792
        %v6794 = vpop.xlane.xlu0 %6793
        %v6795 = vsel %vm1315, %v6753, -inf
        %6796 = vmax.xlane.f32.xlu0 %v6795
        %v6797 = vpop.xlane.xlu0 %6796
        %v6798 = vsel %vm1315, %v6754, -inf
        %6799 = vmax.xlane.f32.xlu0 %v6798
        %v6800 = vpop.xlane.xlu0 %6799
        %v6801 = vsel %vm1315, %v6755, -inf
        %6802 = vmax.xlane.f32.xlu0 %v6801
        %v6803 = vpop.xlane.xlu0 %6802
        %v6804 = vsub.f32 %v6740, %v6758
        %v6805 = vsub.f32 %v6741, %v6761
        %v6806 = vsub.f32 %v6742, %v6764
        %v6807 = vsub.f32 %v6743, %v6767
        %v6808 = vsub.f32 %v6744, %v6770
        %v6809 = vsub.f32 %v6745, %v6773
        %v6810 = vsub.f32 %v6746, %v6776
        %v6811 = vsub.f32 %v6747, %v6779
        %v6812 = vsub.f32 %v6748, %v6782
        %v6813 = vsub.f32 %v6749, %v6785
        %v6814 = vsub.f32 %v6750, %v6788
        %v6815 = vsub.f32 %v6751, %v6791
        %v6816 = vsub.f32 %v6752, %v6794
        %v6817 = vsub.f32 %v6753, %v6797
        %v6818 = vsub.f32 %v6754, %v6800
        %v6819 = vsub.f32 %v6755, %v6803
        %v6820 = vmul.f32 %v6804, 1.442695
        %v6821 = vpow.pop %v6820
        %v6822 = vmul.f32 %v6805, 1.442695
        %v6823 = vpow.pop %v6822
        %v6824 = vmul.f32 %v6806, 1.442695
        %v6825 = vpow.pop %v6824
        %v6826 = vmul.f32 %v6807, 1.442695
        %v6827 = vpow.pop %v6826
        %v6828 = vmul.f32 %v6808, 1.442695
        %v6829 = vpow.pop %v6828
        %v6830 = vmul.f32 %v6809, 1.442695
        %v6831 = vpow.pop %v6830
        %v6832 = vmul.f32 %v6810, 1.442695
        %v6833 = vpow.pop %v6832
        %v6834 = vmul.f32 %v6811, 1.442695
        %v6835 = vpow.pop %v6834
        %v6836 = vmul.f32 %v6812, 1.442695
        %v6837 = vpow.pop %v6836
        %v6838 = vmul.f32 %v6813, 1.442695
        %v6839 = vpow.pop %v6838
        %v6840 = vmul.f32 %v6814, 1.442695
        %v6841 = vpow.pop %v6840
        %v6842 = vmul.f32 %v6815, 1.442695
        %v6843 = vpow.pop %v6842
        %v6844 = vmul.f32 %v6816, 1.442695
        %v6845 = vpow.pop %v6844
        %v6846 = vmul.f32 %v6817, 1.442695
        %v6847 = vpow.pop %v6846
        %v6848 = vmul.f32 %v6818, 1.442695
        %v6849 = vpow.pop %v6848
        %v6850 = vmul.f32 %v6819, 1.442695
        %v6851 = vpow.pop %v6850
        %v6852 = vsel %vm1315, %v6821, 0.0
        %6853 = vadd.xlane.f32.xlu0 %v6852
        %v6854 = vpop.xlane.xlu0 %6853
        %v6855 = vsel %vm1315, %v6823, 0.0
        %6856 = vadd.xlane.f32.xlu0 %v6855
        %v6857 = vpop.xlane.xlu0 %6856
        %v6858 = vsel %vm1315, %v6825, 0.0
        %6859 = vadd.xlane.f32.xlu0 %v6858
        %v6860 = vpop.xlane.xlu0 %6859
        %v6861 = vsel %vm1315, %v6827, 0.0
        %6862 = vadd.xlane.f32.xlu0 %v6861
        %v6863 = vpop.xlane.xlu0 %6862
        %v6864 = vsel %vm1315, %v6829, 0.0
        %6865 = vadd.xlane.f32.xlu0 %v6864
        %v6866 = vpop.xlane.xlu0 %6865
        %v6867 = vsel %vm1315, %v6831, 0.0
        %6868 = vadd.xlane.f32.xlu0 %v6867
        %v6869 = vpop.xlane.xlu0 %6868
        %v6870 = vsel %vm1315, %v6833, 0.0
        %6871 = vadd.xlane.f32.xlu0 %v6870
        %v6872 = vpop.xlane.xlu0 %6871
        %v6873 = vsel %vm1315, %v6835, 0.0
        %6874 = vadd.xlane.f32.xlu0 %v6873
        %v6875 = vpop.xlane.xlu0 %6874
        %v6876 = vsel %vm1315, %v6837, 0.0
        %6877 = vadd.xlane.f32.xlu0 %v6876
        %v6878 = vpop.xlane.xlu0 %6877
        %v6879 = vsel %vm1315, %v6839, 0.0
        %6880 = vadd.xlane.f32.xlu0 %v6879
        %v6881 = vpop.xlane.xlu0 %6880
        %v6882 = vsel %vm1315, %v6841, 0.0
        %6883 = vadd.xlane.f32.xlu0 %v6882
        %v6884 = vpop.xlane.xlu0 %6883
        %v6885 = vsel %vm1315, %v6843, 0.0
        %6886 = vadd.xlane.f32.xlu0 %v6885
        %v6887 = vpop.xlane.xlu0 %6886
        %v6888 = vsel %vm1315, %v6845, 0.0
        %6889 = vadd.xlane.f32.xlu0 %v6888
        %v6890 = vpop.xlane.xlu0 %6889
        %v6891 = vsel %vm1315, %v6847, 0.0
        %6892 = vadd.xlane.f32.xlu0 %v6891
        %v6893 = vpop.xlane.xlu0 %6892
        %v6894 = vsel %vm1315, %v6849, 0.0
        %6895 = vadd.xlane.f32.xlu0 %v6894
        %v6896 = vpop.xlane.xlu0 %6895
        %v6897 = vsel %vm1315, %v6851, 0.0
        %6898 = vadd.xlane.f32.xlu0 %v6897
        %v6899 = vpop.xlane.xlu0 %6898
        %v6900 = vrcp.pop %v6854
        %v6901 = vrcp.pop %v6857
        %v6902 = vrcp.pop %v6860
        %v6903 = vrcp.pop %v6863
        %v6904 = vrcp.pop %v6866
        %v6905 = vrcp.pop %v6869
        %v6906 = vrcp.pop %v6872
        %v6907 = vrcp.pop %v6875
        %v6908 = vrcp.pop %v6878
        %v6909 = vrcp.pop %v6881
        %v6910 = vrcp.pop %v6884
        %v6911 = vrcp.pop %v6887
        %v6912 = vrcp.pop %v6890
        %v6913 = vrcp.pop %v6893
        %v6914 = vrcp.pop %v6896
        %v6915 = vrcp.pop %v6899
        %v6916 = vmul.f32 %v6821, %v6900
        %v6917 = vmul.f32 %v6823, %v6901
        %v6918 = vmul.f32 %v6825, %v6902
        %v6919 = vmul.f32 %v6827, %v6903
        %v6920 = vmul.f32 %v6829, %v6904
        %v6921 = vmul.f32 %v6831, %v6905
        %v6922 = vmul.f32 %v6833, %v6906
        %v6923 = vmul.f32 %v6835, %v6907
        %v6924 = vmul.f32 %v6837, %v6908
        %v6925 = vmul.f32 %v6839, %v6909
        %v6926 = vmul.f32 %v6841, %v6910
        %v6927 = vmul.f32 %v6843, %v6911
        %v6928 = vmul.f32 %v6845, %v6912
        %v6929 = vmul.f32 %v6847, %v6913
        %v6930 = vmul.f32 %v6849, %v6914
        %v6931 = vmul.f32 %v6851, %v6915
        %v6932 = vpack.c.bf16 %v6917, %v6916
        %v6933 = vpack.c.bf16 %v6919, %v6918
        %v6934 = vpack.c.bf16 %v6921, %v6920
        %v6935 = vpack.c.bf16 %v6923, %v6922
        %v6936 = vpack.c.bf16 %v6925, %v6924
        %v6937 = vpack.c.bf16 %v6927, %v6926
        %v6938 = vpack.c.bf16 %v6929, %v6928
        %v6939 = vpack.c.bf16 %v6931, %v6930
        %v6941 = vsel %vm1315, %v6932, 0
        %v6944 = vsel %vm1315, %v6933, 0
        %6946 = vmatprep.subr.bf16.mxu0 0
        %6947 = vmatpush1.bf16.msra.mxu0 0
        %6948 = vmatprep.subr.bf16.mxu0 0
        %6949 = vmatpush1.bf16.msra.mxu0 0
        %6950 = vmatprep.subr.bf16.mxu0 0
        %6951 = vmatpush1.bf16.msra.mxu0 0
        %6952 = vmatprep.subr.bf16.mxu0 0
        %6953 = vmatpush1.bf16.msra.mxu0 0
        %6954 = vmatprep.subr.bf16.mxu0 0
        %6955 = vmatpush1.bf16.msra.mxu0 0
        %6956 = vmatprep.subr.bf16.mxu0 0
        %6957 = vmatpush1.bf16.msra.mxu0 0
        %6958 = vmatprep.subr.bf16.mxu0 0
        %6959 = vmatpush1.bf16.msra.mxu0 %v6449
        %6960 = vmatprep.subr.bf16.mxu0 0
        %6961 = vmatpush1.bf16.msra.mxu0 %v6448
        %6962 = vmatprep.subr.bf16.mxu0 0
        %6963 = vmatpush2.bf16.msra.mxu0 0
        %6964 = vmatprep.subr.bf16.mxu0 0
        %6965 = vmatpush2.bf16.msra.mxu0 0
        %6966 = vmatprep.subr.bf16.mxu0 0
        %6967 = vmatpush2.bf16.msra.mxu0 0
        %6968 = vmatprep.subr.bf16.mxu0 0
        %6969 = vmatpush2.bf16.msra.mxu0 0
        %6970 = vmatprep.subr.bf16.mxu0 0
        %6971 = vmatpush2.bf16.msra.mxu0 0
        %6972 = vmatprep.subr.bf16.mxu0 0
        %6973 = vmatpush2.bf16.msra.mxu0 0
        %6974 = vmatprep.subr.bf16.mxu0 0
        %6975 = vmatpush2.bf16.msra.mxu0 0
        %6976 = vmatprep.subr.bf16.mxu0 0
        %6977 = vmatpush2.bf16.msra.mxu0 0
        %6978 = vmatprep.mubr.bf16.mxu0 0
        %6979 = vmatmul.mubr.bf16.gmra.mxu0 %v6941
        %v6980 = vpop.f32.mrf.mxu0
        %v6981 = vadd.f32 0.0, %v6980
        %v6982 = vpop.f32.mrf.mxu0
        %v6983 = vpop.f32.mrf.mxu0
        %v6984 = vadd.f32 0.0, %v6983
        %v6985 = vpop.f32.mrf.mxu0
        %6986 = vmatprep.mubr.bf16.mxu0 0
        %6987 = vmatmul.mubr.bf16.gmra.mxu0 %v6944
        %v6988 = vpop.f32.mrf.mxu0
        %v6989 = vadd.f32 0.0, %v6988
        %v6990 = vpop.f32.mrf.mxu0
        %v6991 = vpop.f32.mrf.mxu0
        %v6992 = vadd.f32 0.0, %v6991
        %v6993 = vpop.f32.mrf.mxu0
        %6994 = vdwg.mxu0
        %6997 = vrot.lane.b32.xlu0 %v6448, 112
        %v6998 = vpop.permute.xlu0 %6997
        %6999 = vrot.lane.b32.xlu0 %v6449, 112
        %v7000 = vpop.permute.xlu0 %6999
        %v7004 = vsel %vm1315, %v6934, 0
        %v7007 = vsel %vm1315, %v6935, 0
        %7009 = vmatprep.subr.bf16.mxu0 0
        %7010 = vmatpush1.bf16.msra.mxu0 0
        %7011 = vmatprep.subr.bf16.mxu0 0
        %7012 = vmatpush1.bf16.msra.mxu0 0
        %7013 = vmatprep.subr.bf16.mxu0 0
        %7014 = vmatpush1.bf16.msra.mxu0 0
        %7015 = vmatprep.subr.bf16.mxu0 0
        %7016 = vmatpush1.bf16.msra.mxu0 0
        %7017 = vmatprep.subr.bf16.mxu0 0
        %7018 = vmatpush1.bf16.msra.mxu0 0
        %7019 = vmatprep.subr.bf16.mxu0 0
        %7020 = vmatpush1.bf16.msra.mxu0 0
        %7021 = vmatprep.subr.bf16.mxu0 0
        %7022 = vmatpush1.bf16.msra.mxu0 %v7000
        %7023 = vmatprep.subr.bf16.mxu0 0
        %7024 = vmatpush1.bf16.msra.mxu0 %v6998
        %7025 = vmatprep.subr.bf16.mxu0 0
        %7026 = vmatpush2.bf16.msra.mxu0 0
        %7027 = vmatprep.subr.bf16.mxu0 0
        %7028 = vmatpush2.bf16.msra.mxu0 0
        %7029 = vmatprep.subr.bf16.mxu0 0
        %7030 = vmatpush2.bf16.msra.mxu0 0
        %7031 = vmatprep.subr.bf16.mxu0 0
        %7032 = vmatpush2.bf16.msra.mxu0 0
        %7033 = vmatprep.subr.bf16.mxu0 0
        %7034 = vmatpush2.bf16.msra.mxu0 0
        %7035 = vmatprep.subr.bf16.mxu0 0
        %7036 = vmatpush2.bf16.msra.mxu0 0
        %7037 = vmatprep.subr.bf16.mxu0 0
        %7038 = vmatpush2.bf16.msra.mxu0 0
        %7039 = vmatprep.subr.bf16.mxu0 0
        %7040 = vmatpush2.bf16.msra.mxu0 0
        %7041 = vmatprep.mubr.bf16.mxu0 0
        %7042 = vmatmul.mubr.bf16.gmra.mxu0 %v7004
        %v7043 = vpop.f32.mrf.mxu0
        %v7044 = vadd.f32 0.0, %v7043
        %v7045 = vpop.f32.mrf.mxu0
        %v7046 = vpop.f32.mrf.mxu0
        %v7047 = vadd.f32 0.0, %v7046
        %v7048 = vpop.f32.mrf.mxu0
        %7049 = vmatprep.mubr.bf16.mxu0 0
        %7050 = vmatmul.mubr.bf16.gmra.mxu0 %v7007
        %v7051 = vpop.f32.mrf.mxu0
        %v7052 = vadd.f32 0.0, %v7051
        %v7053 = vpop.f32.mrf.mxu0
        %v7054 = vpop.f32.mrf.mxu0
        %v7055 = vadd.f32 0.0, %v7054
        %v7056 = vpop.f32.mrf.mxu0
        %7057 = vdwg.mxu0
        %7058 = vrot.lane.b32.xlu0 %v6448, 96
        %v7059 = vpop.permute.xlu0 %7058
        %7060 = vrot.lane.b32.xlu0 %v6449, 96
        %v7061 = vpop.permute.xlu0 %7060
        %v7065 = vsel %vm1315, %v6936, 0
        %v7068 = vsel %vm1315, %v6937, 0
        %7070 = vmatprep.subr.bf16.mxu0 0
        %7071 = vmatpush1.bf16.msra.mxu0 0
        %7072 = vmatprep.subr.bf16.mxu0 0
        %7073 = vmatpush1.bf16.msra.mxu0 0
        %7074 = vmatprep.subr.bf16.mxu0 0
        %7075 = vmatpush1.bf16.msra.mxu0 0
        %7076 = vmatprep.subr.bf16.mxu0 0
        %7077 = vmatpush1.bf16.msra.mxu0 0
        %7078 = vmatprep.subr.bf16.mxu0 0
        %7079 = vmatpush1.bf16.msra.mxu0 0
        %7080 = vmatprep.subr.bf16.mxu0 0
        %7081 = vmatpush1.bf16.msra.mxu0 0
        %7082 = vmatprep.subr.bf16.mxu0 0
        %7083 = vmatpush1.bf16.msra.mxu0 %v7061
        %7084 = vmatprep.subr.bf16.mxu0 0
        %7085 = vmatpush1.bf16.msra.mxu0 %v7059
        %7086 = vmatprep.subr.bf16.mxu0 0
        %7087 = vmatpush2.bf16.msra.mxu0 0
        %7088 = vmatprep.subr.bf16.mxu0 0
        %7089 = vmatpush2.bf16.msra.mxu0 0
        %7090 = vmatprep.subr.bf16.mxu0 0
        %7091 = vmatpush2.bf16.msra.mxu0 0
        %7092 = vmatprep.subr.bf16.mxu0 0
        %7093 = vmatpush2.bf16.msra.mxu0 0
        %7094 = vmatprep.subr.bf16.mxu0 0
        %7095 = vmatpush2.bf16.msra.mxu0 0
        %7096 = vmatprep.subr.bf16.mxu0 0
        %7097 = vmatpush2.bf16.msra.mxu0 0
        %7098 = vmatprep.subr.bf16.mxu0 0
        %7099 = vmatpush2.bf16.msra.mxu0 0
        %7100 = vmatprep.subr.bf16.mxu0 0
        %7101 = vmatpush2.bf16.msra.mxu0 0
        %7102 = vmatprep.mubr.bf16.mxu0 0
        %7103 = vmatmul.mubr.bf16.gmra.mxu0 %v7065
        %v7104 = vpop.f32.mrf.mxu0
        %v7105 = vadd.f32 0.0, %v7104
        %v7106 = vpop.f32.mrf.mxu0
        %v7107 = vpop.f32.mrf.mxu0
        %v7108 = vadd.f32 0.0, %v7107
        %v7109 = vpop.f32.mrf.mxu0
        %7110 = vmatprep.mubr.bf16.mxu0 0
        %7111 = vmatmul.mubr.bf16.gmra.mxu0 %v7068
        %v7112 = vpop.f32.mrf.mxu0
        %v7113 = vadd.f32 0.0, %v7112
        %v7114 = vpop.f32.mrf.mxu0
        %v7115 = vpop.f32.mrf.mxu0
        %v7116 = vadd.f32 0.0, %v7115
        %v7117 = vpop.f32.mrf.mxu0
        %7118 = vdwg.mxu0
        %7119 = vrot.lane.b32.xlu0 %v6448, 80
        %v7120 = vpop.permute.xlu0 %7119
        %7121 = vrot.lane.b32.xlu0 %v6449, 80
        %v7122 = vpop.permute.xlu0 %7121
        %v7126 = vsel %vm1315, %v6938, 0
        %v7129 = vsel %vm1315, %v6939, 0
        %7131 = vmatprep.subr.bf16.mxu0 0
        %7132 = vmatpush1.bf16.msra.mxu0 0
        %7133 = vmatprep.subr.bf16.mxu0 0
        %7134 = vmatpush1.bf16.msra.mxu0 0
        %7135 = vmatprep.subr.bf16.mxu0 0
        %7136 = vmatpush1.bf16.msra.mxu0 0
        %7137 = vmatprep.subr.bf16.mxu0 0
        %7138 = vmatpush1.bf16.msra.mxu0 0
        %7139 = vmatprep.subr.bf16.mxu0 0
        %7140 = vmatpush1.bf16.msra.mxu0 0
        %7141 = vmatprep.subr.bf16.mxu0 0
        %7142 = vmatpush1.bf16.msra.mxu0 0
        %7143 = vmatprep.subr.bf16.mxu0 0
        %7144 = vmatpush1.bf16.msra.mxu0 %v7122
        %7145 = vmatprep.subr.bf16.mxu0 0
        %7146 = vmatpush1.bf16.msra.mxu0 %v7120
        %7147 = vmatprep.subr.bf16.mxu0 0
        %7148 = vmatpush2.bf16.msra.mxu0 0
        %7149 = vmatprep.subr.bf16.mxu0 0
        %7150 = vmatpush2.bf16.msra.mxu0 0
        %7151 = vmatprep.subr.bf16.mxu0 0
        %7152 = vmatpush2.bf16.msra.mxu0 0
        %7153 = vmatprep.subr.bf16.mxu0 0
        %7154 = vmatpush2.bf16.msra.mxu0 0
        %7155 = vmatprep.subr.bf16.mxu0 0
        %7156 = vmatpush2.bf16.msra.mxu0 0
        %7157 = vmatprep.subr.bf16.mxu0 0
        %7158 = vmatpush2.bf16.msra.mxu0 0
        %7159 = vmatprep.subr.bf16.mxu0 0
        %7160 = vmatpush2.bf16.msra.mxu0 0
        %7161 = vmatprep.subr.bf16.mxu0 0
        %7162 = vmatpush2.bf16.msra.mxu0 0
        %7163 = vmatprep.mubr.bf16.mxu0 0
        %7164 = vmatmul.mubr.bf16.gmra.mxu0 %v7126
        %v7165 = vpop.f32.mrf.mxu0
        %v7166 = vadd.f32 0.0, %v7165
        %v7167 = vpop.f32.mrf.mxu0
        %v7168 = vpop.f32.mrf.mxu0
        %v7169 = vadd.f32 0.0, %v7168
        %v7170 = vpop.f32.mrf.mxu0
        %7171 = vmatprep.mubr.bf16.mxu0 0
        %7172 = vmatmul.mubr.bf16.gmra.mxu0 %v7129
        %v7173 = vpop.f32.mrf.mxu0
        %v7174 = vadd.f32 0.0, %v7173
        %v7175 = vpop.f32.mrf.mxu0
        %v7176 = vpop.f32.mrf.mxu0
        %v7177 = vadd.f32 0.0, %v7176
        %v7178 = vpop.f32.mrf.mxu0
        %7179 = vdwg.mxu0
        %7184 = vrot.lane.b32.xlu0 %v7044, 16
        %v7185 = vpop.permute.xlu0 %7184
        %7186 = vrot.lane.b32.xlu0 %v7047, 16
        %v7187 = vpop.permute.xlu0 %7186
        %7188 = vrot.lane.b32.xlu0 %v7052, 16
        %v7189 = vpop.permute.xlu0 %7188
        %7190 = vrot.lane.b32.xlu0 %v7055, 16
        %v7191 = vpop.permute.xlu0 %7190
        %7200 = vrot.lane.b32.xlu0 %v7105, 32
        %v7201 = vpop.permute.xlu0 %7200
        %7202 = vrot.lane.b32.xlu0 %v7108, 32
        %v7203 = vpop.permute.xlu0 %7202
        %7204 = vrot.lane.b32.xlu0 %v7113, 32
        %v7205 = vpop.permute.xlu0 %7204
        %7206 = vrot.lane.b32.xlu0 %v7116, 32
        %v7207 = vpop.permute.xlu0 %7206
        %7216 = vrot.lane.b32.xlu0 %v7166, 48
        %v7217 = vpop.permute.xlu0 %7216
        %7218 = vrot.lane.b32.xlu0 %v7169, 48
        %v7219 = vpop.permute.xlu0 %7218
        %7220 = vrot.lane.b32.xlu0 %v7174, 48
        %v7221 = vpop.permute.xlu0 %7220
        %7222 = vrot.lane.b32.xlu0 %v7177, 48
        %v7223 = vpop.permute.xlu0 %7222
        %v7228 = vsel %vm1014, %v6981, %v7185
        %v7229 = vsel %vm1014, %v6984, %v7187
        %v7230 = vsel %vm1014, %v6989, %v7189
        %v7231 = vsel %vm1014, %v6992, %v7191
        %v7232 = vsel %vm1315, %v7228, %v7201
        %v7233 = vsel %vm1315, %v7229, %v7203
        %v7234 = vsel %vm1315, %v7230, %v7205
        %v7235 = vsel %vm1315, %v7231, %v7207
        %v7236 = vsel %vm1796, %v7232, %v7217
        %v7237 = vsel %vm1796, %v7233, %v7219
        %v7238 = vsel %vm1796, %v7234, %v7221
        %v7239 = vsel %vm1796, %v7235, %v7223
        %v7240 = vpack.c.bf16 %v5618, %v5614
        %v7241 = vpack.c.bf16 %v5628, %v5624
        %v7242 = vpack.c.bf16 %v5620, %v5616
        %v7243 = vpack.c.bf16 %v5630, %v5626
        %7246 = vrot.lane.b32.xlu0 %v7240, 64
        %v7247 = vpop.permute.xlu0 %7246
        %7248 = vrot.lane.b32.xlu0 %v7241, 64
        %v7249 = vpop.permute.xlu0 %7248
        %v7251 = vsel %vm1014, %v7240, 0
        %v7254 = vsel %vm1014, %v7241, 0
        %v7257 = vsel %vm1014, %v7247, 0
        %v7260 = vsel %vm1014, %v7249, 0
        %7262 = vmatprep.subr.bf16.mxu0 0
        %7263 = vmatpush1.bf16.xpose.msra.mxu0 0
        %7264 = vmatprep.subr.bf16.mxu0 0
        %7265 = vmatpush1.bf16.xpose.msra.mxu0 0
        %7266 = vmatprep.subr.bf16.mxu0 0
        %7267 = vmatpush1.bf16.xpose.msra.mxu0 0
        %7268 = vmatprep.subr.bf16.mxu0 0
        %7269 = vmatpush1.bf16.xpose.msra.mxu0 0
        %7270 = vmatprep.subr.bf16.mxu0 0
        %7271 = vmatpush1.bf16.xpose.msra.mxu0 0
        %7272 = vmatprep.subr.bf16.mxu0 0
        %7273 = vmatpush1.bf16.xpose.msra.mxu0 0
        %7274 = vmatprep.subr.bf16.mxu0 0
        %7275 = vmatpush1.bf16.xpose.msra.mxu0 %v7260
        %7276 = vmatprep.subr.bf16.mxu0 0
        %7277 = vmatpush1.bf16.xpose.msra.mxu0 %v7257
        %7278 = vmatprep.subr.bf16.mxu0 0
        %7279 = vmatpush2.bf16.xpose.msra.mxu0 0
        %7280 = vmatprep.subr.bf16.mxu0 0
        %7281 = vmatpush2.bf16.xpose.msra.mxu0 0
        %7282 = vmatprep.subr.bf16.mxu0 0
        %7283 = vmatpush2.bf16.xpose.msra.mxu0 0
        %7284 = vmatprep.subr.bf16.mxu0 0
        %7285 = vmatpush2.bf16.xpose.msra.mxu0 0
        %7286 = vmatprep.subr.bf16.mxu0 0
        %7287 = vmatpush2.bf16.xpose.msra.mxu0 0
        %7288 = vmatprep.subr.bf16.mxu0 0
        %7289 = vmatpush2.bf16.xpose.msra.mxu0 0
        %7290 = vmatprep.subr.bf16.mxu0 0
        %7291 = vmatpush2.bf16.xpose.msra.mxu0 0
        %7292 = vmatprep.subr.bf16.mxu0 0
        %7293 = vmatpush2.bf16.xpose.msra.mxu0 0
        %7294 = vmatprep.mubr.bf16.mxu0 0
        %7295 = vmatmul.mubr.bf16.gmra.mxu0 %v7251
        %v7296 = vpop.f32.mrf.mxu0
        %v7297 = vadd.f32 0.0, %v7296
        %v7298 = vpop.f32.mrf.mxu0
        %v7299 = vpop.f32.mrf.mxu0
        %v7300 = vadd.f32 0.0, %v7299
        %v7301 = vpop.f32.mrf.mxu0
        %7302 = vmatprep.mubr.bf16.mxu0 0
        %7303 = vmatmul.mubr.bf16.gmra.mxu0 %v7254
        %v7304 = vpop.f32.mrf.mxu0
        %v7305 = vadd.f32 0.0, %v7304
        %v7306 = vpop.f32.mrf.mxu0
        %v7307 = vpop.f32.mrf.mxu0
        %v7308 = vadd.f32 0.0, %v7307
        %v7309 = vpop.f32.mrf.mxu0
        %7310 = vdwg.mxu0
        %7311 = vrot.lane.b32.xlu0 %v7240, 112
        %v7312 = vpop.permute.xlu0 %7311
        %7313 = vrot.lane.b32.xlu0 %v7241, 112
        %v7314 = vpop.permute.xlu0 %7313
        %7315 = vrot.lane.b32.xlu0 %v7240, 48
        %v7316 = vpop.permute.xlu0 %7315
        %7317 = vrot.lane.b32.xlu0 %v7241, 48
        %v7318 = vpop.permute.xlu0 %7317
        %v7320 = vsel %vm1014, %v7312, 0
        %v7323 = vsel %vm1014, %v7314, 0
        %v7326 = vsel %vm1014, %v7316, 0
        %v7329 = vsel %vm1014, %v7318, 0
        %7331 = vmatprep.subr.bf16.mxu0 0
        %7332 = vmatpush1.bf16.xpose.msra.mxu0 0
        %7333 = vmatprep.subr.bf16.mxu0 0
        %7334 = vmatpush1.bf16.xpose.msra.mxu0 0
        %7335 = vmatprep.subr.bf16.mxu0 0
        %7336 = vmatpush1.bf16.xpose.msra.mxu0 0
        %7337 = vmatprep.subr.bf16.mxu0 0
        %7338 = vmatpush1.bf16.xpose.msra.mxu0 0
        %7339 = vmatprep.subr.bf16.mxu0 0
        %7340 = vmatpush1.bf16.xpose.msra.mxu0 0
        %7341 = vmatprep.subr.bf16.mxu0 0
        %7342 = vmatpush1.bf16.xpose.msra.mxu0 0
        %7343 = vmatprep.subr.bf16.mxu0 0
        %7344 = vmatpush1.bf16.xpose.msra.mxu0 %v7329
        %7345 = vmatprep.subr.bf16.mxu0 0
        %7346 = vmatpush1.bf16.xpose.msra.mxu0 %v7326
        %7347 = vmatprep.subr.bf16.mxu0 0
        %7348 = vmatpush2.bf16.xpose.msra.mxu0 0
        %7349 = vmatprep.subr.bf16.mxu0 0
        %7350 = vmatpush2.bf16.xpose.msra.mxu0 0
        %7351 = vmatprep.subr.bf16.mxu0 0
        %7352 = vmatpush2.bf16.xpose.msra.mxu0 0
        %7353 = vmatprep.subr.bf16.mxu0 0
        %7354 = vmatpush2.bf16.xpose.msra.mxu0 0
        %7355 = vmatprep.subr.bf16.mxu0 0
        %7356 = vmatpush2.bf16.xpose.msra.mxu0 0
        %7357 = vmatprep.subr.bf16.mxu0 0
        %7358 = vmatpush2.bf16.xpose.msra.mxu0 0
        %7359 = vmatprep.subr.bf16.mxu0 0
        %7360 = vmatpush2.bf16.xpose.msra.mxu0 0
        %7361 = vmatprep.subr.bf16.mxu0 0
        %7362 = vmatpush2.bf16.xpose.msra.mxu0 0
        %7363 = vmatprep.mubr.bf16.mxu0 0
        %7364 = vmatmul.mubr.bf16.gmra.mxu0 %v7320
        %v7365 = vpop.f32.mrf.mxu0
        %v7366 = vadd.f32 0.0, %v7365
        %v7367 = vpop.f32.mrf.mxu0
        %v7368 = vpop.f32.mrf.mxu0
        %v7369 = vadd.f32 0.0, %v7368
        %v7370 = vpop.f32.mrf.mxu0
        %7371 = vmatprep.mubr.bf16.mxu0 0
        %7372 = vmatmul.mubr.bf16.gmra.mxu0 %v7323
        %v7373 = vpop.f32.mrf.mxu0
        %v7374 = vadd.f32 0.0, %v7373
        %v7375 = vpop.f32.mrf.mxu0
        %v7376 = vpop.f32.mrf.mxu0
        %v7377 = vadd.f32 0.0, %v7376
        %v7378 = vpop.f32.mrf.mxu0
        %7379 = vdwg.mxu0
        %7380 = vrot.lane.b32.xlu0 %v7240, 96
        %v7381 = vpop.permute.xlu0 %7380
        %7382 = vrot.lane.b32.xlu0 %v7241, 96
        %v7383 = vpop.permute.xlu0 %7382
        %7384 = vrot.lane.b32.xlu0 %v7240, 32
        %v7385 = vpop.permute.xlu0 %7384
        %7386 = vrot.lane.b32.xlu0 %v7241, 32
        %v7387 = vpop.permute.xlu0 %7386
        %v7389 = vsel %vm1014, %v7381, 0
        %v7392 = vsel %vm1014, %v7383, 0
        %v7395 = vsel %vm1014, %v7385, 0
        %v7398 = vsel %vm1014, %v7387, 0
        %7400 = vmatprep.subr.bf16.mxu0 0
        %7401 = vmatpush1.bf16.xpose.msra.mxu0 0
        %7402 = vmatprep.subr.bf16.mxu0 0
        %7403 = vmatpush1.bf16.xpose.msra.mxu0 0
        %7404 = vmatprep.subr.bf16.mxu0 0
        %7405 = vmatpush1.bf16.xpose.msra.mxu0 0
        %7406 = vmatprep.subr.bf16.mxu0 0
        %7407 = vmatpush1.bf16.xpose.msra.mxu0 0
        %7408 = vmatprep.subr.bf16.mxu0 0
        %7409 = vmatpush1.bf16.xpose.msra.mxu0 0
        %7410 = vmatprep.subr.bf16.mxu0 0
        %7411 = vmatpush1.bf16.xpose.msra.mxu0 0
        %7412 = vmatprep.subr.bf16.mxu0 0
        %7413 = vmatpush1.bf16.xpose.msra.mxu0 %v7398
        %7414 = vmatprep.subr.bf16.mxu0 0
        %7415 = vmatpush1.bf16.xpose.msra.mxu0 %v7395
        %7416 = vmatprep.subr.bf16.mxu0 0
        %7417 = vmatpush2.bf16.xpose.msra.mxu0 0
        %7418 = vmatprep.subr.bf16.mxu0 0
        %7419 = vmatpush2.bf16.xpose.msra.mxu0 0
        %7420 = vmatprep.subr.bf16.mxu0 0
        %7421 = vmatpush2.bf16.xpose.msra.mxu0 0
        %7422 = vmatprep.subr.bf16.mxu0 0
        %7423 = vmatpush2.bf16.xpose.msra.mxu0 0
        %7424 = vmatprep.subr.bf16.mxu0 0
        %7425 = vmatpush2.bf16.xpose.msra.mxu0 0
        %7426 = vmatprep.subr.bf16.mxu0 0
        %7427 = vmatpush2.bf16.xpose.msra.mxu0 0
        %7428 = vmatprep.subr.bf16.mxu0 0
        %7429 = vmatpush2.bf16.xpose.msra.mxu0 0
        %7430 = vmatprep.subr.bf16.mxu0 0
        %7431 = vmatpush2.bf16.xpose.msra.mxu0 0
        %7432 = vmatprep.mubr.bf16.mxu0 0
        %7433 = vmatmul.mubr.bf16.gmra.mxu0 %v7389
        %v7434 = vpop.f32.mrf.mxu0
        %v7435 = vadd.f32 0.0, %v7434
        %v7436 = vpop.f32.mrf.mxu0
        %v7437 = vpop.f32.mrf.mxu0
        %v7438 = vadd.f32 0.0, %v7437
        %v7439 = vpop.f32.mrf.mxu0
        %7440 = vmatprep.mubr.bf16.mxu0 0
        %7441 = vmatmul.mubr.bf16.gmra.mxu0 %v7392
        %v7442 = vpop.f32.mrf.mxu0
        %v7443 = vadd.f32 0.0, %v7442
        %v7444 = vpop.f32.mrf.mxu0
        %v7445 = vpop.f32.mrf.mxu0
        %v7446 = vadd.f32 0.0, %v7445
        %v7447 = vpop.f32.mrf.mxu0
        %7448 = vdwg.mxu0
        %7449 = vrot.lane.b32.xlu0 %v7240, 80
        %v7450 = vpop.permute.xlu0 %7449
        %7451 = vrot.lane.b32.xlu0 %v7241, 80
        %v7452 = vpop.permute.xlu0 %7451
        %7453 = vrot.lane.b32.xlu0 %v7240, 16
        %v7454 = vpop.permute.xlu0 %7453
        %7455 = vrot.lane.b32.xlu0 %v7241, 16
        %v7456 = vpop.permute.xlu0 %7455
        %v7458 = vsel %vm1014, %v7450, 0
        %v7461 = vsel %vm1014, %v7452, 0
        %v7464 = vsel %vm1014, %v7454, 0
        %v7467 = vsel %vm1014, %v7456, 0
        %7469 = vmatprep.subr.bf16.mxu0 0
        %7470 = vmatpush1.bf16.xpose.msra.mxu0 0
        %7471 = vmatprep.subr.bf16.mxu0 0
        %7472 = vmatpush1.bf16.xpose.msra.mxu0 0
        %7473 = vmatprep.subr.bf16.mxu0 0
        %7474 = vmatpush1.bf16.xpose.msra.mxu0 0
        %7475 = vmatprep.subr.bf16.mxu0 0
        %7476 = vmatpush1.bf16.xpose.msra.mxu0 0
        %7477 = vmatprep.subr.bf16.mxu0 0
        %7478 = vmatpush1.bf16.xpose.msra.mxu0 0
        %7479 = vmatprep.subr.bf16.mxu0 0
        %7480 = vmatpush1.bf16.xpose.msra.mxu0 0
        %7481 = vmatprep.subr.bf16.mxu0 0
        %7482 = vmatpush1.bf16.xpose.msra.mxu0 %v7467
        %7483 = vmatprep.subr.bf16.mxu0 0
        %7484 = vmatpush1.bf16.xpose.msra.mxu0 %v7464
        %7485 = vmatprep.subr.bf16.mxu0 0
        %7486 = vmatpush2.bf16.xpose.msra.mxu0 0
        %7487 = vmatprep.subr.bf16.mxu0 0
        %7488 = vmatpush2.bf16.xpose.msra.mxu0 0
        %7489 = vmatprep.subr.bf16.mxu0 0
        %7490 = vmatpush2.bf16.xpose.msra.mxu0 0
        %7491 = vmatprep.subr.bf16.mxu0 0
        %7492 = vmatpush2.bf16.xpose.msra.mxu0 0
        %7493 = vmatprep.subr.bf16.mxu0 0
        %7494 = vmatpush2.bf16.xpose.msra.mxu0 0
        %7495 = vmatprep.subr.bf16.mxu0 0
        %7496 = vmatpush2.bf16.xpose.msra.mxu0 0
        %7497 = vmatprep.subr.bf16.mxu0 0
        %7498 = vmatpush2.bf16.xpose.msra.mxu0 0
        %7499 = vmatprep.subr.bf16.mxu0 0
        %7500 = vmatpush2.bf16.xpose.msra.mxu0 0
        %7501 = vmatprep.mubr.bf16.mxu0 0
        %7502 = vmatmul.mubr.bf16.gmra.mxu0 %v7458
        %v7503 = vpop.f32.mrf.mxu0
        %v7504 = vadd.f32 0.0, %v7503
        %v7505 = vpop.f32.mrf.mxu0
        %v7506 = vpop.f32.mrf.mxu0
        %v7507 = vadd.f32 0.0, %v7506
        %v7508 = vpop.f32.mrf.mxu0
        %7509 = vmatprep.mubr.bf16.mxu0 0
        %7510 = vmatmul.mubr.bf16.gmra.mxu0 %v7461
        %v7511 = vpop.f32.mrf.mxu0
        %v7512 = vadd.f32 0.0, %v7511
        %v7513 = vpop.f32.mrf.mxu0
        %v7514 = vpop.f32.mrf.mxu0
        %v7515 = vadd.f32 0.0, %v7514
        %v7516 = vpop.f32.mrf.mxu0
        %7517 = vdwg.mxu0
        %v7518 = vmul.f32 %v7297, 0.25
        %v7519 = vmul.f32 %v7300, 0.25
        %v7520 = vmul.f32 %v7305, 0.25
        %v7521 = vmul.f32 %v7308, 0.25
        %v7522 = vmul.f32 %v7366, 0.25
        %v7523 = vmul.f32 %v7369, 0.25
        %v7524 = vmul.f32 %v7374, 0.25
        %v7525 = vmul.f32 %v7377, 0.25
        %v7526 = vmul.f32 %v7435, 0.25
        %v7527 = vmul.f32 %v7438, 0.25
        %v7528 = vmul.f32 %v7443, 0.25
        %v7529 = vmul.f32 %v7446, 0.25
        %v7530 = vmul.f32 %v7504, 0.25
        %v7531 = vmul.f32 %v7507, 0.25
        %v7532 = vmul.f32 %v7512, 0.25
        %v7533 = vmul.f32 %v7515, 0.25
        %v7534 = vadd.f32 %v7518, %v551
        %v7535 = vadd.f32 %v7519, %v552
        %v7536 = vadd.f32 %v7520, %v553
        %v7537 = vadd.f32 %v7521, %v554
        %v7538 = vadd.f32 %v7522, %v551
        %v7539 = vadd.f32 %v7523, %v552
        %v7540 = vadd.f32 %v7524, %v553
        %v7541 = vadd.f32 %v7525, %v554
        %v7542 = vadd.f32 %v7526, %v551
        %v7543 = vadd.f32 %v7527, %v552
        %v7544 = vadd.f32 %v7528, %v553
        %v7545 = vadd.f32 %v7529, %v554
        %v7546 = vadd.f32 %v7530, %v551
        %v7547 = vadd.f32 %v7531, %v552
        %v7548 = vadd.f32 %v7532, %v553
        %v7549 = vadd.f32 %v7533, %v554
        %v7550 = vsel %vm1315, %v7534, -inf
        %7551 = vmax.xlane.f32.xlu0 %v7550
        %v7552 = vpop.xlane.xlu0 %7551
        %v7553 = vsel %vm1315, %v7535, -inf
        %7554 = vmax.xlane.f32.xlu0 %v7553
        %v7555 = vpop.xlane.xlu0 %7554
        %v7556 = vsel %vm1315, %v7536, -inf
        %7557 = vmax.xlane.f32.xlu0 %v7556
        %v7558 = vpop.xlane.xlu0 %7557
        %v7559 = vsel %vm1315, %v7537, -inf
        %7560 = vmax.xlane.f32.xlu0 %v7559
        %v7561 = vpop.xlane.xlu0 %7560
        %v7562 = vsel %vm1315, %v7538, -inf
        %7563 = vmax.xlane.f32.xlu0 %v7562
        %v7564 = vpop.xlane.xlu0 %7563
        %v7565 = vsel %vm1315, %v7539, -inf
        %7566 = vmax.xlane.f32.xlu0 %v7565
        %v7567 = vpop.xlane.xlu0 %7566
        %v7568 = vsel %vm1315, %v7540, -inf
        %7569 = vmax.xlane.f32.xlu0 %v7568
        %v7570 = vpop.xlane.xlu0 %7569
        %v7571 = vsel %vm1315, %v7541, -inf
        %7572 = vmax.xlane.f32.xlu0 %v7571
        %v7573 = vpop.xlane.xlu0 %7572
        %v7574 = vsel %vm1315, %v7542, -inf
        %7575 = vmax.xlane.f32.xlu0 %v7574
        %v7576 = vpop.xlane.xlu0 %7575
        %v7577 = vsel %vm1315, %v7543, -inf
        %7578 = vmax.xlane.f32.xlu0 %v7577
        %v7579 = vpop.xlane.xlu0 %7578
        %v7580 = vsel %vm1315, %v7544, -inf
        %7581 = vmax.xlane.f32.xlu0 %v7580
        %v7582 = vpop.xlane.xlu0 %7581
        %v7583 = vsel %vm1315, %v7545, -inf
        %7584 = vmax.xlane.f32.xlu0 %v7583
        %v7585 = vpop.xlane.xlu0 %7584
        %v7586 = vsel %vm1315, %v7546, -inf
        %7587 = vmax.xlane.f32.xlu0 %v7586
        %v7588 = vpop.xlane.xlu0 %7587
        %v7589 = vsel %vm1315, %v7547, -inf
        %7590 = vmax.xlane.f32.xlu0 %v7589
        %v7591 = vpop.xlane.xlu0 %7590
        %v7592 = vsel %vm1315, %v7548, -inf
        %7593 = vmax.xlane.f32.xlu0 %v7592
        %v7594 = vpop.xlane.xlu0 %7593
        %v7595 = vsel %vm1315, %v7549, -inf
        %7596 = vmax.xlane.f32.xlu0 %v7595
        %v7597 = vpop.xlane.xlu0 %7596
        %v7598 = vsub.f32 %v7534, %v7552
        %v7599 = vsub.f32 %v7535, %v7555
        %v7600 = vsub.f32 %v7536, %v7558
        %v7601 = vsub.f32 %v7537, %v7561
        %v7602 = vsub.f32 %v7538, %v7564
        %v7603 = vsub.f32 %v7539, %v7567
        %v7604 = vsub.f32 %v7540, %v7570
        %v7605 = vsub.f32 %v7541, %v7573
        %v7606 = vsub.f32 %v7542, %v7576
        %v7607 = vsub.f32 %v7543, %v7579
        %v7608 = vsub.f32 %v7544, %v7582
        %v7609 = vsub.f32 %v7545, %v7585
        %v7610 = vsub.f32 %v7546, %v7588
        %v7611 = vsub.f32 %v7547, %v7591
        %v7612 = vsub.f32 %v7548, %v7594
        %v7613 = vsub.f32 %v7549, %v7597
        %v7614 = vmul.f32 %v7598, 1.442695
        %v7615 = vpow.pop %v7614
        %v7616 = vmul.f32 %v7599, 1.442695
        %v7617 = vpow.pop %v7616
        %v7618 = vmul.f32 %v7600, 1.442695
        %v7619 = vpow.pop %v7618
        %v7620 = vmul.f32 %v7601, 1.442695
        %v7621 = vpow.pop %v7620
        %v7622 = vmul.f32 %v7602, 1.442695
        %v7623 = vpow.pop %v7622
        %v7624 = vmul.f32 %v7603, 1.442695
        %v7625 = vpow.pop %v7624
        %v7626 = vmul.f32 %v7604, 1.442695
        %v7627 = vpow.pop %v7626
        %v7628 = vmul.f32 %v7605, 1.442695
        %v7629 = vpow.pop %v7628
        %v7630 = vmul.f32 %v7606, 1.442695
        %v7631 = vpow.pop %v7630
        %v7632 = vmul.f32 %v7607, 1.442695
        %v7633 = vpow.pop %v7632
        %v7634 = vmul.f32 %v7608, 1.442695
        %v7635 = vpow.pop %v7634
        %v7636 = vmul.f32 %v7609, 1.442695
        %v7637 = vpow.pop %v7636
        %v7638 = vmul.f32 %v7610, 1.442695
        %v7639 = vpow.pop %v7638
        %v7640 = vmul.f32 %v7611, 1.442695
        %v7641 = vpow.pop %v7640
        %v7642 = vmul.f32 %v7612, 1.442695
        %v7643 = vpow.pop %v7642
        %v7644 = vmul.f32 %v7613, 1.442695
        %v7645 = vpow.pop %v7644
        %v7646 = vsel %vm1315, %v7615, 0.0
        %7647 = vadd.xlane.f32.xlu0 %v7646
        %v7648 = vpop.xlane.xlu0 %7647
        %v7649 = vsel %vm1315, %v7617, 0.0
        %7650 = vadd.xlane.f32.xlu0 %v7649
        %v7651 = vpop.xlane.xlu0 %7650
        %v7652 = vsel %vm1315, %v7619, 0.0
        %7653 = vadd.xlane.f32.xlu0 %v7652
        %v7654 = vpop.xlane.xlu0 %7653
        %v7655 = vsel %vm1315, %v7621, 0.0
        %7656 = vadd.xlane.f32.xlu0 %v7655
        %v7657 = vpop.xlane.xlu0 %7656
        %v7658 = vsel %vm1315, %v7623, 0.0
        %7659 = vadd.xlane.f32.xlu0 %v7658
        %v7660 = vpop.xlane.xlu0 %7659
        %v7661 = vsel %vm1315, %v7625, 0.0
        %7662 = vadd.xlane.f32.xlu0 %v7661
        %v7663 = vpop.xlane.xlu0 %7662
        %v7664 = vsel %vm1315, %v7627, 0.0
        %7665 = vadd.xlane.f32.xlu0 %v7664
        %v7666 = vpop.xlane.xlu0 %7665
        %v7667 = vsel %vm1315, %v7629, 0.0
        %7668 = vadd.xlane.f32.xlu0 %v7667
        %v7669 = vpop.xlane.xlu0 %7668
        %v7670 = vsel %vm1315, %v7631, 0.0
        %7671 = vadd.xlane.f32.xlu0 %v7670
        %v7672 = vpop.xlane.xlu0 %7671
        %v7673 = vsel %vm1315, %v7633, 0.0
        %7674 = vadd.xlane.f32.xlu0 %v7673
        %v7675 = vpop.xlane.xlu0 %7674
        %v7676 = vsel %vm1315, %v7635, 0.0
        %7677 = vadd.xlane.f32.xlu0 %v7676
        %v7678 = vpop.xlane.xlu0 %7677
        %v7679 = vsel %vm1315, %v7637, 0.0
        %7680 = vadd.xlane.f32.xlu0 %v7679
        %v7681 = vpop.xlane.xlu0 %7680
        %v7682 = vsel %vm1315, %v7639, 0.0
        %7683 = vadd.xlane.f32.xlu0 %v7682
        %v7684 = vpop.xlane.xlu0 %7683
        %v7685 = vsel %vm1315, %v7641, 0.0
        %7686 = vadd.xlane.f32.xlu0 %v7685
        %v7687 = vpop.xlane.xlu0 %7686
        %v7688 = vsel %vm1315, %v7643, 0.0
        %7689 = vadd.xlane.f32.xlu0 %v7688
        %v7690 = vpop.xlane.xlu0 %7689
        %v7691 = vsel %vm1315, %v7645, 0.0
        %7692 = vadd.xlane.f32.xlu0 %v7691
        %v7693 = vpop.xlane.xlu0 %7692
        %v7694 = vrcp.pop %v7648
        %v7695 = vrcp.pop %v7651
        %v7696 = vrcp.pop %v7654
        %v7697 = vrcp.pop %v7657
        %v7698 = vrcp.pop %v7660
        %v7699 = vrcp.pop %v7663
        %v7700 = vrcp.pop %v7666
        %v7701 = vrcp.pop %v7669
        %v7702 = vrcp.pop %v7672
        %v7703 = vrcp.pop %v7675
        %v7704 = vrcp.pop %v7678
        %v7705 = vrcp.pop %v7681
        %v7706 = vrcp.pop %v7684
        %v7707 = vrcp.pop %v7687
        %v7708 = vrcp.pop %v7690
        %v7709 = vrcp.pop %v7693
        %v7710 = vmul.f32 %v7615, %v7694
        %v7711 = vmul.f32 %v7617, %v7695
        %v7712 = vmul.f32 %v7619, %v7696
        %v7713 = vmul.f32 %v7621, %v7697
        %v7714 = vmul.f32 %v7623, %v7698
        %v7715 = vmul.f32 %v7625, %v7699
        %v7716 = vmul.f32 %v7627, %v7700
        %v7717 = vmul.f32 %v7629, %v7701
        %v7718 = vmul.f32 %v7631, %v7702
        %v7719 = vmul.f32 %v7633, %v7703
        %v7720 = vmul.f32 %v7635, %v7704
        %v7721 = vmul.f32 %v7637, %v7705
        %v7722 = vmul.f32 %v7639, %v7706
        %v7723 = vmul.f32 %v7641, %v7707
        %v7724 = vmul.f32 %v7643, %v7708
        %v7725 = vmul.f32 %v7645, %v7709
        %v7726 = vpack.c.bf16 %v7711, %v7710
        %v7727 = vpack.c.bf16 %v7713, %v7712
        %v7728 = vpack.c.bf16 %v7715, %v7714
        %v7729 = vpack.c.bf16 %v7717, %v7716
        %v7730 = vpack.c.bf16 %v7719, %v7718
        %v7731 = vpack.c.bf16 %v7721, %v7720
        %v7732 = vpack.c.bf16 %v7723, %v7722
        %v7733 = vpack.c.bf16 %v7725, %v7724
        %v7735 = vsel %vm1315, %v7726, 0
        %v7738 = vsel %vm1315, %v7727, 0
        %7740 = vmatprep.subr.bf16.mxu0 0
        %7741 = vmatpush1.bf16.msra.mxu0 0
        %7742 = vmatprep.subr.bf16.mxu0 0
        %7743 = vmatpush1.bf16.msra.mxu0 0
        %7744 = vmatprep.subr.bf16.mxu0 0
        %7745 = vmatpush1.bf16.msra.mxu0 0
        %7746 = vmatprep.subr.bf16.mxu0 0
        %7747 = vmatpush1.bf16.msra.mxu0 0
        %7748 = vmatprep.subr.bf16.mxu0 0
        %7749 = vmatpush1.bf16.msra.mxu0 0
        %7750 = vmatprep.subr.bf16.mxu0 0
        %7751 = vmatpush1.bf16.msra.mxu0 0
        %7752 = vmatprep.subr.bf16.mxu0 0
        %7753 = vmatpush1.bf16.msra.mxu0 %v7243
        %7754 = vmatprep.subr.bf16.mxu0 0
        %7755 = vmatpush1.bf16.msra.mxu0 %v7242
        %7756 = vmatprep.subr.bf16.mxu0 0
        %7757 = vmatpush2.bf16.msra.mxu0 0
        %7758 = vmatprep.subr.bf16.mxu0 0
        %7759 = vmatpush2.bf16.msra.mxu0 0
        %7760 = vmatprep.subr.bf16.mxu0 0
        %7761 = vmatpush2.bf16.msra.mxu0 0
        %7762 = vmatprep.subr.bf16.mxu0 0
        %7763 = vmatpush2.bf16.msra.mxu0 0
        %7764 = vmatprep.subr.bf16.mxu0 0
        %7765 = vmatpush2.bf16.msra.mxu0 0
        %7766 = vmatprep.subr.bf16.mxu0 0
        %7767 = vmatpush2.bf16.msra.mxu0 0
        %7768 = vmatprep.subr.bf16.mxu0 0
        %7769 = vmatpush2.bf16.msra.mxu0 0
        %7770 = vmatprep.subr.bf16.mxu0 0
        %7771 = vmatpush2.bf16.msra.mxu0 0
        %7772 = vmatprep.mubr.bf16.mxu0 0
        %7773 = vmatmul.mubr.bf16.gmra.mxu0 %v7735
        %v7774 = vpop.f32.mrf.mxu0
        %v7775 = vadd.f32 0.0, %v7774
        %v7776 = vpop.f32.mrf.mxu0
        %v7777 = vpop.f32.mrf.mxu0
        %v7778 = vadd.f32 0.0, %v7777
        %v7779 = vpop.f32.mrf.mxu0
        %7780 = vmatprep.mubr.bf16.mxu0 0
        %7781 = vmatmul.mubr.bf16.gmra.mxu0 %v7738
        %v7782 = vpop.f32.mrf.mxu0
        %v7783 = vadd.f32 0.0, %v7782
        %v7784 = vpop.f32.mrf.mxu0
        %v7785 = vpop.f32.mrf.mxu0
        %v7786 = vadd.f32 0.0, %v7785
        %v7787 = vpop.f32.mrf.mxu0
        %7788 = vdwg.mxu0
        %7791 = vrot.lane.b32.xlu0 %v7242, 112
        %v7792 = vpop.permute.xlu0 %7791
        %7793 = vrot.lane.b32.xlu0 %v7243, 112
        %v7794 = vpop.permute.xlu0 %7793
        %v7798 = vsel %vm1315, %v7728, 0
        %v7801 = vsel %vm1315, %v7729, 0
        %7803 = vmatprep.subr.bf16.mxu0 0
        %7804 = vmatpush1.bf16.msra.mxu0 0
        %7805 = vmatprep.subr.bf16.mxu0 0
        %7806 = vmatpush1.bf16.msra.mxu0 0
        %7807 = vmatprep.subr.bf16.mxu0 0
        %7808 = vmatpush1.bf16.msra.mxu0 0
        %7809 = vmatprep.subr.bf16.mxu0 0
        %7810 = vmatpush1.bf16.msra.mxu0 0
        %7811 = vmatprep.subr.bf16.mxu0 0
        %7812 = vmatpush1.bf16.msra.mxu0 0
        %7813 = vmatprep.subr.bf16.mxu0 0
        %7814 = vmatpush1.bf16.msra.mxu0 0
        %7815 = vmatprep.subr.bf16.mxu0 0
        %7816 = vmatpush1.bf16.msra.mxu0 %v7794
        %7817 = vmatprep.subr.bf16.mxu0 0
        %7818 = vmatpush1.bf16.msra.mxu0 %v7792
        %7819 = vmatprep.subr.bf16.mxu0 0
        %7820 = vmatpush2.bf16.msra.mxu0 0
        %7821 = vmatprep.subr.bf16.mxu0 0
        %7822 = vmatpush2.bf16.msra.mxu0 0
        %7823 = vmatprep.subr.bf16.mxu0 0
        %7824 = vmatpush2.bf16.msra.mxu0 0
        %7825 = vmatprep.subr.bf16.mxu0 0
        %7826 = vmatpush2.bf16.msra.mxu0 0
        %7827 = vmatprep.subr.bf16.mxu0 0
        %7828 = vmatpush2.bf16.msra.mxu0 0
        %7829 = vmatprep.subr.bf16.mxu0 0
        %7830 = vmatpush2.bf16.msra.mxu0 0
        %7831 = vmatprep.subr.bf16.mxu0 0
        %7832 = vmatpush2.bf16.msra.mxu0 0
        %7833 = vmatprep.subr.bf16.mxu0 0
        %7834 = vmatpush2.bf16.msra.mxu0 0
        %7835 = vmatprep.mubr.bf16.mxu0 0
        %7836 = vmatmul.mubr.bf16.gmra.mxu0 %v7798
        %v7837 = vpop.f32.mrf.mxu0
        %v7838 = vadd.f32 0.0, %v7837
        %v7839 = vpop.f32.mrf.mxu0
        %v7840 = vpop.f32.mrf.mxu0
        %v7841 = vadd.f32 0.0, %v7840
        %v7842 = vpop.f32.mrf.mxu0
        %7843 = vmatprep.mubr.bf16.mxu0 0
        %7844 = vmatmul.mubr.bf16.gmra.mxu0 %v7801
        %v7845 = vpop.f32.mrf.mxu0
        %v7846 = vadd.f32 0.0, %v7845
        %v7847 = vpop.f32.mrf.mxu0
        %v7848 = vpop.f32.mrf.mxu0
        %v7849 = vadd.f32 0.0, %v7848
        %v7850 = vpop.f32.mrf.mxu0
        %7851 = vdwg.mxu0
        %7852 = vrot.lane.b32.xlu0 %v7242, 96
        %v7853 = vpop.permute.xlu0 %7852
        %7854 = vrot.lane.b32.xlu0 %v7243, 96
        %v7855 = vpop.permute.xlu0 %7854
        %v7859 = vsel %vm1315, %v7730, 0
        %v7862 = vsel %vm1315, %v7731, 0
        %7864 = vmatprep.subr.bf16.mxu0 0
        %7865 = vmatpush1.bf16.msra.mxu0 0
        %7866 = vmatprep.subr.bf16.mxu0 0
        %7867 = vmatpush1.bf16.msra.mxu0 0
        %7868 = vmatprep.subr.bf16.mxu0 0
        %7869 = vmatpush1.bf16.msra.mxu0 0
        %7870 = vmatprep.subr.bf16.mxu0 0
        %7871 = vmatpush1.bf16.msra.mxu0 0
        %7872 = vmatprep.subr.bf16.mxu0 0
        %7873 = vmatpush1.bf16.msra.mxu0 0
        %7874 = vmatprep.subr.bf16.mxu0 0
        %7875 = vmatpush1.bf16.msra.mxu0 0
        %7876 = vmatprep.subr.bf16.mxu0 0
        %7877 = vmatpush1.bf16.msra.mxu0 %v7855
        %7878 = vmatprep.subr.bf16.mxu0 0
        %7879 = vmatpush1.bf16.msra.mxu0 %v7853
        %7880 = vmatprep.subr.bf16.mxu0 0
        %7881 = vmatpush2.bf16.msra.mxu0 0
        %7882 = vmatprep.subr.bf16.mxu0 0
        %7883 = vmatpush2.bf16.msra.mxu0 0
        %7884 = vmatprep.subr.bf16.mxu0 0
        %7885 = vmatpush2.bf16.msra.mxu0 0
        %7886 = vmatprep.subr.bf16.mxu0 0
        %7887 = vmatpush2.bf16.msra.mxu0 0
        %7888 = vmatprep.subr.bf16.mxu0 0
        %7889 = vmatpush2.bf16.msra.mxu0 0
        %7890 = vmatprep.subr.bf16.mxu0 0
        %7891 = vmatpush2.bf16.msra.mxu0 0
        %7892 = vmatprep.subr.bf16.mxu0 0
        %7893 = vmatpush2.bf16.msra.mxu0 0
        %7894 = vmatprep.subr.bf16.mxu0 0
        %7895 = vmatpush2.bf16.msra.mxu0 0
        %7896 = vmatprep.mubr.bf16.mxu0 0
        %7897 = vmatmul.mubr.bf16.gmra.mxu0 %v7859
        %v7898 = vpop.f32.mrf.mxu0
        %v7899 = vadd.f32 0.0, %v7898
        %v7900 = vpop.f32.mrf.mxu0
        %v7901 = vpop.f32.mrf.mxu0
        %v7902 = vadd.f32 0.0, %v7901
        %v7903 = vpop.f32.mrf.mxu0
        %7904 = vmatprep.mubr.bf16.mxu0 0
        %7905 = vmatmul.mubr.bf16.gmra.mxu0 %v7862
        %v7906 = vpop.f32.mrf.mxu0
        %v7907 = vadd.f32 0.0, %v7906
        %v7908 = vpop.f32.mrf.mxu0
        %v7909 = vpop.f32.mrf.mxu0
        %v7910 = vadd.f32 0.0, %v7909
        %v7911 = vpop.f32.mrf.mxu0
        %7912 = vdwg.mxu0
        %7913 = vrot.lane.b32.xlu0 %v7242, 80
        %v7914 = vpop.permute.xlu0 %7913
        %7915 = vrot.lane.b32.xlu0 %v7243, 80
        %v7916 = vpop.permute.xlu0 %7915
        %v7920 = vsel %vm1315, %v7732, 0
        %v7923 = vsel %vm1315, %v7733, 0
        %7925 = vmatprep.subr.bf16.mxu0 0
        %7926 = vmatpush1.bf16.msra.mxu0 0
        %7927 = vmatprep.subr.bf16.mxu0 0
        %7928 = vmatpush1.bf16.msra.mxu0 0
        %7929 = vmatprep.subr.bf16.mxu0 0
        %7930 = vmatpush1.bf16.msra.mxu0 0
        %7931 = vmatprep.subr.bf16.mxu0 0
        %7932 = vmatpush1.bf16.msra.mxu0 0
        %7933 = vmatprep.subr.bf16.mxu0 0
        %7934 = vmatpush1.bf16.msra.mxu0 0
        %7935 = vmatprep.subr.bf16.mxu0 0
        %7936 = vmatpush1.bf16.msra.mxu0 0
        %7937 = vmatprep.subr.bf16.mxu0 0
        %7938 = vmatpush1.bf16.msra.mxu0 %v7916
        %7939 = vmatprep.subr.bf16.mxu0 0
        %7940 = vmatpush1.bf16.msra.mxu0 %v7914
        %7941 = vmatprep.subr.bf16.mxu0 0
        %7942 = vmatpush2.bf16.msra.mxu0 0
        %7943 = vmatprep.subr.bf16.mxu0 0
        %7944 = vmatpush2.bf16.msra.mxu0 0
        %7945 = vmatprep.subr.bf16.mxu0 0
        %7946 = vmatpush2.bf16.msra.mxu0 0
        %7947 = vmatprep.subr.bf16.mxu0 0
        %7948 = vmatpush2.bf16.msra.mxu0 0
        %7949 = vmatprep.subr.bf16.mxu0 0
        %7950 = vmatpush2.bf16.msra.mxu0 0
        %7951 = vmatprep.subr.bf16.mxu0 0
        %7952 = vmatpush2.bf16.msra.mxu0 0
        %7953 = vmatprep.subr.bf16.mxu0 0
        %7954 = vmatpush2.bf16.msra.mxu0 0
        %7955 = vmatprep.subr.bf16.mxu0 0
        %7956 = vmatpush2.bf16.msra.mxu0 0
        %7957 = vmatprep.mubr.bf16.mxu0 0
        %7958 = vmatmul.mubr.bf16.gmra.mxu0 %v7920
        %v7959 = vpop.f32.mrf.mxu0
        %v7960 = vadd.f32 0.0, %v7959
        %v7961 = vpop.f32.mrf.mxu0
        %v7962 = vpop.f32.mrf.mxu0
        %v7963 = vadd.f32 0.0, %v7962
        %v7964 = vpop.f32.mrf.mxu0
        %7965 = vmatprep.mubr.bf16.mxu0 0
        %7966 = vmatmul.mubr.bf16.gmra.mxu0 %v7923
        %v7967 = vpop.f32.mrf.mxu0
        %v7968 = vadd.f32 0.0, %v7967
        %v7969 = vpop.f32.mrf.mxu0
        %v7970 = vpop.f32.mrf.mxu0
        %v7971 = vadd.f32 0.0, %v7970
        %v7972 = vpop.f32.mrf.mxu0
        %7973 = vdwg.mxu0
        %7978 = vrot.lane.b32.xlu0 %v7838, 16
        %v7979 = vpop.permute.xlu0 %7978
        %7980 = vrot.lane.b32.xlu0 %v7841, 16
        %v7981 = vpop.permute.xlu0 %7980
        %7982 = vrot.lane.b32.xlu0 %v7846, 16
        %v7983 = vpop.permute.xlu0 %7982
        %7984 = vrot.lane.b32.xlu0 %v7849, 16
        %v7985 = vpop.permute.xlu0 %7984
        %7994 = vrot.lane.b32.xlu0 %v7899, 32
        %v7995 = vpop.permute.xlu0 %7994
        %7996 = vrot.lane.b32.xlu0 %v7902, 32
        %v7997 = vpop.permute.xlu0 %7996
        %7998 = vrot.lane.b32.xlu0 %v7907, 32
        %v7999 = vpop.permute.xlu0 %7998
        %8000 = vrot.lane.b32.xlu0 %v7910, 32
        %v8001 = vpop.permute.xlu0 %8000
        %8010 = vrot.lane.b32.xlu0 %v7960, 48
        %v8011 = vpop.permute.xlu0 %8010
        %8012 = vrot.lane.b32.xlu0 %v7963, 48
        %v8013 = vpop.permute.xlu0 %8012
        %8014 = vrot.lane.b32.xlu0 %v7968, 48
        %v8015 = vpop.permute.xlu0 %8014
        %8016 = vrot.lane.b32.xlu0 %v7971, 48
        %v8017 = vpop.permute.xlu0 %8016
        %v8022 = vsel %vm1014, %v7775, %v7979
        %v8023 = vsel %vm1014, %v7778, %v7981
        %v8024 = vsel %vm1014, %v7783, %v7983
        %v8025 = vsel %vm1014, %v7786, %v7985
        %v8026 = vsel %vm1315, %v8022, %v7995
        %v8027 = vsel %vm1315, %v8023, %v7997
        %v8028 = vsel %vm1315, %v8024, %v7999
        %v8029 = vsel %vm1315, %v8025, %v8001
        %v8030 = vsel %vm1796, %v8026, %v8011
        %v8031 = vsel %vm1796, %v8027, %v8013
        %v8032 = vsel %vm1796, %v8028, %v8015
        %v8033 = vsel %vm1796, %v8029, %v8017
        %v8034 = vpack.c.bf16 %v5638, %v5634
        %v8035 = vpack.c.bf16 %v5648, %v5644
        %v8036 = vpack.c.bf16 %v5640, %v5636
        %v8037 = vpack.c.bf16 %v5650, %v5646
        %8040 = vrot.lane.b32.xlu0 %v8034, 64
        %v8041 = vpop.permute.xlu0 %8040
        %8042 = vrot.lane.b32.xlu0 %v8035, 64
        %v8043 = vpop.permute.xlu0 %8042
        %v8045 = vsel %vm1014, %v8034, 0
        %v8048 = vsel %vm1014, %v8035, 0
        %v8051 = vsel %vm1014, %v8041, 0
        %v8054 = vsel %vm1014, %v8043, 0
        %8056 = vmatprep.subr.bf16.mxu0 0
        %8057 = vmatpush1.bf16.xpose.msra.mxu0 0
        %8058 = vmatprep.subr.bf16.mxu0 0
        %8059 = vmatpush1.bf16.xpose.msra.mxu0 0
        %8060 = vmatprep.subr.bf16.mxu0 0
        %8061 = vmatpush1.bf16.xpose.msra.mxu0 0
        %8062 = vmatprep.subr.bf16.mxu0 0
        %8063 = vmatpush1.bf16.xpose.msra.mxu0 0
        %8064 = vmatprep.subr.bf16.mxu0 0
        %8065 = vmatpush1.bf16.xpose.msra.mxu0 0
        %8066 = vmatprep.subr.bf16.mxu0 0
        %8067 = vmatpush1.bf16.xpose.msra.mxu0 0
        %8068 = vmatprep.subr.bf16.mxu0 0
        %8069 = vmatpush1.bf16.xpose.msra.mxu0 %v8054
        %8070 = vmatprep.subr.bf16.mxu0 0
        %8071 = vmatpush1.bf16.xpose.msra.mxu0 %v8051
        %8072 = vmatprep.subr.bf16.mxu0 0
        %8073 = vmatpush2.bf16.xpose.msra.mxu0 0
        %8074 = vmatprep.subr.bf16.mxu0 0
        %8075 = vmatpush2.bf16.xpose.msra.mxu0 0
        %8076 = vmatprep.subr.bf16.mxu0 0
        %8077 = vmatpush2.bf16.xpose.msra.mxu0 0
        %8078 = vmatprep.subr.bf16.mxu0 0
        %8079 = vmatpush2.bf16.xpose.msra.mxu0 0
        %8080 = vmatprep.subr.bf16.mxu0 0
        %8081 = vmatpush2.bf16.xpose.msra.mxu0 0
        %8082 = vmatprep.subr.bf16.mxu0 0
        %8083 = vmatpush2.bf16.xpose.msra.mxu0 0
        %8084 = vmatprep.subr.bf16.mxu0 0
        %8085 = vmatpush2.bf16.xpose.msra.mxu0 0
        %8086 = vmatprep.subr.bf16.mxu0 0
        %8087 = vmatpush2.bf16.xpose.msra.mxu0 0
        %8088 = vmatprep.mubr.bf16.mxu0 0
        %8089 = vmatmul.mubr.bf16.gmra.mxu0 %v8045
        %v8090 = vpop.f32.mrf.mxu0
        %v8091 = vadd.f32 0.0, %v8090
        %v8092 = vpop.f32.mrf.mxu0
        %v8093 = vpop.f32.mrf.mxu0
        %v8094 = vadd.f32 0.0, %v8093
        %v8095 = vpop.f32.mrf.mxu0
        %8096 = vmatprep.mubr.bf16.mxu0 0
        %8097 = vmatmul.mubr.bf16.gmra.mxu0 %v8048
        %v8098 = vpop.f32.mrf.mxu0
        %v8099 = vadd.f32 0.0, %v8098
        %v8100 = vpop.f32.mrf.mxu0
        %v8101 = vpop.f32.mrf.mxu0
        %v8102 = vadd.f32 0.0, %v8101
        %v8103 = vpop.f32.mrf.mxu0
        %8104 = vdwg.mxu0
        %8105 = vrot.lane.b32.xlu0 %v8034, 112
        %v8106 = vpop.permute.xlu0 %8105
        %8107 = vrot.lane.b32.xlu0 %v8035, 112
        %v8108 = vpop.permute.xlu0 %8107
        %8109 = vrot.lane.b32.xlu0 %v8034, 48
        %v8110 = vpop.permute.xlu0 %8109
        %8111 = vrot.lane.b32.xlu0 %v8035, 48
        %v8112 = vpop.permute.xlu0 %8111
        %v8114 = vsel %vm1014, %v8106, 0
        %v8117 = vsel %vm1014, %v8108, 0
        %v8120 = vsel %vm1014, %v8110, 0
        %v8123 = vsel %vm1014, %v8112, 0
        %8125 = vmatprep.subr.bf16.mxu0 0
        %8126 = vmatpush1.bf16.xpose.msra.mxu0 0
        %8127 = vmatprep.subr.bf16.mxu0 0
        %8128 = vmatpush1.bf16.xpose.msra.mxu0 0
        %8129 = vmatprep.subr.bf16.mxu0 0
        %8130 = vmatpush1.bf16.xpose.msra.mxu0 0
        %8131 = vmatprep.subr.bf16.mxu0 0
        %8132 = vmatpush1.bf16.xpose.msra.mxu0 0
        %8133 = vmatprep.subr.bf16.mxu0 0
        %8134 = vmatpush1.bf16.xpose.msra.mxu0 0
        %8135 = vmatprep.subr.bf16.mxu0 0
        %8136 = vmatpush1.bf16.xpose.msra.mxu0 0
        %8137 = vmatprep.subr.bf16.mxu0 0
        %8138 = vmatpush1.bf16.xpose.msra.mxu0 %v8123
        %8139 = vmatprep.subr.bf16.mxu0 0
        %8140 = vmatpush1.bf16.xpose.msra.mxu0 %v8120
        %8141 = vmatprep.subr.bf16.mxu0 0
        %8142 = vmatpush2.bf16.xpose.msra.mxu0 0
        %8143 = vmatprep.subr.bf16.mxu0 0
        %8144 = vmatpush2.bf16.xpose.msra.mxu0 0
        %8145 = vmatprep.subr.bf16.mxu0 0
        %8146 = vmatpush2.bf16.xpose.msra.mxu0 0
        %8147 = vmatprep.subr.bf16.mxu0 0
        %8148 = vmatpush2.bf16.xpose.msra.mxu0 0
        %8149 = vmatprep.subr.bf16.mxu0 0
        %8150 = vmatpush2.bf16.xpose.msra.mxu0 0
        %8151 = vmatprep.subr.bf16.mxu0 0
        %8152 = vmatpush2.bf16.xpose.msra.mxu0 0
        %8153 = vmatprep.subr.bf16.mxu0 0
        %8154 = vmatpush2.bf16.xpose.msra.mxu0 0
        %8155 = vmatprep.subr.bf16.mxu0 0
        %8156 = vmatpush2.bf16.xpose.msra.mxu0 0
        %8157 = vmatprep.mubr.bf16.mxu0 0
        %8158 = vmatmul.mubr.bf16.gmra.mxu0 %v8114
        %v8159 = vpop.f32.mrf.mxu0
        %v8160 = vadd.f32 0.0, %v8159
        %v8161 = vpop.f32.mrf.mxu0
        %v8162 = vpop.f32.mrf.mxu0
        %v8163 = vadd.f32 0.0, %v8162
        %v8164 = vpop.f32.mrf.mxu0
        %8165 = vmatprep.mubr.bf16.mxu0 0
        %8166 = vmatmul.mubr.bf16.gmra.mxu0 %v8117
        %v8167 = vpop.f32.mrf.mxu0
        %v8168 = vadd.f32 0.0, %v8167
        %v8169 = vpop.f32.mrf.mxu0
        %v8170 = vpop.f32.mrf.mxu0
        %v8171 = vadd.f32 0.0, %v8170
        %v8172 = vpop.f32.mrf.mxu0
        %8173 = vdwg.mxu0
        %8174 = vrot.lane.b32.xlu0 %v8034, 96
        %v8175 = vpop.permute.xlu0 %8174
        %8176 = vrot.lane.b32.xlu0 %v8035, 96
        %v8177 = vpop.permute.xlu0 %8176
        %8178 = vrot.lane.b32.xlu0 %v8034, 32
        %v8179 = vpop.permute.xlu0 %8178
        %8180 = vrot.lane.b32.xlu0 %v8035, 32
        %v8181 = vpop.permute.xlu0 %8180
        %v8183 = vsel %vm1014, %v8175, 0
        %v8186 = vsel %vm1014, %v8177, 0
        %v8189 = vsel %vm1014, %v8179, 0
        %v8192 = vsel %vm1014, %v8181, 0
        %8194 = vmatprep.subr.bf16.mxu0 0
        %8195 = vmatpush1.bf16.xpose.msra.mxu0 0
        %8196 = vmatprep.subr.bf16.mxu0 0
        %8197 = vmatpush1.bf16.xpose.msra.mxu0 0
        %8198 = vmatprep.subr.bf16.mxu0 0
        %8199 = vmatpush1.bf16.xpose.msra.mxu0 0
        %8200 = vmatprep.subr.bf16.mxu0 0
        %8201 = vmatpush1.bf16.xpose.msra.mxu0 0
        %8202 = vmatprep.subr.bf16.mxu0 0
        %8203 = vmatpush1.bf16.xpose.msra.mxu0 0
        %8204 = vmatprep.subr.bf16.mxu0 0
        %8205 = vmatpush1.bf16.xpose.msra.mxu0 0
        %8206 = vmatprep.subr.bf16.mxu0 0
        %8207 = vmatpush1.bf16.xpose.msra.mxu0 %v8192
        %8208 = vmatprep.subr.bf16.mxu0 0
        %8209 = vmatpush1.bf16.xpose.msra.mxu0 %v8189
        %8210 = vmatprep.subr.bf16.mxu0 0
        %8211 = vmatpush2.bf16.xpose.msra.mxu0 0
        %8212 = vmatprep.subr.bf16.mxu0 0
        %8213 = vmatpush2.bf16.xpose.msra.mxu0 0
        %8214 = vmatprep.subr.bf16.mxu0 0
        %8215 = vmatpush2.bf16.xpose.msra.mxu0 0
        %8216 = vmatprep.subr.bf16.mxu0 0
        %8217 = vmatpush2.bf16.xpose.msra.mxu0 0
        %8218 = vmatprep.subr.bf16.mxu0 0
        %8219 = vmatpush2.bf16.xpose.msra.mxu0 0
        %8220 = vmatprep.subr.bf16.mxu0 0
        %8221 = vmatpush2.bf16.xpose.msra.mxu0 0
        %8222 = vmatprep.subr.bf16.mxu0 0
        %8223 = vmatpush2.bf16.xpose.msra.mxu0 0
        %8224 = vmatprep.subr.bf16.mxu0 0
        %8225 = vmatpush2.bf16.xpose.msra.mxu0 0
        %8226 = vmatprep.mubr.bf16.mxu0 0
        %8227 = vmatmul.mubr.bf16.gmra.mxu0 %v8183
        %v8228 = vpop.f32.mrf.mxu0
        %v8229 = vadd.f32 0.0, %v8228
        %v8230 = vpop.f32.mrf.mxu0
        %v8231 = vpop.f32.mrf.mxu0
        %v8232 = vadd.f32 0.0, %v8231
        %v8233 = vpop.f32.mrf.mxu0
        %8234 = vmatprep.mubr.bf16.mxu0 0
        %8235 = vmatmul.mubr.bf16.gmra.mxu0 %v8186
        %v8236 = vpop.f32.mrf.mxu0
        %v8237 = vadd.f32 0.0, %v8236
        %v8238 = vpop.f32.mrf.mxu0
        %v8239 = vpop.f32.mrf.mxu0
        %v8240 = vadd.f32 0.0, %v8239
        %v8241 = vpop.f32.mrf.mxu0
        %8242 = vdwg.mxu0
        %8243 = vrot.lane.b32.xlu0 %v8034, 80
        %v8244 = vpop.permute.xlu0 %8243
        %8245 = vrot.lane.b32.xlu0 %v8035, 80
        %v8246 = vpop.permute.xlu0 %8245
        %8247 = vrot.lane.b32.xlu0 %v8034, 16
        %v8248 = vpop.permute.xlu0 %8247
        %8249 = vrot.lane.b32.xlu0 %v8035, 16
        %v8250 = vpop.permute.xlu0 %8249
        %v8252 = vsel %vm1014, %v8244, 0
        %v8255 = vsel %vm1014, %v8246, 0
        %v8258 = vsel %vm1014, %v8248, 0
        %v8261 = vsel %vm1014, %v8250, 0
        %8263 = vmatprep.subr.bf16.mxu0 0
        %8264 = vmatpush1.bf16.xpose.msra.mxu0 0
        %8265 = vmatprep.subr.bf16.mxu0 0
        %8266 = vmatpush1.bf16.xpose.msra.mxu0 0
        %8267 = vmatprep.subr.bf16.mxu0 0
        %8268 = vmatpush1.bf16.xpose.msra.mxu0 0
        %8269 = vmatprep.subr.bf16.mxu0 0
        %8270 = vmatpush1.bf16.xpose.msra.mxu0 0
        %8271 = vmatprep.subr.bf16.mxu0 0
        %8272 = vmatpush1.bf16.xpose.msra.mxu0 0
        %8273 = vmatprep.subr.bf16.mxu0 0
        %8274 = vmatpush1.bf16.xpose.msra.mxu0 0
        %8275 = vmatprep.subr.bf16.mxu0 0
        %8276 = vmatpush1.bf16.xpose.msra.mxu0 %v8261
        %8277 = vmatprep.subr.bf16.mxu0 0
        %8278 = vmatpush1.bf16.xpose.msra.mxu0 %v8258
        %8279 = vmatprep.subr.bf16.mxu0 0
        %8280 = vmatpush2.bf16.xpose.msra.mxu0 0
        %8281 = vmatprep.subr.bf16.mxu0 0
        %8282 = vmatpush2.bf16.xpose.msra.mxu0 0
        %8283 = vmatprep.subr.bf16.mxu0 0
        %8284 = vmatpush2.bf16.xpose.msra.mxu0 0
        %8285 = vmatprep.subr.bf16.mxu0 0
        %8286 = vmatpush2.bf16.xpose.msra.mxu0 0
        %8287 = vmatprep.subr.bf16.mxu0 0
        %8288 = vmatpush2.bf16.xpose.msra.mxu0 0
        %8289 = vmatprep.subr.bf16.mxu0 0
        %8290 = vmatpush2.bf16.xpose.msra.mxu0 0
        %8291 = vmatprep.subr.bf16.mxu0 0
        %8292 = vmatpush2.bf16.xpose.msra.mxu0 0
        %8293 = vmatprep.subr.bf16.mxu0 0
        %8294 = vmatpush2.bf16.xpose.msra.mxu0 0
        %8295 = vmatprep.mubr.bf16.mxu0 0
        %8296 = vmatmul.mubr.bf16.gmra.mxu0 %v8252
        %v8297 = vpop.f32.mrf.mxu0
        %v8298 = vadd.f32 0.0, %v8297
        %v8299 = vpop.f32.mrf.mxu0
        %v8300 = vpop.f32.mrf.mxu0
        %v8301 = vadd.f32 0.0, %v8300
        %v8302 = vpop.f32.mrf.mxu0
        %8303 = vmatprep.mubr.bf16.mxu0 0
        %8304 = vmatmul.mubr.bf16.gmra.mxu0 %v8255
        %v8305 = vpop.f32.mrf.mxu0
        %v8306 = vadd.f32 0.0, %v8305
        %v8307 = vpop.f32.mrf.mxu0
        %v8308 = vpop.f32.mrf.mxu0
        %v8309 = vadd.f32 0.0, %v8308
        %v8310 = vpop.f32.mrf.mxu0
        %8311 = vdwg.mxu0
        %v8312 = vmul.f32 %v8091, 0.25
        %v8313 = vmul.f32 %v8094, 0.25
        %v8314 = vmul.f32 %v8099, 0.25
        %v8315 = vmul.f32 %v8102, 0.25
        %v8316 = vmul.f32 %v8160, 0.25
        %v8317 = vmul.f32 %v8163, 0.25
        %v8318 = vmul.f32 %v8168, 0.25
        %v8319 = vmul.f32 %v8171, 0.25
        %v8320 = vmul.f32 %v8229, 0.25
        %v8321 = vmul.f32 %v8232, 0.25
        %v8322 = vmul.f32 %v8237, 0.25
        %v8323 = vmul.f32 %v8240, 0.25
        %v8324 = vmul.f32 %v8298, 0.25
        %v8325 = vmul.f32 %v8301, 0.25
        %v8326 = vmul.f32 %v8306, 0.25
        %v8327 = vmul.f32 %v8309, 0.25
        %v8328 = vadd.f32 %v8312, %v551
        %v8329 = vadd.f32 %v8313, %v552
        %v8330 = vadd.f32 %v8314, %v553
        %v8331 = vadd.f32 %v8315, %v554
        %v8332 = vadd.f32 %v8316, %v551
        %v8333 = vadd.f32 %v8317, %v552
        %v8334 = vadd.f32 %v8318, %v553
        %v8335 = vadd.f32 %v8319, %v554
        %v8336 = vadd.f32 %v8320, %v551
        %v8337 = vadd.f32 %v8321, %v552
        %v8338 = vadd.f32 %v8322, %v553
        %v8339 = vadd.f32 %v8323, %v554
        %v8340 = vadd.f32 %v8324, %v551
        %v8341 = vadd.f32 %v8325, %v552
        %v8342 = vadd.f32 %v8326, %v553
        %v8343 = vadd.f32 %v8327, %v554
        %v8344 = vsel %vm1315, %v8328, -inf
        %8345 = vmax.xlane.f32.xlu0 %v8344
        %v8346 = vpop.xlane.xlu0 %8345
        %v8347 = vsel %vm1315, %v8329, -inf
        %8348 = vmax.xlane.f32.xlu0 %v8347
        %v8349 = vpop.xlane.xlu0 %8348
        %v8350 = vsel %vm1315, %v8330, -inf
        %8351 = vmax.xlane.f32.xlu0 %v8350
        %v8352 = vpop.xlane.xlu0 %8351
        %v8353 = vsel %vm1315, %v8331, -inf
        %8354 = vmax.xlane.f32.xlu0 %v8353
        %v8355 = vpop.xlane.xlu0 %8354
        %v8356 = vsel %vm1315, %v8332, -inf
        %8357 = vmax.xlane.f32.xlu0 %v8356
        %v8358 = vpop.xlane.xlu0 %8357
        %v8359 = vsel %vm1315, %v8333, -inf
        %8360 = vmax.xlane.f32.xlu0 %v8359
        %v8361 = vpop.xlane.xlu0 %8360
        %v8362 = vsel %vm1315, %v8334, -inf
        %8363 = vmax.xlane.f32.xlu0 %v8362
        %v8364 = vpop.xlane.xlu0 %8363
        %v8365 = vsel %vm1315, %v8335, -inf
        %8366 = vmax.xlane.f32.xlu0 %v8365
        %v8367 = vpop.xlane.xlu0 %8366
        %v8368 = vsel %vm1315, %v8336, -inf
        %8369 = vmax.xlane.f32.xlu0 %v8368
        %v8370 = vpop.xlane.xlu0 %8369
        %v8371 = vsel %vm1315, %v8337, -inf
        %8372 = vmax.xlane.f32.xlu0 %v8371
        %v8373 = vpop.xlane.xlu0 %8372
        %v8374 = vsel %vm1315, %v8338, -inf
        %8375 = vmax.xlane.f32.xlu0 %v8374
        %v8376 = vpop.xlane.xlu0 %8375
        %v8377 = vsel %vm1315, %v8339, -inf
        %8378 = vmax.xlane.f32.xlu0 %v8377
        %v8379 = vpop.xlane.xlu0 %8378
        %v8380 = vsel %vm1315, %v8340, -inf
        %8381 = vmax.xlane.f32.xlu0 %v8380
        %v8382 = vpop.xlane.xlu0 %8381
        %v8383 = vsel %vm1315, %v8341, -inf
        %8384 = vmax.xlane.f32.xlu0 %v8383
        %v8385 = vpop.xlane.xlu0 %8384
        %v8386 = vsel %vm1315, %v8342, -inf
        %8387 = vmax.xlane.f32.xlu0 %v8386
        %v8388 = vpop.xlane.xlu0 %8387
        %v8389 = vsel %vm1315, %v8343, -inf
        %8390 = vmax.xlane.f32.xlu0 %v8389
        %v8391 = vpop.xlane.xlu0 %8390
        %v8392 = vsub.f32 %v8328, %v8346
        %v8393 = vsub.f32 %v8329, %v8349
        %v8394 = vsub.f32 %v8330, %v8352
        %v8395 = vsub.f32 %v8331, %v8355
        %v8396 = vsub.f32 %v8332, %v8358
        %v8397 = vsub.f32 %v8333, %v8361
        %v8398 = vsub.f32 %v8334, %v8364
        %v8399 = vsub.f32 %v8335, %v8367
        %v8400 = vsub.f32 %v8336, %v8370
        %v8401 = vsub.f32 %v8337, %v8373
        %v8402 = vsub.f32 %v8338, %v8376
        %v8403 = vsub.f32 %v8339, %v8379
        %v8404 = vsub.f32 %v8340, %v8382
        %v8405 = vsub.f32 %v8341, %v8385
        %v8406 = vsub.f32 %v8342, %v8388
        %v8407 = vsub.f32 %v8343, %v8391
        %v8408 = vmul.f32 %v8392, 1.442695
        %v8409 = vpow.pop %v8408
        %v8410 = vmul.f32 %v8393, 1.442695
        %v8411 = vpow.pop %v8410
        %v8412 = vmul.f32 %v8394, 1.442695
        %v8413 = vpow.pop %v8412
        %v8414 = vmul.f32 %v8395, 1.442695
        %v8415 = vpow.pop %v8414
        %v8416 = vmul.f32 %v8396, 1.442695
        %v8417 = vpow.pop %v8416
        %v8418 = vmul.f32 %v8397, 1.442695
        %v8419 = vpow.pop %v8418
        %v8420 = vmul.f32 %v8398, 1.442695
        %v8421 = vpow.pop %v8420
        %v8422 = vmul.f32 %v8399, 1.442695
        %v8423 = vpow.pop %v8422
        %v8424 = vmul.f32 %v8400, 1.442695
        %v8425 = vpow.pop %v8424
        %v8426 = vmul.f32 %v8401, 1.442695
        %v8427 = vpow.pop %v8426
        %v8428 = vmul.f32 %v8402, 1.442695
        %v8429 = vpow.pop %v8428
        %v8430 = vmul.f32 %v8403, 1.442695
        %v8431 = vpow.pop %v8430
        %v8432 = vmul.f32 %v8404, 1.442695
        %v8433 = vpow.pop %v8432
        %v8434 = vmul.f32 %v8405, 1.442695
        %v8435 = vpow.pop %v8434
        %v8436 = vmul.f32 %v8406, 1.442695
        %v8437 = vpow.pop %v8436
        %v8438 = vmul.f32 %v8407, 1.442695
        %v8439 = vpow.pop %v8438
        %v8440 = vsel %vm1315, %v8409, 0.0
        %8441 = vadd.xlane.f32.xlu0 %v8440
        %v8442 = vpop.xlane.xlu0 %8441
        %v8443 = vsel %vm1315, %v8411, 0.0
        %8444 = vadd.xlane.f32.xlu0 %v8443
        %v8445 = vpop.xlane.xlu0 %8444
        %v8446 = vsel %vm1315, %v8413, 0.0
        %8447 = vadd.xlane.f32.xlu0 %v8446
        %v8448 = vpop.xlane.xlu0 %8447
        %v8449 = vsel %vm1315, %v8415, 0.0
        %8450 = vadd.xlane.f32.xlu0 %v8449
        %v8451 = vpop.xlane.xlu0 %8450
        %v8452 = vsel %vm1315, %v8417, 0.0
        %8453 = vadd.xlane.f32.xlu0 %v8452
        %v8454 = vpop.xlane.xlu0 %8453
        %v8455 = vsel %vm1315, %v8419, 0.0
        %8456 = vadd.xlane.f32.xlu0 %v8455
        %v8457 = vpop.xlane.xlu0 %8456
        %v8458 = vsel %vm1315, %v8421, 0.0
        %8459 = vadd.xlane.f32.xlu0 %v8458
        %v8460 = vpop.xlane.xlu0 %8459
        %v8461 = vsel %vm1315, %v8423, 0.0
        %8462 = vadd.xlane.f32.xlu0 %v8461
        %v8463 = vpop.xlane.xlu0 %8462
        %v8464 = vsel %vm1315, %v8425, 0.0
        %8465 = vadd.xlane.f32.xlu0 %v8464
        %v8466 = vpop.xlane.xlu0 %8465
        %v8467 = vsel %vm1315, %v8427, 0.0
        %8468 = vadd.xlane.f32.xlu0 %v8467
        %v8469 = vpop.xlane.xlu0 %8468
        %v8470 = vsel %vm1315, %v8429, 0.0
        %8471 = vadd.xlane.f32.xlu0 %v8470
        %v8472 = vpop.xlane.xlu0 %8471
        %v8473 = vsel %vm1315, %v8431, 0.0
        %8474 = vadd.xlane.f32.xlu0 %v8473
        %v8475 = vpop.xlane.xlu0 %8474
        %v8476 = vsel %vm1315, %v8433, 0.0
        %8477 = vadd.xlane.f32.xlu0 %v8476
        %v8478 = vpop.xlane.xlu0 %8477
        %v8479 = vsel %vm1315, %v8435, 0.0
        %8480 = vadd.xlane.f32.xlu0 %v8479
        %v8481 = vpop.xlane.xlu0 %8480
        %v8482 = vsel %vm1315, %v8437, 0.0
        %8483 = vadd.xlane.f32.xlu0 %v8482
        %v8484 = vpop.xlane.xlu0 %8483
        %v8485 = vsel %vm1315, %v8439, 0.0
        %8486 = vadd.xlane.f32.xlu0 %v8485
        %v8487 = vpop.xlane.xlu0 %8486
        %v8488 = vrcp.pop %v8442
        %v8489 = vrcp.pop %v8445
        %v8490 = vrcp.pop %v8448
        %v8491 = vrcp.pop %v8451
        %v8492 = vrcp.pop %v8454
        %v8493 = vrcp.pop %v8457
        %v8494 = vrcp.pop %v8460
        %v8495 = vrcp.pop %v8463
        %v8496 = vrcp.pop %v8466
        %v8497 = vrcp.pop %v8469
        %v8498 = vrcp.pop %v8472
        %v8499 = vrcp.pop %v8475
        %v8500 = vrcp.pop %v8478
        %v8501 = vrcp.pop %v8481
        %v8502 = vrcp.pop %v8484
        %v8503 = vrcp.pop %v8487
        %v8504 = vmul.f32 %v8409, %v8488
        %v8505 = vmul.f32 %v8411, %v8489
        %v8506 = vmul.f32 %v8413, %v8490
        %v8507 = vmul.f32 %v8415, %v8491
        %v8508 = vmul.f32 %v8417, %v8492
        %v8509 = vmul.f32 %v8419, %v8493
        %v8510 = vmul.f32 %v8421, %v8494
        %v8511 = vmul.f32 %v8423, %v8495
        %v8512 = vmul.f32 %v8425, %v8496
        %v8513 = vmul.f32 %v8427, %v8497
        %v8514 = vmul.f32 %v8429, %v8498
        %v8515 = vmul.f32 %v8431, %v8499
        %v8516 = vmul.f32 %v8433, %v8500
        %v8517 = vmul.f32 %v8435, %v8501
        %v8518 = vmul.f32 %v8437, %v8502
        %v8519 = vmul.f32 %v8439, %v8503
        %v8520 = vpack.c.bf16 %v8505, %v8504
        %v8521 = vpack.c.bf16 %v8507, %v8506
        %v8522 = vpack.c.bf16 %v8509, %v8508
        %v8523 = vpack.c.bf16 %v8511, %v8510
        %v8524 = vpack.c.bf16 %v8513, %v8512
        %v8525 = vpack.c.bf16 %v8515, %v8514
        %v8526 = vpack.c.bf16 %v8517, %v8516
        %v8527 = vpack.c.bf16 %v8519, %v8518
        %v8529 = vsel %vm1315, %v8520, 0
        %v8532 = vsel %vm1315, %v8521, 0
        %8534 = vmatprep.subr.bf16.mxu0 0
        %8535 = vmatpush1.bf16.msra.mxu0 0
        %8536 = vmatprep.subr.bf16.mxu0 0
        %8537 = vmatpush1.bf16.msra.mxu0 0
        %8538 = vmatprep.subr.bf16.mxu0 0
        %8539 = vmatpush1.bf16.msra.mxu0 0
        %8540 = vmatprep.subr.bf16.mxu0 0
        %8541 = vmatpush1.bf16.msra.mxu0 0
        %8542 = vmatprep.subr.bf16.mxu0 0
        %8543 = vmatpush1.bf16.msra.mxu0 0
        %8544 = vmatprep.subr.bf16.mxu0 0
        %8545 = vmatpush1.bf16.msra.mxu0 0
        %8546 = vmatprep.subr.bf16.mxu0 0
        %8547 = vmatpush1.bf16.msra.mxu0 %v8037
        %8548 = vmatprep.subr.bf16.mxu0 0
        %8549 = vmatpush1.bf16.msra.mxu0 %v8036
        %8550 = vmatprep.subr.bf16.mxu0 0
        %8551 = vmatpush2.bf16.msra.mxu0 0
        %8552 = vmatprep.subr.bf16.mxu0 0
        %8553 = vmatpush2.bf16.msra.mxu0 0
        %8554 = vmatprep.subr.bf16.mxu0 0
        %8555 = vmatpush2.bf16.msra.mxu0 0
        %8556 = vmatprep.subr.bf16.mxu0 0
        %8557 = vmatpush2.bf16.msra.mxu0 0
        %8558 = vmatprep.subr.bf16.mxu0 0
        %8559 = vmatpush2.bf16.msra.mxu0 0
        %8560 = vmatprep.subr.bf16.mxu0 0
        %8561 = vmatpush2.bf16.msra.mxu0 0
        %8562 = vmatprep.subr.bf16.mxu0 0
        %8563 = vmatpush2.bf16.msra.mxu0 0
        %8564 = vmatprep.subr.bf16.mxu0 0
        %8565 = vmatpush2.bf16.msra.mxu0 0
        %8566 = vmatprep.mubr.bf16.mxu0 0
        %8567 = vmatmul.mubr.bf16.gmra.mxu0 %v8529
        %v8568 = vpop.f32.mrf.mxu0
        %v8569 = vadd.f32 0.0, %v8568
        %v8570 = vpop.f32.mrf.mxu0
        %v8571 = vpop.f32.mrf.mxu0
        %v8572 = vadd.f32 0.0, %v8571
        %v8573 = vpop.f32.mrf.mxu0
        %8574 = vmatprep.mubr.bf16.mxu0 0
        %8575 = vmatmul.mubr.bf16.gmra.mxu0 %v8532
        %v8576 = vpop.f32.mrf.mxu0
        %v8577 = vadd.f32 0.0, %v8576
        %v8578 = vpop.f32.mrf.mxu0
        %v8579 = vpop.f32.mrf.mxu0
        %v8580 = vadd.f32 0.0, %v8579
        %v8581 = vpop.f32.mrf.mxu0
        %8582 = vdwg.mxu0
        %8585 = vrot.lane.b32.xlu0 %v8036, 112
        %v8586 = vpop.permute.xlu0 %8585
        %8587 = vrot.lane.b32.xlu0 %v8037, 112
        %v8588 = vpop.permute.xlu0 %8587
        %v8592 = vsel %vm1315, %v8522, 0
        %v8595 = vsel %vm1315, %v8523, 0
        %8597 = vmatprep.subr.bf16.mxu0 0
        %8598 = vmatpush1.bf16.msra.mxu0 0
        %8599 = vmatprep.subr.bf16.mxu0 0
        %8600 = vmatpush1.bf16.msra.mxu0 0
        %8601 = vmatprep.subr.bf16.mxu0 0
        %8602 = vmatpush1.bf16.msra.mxu0 0
        %8603 = vmatprep.subr.bf16.mxu0 0
        %8604 = vmatpush1.bf16.msra.mxu0 0
        %8605 = vmatprep.subr.bf16.mxu0 0
        %8606 = vmatpush1.bf16.msra.mxu0 0
        %8607 = vmatprep.subr.bf16.mxu0 0
        %8608 = vmatpush1.bf16.msra.mxu0 0
        %8609 = vmatprep.subr.bf16.mxu0 0
        %8610 = vmatpush1.bf16.msra.mxu0 %v8588
        %8611 = vmatprep.subr.bf16.mxu0 0
        %8612 = vmatpush1.bf16.msra.mxu0 %v8586
        %8613 = vmatprep.subr.bf16.mxu0 0
        %8614 = vmatpush2.bf16.msra.mxu0 0
        %8615 = vmatprep.subr.bf16.mxu0 0
        %8616 = vmatpush2.bf16.msra.mxu0 0
        %8617 = vmatprep.subr.bf16.mxu0 0
        %8618 = vmatpush2.bf16.msra.mxu0 0
        %8619 = vmatprep.subr.bf16.mxu0 0
        %8620 = vmatpush2.bf16.msra.mxu0 0
        %8621 = vmatprep.subr.bf16.mxu0 0
        %8622 = vmatpush2.bf16.msra.mxu0 0
        %8623 = vmatprep.subr.bf16.mxu0 0
        %8624 = vmatpush2.bf16.msra.mxu0 0
        %8625 = vmatprep.subr.bf16.mxu0 0
        %8626 = vmatpush2.bf16.msra.mxu0 0
        %8627 = vmatprep.subr.bf16.mxu0 0
        %8628 = vmatpush2.bf16.msra.mxu0 0
        %8629 = vmatprep.mubr.bf16.mxu0 0
        %8630 = vmatmul.mubr.bf16.gmra.mxu0 %v8592
        %v8631 = vpop.f32.mrf.mxu0
        %v8632 = vadd.f32 0.0, %v8631
        %v8633 = vpop.f32.mrf.mxu0
        %v8634 = vpop.f32.mrf.mxu0
        %v8635 = vadd.f32 0.0, %v8634
        %v8636 = vpop.f32.mrf.mxu0
        %8637 = vmatprep.mubr.bf16.mxu0 0
        %8638 = vmatmul.mubr.bf16.gmra.mxu0 %v8595
        %v8639 = vpop.f32.mrf.mxu0
        %v8640 = vadd.f32 0.0, %v8639
        %v8641 = vpop.f32.mrf.mxu0
        %v8642 = vpop.f32.mrf.mxu0
        %v8643 = vadd.f32 0.0, %v8642
        %v8644 = vpop.f32.mrf.mxu0
        %8645 = vdwg.mxu0
        %8646 = vrot.lane.b32.xlu0 %v8036, 96
        %v8647 = vpop.permute.xlu0 %8646
        %8648 = vrot.lane.b32.xlu0 %v8037, 96
        %v8649 = vpop.permute.xlu0 %8648
        %v8653 = vsel %vm1315, %v8524, 0
        %v8656 = vsel %vm1315, %v8525, 0
        %8658 = vmatprep.subr.bf16.mxu0 0
        %8659 = vmatpush1.bf16.msra.mxu0 0
        %8660 = vmatprep.subr.bf16.mxu0 0
        %8661 = vmatpush1.bf16.msra.mxu0 0
        %8662 = vmatprep.subr.bf16.mxu0 0
        %8663 = vmatpush1.bf16.msra.mxu0 0
        %8664 = vmatprep.subr.bf16.mxu0 0
        %8665 = vmatpush1.bf16.msra.mxu0 0
        %8666 = vmatprep.subr.bf16.mxu0 0
        %8667 = vmatpush1.bf16.msra.mxu0 0
        %8668 = vmatprep.subr.bf16.mxu0 0
        %8669 = vmatpush1.bf16.msra.mxu0 0
        %8670 = vmatprep.subr.bf16.mxu0 0
        %8671 = vmatpush1.bf16.msra.mxu0 %v8649
        %8672 = vmatprep.subr.bf16.mxu0 0
        %8673 = vmatpush1.bf16.msra.mxu0 %v8647
        %8674 = vmatprep.subr.bf16.mxu0 0
        %8675 = vmatpush2.bf16.msra.mxu0 0
        %8676 = vmatprep.subr.bf16.mxu0 0
        %8677 = vmatpush2.bf16.msra.mxu0 0
        %8678 = vmatprep.subr.bf16.mxu0 0
        %8679 = vmatpush2.bf16.msra.mxu0 0
        %8680 = vmatprep.subr.bf16.mxu0 0
        %8681 = vmatpush2.bf16.msra.mxu0 0
        %8682 = vmatprep.subr.bf16.mxu0 0
        %8683 = vmatpush2.bf16.msra.mxu0 0
        %8684 = vmatprep.subr.bf16.mxu0 0
        %8685 = vmatpush2.bf16.msra.mxu0 0
        %8686 = vmatprep.subr.bf16.mxu0 0
        %8687 = vmatpush2.bf16.msra.mxu0 0
        %8688 = vmatprep.subr.bf16.mxu0 0
        %8689 = vmatpush2.bf16.msra.mxu0 0
        %8690 = vmatprep.mubr.bf16.mxu0 0
        %8691 = vmatmul.mubr.bf16.gmra.mxu0 %v8653
        %v8692 = vpop.f32.mrf.mxu0
        %v8693 = vadd.f32 0.0, %v8692
        %v8694 = vpop.f32.mrf.mxu0
        %v8695 = vpop.f32.mrf.mxu0
        %v8696 = vadd.f32 0.0, %v8695
        %v8697 = vpop.f32.mrf.mxu0
        %8698 = vmatprep.mubr.bf16.mxu0 0
        %8699 = vmatmul.mubr.bf16.gmra.mxu0 %v8656
        %v8700 = vpop.f32.mrf.mxu0
        %v8701 = vadd.f32 0.0, %v8700
        %v8702 = vpop.f32.mrf.mxu0
        %v8703 = vpop.f32.mrf.mxu0
        %v8704 = vadd.f32 0.0, %v8703
        %v8705 = vpop.f32.mrf.mxu0
        %8706 = vdwg.mxu0
        %8707 = vrot.lane.b32.xlu0 %v8036, 80
        %v8708 = vpop.permute.xlu0 %8707
        %8709 = vrot.lane.b32.xlu0 %v8037, 80
        %v8710 = vpop.permute.xlu0 %8709
        %v8714 = vsel %vm1315, %v8526, 0
        %v8717 = vsel %vm1315, %v8527, 0
        %8719 = vmatprep.subr.bf16.mxu0 0
        %8720 = vmatpush1.bf16.msra.mxu0 0
        %8721 = vmatprep.subr.bf16.mxu0 0
        %8722 = vmatpush1.bf16.msra.mxu0 0
        %8723 = vmatprep.subr.bf16.mxu0 0
        %8724 = vmatpush1.bf16.msra.mxu0 0
        %8725 = vmatprep.subr.bf16.mxu0 0
        %8726 = vmatpush1.bf16.msra.mxu0 0
        %8727 = vmatprep.subr.bf16.mxu0 0
        %8728 = vmatpush1.bf16.msra.mxu0 0
        %8729 = vmatprep.subr.bf16.mxu0 0
        %8730 = vmatpush1.bf16.msra.mxu0 0
        %8731 = vmatprep.subr.bf16.mxu0 0
        %8732 = vmatpush1.bf16.msra.mxu0 %v8710
        %8733 = vmatprep.subr.bf16.mxu0 0
        %8734 = vmatpush1.bf16.msra.mxu0 %v8708
        %8735 = vmatprep.subr.bf16.mxu0 0
        %8736 = vmatpush2.bf16.msra.mxu0 0
        %8737 = vmatprep.subr.bf16.mxu0 0
        %8738 = vmatpush2.bf16.msra.mxu0 0
        %8739 = vmatprep.subr.bf16.mxu0 0
        %8740 = vmatpush2.bf16.msra.mxu0 0
        %8741 = vmatprep.subr.bf16.mxu0 0
        %8742 = vmatpush2.bf16.msra.mxu0 0
        %8743 = vmatprep.subr.bf16.mxu0 0
        %8744 = vmatpush2.bf16.msra.mxu0 0
        %8745 = vmatprep.subr.bf16.mxu0 0
        %8746 = vmatpush2.bf16.msra.mxu0 0
        %8747 = vmatprep.subr.bf16.mxu0 0
        %8748 = vmatpush2.bf16.msra.mxu0 0
        %8749 = vmatprep.subr.bf16.mxu0 0
        %8750 = vmatpush2.bf16.msra.mxu0 0
        %8751 = vmatprep.mubr.bf16.mxu0 0
        %8752 = vmatmul.mubr.bf16.gmra.mxu0 %v8714
        %v8753 = vpop.f32.mrf.mxu0
        %v8754 = vadd.f32 0.0, %v8753
        %v8755 = vpop.f32.mrf.mxu0
        %v8756 = vpop.f32.mrf.mxu0
        %v8757 = vadd.f32 0.0, %v8756
        %v8758 = vpop.f32.mrf.mxu0
        %8759 = vmatprep.mubr.bf16.mxu0 0
        %8760 = vmatmul.mubr.bf16.gmra.mxu0 %v8717
        %v8761 = vpop.f32.mrf.mxu0
        %v8762 = vadd.f32 0.0, %v8761
        %v8763 = vpop.f32.mrf.mxu0
        %v8764 = vpop.f32.mrf.mxu0
        %v8765 = vadd.f32 0.0, %v8764
        %v8766 = vpop.f32.mrf.mxu0
        %8767 = vdwg.mxu0
        %8772 = vrot.lane.b32.xlu0 %v8632, 16
        %v8773 = vpop.permute.xlu0 %8772
        %8774 = vrot.lane.b32.xlu0 %v8635, 16
        %v8775 = vpop.permute.xlu0 %8774
        %8776 = vrot.lane.b32.xlu0 %v8640, 16
        %v8777 = vpop.permute.xlu0 %8776
        %8778 = vrot.lane.b32.xlu0 %v8643, 16
        %v8779 = vpop.permute.xlu0 %8778
        %8788 = vrot.lane.b32.xlu0 %v8693, 32
        %v8789 = vpop.permute.xlu0 %8788
        %8790 = vrot.lane.b32.xlu0 %v8696, 32
        %v8791 = vpop.permute.xlu0 %8790
        %8792 = vrot.lane.b32.xlu0 %v8701, 32
        %v8793 = vpop.permute.xlu0 %8792
        %8794 = vrot.lane.b32.xlu0 %v8704, 32
        %v8795 = vpop.permute.xlu0 %8794
        %8804 = vrot.lane.b32.xlu0 %v8754, 48
        %v8805 = vpop.permute.xlu0 %8804
        %8806 = vrot.lane.b32.xlu0 %v8757, 48
        %v8807 = vpop.permute.xlu0 %8806
        %8808 = vrot.lane.b32.xlu0 %v8762, 48
        %v8809 = vpop.permute.xlu0 %8808
        %8810 = vrot.lane.b32.xlu0 %v8765, 48
        %v8811 = vpop.permute.xlu0 %8810
        %v8816 = vsel %vm1014, %v8569, %v8773
        %v8817 = vsel %vm1014, %v8572, %v8775
        %v8818 = vsel %vm1014, %v8577, %v8777
        %v8819 = vsel %vm1014, %v8580, %v8779
        %v8820 = vsel %vm1315, %v8816, %v8789
        %v8821 = vsel %vm1315, %v8817, %v8791
        %v8822 = vsel %vm1315, %v8818, %v8793
        %v8823 = vsel %vm1315, %v8819, %v8795
        %v8824 = vsel %vm1796, %v8820, %v8805
        %v8825 = vsel %vm1796, %v8821, %v8807
        %v8826 = vsel %vm1796, %v8822, %v8809
        %v8827 = vsel %vm1796, %v8823, %v8811
        %v8828 = vpack.c.bf16 %v6443, %v6442
        %v8829 = vpack.c.bf16 %v6445, %v6444
        %v8830 = vpack.c.bf16 %v7237, %v7236
        %v8831 = vpack.c.bf16 %v7239, %v7238
        %v8832 = vpack.c.bf16 %v8031, %v8030
        %v8833 = vpack.c.bf16 %v8033, %v8032
        %v8834 = vpack.c.bf16 %v8825, %v8824
        %v8835 = vpack.c.bf16 %v8827, %v8826
        %s8836 = scalar_lea.vmem %s4, 32
        %v8837 = vld [vmem:[%s8836] sm:$0xf]
        %v8838 = vld [vmem:[%s8836 + $0x4] sm:$0xf]
        %v8839 = vld [vmem:[%s8836 + $0x8] sm:$0xf]
        %v8840 = vld [vmem:[%s8836 + $0xc] sm:$0xf]
        %v8841 = vld [vmem:[%s8836 + $0x10] sm:$0xf]
        %v8842 = vld [vmem:[%s8836 + $0x14] sm:$0xf]
        %v8843 = vld [vmem:[%s8836 + $0x18] sm:$0xf]
        %v8844 = vld [vmem:[%s8836 + $0x1c] sm:$0xf]
        %v8853 = vunpack.c.l.b16 %v8837
        %v8854 = vunpack.c.l.b16 %v8838
        %v8855 = vunpack.c.l.b16 %v8839
        %v8856 = vunpack.c.l.b16 %v8840
        %v8857 = vunpack.c.l.b16 %v8841
        %v8858 = vunpack.c.l.b16 %v8842
        %v8859 = vunpack.c.l.b16 %v8843
        %v8860 = vunpack.c.l.b16 %v8844
        %v8861 = vpack.c.b16 %v8854, %v8853
        %v8862 = vpack.c.b16 %v8856, %v8855
        %v8863 = vpack.c.b16 %v8858, %v8857
        %v8864 = vpack.c.b16 %v8860, %v8859
        %v8870 = vsel %vm557, %v8828, 0
        %v8873 = vsel %vm557, %v8829, 0
        %v8876 = vsel %vm557, %v8830, 0
        %v8879 = vsel %vm557, %v8831, 0
        %v8882 = vsel %vm557, %v8832, 0
        %v8885 = vsel %vm557, %v8833, 0
        %v8888 = vsel %vm557, %v8834, 0
        %v8891 = vsel %vm557, %v8835, 0
        %8893 = vmatprep.subr.bf16.mxu0 0
        %8894 = vmatpush1.bf16.msra.mxu0 0
        %8895 = vmatprep.subr.bf16.mxu0 0
        %8896 = vmatpush1.bf16.msra.mxu0 0
        %8897 = vmatprep.subr.bf16.mxu0 0
        %8898 = vmatpush1.bf16.msra.mxu0 0
        %8899 = vmatprep.subr.bf16.mxu0 0
        %8900 = vmatpush1.bf16.msra.mxu0 0
        %8901 = vmatprep.subr.bf16.mxu0 0
        %8902 = vmatpush1.bf16.msra.mxu0 %v8864
        %8903 = vmatprep.subr.bf16.mxu0 0
        %8904 = vmatpush1.bf16.msra.mxu0 %v8863
        %8905 = vmatprep.subr.bf16.mxu0 0
        %8906 = vmatpush1.bf16.msra.mxu0 %v8862
        %8907 = vmatprep.subr.bf16.mxu0 0
        %8908 = vmatpush1.bf16.msra.mxu0 %v8861
        %8909 = vmatprep.subr.bf16.mxu0 0
        %8910 = vmatpush2.bf16.msra.mxu0 0
        %8911 = vmatprep.subr.bf16.mxu0 0
        %8912 = vmatpush2.bf16.msra.mxu0 0
        %8913 = vmatprep.subr.bf16.mxu0 0
        %8914 = vmatpush2.bf16.msra.mxu0 0
        %8915 = vmatprep.subr.bf16.mxu0 0
        %8916 = vmatpush2.bf16.msra.mxu0 0
        %8917 = vmatprep.subr.bf16.mxu0 0
        %8918 = vmatpush2.bf16.msra.mxu0 0
        %8919 = vmatprep.subr.bf16.mxu0 0
        %8920 = vmatpush2.bf16.msra.mxu0 0
        %8921 = vmatprep.subr.bf16.mxu0 0
        %8922 = vmatpush2.bf16.msra.mxu0 0
        %8923 = vmatprep.subr.bf16.mxu0 0
        %8924 = vmatpush2.bf16.msra.mxu0 0
        %8925 = vmatprep.mubr.bf16.mxu0 0
        %8926 = vmatmul.mubr.bf16.gmra.mxu0 %v8870
        %v8927 = vpop.f32.mrf.mxu0
        %v8928 = vadd.f32 0.0, %v8927
        %v8929 = vpop.f32.mrf.mxu0
        %v8930 = vpop.f32.mrf.mxu0
        %v8931 = vadd.f32 0.0, %v8930
        %v8932 = vpop.f32.mrf.mxu0
        %8933 = vmatprep.mubr.bf16.mxu0 0
        %8934 = vmatmul.mubr.bf16.gmra.mxu0 %v8873
        %v8935 = vpop.f32.mrf.mxu0
        %v8936 = vadd.f32 0.0, %v8935
        %v8937 = vpop.f32.mrf.mxu0
        %v8938 = vpop.f32.mrf.mxu0
        %v8939 = vadd.f32 0.0, %v8938
        %v8940 = vpop.f32.mrf.mxu0
        %8941 = vmatprep.mubr.bf16.mxu0 0
        %8942 = vmatmul.mubr.bf16.gmra.mxu0 %v8876
        %v8943 = vpop.f32.mrf.mxu0
        %v8944 = vadd.f32 0.0, %v8943
        %v8945 = vpop.f32.mrf.mxu0
        %v8946 = vpop.f32.mrf.mxu0
        %v8947 = vadd.f32 0.0, %v8946
        %v8948 = vpop.f32.mrf.mxu0
        %8949 = vmatprep.mubr.bf16.mxu0 0
        %8950 = vmatmul.mubr.bf16.gmra.mxu0 %v8879
        %v8951 = vpop.f32.mrf.mxu0
        %v8952 = vadd.f32 0.0, %v8951
        %v8953 = vpop.f32.mrf.mxu0
        %v8954 = vpop.f32.mrf.mxu0
        %v8955 = vadd.f32 0.0, %v8954
        %v8956 = vpop.f32.mrf.mxu0
        %8957 = vmatprep.mubr.bf16.mxu0 0
        %8958 = vmatmul.mubr.bf16.gmra.mxu0 %v8882
        %v8959 = vpop.f32.mrf.mxu0
        %v8960 = vadd.f32 0.0, %v8959
        %v8961 = vpop.f32.mrf.mxu0
        %v8962 = vpop.f32.mrf.mxu0
        %v8963 = vadd.f32 0.0, %v8962
        %v8964 = vpop.f32.mrf.mxu0
        %8965 = vmatprep.mubr.bf16.mxu0 0
        %8966 = vmatmul.mubr.bf16.gmra.mxu0 %v8885
        %v8967 = vpop.f32.mrf.mxu0
        %v8968 = vadd.f32 0.0, %v8967
        %v8969 = vpop.f32.mrf.mxu0
        %v8970 = vpop.f32.mrf.mxu0
        %v8971 = vadd.f32 0.0, %v8970
        %v8972 = vpop.f32.mrf.mxu0
        %8973 = vmatprep.mubr.bf16.mxu0 0
        %8974 = vmatmul.mubr.bf16.gmra.mxu0 %v8888
        %v8975 = vpop.f32.mrf.mxu0
        %v8976 = vadd.f32 0.0, %v8975
        %v8977 = vpop.f32.mrf.mxu0
        %v8978 = vpop.f32.mrf.mxu0
        %v8979 = vadd.f32 0.0, %v8978
        %v8980 = vpop.f32.mrf.mxu0
        %8981 = vmatprep.mubr.bf16.mxu0 0
        %8982 = vmatmul.mubr.bf16.gmra.mxu0 %v8891
        %v8983 = vpop.f32.mrf.mxu0
        %v8984 = vadd.f32 0.0, %v8983
        %v8985 = vpop.f32.mrf.mxu0
        %v8986 = vpop.f32.mrf.mxu0
        %v8987 = vadd.f32 0.0, %v8986
        %v8988 = vpop.f32.mrf.mxu0
        %8989 = vdwg.mxu0
        %v8990 = vadd.f32 %v5186, %v8928
        %v8991 = vadd.f32 %v5187, %v8931
        %v8992 = vadd.f32 %v5188, %v8936
        %v8993 = vadd.f32 %v5189, %v8939
        %v8994 = vadd.f32 %v5190, %v8944
        %v8995 = vadd.f32 %v5191, %v8947
        %v8996 = vadd.f32 %v5192, %v8952
        %v8997 = vadd.f32 %v5193, %v8955
        %v8998 = vadd.f32 %v5194, %v8960
        %v8999 = vadd.f32 %v5195, %v8963
        %v9000 = vadd.f32 %v5196, %v8968
        %v9001 = vadd.f32 %v5197, %v8971
        %v9002 = vadd.f32 %v5198, %v8976
        %v9003 = vadd.f32 %v5199, %v8979
        %v9004 = vadd.f32 %v5200, %v8984
        %v9005 = vadd.f32 %v5201, %v8987
        %s9006 = scalar_lea.vmem %s5, 1
        %v9007 = vld [vmem:[%s9006] sm:$0x1]
        %v9009 = vlaneseq
        %v9010 = vshrl.u32 %v9009, 7
        %v9011 = vsub.s32 0, %v9010
        %v9012 = vrot.slane %v9007, %v9011
        %v9014 = vadd.f32 %v8990, %v9012
        %v9015 = vadd.f32 %v8991, %v9012
        %v9016 = vadd.f32 %v8992, %v9012
        %v9017 = vadd.f32 %v8993, %v9012
        %v9018 = vadd.f32 %v8994, %v9012
        %v9019 = vadd.f32 %v8995, %v9012
        %v9020 = vadd.f32 %v8996, %v9012
        %v9021 = vadd.f32 %v8997, %v9012
        %v9022 = vadd.f32 %v8998, %v9012
        %v9023 = vadd.f32 %v8999, %v9012
        %v9024 = vadd.f32 %v9000, %v9012
        %v9025 = vadd.f32 %v9001, %v9012
        %v9026 = vadd.f32 %v9002, %v9012
        %v9027 = vadd.f32 %v9003, %v9012
        %v9028 = vadd.f32 %v9004, %v9012
        %v9029 = vadd.f32 %v9005, %v9012
        %s9030 = scalar_lea.vmem %s6, 1
        %v9031 = vld [vmem:[%s9030] sm:$0x1]
        %s9032 = scalar_lea.vmem %s7, 1
        %v9033 = vld [vmem:[%s9032] sm:$0x1]
        %v9034 = vsel %vm557, %v9014, 0.0
        %9035 = vadd.xlane.f32.xlu0 %v9034
        %v9036 = vpop.xlane.xlu0 %9035
        %v9037 = vsel %vm557, %v9015, 0.0
        %9038 = vadd.xlane.f32.xlu0 %v9037
        %v9039 = vpop.xlane.xlu0 %9038
        %v9040 = vsel %vm557, %v9016, 0.0
        %9041 = vadd.xlane.f32.xlu0 %v9040
        %v9042 = vpop.xlane.xlu0 %9041
        %v9043 = vsel %vm557, %v9017, 0.0
        %9044 = vadd.xlane.f32.xlu0 %v9043
        %v9045 = vpop.xlane.xlu0 %9044
        %v9046 = vsel %vm557, %v9018, 0.0
        %9047 = vadd.xlane.f32.xlu0 %v9046
        %v9048 = vpop.xlane.xlu0 %9047
        %v9049 = vsel %vm557, %v9019, 0.0
        %9050 = vadd.xlane.f32.xlu0 %v9049
        %v9051 = vpop.xlane.xlu0 %9050
        %v9052 = vsel %vm557, %v9020, 0.0
        %9053 = vadd.xlane.f32.xlu0 %v9052
        %v9054 = vpop.xlane.xlu0 %9053
        %v9055 = vsel %vm557, %v9021, 0.0
        %9056 = vadd.xlane.f32.xlu0 %v9055
        %v9057 = vpop.xlane.xlu0 %9056
        %v9058 = vsel %vm557, %v9022, 0.0
        %9059 = vadd.xlane.f32.xlu0 %v9058
        %v9060 = vpop.xlane.xlu0 %9059
        %v9061 = vsel %vm557, %v9023, 0.0
        %9062 = vadd.xlane.f32.xlu0 %v9061
        %v9063 = vpop.xlane.xlu0 %9062
        %v9064 = vsel %vm557, %v9024, 0.0
        %9065 = vadd.xlane.f32.xlu0 %v9064
        %v9066 = vpop.xlane.xlu0 %9065
        %v9067 = vsel %vm557, %v9025, 0.0
        %9068 = vadd.xlane.f32.xlu0 %v9067
        %v9069 = vpop.xlane.xlu0 %9068
        %v9070 = vsel %vm557, %v9026, 0.0
        %9071 = vadd.xlane.f32.xlu0 %v9070
        %v9072 = vpop.xlane.xlu0 %9071
        %v9073 = vsel %vm557, %v9027, 0.0
        %9074 = vadd.xlane.f32.xlu0 %v9073
        %v9075 = vpop.xlane.xlu0 %9074
        %v9076 = vsel %vm557, %v9028, 0.0
        %9077 = vadd.xlane.f32.xlu0 %v9076
        %v9078 = vpop.xlane.xlu0 %9077
        %v9079 = vsel %vm557, %v9029, 0.0
        %9080 = vadd.xlane.f32.xlu0 %v9079
        %v9081 = vpop.xlane.xlu0 %9080
        %v9082 = vmul.f32 %v9036, %v606
        %v9083 = vmul.f32 %v9039, %v606
        %v9084 = vmul.f32 %v9042, %v606
        %v9085 = vmul.f32 %v9045, %v606
        %v9086 = vmul.f32 %v9048, %v606
        %v9087 = vmul.f32 %v9051, %v606
        %v9088 = vmul.f32 %v9054, %v606
        %v9089 = vmul.f32 %v9057, %v606
        %v9090 = vmul.f32 %v9060, %v606
        %v9091 = vmul.f32 %v9063, %v606
        %v9092 = vmul.f32 %v9066, %v606
        %v9093 = vmul.f32 %v9069, %v606
        %v9094 = vmul.f32 %v9072, %v606
        %v9095 = vmul.f32 %v9075, %v606
        %v9096 = vmul.f32 %v9078, %v606
        %v9097 = vmul.f32 %v9081, %v606
        %v9098 = vsub.f32 %v9014, %v9082
        %v9099 = vsub.f32 %v9015, %v9083
        %v9100 = vsub.f32 %v9016, %v9084
        %v9101 = vsub.f32 %v9017, %v9085
        %v9102 = vsub.f32 %v9018, %v9086
        %v9103 = vsub.f32 %v9019, %v9087
        %v9104 = vsub.f32 %v9020, %v9088
        %v9105 = vsub.f32 %v9021, %v9089
        %v9106 = vsub.f32 %v9022, %v9090
        %v9107 = vsub.f32 %v9023, %v9091
        %v9108 = vsub.f32 %v9024, %v9092
        %v9109 = vsub.f32 %v9025, %v9093
        %v9110 = vsub.f32 %v9026, %v9094
        %v9111 = vsub.f32 %v9027, %v9095
        %v9112 = vsub.f32 %v9028, %v9096
        %v9113 = vsub.f32 %v9029, %v9097
        %v9114 = vmul.f32 %v9098, %v9098
        %v9115 = vmul.f32 %v9099, %v9099
        %v9116 = vmul.f32 %v9100, %v9100
        %v9117 = vmul.f32 %v9101, %v9101
        %v9118 = vmul.f32 %v9102, %v9102
        %v9119 = vmul.f32 %v9103, %v9103
        %v9120 = vmul.f32 %v9104, %v9104
        %v9121 = vmul.f32 %v9105, %v9105
        %v9122 = vmul.f32 %v9106, %v9106
        %v9123 = vmul.f32 %v9107, %v9107
        %v9124 = vmul.f32 %v9108, %v9108
        %v9125 = vmul.f32 %v9109, %v9109
        %v9126 = vmul.f32 %v9110, %v9110
        %v9127 = vmul.f32 %v9111, %v9111
        %v9128 = vmul.f32 %v9112, %v9112
        %v9129 = vmul.f32 %v9113, %v9113
        %v9130 = vsel %vm557, %v9114, 0.0
        %9131 = vadd.xlane.f32.xlu0 %v9130
        %v9132 = vpop.xlane.xlu0 %9131
        %v9133 = vsel %vm557, %v9115, 0.0
        %9134 = vadd.xlane.f32.xlu0 %v9133
        %v9135 = vpop.xlane.xlu0 %9134
        %v9136 = vsel %vm557, %v9116, 0.0
        %9137 = vadd.xlane.f32.xlu0 %v9136
        %v9138 = vpop.xlane.xlu0 %9137
        %v9139 = vsel %vm557, %v9117, 0.0
        %9140 = vadd.xlane.f32.xlu0 %v9139
        %v9141 = vpop.xlane.xlu0 %9140
        %v9142 = vsel %vm557, %v9118, 0.0
        %9143 = vadd.xlane.f32.xlu0 %v9142
        %v9144 = vpop.xlane.xlu0 %9143
        %v9145 = vsel %vm557, %v9119, 0.0
        %9146 = vadd.xlane.f32.xlu0 %v9145
        %v9147 = vpop.xlane.xlu0 %9146
        %v9148 = vsel %vm557, %v9120, 0.0
        %9149 = vadd.xlane.f32.xlu0 %v9148
        %v9150 = vpop.xlane.xlu0 %9149
        %v9151 = vsel %vm557, %v9121, 0.0
        %9152 = vadd.xlane.f32.xlu0 %v9151
        %v9153 = vpop.xlane.xlu0 %9152
        %v9154 = vsel %vm557, %v9122, 0.0
        %9155 = vadd.xlane.f32.xlu0 %v9154
        %v9156 = vpop.xlane.xlu0 %9155
        %v9157 = vsel %vm557, %v9123, 0.0
        %9158 = vadd.xlane.f32.xlu0 %v9157
        %v9159 = vpop.xlane.xlu0 %9158
        %v9160 = vsel %vm557, %v9124, 0.0
        %9161 = vadd.xlane.f32.xlu0 %v9160
        %v9162 = vpop.xlane.xlu0 %9161
        %v9163 = vsel %vm557, %v9125, 0.0
        %9164 = vadd.xlane.f32.xlu0 %v9163
        %v9165 = vpop.xlane.xlu0 %9164
        %v9166 = vsel %vm557, %v9126, 0.0
        %9167 = vadd.xlane.f32.xlu0 %v9166
        %v9168 = vpop.xlane.xlu0 %9167
        %v9169 = vsel %vm557, %v9127, 0.0
        %9170 = vadd.xlane.f32.xlu0 %v9169
        %v9171 = vpop.xlane.xlu0 %9170
        %v9172 = vsel %vm557, %v9128, 0.0
        %9173 = vadd.xlane.f32.xlu0 %v9172
        %v9174 = vpop.xlane.xlu0 %9173
        %v9175 = vsel %vm557, %v9129, 0.0
        %9176 = vadd.xlane.f32.xlu0 %v9175
        %v9177 = vpop.xlane.xlu0 %9176
        %v9178 = vmul.f32 %v9132, %v606
        %v9179 = vmul.f32 %v9135, %v606
        %v9180 = vmul.f32 %v9138, %v606
        %v9181 = vmul.f32 %v9141, %v606
        %v9182 = vmul.f32 %v9144, %v606
        %v9183 = vmul.f32 %v9147, %v606
        %v9184 = vmul.f32 %v9150, %v606
        %v9185 = vmul.f32 %v9153, %v606
        %v9186 = vmul.f32 %v9156, %v606
        %v9187 = vmul.f32 %v9159, %v606
        %v9188 = vmul.f32 %v9162, %v606
        %v9189 = vmul.f32 %v9165, %v606
        %v9190 = vmul.f32 %v9168, %v606
        %v9191 = vmul.f32 %v9171, %v606
        %v9192 = vmul.f32 %v9174, %v606
        %v9193 = vmul.f32 %v9177, %v606
        %v9194 = vadd.f32 %v9178, 1e-05
        %v9195 = vadd.f32 %v9179, 1e-05
        %v9196 = vadd.f32 %v9180, 1e-05
        %v9197 = vadd.f32 %v9181, 1e-05
        %v9198 = vadd.f32 %v9182, 1e-05
        %v9199 = vadd.f32 %v9183, 1e-05
        %v9200 = vadd.f32 %v9184, 1e-05
        %v9201 = vadd.f32 %v9185, 1e-05
        %v9202 = vadd.f32 %v9186, 1e-05
        %v9203 = vadd.f32 %v9187, 1e-05
        %v9204 = vadd.f32 %v9188, 1e-05
        %v9205 = vadd.f32 %v9189, 1e-05
        %v9206 = vadd.f32 %v9190, 1e-05
        %v9207 = vadd.f32 %v9191, 1e-05
        %v9208 = vadd.f32 %v9192, 1e-05
        %v9209 = vadd.f32 %v9193, 1e-05
        %v9210 = vrsqrt.pop %v9194
        %v9211 = vrsqrt.pop %v9195
        %v9212 = vrsqrt.pop %v9196
        %v9213 = vrsqrt.pop %v9197
        %v9214 = vrsqrt.pop %v9198
        %v9215 = vrsqrt.pop %v9199
        %v9216 = vrsqrt.pop %v9200
        %v9217 = vrsqrt.pop %v9201
        %v9218 = vrsqrt.pop %v9202
        %v9219 = vrsqrt.pop %v9203
        %v9220 = vrsqrt.pop %v9204
        %v9221 = vrsqrt.pop %v9205
        %v9222 = vrsqrt.pop %v9206
        %v9223 = vrsqrt.pop %v9207
        %v9224 = vrsqrt.pop %v9208
        %v9225 = vrsqrt.pop %v9209
        %v9226 = vmul.f32 %v9098, %v9210
        %v9227 = vmul.f32 %v9099, %v9211
        %v9228 = vmul.f32 %v9100, %v9212
        %v9229 = vmul.f32 %v9101, %v9213
        %v9230 = vmul.f32 %v9102, %v9214
        %v9231 = vmul.f32 %v9103, %v9215
        %v9232 = vmul.f32 %v9104, %v9216
        %v9233 = vmul.f32 %v9105, %v9217
        %v9234 = vmul.f32 %v9106, %v9218
        %v9235 = vmul.f32 %v9107, %v9219
        %v9236 = vmul.f32 %v9108, %v9220
        %v9237 = vmul.f32 %v9109, %v9221
        %v9238 = vmul.f32 %v9110, %v9222
        %v9239 = vmul.f32 %v9111, %v9223
        %v9240 = vmul.f32 %v9112, %v9224
        %v9241 = vmul.f32 %v9113, %v9225
        %v9243 = vlaneseq
        %v9244 = vshrl.u32 %v9243, 7
        %v9245 = vsub.s32 0, %v9244
        %v9246 = vrot.slane %v9031, %v9245
        %v9248 = vmul.f32 %v9226, %v9246
        %v9249 = vmul.f32 %v9227, %v9246
        %v9250 = vmul.f32 %v9228, %v9246
        %v9251 = vmul.f32 %v9229, %v9246
        %v9252 = vmul.f32 %v9230, %v9246
        %v9253 = vmul.f32 %v9231, %v9246
        %v9254 = vmul.f32 %v9232, %v9246
        %v9255 = vmul.f32 %v9233, %v9246
        %v9256 = vmul.f32 %v9234, %v9246
        %v9257 = vmul.f32 %v9235, %v9246
        %v9258 = vmul.f32 %v9236, %v9246
        %v9259 = vmul.f32 %v9237, %v9246
        %v9260 = vmul.f32 %v9238, %v9246
        %v9261 = vmul.f32 %v9239, %v9246
        %v9262 = vmul.f32 %v9240, %v9246
        %v9263 = vmul.f32 %v9241, %v9246
        %v9265 = vlaneseq
        %v9266 = vshrl.u32 %v9265, 7
        %v9267 = vsub.s32 0, %v9266
        %v9268 = vrot.slane %v9033, %v9267
        %v9270 = vadd.f32 %v9248, %v9268
        %v9271 = vadd.f32 %v9249, %v9268
        %v9272 = vadd.f32 %v9250, %v9268
        %v9273 = vadd.f32 %v9251, %v9268
        %v9274 = vadd.f32 %v9252, %v9268
        %v9275 = vadd.f32 %v9253, %v9268
        %v9276 = vadd.f32 %v9254, %v9268
        %v9277 = vadd.f32 %v9255, %v9268
        %v9278 = vadd.f32 %v9256, %v9268
        %v9279 = vadd.f32 %v9257, %v9268
        %v9280 = vadd.f32 %v9258, %v9268
        %v9281 = vadd.f32 %v9259, %v9268
        %v9282 = vadd.f32 %v9260, %v9268
        %v9283 = vadd.f32 %v9261, %v9268
        %v9284 = vadd.f32 %v9262, %v9268
        %v9285 = vadd.f32 %v9263, %v9268
        %v9286 = vpack.c.bf16 %v9271, %v9270
        %v9287 = vpack.c.bf16 %v9273, %v9272
        %v9288 = vpack.c.bf16 %v9275, %v9274
        %v9289 = vpack.c.bf16 %v9277, %v9276
        %v9290 = vpack.c.bf16 %v9279, %v9278
        %v9291 = vpack.c.bf16 %v9281, %v9280
        %v9292 = vpack.c.bf16 %v9283, %v9282
        %v9293 = vpack.c.bf16 %v9285, %v9284
        %s9294 = scalar_lea.vmem %s8, 64
        %v9295 = vld [vmem:[%s9294] sm:$0xff]
        %v9296 = vld [vmem:[%s9294 + $0x8] sm:$0xff]
        %v9297 = vld [vmem:[%s9294 + $0x10] sm:$0xff]
        %v9298 = vld [vmem:[%s9294 + $0x18] sm:$0xff]
        %v9299 = vld [vmem:[%s9294 + $0x20] sm:$0xff]
        %v9300 = vld [vmem:[%s9294 + $0x28] sm:$0xff]
        %v9301 = vld [vmem:[%s9294 + $0x30] sm:$0xff]
        %v9302 = vld [vmem:[%s9294 + $0x38] sm:$0xff]
        %s9303 = scalar_lea.vmem %s9, 2
        %v9304 = vld [vmem:[%s9303] sm:$0x3]
        %v9306 = vlaneseq
        %v9307 = vshrl.u32 %v9306, 7
        %v9308 = vsub.s32 0, %v9307
        %v9309 = vrot.slane %v9304, %v9308
        %v9310 = vlaneseq
        %v9311 = vshrl.u32 %v9310, 7
        %v9312 = vsub.s32 1, %v9311
        %v9313 = vrot.slane %v9304, %v9312
        %v9324 = vunpack.c.l.b16 %v9295
        %v9325 = vunpack.c.h.b16 %v9295
        %v9326 = vunpack.c.l.b16 %v9296
        %v9327 = vunpack.c.h.b16 %v9296
        %v9328 = vunpack.c.l.b16 %v9297
        %v9329 = vunpack.c.h.b16 %v9297
        %v9330 = vunpack.c.l.b16 %v9298
        %v9331 = vunpack.c.h.b16 %v9298
        %v9332 = vunpack.c.l.b16 %v9299
        %v9333 = vunpack.c.h.b16 %v9299
        %v9334 = vunpack.c.l.b16 %v9300
        %v9335 = vunpack.c.h.b16 %v9300
        %v9336 = vunpack.c.l.b16 %v9301
        %v9337 = vunpack.c.h.b16 %v9301
        %v9338 = vunpack.c.l.b16 %v9302
        %v9339 = vunpack.c.h.b16 %v9302
        %v9340 = vpack.c.b16 %v9326, %v9324
        %v9341 = vpack.c.b16 %v9327, %v9325
        %v9342 = vpack.c.b16 %v9330, %v9328
        %v9343 = vpack.c.b16 %v9331, %v9329
        %v9344 = vpack.c.b16 %v9334, %v9332
        %v9345 = vpack.c.b16 %v9335, %v9333
        %v9346 = vpack.c.b16 %v9338, %v9336
        %v9347 = vpack.c.b16 %v9339, %v9337
        %v9357 = vsel %vm557, %v9286, 0
        %v9360 = vsel %vm557, %v9287, 0
        %v9363 = vsel %vm557, %v9288, 0
        %v9366 = vsel %vm557, %v9289, 0
        %v9369 = vsel %vm557, %v9290, 0
        %v9372 = vsel %vm557, %v9291, 0
        %v9375 = vsel %vm557, %v9292, 0
        %v9378 = vsel %vm557, %v9293, 0
        %9380 = vmatprep.subr.bf16.mxu0 0
        %9381 = vmatpush1.bf16.msra.mxu0 0
        %9382 = vmatprep.subr.bf16.mxu0 0
        %9383 = vmatpush1.bf16.msra.mxu0 0
        %9384 = vmatprep.subr.bf16.mxu0 0
        %9385 = vmatpush1.bf16.msra.mxu0 0
        %9386 = vmatprep.subr.bf16.mxu0 0
        %9387 = vmatpush1.bf16.msra.mxu0 0
        %9388 = vmatprep.subr.bf16.mxu0 %v9347
        %9389 = vmatpush1.bf16.msra.mxu0 %v9346
        %9390 = vmatprep.subr.bf16.mxu0 %v9345
        %9391 = vmatpush1.bf16.msra.mxu0 %v9344
        %9392 = vmatprep.subr.bf16.mxu0 %v9343
        %9393 = vmatpush1.bf16.msra.mxu0 %v9342
        %9394 = vmatprep.subr.bf16.mxu0 %v9341
        %9395 = vmatpush1.bf16.msra.mxu0 %v9340
        %9396 = vmatprep.subr.bf16.mxu0 0
        %9397 = vmatpush2.bf16.msra.mxu0 0
        %9398 = vmatprep.subr.bf16.mxu0 0
        %9399 = vmatpush2.bf16.msra.mxu0 0
        %9400 = vmatprep.subr.bf16.mxu0 0
        %9401 = vmatpush2.bf16.msra.mxu0 0
        %9402 = vmatprep.subr.bf16.mxu0 0
        %9403 = vmatpush2.bf16.msra.mxu0 0
        %9404 = vmatprep.subr.bf16.mxu0 0
        %9405 = vmatpush2.bf16.msra.mxu0 0
        %9406 = vmatprep.subr.bf16.mxu0 0
        %9407 = vmatpush2.bf16.msra.mxu0 0
        %9408 = vmatprep.subr.bf16.mxu0 0
        %9409 = vmatpush2.bf16.msra.mxu0 0
        %9410 = vmatprep.subr.bf16.mxu0 0
        %9411 = vmatpush2.bf16.msra.mxu0 0
        %9412 = vmatprep.mubr.bf16.mxu0 0
        %9413 = vmatmul.mubr.bf16.gmra.mxu0 %v9357
        %v9414 = vpop.f32.mrf.mxu0
        %v9415 = vadd.f32 %v9309, %v9414
        %v9416 = vpop.f32.mrf.mxu0
        %v9417 = vadd.f32 %v9313, %v9416
        %v9418 = vpop.f32.mrf.mxu0
        %v9419 = vadd.f32 %v9309, %v9418
        %v9420 = vpop.f32.mrf.mxu0
        %v9421 = vadd.f32 %v9313, %v9420
        %9422 = vmatprep.mubr.bf16.mxu0 0
        %9423 = vmatmul.mubr.bf16.gmra.mxu0 %v9360
        %v9424 = vpop.f32.mrf.mxu0
        %v9425 = vadd.f32 %v9309, %v9424
        %v9426 = vpop.f32.mrf.mxu0
        %v9427 = vadd.f32 %v9313, %v9426
        %v9428 = vpop.f32.mrf.mxu0
        %v9429 = vadd.f32 %v9309, %v9428
        %v9430 = vpop.f32.mrf.mxu0
        %v9431 = vadd.f32 %v9313, %v9430
        %9432 = vmatprep.mubr.bf16.mxu0 0
        %9433 = vmatmul.mubr.bf16.gmra.mxu0 %v9363
        %v9434 = vpop.f32.mrf.mxu0
        %v9435 = vadd.f32 %v9309, %v9434
        %v9436 = vpop.f32.mrf.mxu0
        %v9437 = vadd.f32 %v9313, %v9436
        %v9438 = vpop.f32.mrf.mxu0
        %v9439 = vadd.f32 %v9309, %v9438
        %v9440 = vpop.f32.mrf.mxu0
        %v9441 = vadd.f32 %v9313, %v9440
        %9442 = vmatprep.mubr.bf16.mxu0 0
        %9443 = vmatmul.mubr.bf16.gmra.mxu0 %v9366
        %v9444 = vpop.f32.mrf.mxu0
        %v9445 = vadd.f32 %v9309, %v9444
        %v9446 = vpop.f32.mrf.mxu0
        %v9447 = vadd.f32 %v9313, %v9446
        %v9448 = vpop.f32.mrf.mxu0
        %v9449 = vadd.f32 %v9309, %v9448
        %v9450 = vpop.f32.mrf.mxu0
        %v9451 = vadd.f32 %v9313, %v9450
        %9452 = vmatprep.mubr.bf16.mxu0 0
        %9453 = vmatmul.mubr.bf16.gmra.mxu0 %v9369
        %v9454 = vpop.f32.mrf.mxu0
        %v9455 = vadd.f32 %v9309, %v9454
        %v9456 = vpop.f32.mrf.mxu0
        %v9457 = vadd.f32 %v9313, %v9456
        %v9458 = vpop.f32.mrf.mxu0
        %v9459 = vadd.f32 %v9309, %v9458
        %v9460 = vpop.f32.mrf.mxu0
        %v9461 = vadd.f32 %v9313, %v9460
        %9462 = vmatprep.mubr.bf16.mxu0 0
        %9463 = vmatmul.mubr.bf16.gmra.mxu0 %v9372
        %v9464 = vpop.f32.mrf.mxu0
        %v9465 = vadd.f32 %v9309, %v9464
        %v9466 = vpop.f32.mrf.mxu0
        %v9467 = vadd.f32 %v9313, %v9466
        %v9468 = vpop.f32.mrf.mxu0
        %v9469 = vadd.f32 %v9309, %v9468
        %v9470 = vpop.f32.mrf.mxu0
        %v9471 = vadd.f32 %v9313, %v9470
        %9472 = vmatprep.mubr.bf16.mxu0 0
        %9473 = vmatmul.mubr.bf16.gmra.mxu0 %v9375
        %v9474 = vpop.f32.mrf.mxu0
        %v9475 = vadd.f32 %v9309, %v9474
        %v9476 = vpop.f32.mrf.mxu0
        %v9477 = vadd.f32 %v9313, %v9476
        %v9478 = vpop.f32.mrf.mxu0
        %v9479 = vadd.f32 %v9309, %v9478
        %v9480 = vpop.f32.mrf.mxu0
        %v9481 = vadd.f32 %v9313, %v9480
        %9482 = vmatprep.mubr.bf16.mxu0 0
        %9483 = vmatmul.mubr.bf16.gmra.mxu0 %v9378
        %v9484 = vpop.f32.mrf.mxu0
        %v9485 = vadd.f32 %v9309, %v9484
        %v9486 = vpop.f32.mrf.mxu0
        %v9487 = vadd.f32 %v9313, %v9486
        %v9488 = vpop.f32.mrf.mxu0
        %v9489 = vadd.f32 %v9309, %v9488
        %v9490 = vpop.f32.mrf.mxu0
        %v9491 = vadd.f32 %v9313, %v9490
        %9492 = vdwg.mxu0
        %vm9493 = vcmp.gt.f32.partialorder %v9415, 0.0
        %vm9494 = vcmp.gt.f32.partialorder %v9417, 0.0
        %vm9495 = vcmp.gt.f32.partialorder %v9419, 0.0
        %vm9496 = vcmp.gt.f32.partialorder %v9421, 0.0
        %vm9497 = vcmp.gt.f32.partialorder %v9425, 0.0
        %vm9498 = vcmp.gt.f32.partialorder %v9427, 0.0
        %vm9499 = vcmp.gt.f32.partialorder %v9429, 0.0
        %vm9500 = vcmp.gt.f32.partialorder %v9431, 0.0
        %vm9501 = vcmp.gt.f32.partialorder %v9435, 0.0
        %vm9502 = vcmp.gt.f32.partialorder %v9437, 0.0
        %vm9503 = vcmp.gt.f32.partialorder %v9439, 0.0
        %vm9504 = vcmp.gt.f32.partialorder %v9441, 0.0
        %vm9505 = vcmp.gt.f32.partialorder %v9445, 0.0
        %vm9506 = vcmp.gt.f32.partialorder %v9447, 0.0
        %vm9507 = vcmp.gt.f32.partialorder %v9449, 0.0
        %vm9508 = vcmp.gt.f32.partialorder %v9451, 0.0
        %vm9509 = vcmp.gt.f32.partialorder %v9455, 0.0
        %vm9510 = vcmp.gt.f32.partialorder %v9457, 0.0
        %vm9511 = vcmp.gt.f32.partialorder %v9459, 0.0
        %vm9512 = vcmp.gt.f32.partialorder %v9461, 0.0
        %vm9513 = vcmp.gt.f32.partialorder %v9465, 0.0
        %vm9514 = vcmp.gt.f32.partialorder %v9467, 0.0
        %vm9515 = vcmp.gt.f32.partialorder %v9469, 0.0
        %vm9516 = vcmp.gt.f32.partialorder %v9471, 0.0
        %vm9517 = vcmp.gt.f32.partialorder %v9475, 0.0
        %vm9518 = vcmp.gt.f32.partialorder %v9477, 0.0
        %vm9519 = vcmp.gt.f32.partialorder %v9479, 0.0
        %vm9520 = vcmp.gt.f32.partialorder %v9481, 0.0
        %vm9521 = vcmp.gt.f32.partialorder %v9485, 0.0
        %vm9522 = vcmp.gt.f32.partialorder %v9487, 0.0
        %vm9523 = vcmp.gt.f32.partialorder %v9489, 0.0
        %vm9524 = vcmp.gt.f32.partialorder %v9491, 0.0
        %v9525 = vmul.f32 %v9415, 0.01
        %v9526 = vmul.f32 %v9417, 0.01
        %v9527 = vmul.f32 %v9419, 0.01
        %v9528 = vmul.f32 %v9421, 0.01
        %v9529 = vmul.f32 %v9425, 0.01
        %v9530 = vmul.f32 %v9427, 0.01
        %v9531 = vmul.f32 %v9429, 0.01
        %v9532 = vmul.f32 %v9431, 0.01
        %v9533 = vmul.f32 %v9435, 0.01
        %v9534 = vmul.f32 %v9437, 0.01
        %v9535 = vmul.f32 %v9439, 0.01
        %v9536 = vmul.f32 %v9441, 0.01
        %v9537 = vmul.f32 %v9445, 0.01
        %v9538 = vmul.f32 %v9447, 0.01
        %v9539 = vmul.f32 %v9449, 0.01
        %v9540 = vmul.f32 %v9451, 0.01
        %v9541 = vmul.f32 %v9455, 0.01
        %v9542 = vmul.f32 %v9457, 0.01
        %v9543 = vmul.f32 %v9459, 0.01
        %v9544 = vmul.f32 %v9461, 0.01
        %v9545 = vmul.f32 %v9465, 0.01
        %v9546 = vmul.f32 %v9467, 0.01
        %v9547 = vmul.f32 %v9469, 0.01
        %v9548 = vmul.f32 %v9471, 0.01
        %v9549 = vmul.f32 %v9475, 0.01
        %v9550 = vmul.f32 %v9477, 0.01
        %v9551 = vmul.f32 %v9479, 0.01
        %v9552 = vmul.f32 %v9481, 0.01
        %v9553 = vmul.f32 %v9485, 0.01
        %v9554 = vmul.f32 %v9487, 0.01
        %v9555 = vmul.f32 %v9489, 0.01
        %v9556 = vmul.f32 %v9491, 0.01
        %v9557 = vsel %vm9493, %v9415, %v9525
        %v9558 = vsel %vm9494, %v9417, %v9526
        %v9559 = vsel %vm9495, %v9419, %v9527
        %v9560 = vsel %vm9496, %v9421, %v9528
        %v9561 = vsel %vm9497, %v9425, %v9529
        %v9562 = vsel %vm9498, %v9427, %v9530
        %v9563 = vsel %vm9499, %v9429, %v9531
        %v9564 = vsel %vm9500, %v9431, %v9532
        %v9565 = vsel %vm9501, %v9435, %v9533
        %v9566 = vsel %vm9502, %v9437, %v9534
        %v9567 = vsel %vm9503, %v9439, %v9535
        %v9568 = vsel %vm9504, %v9441, %v9536
        %v9569 = vsel %vm9505, %v9445, %v9537
        %v9570 = vsel %vm9506, %v9447, %v9538
        %v9571 = vsel %vm9507, %v9449, %v9539
        %v9572 = vsel %vm9508, %v9451, %v9540
        %v9573 = vsel %vm9509, %v9455, %v9541
        %v9574 = vsel %vm9510, %v9457, %v9542
        %v9575 = vsel %vm9511, %v9459, %v9543
        %v9576 = vsel %vm9512, %v9461, %v9544
        %v9577 = vsel %vm9513, %v9465, %v9545
        %v9578 = vsel %vm9514, %v9467, %v9546
        %v9579 = vsel %vm9515, %v9469, %v9547
        %v9580 = vsel %vm9516, %v9471, %v9548
        %v9581 = vsel %vm9517, %v9475, %v9549
        %v9582 = vsel %vm9518, %v9477, %v9550
        %v9583 = vsel %vm9519, %v9479, %v9551
        %v9584 = vsel %vm9520, %v9481, %v9552
        %v9585 = vsel %vm9521, %v9485, %v9553
        %v9586 = vsel %vm9522, %v9487, %v9554
        %v9587 = vsel %vm9523, %v9489, %v9555
        %v9588 = vsel %vm9524, %v9491, %v9556
        %v9589 = vpack.c.bf16 %v9559, %v9557
        %v9590 = vpack.c.bf16 %v9560, %v9558
        %v9591 = vpack.c.bf16 %v9563, %v9561
        %v9592 = vpack.c.bf16 %v9564, %v9562
        %v9593 = vpack.c.bf16 %v9567, %v9565
        %v9594 = vpack.c.bf16 %v9568, %v9566
        %v9595 = vpack.c.bf16 %v9571, %v9569
        %v9596 = vpack.c.bf16 %v9572, %v9570
        %v9597 = vpack.c.bf16 %v9575, %v9573
        %v9598 = vpack.c.bf16 %v9576, %v9574
        %v9599 = vpack.c.bf16 %v9579, %v9577
        %v9600 = vpack.c.bf16 %v9580, %v9578
        %v9601 = vpack.c.bf16 %v9583, %v9581
        %v9602 = vpack.c.bf16 %v9584, %v9582
        %v9603 = vpack.c.bf16 %v9587, %v9585
        %v9604 = vpack.c.bf16 %v9588, %v9586
        %s9605 = scalar_lea.vmem %s10, 128
        %v9606 = vld [vmem:[%s9605] sm:$0xf]
        %v9607 = vld [vmem:[%s9605 + $0x4] sm:$0xf]
        %v9608 = vld [vmem:[%s9605 + $0x8] sm:$0xf]
        %v9609 = vld [vmem:[%s9605 + $0xc] sm:$0xf]
        %v9610 = vld [vmem:[%s9605 + $0x10] sm:$0xf]
        %v9611 = vld [vmem:[%s9605 + $0x14] sm:$0xf]
        %v9612 = vld [vmem:[%s9605 + $0x18] sm:$0xf]
        %v9613 = vld [vmem:[%s9605 + $0x1c] sm:$0xf]
        %v9614 = vld [vmem:[%s9605 + $0x20] sm:$0xf]
        %v9615 = vld [vmem:[%s9605 + $0x24] sm:$0xf]
        %v9616 = vld [vmem:[%s9605 + $0x28] sm:$0xf]
        %v9617 = vld [vmem:[%s9605 + $0x2c] sm:$0xf]
        %v9618 = vld [vmem:[%s9605 + $0x30] sm:$0xf]
        %v9619 = vld [vmem:[%s9605 + $0x34] sm:$0xf]
        %v9620 = vld [vmem:[%s9605 + $0x38] sm:$0xf]
        %v9621 = vld [vmem:[%s9605 + $0x3c] sm:$0xf]
        %v9622 = vld [vmem:[%s9605 + $0x40] sm:$0xf]
        %v9623 = vld [vmem:[%s9605 + $0x44] sm:$0xf]
        %v9624 = vld [vmem:[%s9605 + $0x48] sm:$0xf]
        %v9625 = vld [vmem:[%s9605 + $0x4c] sm:$0xf]
        %v9626 = vld [vmem:[%s9605 + $0x50] sm:$0xf]
        %v9627 = vld [vmem:[%s9605 + $0x54] sm:$0xf]
        %v9628 = vld [vmem:[%s9605 + $0x58] sm:$0xf]
        %v9629 = vld [vmem:[%s9605 + $0x5c] sm:$0xf]
        %v9630 = vld [vmem:[%s9605 + $0x60] sm:$0xf]
        %v9631 = vld [vmem:[%s9605 + $0x64] sm:$0xf]
        %v9632 = vld [vmem:[%s9605 + $0x68] sm:$0xf]
        %v9633 = vld [vmem:[%s9605 + $0x6c] sm:$0xf]
        %v9634 = vld [vmem:[%s9605 + $0x70] sm:$0xf]
        %v9635 = vld [vmem:[%s9605 + $0x74] sm:$0xf]
        %v9636 = vld [vmem:[%s9605 + $0x78] sm:$0xf]
        %v9637 = vld [vmem:[%s9605 + $0x7c] sm:$0xf]
        %s9638 = scalar_lea.vmem %s11, 1
        %v9639 = vld [vmem:[%s9638] sm:$0x1]
        %v9641 = vlaneseq
        %v9642 = vshrl.u32 %v9641, 7
        %v9643 = vsub.s32 0, %v9642
        %v9644 = vrot.slane %v9639, %v9643
        %v9678 = vunpack.c.l.b16 %v9606
        %v9679 = vunpack.c.l.b16 %v9607
        %v9680 = vunpack.c.l.b16 %v9608
        %v9681 = vunpack.c.l.b16 %v9609
        %v9682 = vunpack.c.l.b16 %v9610
        %v9683 = vunpack.c.l.b16 %v9611
        %v9684 = vunpack.c.l.b16 %v9612
        %v9685 = vunpack.c.l.b16 %v9613
        %v9686 = vunpack.c.l.b16 %v9614
        %v9687 = vunpack.c.l.b16 %v9615
        %v9688 = vunpack.c.l.b16 %v9616
        %v9689 = vunpack.c.l.b16 %v9617
        %v9690 = vunpack.c.l.b16 %v9618
        %v9691 = vunpack.c.l.b16 %v9619
        %v9692 = vunpack.c.l.b16 %v9620
        %v9693 = vunpack.c.l.b16 %v9621
        %v9694 = vunpack.c.l.b16 %v9622
        %v9695 = vunpack.c.l.b16 %v9623
        %v9696 = vunpack.c.l.b16 %v9624
        %v9697 = vunpack.c.l.b16 %v9625
        %v9698 = vunpack.c.l.b16 %v9626
        %v9699 = vunpack.c.l.b16 %v9627
        %v9700 = vunpack.c.l.b16 %v9628
        %v9701 = vunpack.c.l.b16 %v9629
        %v9702 = vunpack.c.l.b16 %v9630
        %v9703 = vunpack.c.l.b16 %v9631
        %v9704 = vunpack.c.l.b16 %v9632
        %v9705 = vunpack.c.l.b16 %v9633
        %v9706 = vunpack.c.l.b16 %v9634
        %v9707 = vunpack.c.l.b16 %v9635
        %v9708 = vunpack.c.l.b16 %v9636
        %v9709 = vunpack.c.l.b16 %v9637
        %v9710 = vpack.c.b16 %v9679, %v9678
        %v9711 = vpack.c.b16 %v9681, %v9680
        %v9712 = vpack.c.b16 %v9683, %v9682
        %v9713 = vpack.c.b16 %v9685, %v9684
        %v9714 = vpack.c.b16 %v9687, %v9686
        %v9715 = vpack.c.b16 %v9689, %v9688
        %v9716 = vpack.c.b16 %v9691, %v9690
        %v9717 = vpack.c.b16 %v9693, %v9692
        %v9718 = vpack.c.b16 %v9695, %v9694
        %v9719 = vpack.c.b16 %v9697, %v9696
        %v9720 = vpack.c.b16 %v9699, %v9698
        %v9721 = vpack.c.b16 %v9701, %v9700
        %v9722 = vpack.c.b16 %v9703, %v9702
        %v9723 = vpack.c.b16 %v9705, %v9704
        %v9724 = vpack.c.b16 %v9707, %v9706
        %v9725 = vpack.c.b16 %v9709, %v9708
        %9742 = vmatprep.subr.bf16.mxu0 0
        %9743 = vmatpush1.bf16.msra.mxu0 %v9717
        %9744 = vmatprep.subr.bf16.mxu0 0
        %9745 = vmatpush1.bf16.msra.mxu0 %v9716
        %9746 = vmatprep.subr.bf16.mxu0 0
        %9747 = vmatpush1.bf16.msra.mxu0 %v9715
        %9748 = vmatprep.subr.bf16.mxu0 0
        %9749 = vmatpush1.bf16.msra.mxu0 %v9714
        %9750 = vmatprep.subr.bf16.mxu0 0
        %9751 = vmatpush1.bf16.msra.mxu0 %v9713
        %9752 = vmatprep.subr.bf16.mxu0 0
        %9753 = vmatpush1.bf16.msra.mxu0 %v9712
        %9754 = vmatprep.subr.bf16.mxu0 0
        %9755 = vmatpush1.bf16.msra.mxu0 %v9711
        %9756 = vmatprep.subr.bf16.mxu0 0
        %9757 = vmatpush1.bf16.msra.mxu0 %v9710
        %9758 = vmatprep.subr.bf16.mxu0 0
        %9759 = vmatpush2.bf16.msra.mxu0 %v9725
        %9760 = vmatprep.subr.bf16.mxu0 0
        %9761 = vmatpush2.bf16.msra.mxu0 %v9724
        %9762 = vmatprep.subr.bf16.mxu0 0
        %9763 = vmatpush2.bf16.msra.mxu0 %v9723
        %9764 = vmatprep.subr.bf16.mxu0 0
        %9765 = vmatpush2.bf16.msra.mxu0 %v9722
        %9766 = vmatprep.subr.bf16.mxu0 0
        %9767 = vmatpush2.bf16.msra.mxu0 %v9721
        %9768 = vmatprep.subr.bf16.mxu0 0
        %9769 = vmatpush2.bf16.msra.mxu0 %v9720
        %9770 = vmatprep.subr.bf16.mxu0 0
        %9771 = vmatpush2.bf16.msra.mxu0 %v9719
        %9772 = vmatprep.subr.bf16.mxu0 0
        %9773 = vmatpush2.bf16.msra.mxu0 %v9718
        %9774 = vmatprep.mubr.bf16.mxu0 %v9590
        %9775 = vmatmul.mubr.bf16.gmra.mxu0 %v9589
        %v9776 = vpop.f32.mrf.mxu0
        %v9777 = vadd.f32 %v9644, %v9776
        %v9778 = vpop.f32.mrf.mxu0
        %v9779 = vpop.f32.mrf.mxu0
        %v9780 = vadd.f32 %v9644, %v9779
        %v9781 = vpop.f32.mrf.mxu0
        %9782 = vmatprep.mubr.bf16.mxu0 %v9592
        %9783 = vmatmul.mubr.bf16.gmra.mxu0 %v9591
        %v9784 = vpop.f32.mrf.mxu0
        %v9785 = vadd.f32 %v9644, %v9784
        %v9786 = vpop.f32.mrf.mxu0
        %v9787 = vpop.f32.mrf.mxu0
        %v9788 = vadd.f32 %v9644, %v9787
        %v9789 = vpop.f32.mrf.mxu0
        %9790 = vmatprep.mubr.bf16.mxu0 %v9594
        %9791 = vmatmul.mubr.bf16.gmra.mxu0 %v9593
        %v9792 = vpop.f32.mrf.mxu0
        %v9793 = vadd.f32 %v9644, %v9792
        %v9794 = vpop.f32.mrf.mxu0
        %v9795 = vpop.f32.mrf.mxu0
        %v9796 = vadd.f32 %v9644, %v9795
        %v9797 = vpop.f32.mrf.mxu0
        %9798 = vmatprep.mubr.bf16.mxu0 %v9596
        %9799 = vmatmul.mubr.bf16.gmra.mxu0 %v9595
        %v9800 = vpop.f32.mrf.mxu0
        %v9801 = vadd.f32 %v9644, %v9800
        %v9802 = vpop.f32.mrf.mxu0
        %v9803 = vpop.f32.mrf.mxu0
        %v9804 = vadd.f32 %v9644, %v9803
        %v9805 = vpop.f32.mrf.mxu0
        %9806 = vmatprep.mubr.bf16.mxu0 %v9598
        %9807 = vmatmul.mubr.bf16.gmra.mxu0 %v9597
        %v9808 = vpop.f32.mrf.mxu0
        %v9809 = vadd.f32 %v9644, %v9808
        %v9810 = vpop.f32.mrf.mxu0
        %v9811 = vpop.f32.mrf.mxu0
        %v9812 = vadd.f32 %v9644, %v9811
        %v9813 = vpop.f32.mrf.mxu0
        %9814 = vmatprep.mubr.bf16.mxu0 %v9600
        %9815 = vmatmul.mubr.bf16.gmra.mxu0 %v9599
        %v9816 = vpop.f32.mrf.mxu0
        %v9817 = vadd.f32 %v9644, %v9816
        %v9818 = vpop.f32.mrf.mxu0
        %v9819 = vpop.f32.mrf.mxu0
        %v9820 = vadd.f32 %v9644, %v9819
        %v9821 = vpop.f32.mrf.mxu0
        %9822 = vmatprep.mubr.bf16.mxu0 %v9602
        %9823 = vmatmul.mubr.bf16.gmra.mxu0 %v9601
        %v9824 = vpop.f32.mrf.mxu0
        %v9825 = vadd.f32 %v9644, %v9824
        %v9826 = vpop.f32.mrf.mxu0
        %v9827 = vpop.f32.mrf.mxu0
        %v9828 = vadd.f32 %v9644, %v9827
        %v9829 = vpop.f32.mrf.mxu0
        %9830 = vmatprep.mubr.bf16.mxu0 %v9604
        %9831 = vmatmul.mubr.bf16.gmra.mxu0 %v9603
        %v9832 = vpop.f32.mrf.mxu0
        %v9833 = vadd.f32 %v9644, %v9832
        %v9834 = vpop.f32.mrf.mxu0
        %v9835 = vpop.f32.mrf.mxu0
        %v9836 = vadd.f32 %v9644, %v9835
        %v9837 = vpop.f32.mrf.mxu0
        %9838 = vdwg.mxu0
        %v9839 = vadd.f32 %v9014, %v9777
        %v9840 = vadd.f32 %v9015, %v9780
        %v9841 = vadd.f32 %v9016, %v9785
        %v9842 = vadd.f32 %v9017, %v9788
        %v9843 = vadd.f32 %v9018, %v9793
        %v9844 = vadd.f32 %v9019, %v9796
        %v9845 = vadd.f32 %v9020, %v9801
        %v9846 = vadd.f32 %v9021, %v9804
        %v9847 = vadd.f32 %v9022, %v9809
        %v9848 = vadd.f32 %v9023, %v9812
        %v9849 = vadd.f32 %v9024, %v9817
        %v9850 = vadd.f32 %v9025, %v9820
        %v9851 = vadd.f32 %v9026, %v9825
        %v9852 = vadd.f32 %v9027, %v9828
        %v9853 = vadd.f32 %v9028, %v9833
        %v9854 = vadd.f32 %v9029, %v9836
        %v9855 = vld [vmem:[%s12] sm:$0x1]
        %v9856 = vld [vmem:[%s13] sm:$0x1]
        %v9857 = vsel %vm557, %v9839, 0.0
        %9858 = vadd.xlane.f32.xlu0 %v9857
        %v9859 = vpop.xlane.xlu0 %9858
        %v9860 = vsel %vm557, %v9840, 0.0
        %9861 = vadd.xlane.f32.xlu0 %v9860
        %v9862 = vpop.xlane.xlu0 %9861
        %v9863 = vsel %vm557, %v9841, 0.0
        %9864 = vadd.xlane.f32.xlu0 %v9863
        %v9865 = vpop.xlane.xlu0 %9864
        %v9866 = vsel %vm557, %v9842, 0.0
        %9867 = vadd.xlane.f32.xlu0 %v9866
        %v9868 = vpop.xlane.xlu0 %9867
        %v9869 = vsel %vm557, %v9843, 0.0
        %9870 = vadd.xlane.f32.xlu0 %v9869
        %v9871 = vpop.xlane.xlu0 %9870
        %v9872 = vsel %vm557, %v9844, 0.0
        %9873 = vadd.xlane.f32.xlu0 %v9872
        %v9874 = vpop.xlane.xlu0 %9873
        %v9875 = vsel %vm557, %v9845, 0.0
        %9876 = vadd.xlane.f32.xlu0 %v9875
        %v9877 = vpop.xlane.xlu0 %9876
        %v9878 = vsel %vm557, %v9846, 0.0
        %9879 = vadd.xlane.f32.xlu0 %v9878
        %v9880 = vpop.xlane.xlu0 %9879
        %v9881 = vsel %vm557, %v9847, 0.0
        %9882 = vadd.xlane.f32.xlu0 %v9881
        %v9883 = vpop.xlane.xlu0 %9882
        %v9884 = vsel %vm557, %v9848, 0.0
        %9885 = vadd.xlane.f32.xlu0 %v9884
        %v9886 = vpop.xlane.xlu0 %9885
        %v9887 = vsel %vm557, %v9849, 0.0
        %9888 = vadd.xlane.f32.xlu0 %v9887
        %v9889 = vpop.xlane.xlu0 %9888
        %v9890 = vsel %vm557, %v9850, 0.0
        %9891 = vadd.xlane.f32.xlu0 %v9890
        %v9892 = vpop.xlane.xlu0 %9891
        %v9893 = vsel %vm557, %v9851, 0.0
        %9894 = vadd.xlane.f32.xlu0 %v9893
        %v9895 = vpop.xlane.xlu0 %9894
        %v9896 = vsel %vm557, %v9852, 0.0
        %9897 = vadd.xlane.f32.xlu0 %v9896
        %v9898 = vpop.xlane.xlu0 %9897
        %v9899 = vsel %vm557, %v9853, 0.0
        %9900 = vadd.xlane.f32.xlu0 %v9899
        %v9901 = vpop.xlane.xlu0 %9900
        %v9902 = vsel %vm557, %v9854, 0.0
        %9903 = vadd.xlane.f32.xlu0 %v9902
        %v9904 = vpop.xlane.xlu0 %9903
        %v9905 = vmul.f32 %v9859, %v606
        %v9906 = vmul.f32 %v9862, %v606
        %v9907 = vmul.f32 %v9865, %v606
        %v9908 = vmul.f32 %v9868, %v606
        %v9909 = vmul.f32 %v9871, %v606
        %v9910 = vmul.f32 %v9874, %v606
        %v9911 = vmul.f32 %v9877, %v606
        %v9912 = vmul.f32 %v9880, %v606
        %v9913 = vmul.f32 %v9883, %v606
        %v9914 = vmul.f32 %v9886, %v606
        %v9915 = vmul.f32 %v9889, %v606
        %v9916 = vmul.f32 %v9892, %v606
        %v9917 = vmul.f32 %v9895, %v606
        %v9918 = vmul.f32 %v9898, %v606
        %v9919 = vmul.f32 %v9901, %v606
        %v9920 = vmul.f32 %v9904, %v606
        %v9921 = vsub.f32 %v9839, %v9905
        %v9922 = vsub.f32 %v9840, %v9906
        %v9923 = vsub.f32 %v9841, %v9907
        %v9924 = vsub.f32 %v9842, %v9908
        %v9925 = vsub.f32 %v9843, %v9909
        %v9926 = vsub.f32 %v9844, %v9910
        %v9927 = vsub.f32 %v9845, %v9911
        %v9928 = vsub.f32 %v9846, %v9912
        %v9929 = vsub.f32 %v9847, %v9913
        %v9930 = vsub.f32 %v9848, %v9914
        %v9931 = vsub.f32 %v9849, %v9915
        %v9932 = vsub.f32 %v9850, %v9916
        %v9933 = vsub.f32 %v9851, %v9917
        %v9934 = vsub.f32 %v9852, %v9918
        %v9935 = vsub.f32 %v9853, %v9919
        %v9936 = vsub.f32 %v9854, %v9920
        %v9937 = vmul.f32 %v9921, %v9921
        %v9938 = vmul.f32 %v9922, %v9922
        %v9939 = vmul.f32 %v9923, %v9923
        %v9940 = vmul.f32 %v9924, %v9924
        %v9941 = vmul.f32 %v9925, %v9925
        %v9942 = vmul.f32 %v9926, %v9926
        %v9943 = vmul.f32 %v9927, %v9927
        %v9944 = vmul.f32 %v9928, %v9928
        %v9945 = vmul.f32 %v9929, %v9929
        %v9946 = vmul.f32 %v9930, %v9930
        %v9947 = vmul.f32 %v9931, %v9931
        %v9948 = vmul.f32 %v9932, %v9932
        %v9949 = vmul.f32 %v9933, %v9933
        %v9950 = vmul.f32 %v9934, %v9934
        %v9951 = vmul.f32 %v9935, %v9935
        %v9952 = vmul.f32 %v9936, %v9936
        %v9953 = vsel %vm557, %v9937, 0.0
        %9954 = vadd.xlane.f32.xlu0 %v9953
        %v9955 = vpop.xlane.xlu0 %9954
        %v9956 = vsel %vm557, %v9938, 0.0
        %9957 = vadd.xlane.f32.xlu0 %v9956
        %v9958 = vpop.xlane.xlu0 %9957
        %v9959 = vsel %vm557, %v9939, 0.0
        %9960 = vadd.xlane.f32.xlu0 %v9959
        %v9961 = vpop.xlane.xlu0 %9960
        %v9962 = vsel %vm557, %v9940, 0.0
        %9963 = vadd.xlane.f32.xlu0 %v9962
        %v9964 = vpop.xlane.xlu0 %9963
        %v9965 = vsel %vm557, %v9941, 0.0
        %9966 = vadd.xlane.f32.xlu0 %v9965
        %v9967 = vpop.xlane.xlu0 %9966
        %v9968 = vsel %vm557, %v9942, 0.0
        %9969 = vadd.xlane.f32.xlu0 %v9968
        %v9970 = vpop.xlane.xlu0 %9969
        %v9971 = vsel %vm557, %v9943, 0.0
        %9972 = vadd.xlane.f32.xlu0 %v9971
        %v9973 = vpop.xlane.xlu0 %9972
        %v9974 = vsel %vm557, %v9944, 0.0
        %9975 = vadd.xlane.f32.xlu0 %v9974
        %v9976 = vpop.xlane.xlu0 %9975
        %v9977 = vsel %vm557, %v9945, 0.0
        %9978 = vadd.xlane.f32.xlu0 %v9977
        %v9979 = vpop.xlane.xlu0 %9978
        %v9980 = vsel %vm557, %v9946, 0.0
        %9981 = vadd.xlane.f32.xlu0 %v9980
        %v9982 = vpop.xlane.xlu0 %9981
        %v9983 = vsel %vm557, %v9947, 0.0
        %9984 = vadd.xlane.f32.xlu0 %v9983
        %v9985 = vpop.xlane.xlu0 %9984
        %v9986 = vsel %vm557, %v9948, 0.0
        %9987 = vadd.xlane.f32.xlu0 %v9986
        %v9988 = vpop.xlane.xlu0 %9987
        %v9989 = vsel %vm557, %v9949, 0.0
        %9990 = vadd.xlane.f32.xlu0 %v9989
        %v9991 = vpop.xlane.xlu0 %9990
        %v9992 = vsel %vm557, %v9950, 0.0
        %9993 = vadd.xlane.f32.xlu0 %v9992
        %v9994 = vpop.xlane.xlu0 %9993
        %v9995 = vsel %vm557, %v9951, 0.0
        %9996 = vadd.xlane.f32.xlu0 %v9995
        %v9997 = vpop.xlane.xlu0 %9996
        %v9998 = vsel %vm557, %v9952, 0.0
        %9999 = vadd.xlane.f32.xlu0 %v9998
        %v10000 = vpop.xlane.xlu0 %9999
        %v10001 = vmul.f32 %v9955, %v606
        %v10002 = vmul.f32 %v9958, %v606
        %v10003 = vmul.f32 %v9961, %v606
        %v10004 = vmul.f32 %v9964, %v606
        %v10005 = vmul.f32 %v9967, %v606
        %v10006 = vmul.f32 %v9970, %v606
        %v10007 = vmul.f32 %v9973, %v606
        %v10008 = vmul.f32 %v9976, %v606
        %v10009 = vmul.f32 %v9979, %v606
        %v10010 = vmul.f32 %v9982, %v606
        %v10011 = vmul.f32 %v9985, %v606
        %v10012 = vmul.f32 %v9988, %v606
        %v10013 = vmul.f32 %v9991, %v606
        %v10014 = vmul.f32 %v9994, %v606
        %v10015 = vmul.f32 %v9997, %v606
        %v10016 = vmul.f32 %v10000, %v606
        %v10017 = vadd.f32 %v10001, 1e-05
        %v10018 = vadd.f32 %v10002, 1e-05
        %v10019 = vadd.f32 %v10003, 1e-05
        %v10020 = vadd.f32 %v10004, 1e-05
        %v10021 = vadd.f32 %v10005, 1e-05
        %v10022 = vadd.f32 %v10006, 1e-05
        %v10023 = vadd.f32 %v10007, 1e-05
        %v10024 = vadd.f32 %v10008, 1e-05
        %v10025 = vadd.f32 %v10009, 1e-05
        %v10026 = vadd.f32 %v10010, 1e-05
        %v10027 = vadd.f32 %v10011, 1e-05
        %v10028 = vadd.f32 %v10012, 1e-05
        %v10029 = vadd.f32 %v10013, 1e-05
        %v10030 = vadd.f32 %v10014, 1e-05
        %v10031 = vadd.f32 %v10015, 1e-05
        %v10032 = vadd.f32 %v10016, 1e-05
        %v10033 = vrsqrt.pop %v10017
        %v10034 = vrsqrt.pop %v10018
        %v10035 = vrsqrt.pop %v10019
        %v10036 = vrsqrt.pop %v10020
        %v10037 = vrsqrt.pop %v10021
        %v10038 = vrsqrt.pop %v10022
        %v10039 = vrsqrt.pop %v10023
        %v10040 = vrsqrt.pop %v10024
        %v10041 = vrsqrt.pop %v10025
        %v10042 = vrsqrt.pop %v10026
        %v10043 = vrsqrt.pop %v10027
        %v10044 = vrsqrt.pop %v10028
        %v10045 = vrsqrt.pop %v10029
        %v10046 = vrsqrt.pop %v10030
        %v10047 = vrsqrt.pop %v10031
        %v10048 = vrsqrt.pop %v10032
        %v10049 = vmul.f32 %v9921, %v10033
        %v10050 = vmul.f32 %v9922, %v10034
        %v10051 = vmul.f32 %v9923, %v10035
        %v10052 = vmul.f32 %v9924, %v10036
        %v10053 = vmul.f32 %v9925, %v10037
        %v10054 = vmul.f32 %v9926, %v10038
        %v10055 = vmul.f32 %v9927, %v10039
        %v10056 = vmul.f32 %v9928, %v10040
        %v10057 = vmul.f32 %v9929, %v10041
        %v10058 = vmul.f32 %v9930, %v10042
        %v10059 = vmul.f32 %v9931, %v10043
        %v10060 = vmul.f32 %v9932, %v10044
        %v10061 = vmul.f32 %v9933, %v10045
        %v10062 = vmul.f32 %v9934, %v10046
        %v10063 = vmul.f32 %v9935, %v10047
        %v10064 = vmul.f32 %v9936, %v10048
        %v10066 = vlaneseq
        %v10067 = vshrl.u32 %v10066, 7
        %v10068 = vsub.s32 0, %v10067
        %v10069 = vrot.slane %v9855, %v10068
        %v10071 = vmul.f32 %v10049, %v10069
        %v10072 = vmul.f32 %v10050, %v10069
        %v10073 = vmul.f32 %v10051, %v10069
        %v10074 = vmul.f32 %v10052, %v10069
        %v10075 = vmul.f32 %v10053, %v10069
        %v10076 = vmul.f32 %v10054, %v10069
        %v10077 = vmul.f32 %v10055, %v10069
        %v10078 = vmul.f32 %v10056, %v10069
        %v10079 = vmul.f32 %v10057, %v10069
        %v10080 = vmul.f32 %v10058, %v10069
        %v10081 = vmul.f32 %v10059, %v10069
        %v10082 = vmul.f32 %v10060, %v10069
        %v10083 = vmul.f32 %v10061, %v10069
        %v10084 = vmul.f32 %v10062, %v10069
        %v10085 = vmul.f32 %v10063, %v10069
        %v10086 = vmul.f32 %v10064, %v10069
        %v10088 = vlaneseq
        %v10089 = vshrl.u32 %v10088, 7
        %v10090 = vsub.s32 0, %v10089
        %v10091 = vrot.slane %v9856, %v10090
        %v10093 = vadd.f32 %v10071, %v10091
        %v10094 = vadd.f32 %v10072, %v10091
        %v10095 = vadd.f32 %v10073, %v10091
        %v10096 = vadd.f32 %v10074, %v10091
        %v10097 = vadd.f32 %v10075, %v10091
        %v10098 = vadd.f32 %v10076, %v10091
        %v10099 = vadd.f32 %v10077, %v10091
        %v10100 = vadd.f32 %v10078, %v10091
        %v10101 = vadd.f32 %v10079, %v10091
        %v10102 = vadd.f32 %v10080, %v10091
        %v10103 = vadd.f32 %v10081, %v10091
        %v10104 = vadd.f32 %v10082, %v10091
        %v10105 = vadd.f32 %v10083, %v10091
        %v10106 = vadd.f32 %v10084, %v10091
        %v10107 = vadd.f32 %v10085, %v10091
        %v10108 = vadd.f32 %v10086, %v10091
        %v10109 = vpack.c.bf16 %v10094, %v10093
        %v10110 = vpack.c.bf16 %v10096, %v10095
        %v10111 = vpack.c.bf16 %v10098, %v10097
        %v10112 = vpack.c.bf16 %v10100, %v10099
        %v10113 = vpack.c.bf16 %v10102, %v10101
        %v10114 = vpack.c.bf16 %v10104, %v10103
        %v10115 = vpack.c.bf16 %v10106, %v10105
        %v10116 = vpack.c.bf16 %v10108, %v10107
        %v10117 = vld [vmem:[%s14] sm:$0xf]
        %v10118 = vld [vmem:[%s14 + $0x4] sm:$0xf]
        %v10119 = vld [vmem:[%s14 + $0x8] sm:$0xf]
        %v10120 = vld [vmem:[%s14 + $0xc] sm:$0xf]
        %v10121 = vld [vmem:[%s14 + $0x10] sm:$0xf]
        %v10122 = vld [vmem:[%s14 + $0x14] sm:$0xf]
        %v10123 = vld [vmem:[%s14 + $0x18] sm:$0xf]
        %v10124 = vld [vmem:[%s14 + $0x1c] sm:$0xf]
        %v10125 = vld [vmem:[%s15] sm:$0x1]
        %v10127 = vlaneseq
        %v10128 = vshrl.u32 %v10127, 7
        %v10129 = vsub.s32 0, %v10128
        %v10130 = vrot.slane %v10125, %v10129
        %v10140 = vunpack.c.l.b16 %v10117
        %v10141 = vunpack.c.l.b16 %v10118
        %v10142 = vunpack.c.l.b16 %v10119
        %v10143 = vunpack.c.l.b16 %v10120
        %v10144 = vunpack.c.l.b16 %v10121
        %v10145 = vunpack.c.l.b16 %v10122
        %v10146 = vunpack.c.l.b16 %v10123
        %v10147 = vunpack.c.l.b16 %v10124
        %v10148 = vpack.c.b16 %v10141, %v10140
        %v10149 = vpack.c.b16 %v10143, %v10142
        %v10150 = vpack.c.b16 %v10145, %v10144
        %v10151 = vpack.c.b16 %v10147, %v10146
        %v10157 = vsel %vm557, %v10109, 0
        %v10160 = vsel %vm557, %v10110, 0
        %v10163 = vsel %vm557, %v10111, 0
        %v10166 = vsel %vm557, %v10112, 0
        %v10169 = vsel %vm557, %v10113, 0
        %v10172 = vsel %vm557, %v10114, 0
        %v10175 = vsel %vm557, %v10115, 0
        %v10178 = vsel %vm557, %v10116, 0
        %10180 = vmatprep.subr.bf16.mxu0 0
        %10181 = vmatpush1.bf16.msra.mxu0 0
        %10182 = vmatprep.subr.bf16.mxu0 0
        %10183 = vmatpush1.bf16.msra.mxu0 0
        %10184 = vmatprep.subr.bf16.mxu0 0
        %10185 = vmatpush1.bf16.msra.mxu0 0
        %10186 = vmatprep.subr.bf16.mxu0 0
        %10187 = vmatpush1.bf16.msra.mxu0 0
        %10188 = vmatprep.subr.bf16.mxu0 0
        %10189 = vmatpush1.bf16.msra.mxu0 %v10151
        %10190 = vmatprep.subr.bf16.mxu0 0
        %10191 = vmatpush1.bf16.msra.mxu0 %v10150
        %10192 = vmatprep.subr.bf16.mxu0 0
        %10193 = vmatpush1.bf16.msra.mxu0 %v10149
        %10194 = vmatprep.subr.bf16.mxu0 0
        %10195 = vmatpush1.bf16.msra.mxu0 %v10148
        %10196 = vmatprep.subr.bf16.mxu0 0
        %10197 = vmatpush2.bf16.msra.mxu0 0
        %10198 = vmatprep.subr.bf16.mxu0 0
        %10199 = vmatpush2.bf16.msra.mxu0 0
        %10200 = vmatprep.subr.bf16.mxu0 0
        %10201 = vmatpush2.bf16.msra.mxu0 0
        %10202 = vmatprep.subr.bf16.mxu0 0
        %10203 = vmatpush2.bf16.msra.mxu0 0
        %10204 = vmatprep.subr.bf16.mxu0 0
        %10205 = vmatpush2.bf16.msra.mxu0 0
        %10206 = vmatprep.subr.bf16.mxu0 0
        %10207 = vmatpush2.bf16.msra.mxu0 0
        %10208 = vmatprep.subr.bf16.mxu0 0
        %10209 = vmatpush2.bf16.msra.mxu0 0
        %10210 = vmatprep.subr.bf16.mxu0 0
        %10211 = vmatpush2.bf16.msra.mxu0 0
        %10212 = vmatprep.mubr.bf16.mxu0 0
        %10213 = vmatmul.mubr.bf16.gmra.mxu0 %v10157
        %v10214 = vpop.f32.mrf.mxu0
        %v10215 = vadd.f32 %v10130, %v10214
        %v10216 = vpop.f32.mrf.mxu0
        %v10217 = vpop.f32.mrf.mxu0
        %v10218 = vadd.f32 %v10130, %v10217
        %v10219 = vpop.f32.mrf.mxu0
        %10220 = vmatprep.mubr.bf16.mxu0 0
        %10221 = vmatmul.mubr.bf16.gmra.mxu0 %v10160
        %v10222 = vpop.f32.mrf.mxu0
        %v10223 = vadd.f32 %v10130, %v10222
        %v10224 = vpop.f32.mrf.mxu0
        %v10225 = vpop.f32.mrf.mxu0
        %v10226 = vadd.f32 %v10130, %v10225
        %v10227 = vpop.f32.mrf.mxu0
        %10228 = vmatprep.mubr.bf16.mxu0 0
        %10229 = vmatmul.mubr.bf16.gmra.mxu0 %v10163
        %v10230 = vpop.f32.mrf.mxu0
        %v10231 = vadd.f32 %v10130, %v10230
        %v10232 = vpop.f32.mrf.mxu0
        %v10233 = vpop.f32.mrf.mxu0
        %v10234 = vadd.f32 %v10130, %v10233
        %v10235 = vpop.f32.mrf.mxu0
        %10236 = vmatprep.mubr.bf16.mxu0 0
        %10237 = vmatmul.mubr.bf16.gmra.mxu0 %v10166
        %v10238 = vpop.f32.mrf.mxu0
        %v10239 = vadd.f32 %v10130, %v10238
        %v10240 = vpop.f32.mrf.mxu0
        %v10241 = vpop.f32.mrf.mxu0
        %v10242 = vadd.f32 %v10130, %v10241
        %v10243 = vpop.f32.mrf.mxu0
        %10244 = vmatprep.mubr.bf16.mxu0 0
        %10245 = vmatmul.mubr.bf16.gmra.mxu0 %v10169
        %v10246 = vpop.f32.mrf.mxu0
        %v10247 = vadd.f32 %v10130, %v10246
        %v10248 = vpop.f32.mrf.mxu0
        %v10249 = vpop.f32.mrf.mxu0
        %v10250 = vadd.f32 %v10130, %v10249
        %v10251 = vpop.f32.mrf.mxu0
        %10252 = vmatprep.mubr.bf16.mxu0 0
        %10253 = vmatmul.mubr.bf16.gmra.mxu0 %v10172
        %v10254 = vpop.f32.mrf.mxu0
        %v10255 = vadd.f32 %v10130, %v10254
        %v10256 = vpop.f32.mrf.mxu0
        %v10257 = vpop.f32.mrf.mxu0
        %v10258 = vadd.f32 %v10130, %v10257
        %v10259 = vpop.f32.mrf.mxu0
        %10260 = vmatprep.mubr.bf16.mxu0 0
        %10261 = vmatmul.mubr.bf16.gmra.mxu0 %v10175
        %v10262 = vpop.f32.mrf.mxu0
        %v10263 = vadd.f32 %v10130, %v10262
        %v10264 = vpop.f32.mrf.mxu0
        %v10265 = vpop.f32.mrf.mxu0
        %v10266 = vadd.f32 %v10130, %v10265
        %v10267 = vpop.f32.mrf.mxu0
        %10268 = vmatprep.mubr.bf16.mxu0 0
        %10269 = vmatmul.mubr.bf16.gmra.mxu0 %v10178
        %v10270 = vpop.f32.mrf.mxu0
        %v10271 = vadd.f32 %v10130, %v10270
        %v10272 = vpop.f32.mrf.mxu0
        %v10273 = vpop.f32.mrf.mxu0
        %v10274 = vadd.f32 %v10130, %v10273
        %v10275 = vpop.f32.mrf.mxu0
        %10276 = vdwg.mxu0
        %10277 = vst [vmem:[%s515] sm:$0xff] %v10215
        %10278 = vst [vmem:[%s515 + $0x8] sm:$0xff] %v10218
        %10279 = vst [vmem:[%s515 + $0x10] sm:$0xff] %v10223
        %10280 = vst [vmem:[%s515 + $0x18] sm:$0xff] %v10226
        %10281 = vst [vmem:[%s515 + $0x20] sm:$0xff] %v10231
        %10282 = vst [vmem:[%s515 + $0x28] sm:$0xff] %v10234
        %10283 = vst [vmem:[%s515 + $0x30] sm:$0xff] %v10239
        %10284 = vst [vmem:[%s515 + $0x38] sm:$0xff] %v10242
        %10285 = vst [vmem:[%s515 + $0x40] sm:$0xff] %v10247
        %10286 = vst [vmem:[%s515 + $0x48] sm:$0xff] %v10250
        %10287 = vst [vmem:[%s515 + $0x50] sm:$0xff] %v10255
        %10288 = vst [vmem:[%s515 + $0x58] sm:$0xff] %v10258
        %10289 = vst [vmem:[%s515 + $0x60] sm:$0xff] %v10263
        %10290 = vst [vmem:[%s515 + $0x68] sm:$0xff] %v10266
        %10291 = vst [vmem:[%s515 + $0x70] sm:$0xff] %v10271
        %10292 = vst [vmem:[%s515 + $0x78] sm:$0xff] %v10274
        %s10293 = sand.u32 %s379, 1
        %s10294 = scalar_lea.sflag [#allocation3], %s10293
        %s10295 = sand.u32 %s379, 1
        %s10296 = smul.addr %s10295, 128
        %s10297 = scalar_lea.vmem [#allocation2], %s10296
        // Predicated region
        $region85: #{_lambda_.1} parent=83 // pred_check
          %p10298 = pneg %p389
        $region86: #{_lambda_.1} parent=83 // pred_check_branch
          %10300 = sbr.rel (%p10298) target = $region88
        $region87: #{_lambda_.1} parent=83 // pred_region
          %s10301 = smul.u32 16, %s30
          %s10303 = ssub.s32 2048, 2048
          %10304 = vsyncadd %s10294, %s10303
          %s10305 = smul.addr %s10301, 128
          %s10306 = scalar_lea.hbm %s16, %s10305
          %s10307 = sshll.u32 %s10297, 4
          %s10308 = int_to_ptr.vmem [resolvable:$true] %s10307
          %10313 = dma.vmem_to_hbm [thread:$0]  %s10308, 2048, %s10306, %s10294, 128, 128, 8
        $region88: #{_lambda_.1} parent=83 // pred_fallthru
          _
      $region84: #{_lambda_.1} parent=5 // pred_fallthru
        _
      %p10314 = scmp.le.s32.totalorder 2, %s25
      // Predicated region
      $region89: #{_lambda_.1} parent=5 // pred_check
        %p10315 = pneg %p10314
      $region90: #{_lambda_.1} parent=5 // pred_check_branch
        %10317 = sbr.rel (%p10315) target = $region92
      $region91: #{_lambda_.1} parent=5 // pred_region
        %s10318 = ssub.s32 %s25, 2
        // Predicated region
        $region93: #{_lambda_.1} parent=91 // pred_check
          %p10319 = pneg %p395
        $region94: #{_lambda_.1} parent=91 // pred_check_branch
          %10321 = sbr.rel (%p10319) target = $region96
        $region95: #{_lambda_.1} parent=91 // pred_region
          %s10322 = sand.u32 %s380, 1
          %s10323 = scalar_lea.sflag [#allocation3], %s10322
          %s10324 = sand.u32 %s380, 1
          %s10325 = smul.addr %s10324, 128
          %s10326 = scalar_lea.vmem [#allocation2], %s10325
          %10327 = dma.done %s10323, 2048
        $region96: #{_lambda_.1} parent=91 // pred_fallthru
          _
      $region92: #{_lambda_.1} parent=5 // pred_fallthru
        _
    $region6: #{_lambda_.1} parent=1 // loop_footer
      %s29 = sadd.s32 1, %s25
    $region7: #{_lambda_.1} parent=1 // loop_footer_branch
      %24 = sbr.rel target = $region3
    $region8: #{_lambda_.1} parent=1 // loop_exit
      _
    %10328 = vsyncpa [#allocation3], 1
    %s10329 = scalar_lea.sflag [#allocation3], 1
    %10330 = vsyncpa %s10329, 1

</llo_original>
